<compile_context>
chip_gen: v6e
topology: v6e:2x2x1
jax: 0.10.0
libtpu: 0.0.40
codegen_flags: <defaults>
</compile_context>

<pallas_src>
import functools

import jax
import jax.numpy as jnp
from jax.experimental import pallas as pl
from jax.experimental.pallas import tpu as pltpu


# ----------------------------------------------------------------------------
# Fused conv tower: conv1(+bias,ReLU) -> maxpool -> conv2(+bias,ReLU) -> maxpool
# One image per grid step; everything stays in VMEM between stages.
# ----------------------------------------------------------------------------
def _conv_tower_kernel(p_ref, w1_ref, b1_ref, w2_ref, b2_ref, o_ref,
                       s1, s1b, s2, s3, s3b, *, H, W):
    """p_ref : (H*W, 9)       im2col patches of the padded 1-channel input
       w1_ref: (9, C1)        conv1 weights, rows ordered (dy*3 + dx)
       b1_ref: (1, C1)
       w2_ref: (9*C1, C2)     conv2 weights, rows ordered ((dy*3+dx)*C1 + cin)
       b2_ref: (1, C2)
       o_ref : ((H//4)*(W//4), C2)  pooled conv2 output, rows = ho*W4 + wo
       s*    : VMEM scratch."""
    C1 = w1_ref.shape[1]
    C2 = w2_ref.shape[1]
    H2, W2 = H // 2, W // 2
    H4, W4 = H // 4, W // 4

    # ---- conv1 (1 -> C1): single im2col matmul on the MXU, bias + ReLU ----
    y1 = jnp.dot(p_ref[...], w1_ref[...], preferred_element_type=jnp.float32)
    y1 = jnp.maximum(y1 + b1_ref[...], 0.0)            # (H*W, C1)
    s1[...] = y1.reshape(H, W, C1)                      # (h, w, c), c on lanes

    # ---- 2x2 stride-2 max-pool #1: stride-2 reads from VMEM refs ----
    s1b[...] = jnp.maximum(s1[pl.ds(0, H2, stride=2), :, :],
                           s1[pl.ds(1, H2, stride=2), :, :])        # (H2, W, C1)
    p1 = jnp.maximum(s1b[:, pl.ds(0, W2, stride=2), :],
                     s1b[:, pl.ds(1, W2, stride=2), :])             # (H2, W2, C1)

    # ---- zero-pad pooled activation in VMEM (no HBM round trip) ----
    s2[...] = jnp.zeros((H2 + 2, W2 + 2, C1), jnp.float32)
    s2[1:H2 + 1, 1:W2 + 1, :] = p1

    # ---- conv2 (C1 -> C2): 9 shifted taps lane-concatenated -> ONE K=9*C1 matmul
    taps = [s2[dy:dy + H2, dx:dx + W2, :] for dy in range(3) for dx in range(3)]
    patch = jnp.concatenate(taps, axis=-1)              # (H2, W2, 9*C1)
    patch = patch.reshape(H2 * W2, 9 * C1)              # (H2*W2, 288)
    y2 = jnp.dot(patch, w2_ref[...], preferred_element_type=jnp.float32)
    y2 = jnp.maximum(y2 + b2_ref[...], 0.0)             # (H2*W2, C2)
    s3[...] = y2.reshape(H2, W2, C2)

    # ---- 2x2 stride-2 max-pool #2 ----
    s3b[...] = jnp.maximum(s3[pl.ds(0, H4, stride=2), :, :],
                           s3[pl.ds(1, H4, stride=2), :, :])        # (H4, W2, C2)
    p2 = jnp.maximum(s3b[:, pl.ds(0, W4, stride=2), :],
                     s3b[:, pl.ds(1, W4, stride=2), :])             # (H4, W4, C2)

    # NHWC flatten order; fc1_w rows are pre-permuted to match it.
    o_ref[...] = p2.reshape(H4 * W4, C2)


def conv_tower(patches, w1r, b1, w2r, b2, H, W):
    """patches: (N, H*W, 9) im2col of the zero-padded 1-channel input.
       Returns (N, (H//4)*(W//4), C2)."""
    N = patches.shape[0]
    HW = H * W
    C1 = w1r.shape[1]
    C2 = w2r.shape[1]
    H2, W2 = H // 2, W // 2
    H4, W4 = H // 4, W // 4
    kernel = functools.partial(_conv_tower_kernel, H=H, W=W)
    return pl.pallas_call(
        kernel,
        out_shape=jax.ShapeDtypeStruct((N, H4 * W4, C2), jnp.float32),
        grid=(N,),
        in_specs=[
            pl.BlockSpec((None, HW, 9), lambda n: (n, 0, 0)),
            pl.BlockSpec((9, C1), lambda n: (0, 0)),
            pl.BlockSpec((1, C1), lambda n: (0, 0)),
            pl.BlockSpec((9 * C1, C2), lambda n: (0, 0)),
            pl.BlockSpec((1, C2), lambda n: (0, 0)),
        ],
        out_specs=pl.BlockSpec((None, H4 * W4, C2), lambda n: (n, 0, 0)),
        scratch_shapes=[
            pltpu.VMEM((H, W, C1), jnp.float32),            # conv1 output
            pltpu.VMEM((H2, W, C1), jnp.float32),           # row-pooled conv1
            pltpu.VMEM((H2 + 2, W2 + 2, C1), jnp.float32),  # padded pool1
            pltpu.VMEM((H2, W2, C2), jnp.float32),          # conv2 output
            pltpu.VMEM((H4, W2, C2), jnp.float32),          # row-pooled conv2
        ],
        compiler_params=pltpu.CompilerParams(
            dimension_semantics=("parallel",)),
    )(patches, w1r, b1, w2r, b2)


# ----------------------------------------------------------------------------
# Fused MLP head: Linear -> ReLU -> Linear -> sigmoid (all batch rows at once)
# ----------------------------------------------------------------------------
def _mlp_head_kernel(x_ref, w1_ref, b1_ref, w2_ref, b2_ref, o_ref):
    h = jnp.dot(x_ref[...], w1_ref[...], preferred_element_type=jnp.float32)
    h = jnp.maximum(h + b1_ref[...], 0.0)
    z = jnp.dot(h, w2_ref[...], preferred_element_type=jnp.float32) + b2_ref[...]
    o_ref[...] = 1.0 / (1.0 + jnp.exp(-z))


def mlp_head(x, w1, b1, w2, b2):
    N, D = x.shape
    Dh = w1.shape[1]
    return pl.pallas_call(
        _mlp_head_kernel,
        out_shape=jax.ShapeDtypeStruct((N, 1), jnp.float32),
        grid=(1,),
        in_specs=[
            pl.BlockSpec((N, D), lambda i: (0, 0)),
            pl.BlockSpec((D, Dh), lambda i: (0, 0)),
            pl.BlockSpec((1, Dh), lambda i: (0, 0)),
            pl.BlockSpec((Dh, 1), lambda i: (0, 0)),
            pl.BlockSpec((1, 1), lambda i: (0, 0)),
        ],
        out_specs=pl.BlockSpec((N, 1), lambda i: (0, 0)),
    )(x, w1, b1, w2, b2)


# ----------------------------------------------------------------------------
# Full forward pass + parameters
# ----------------------------------------------------------------------------
@jax.jit
def simple_cnn_forward(x_nchw, kp):
    """x_nchw: (N, 1, H, W).  kp: kernel-ready params (see prepare_params)."""
    N, _, H, W = x_nchw.shape
    x = x_nchw.reshape(N, H, W)
    xpad = jnp.pad(x, ((0, 0), (1, 1), (1, 1)))
    # Host-side im2col of the single-channel input (lane-dense conv1 matmul).
    patches = jnp.stack(
        [xpad[:, dy:dy + H, dx:dx + W] for dy in range(3) for dx in range(3)],
        axis=-1)                                           # (N, H, W, 9)
    patches = patches.reshape(N, H * W, 9)

    feats = conv_tower(patches, kp["w1r"], kp["b1"], kp["w2r"], kp["b2"], H, W)
    flat = feats.reshape(N, -1)                            # free contiguous reshape
    return mlp_head(flat, kp["fc1_w"], kp["fc1_b"], kp["fc2_w"], kp["fc2_b"])


def init_params(key, input_size=32):
    if input_size not in (32, 64):
        raise ValueError("Unsupported input size. Only 32x32 and 64x64 are supported.")
    fc_in = 64 * (input_size // 4) * (input_size // 4)
    ks = jax.random.split(key, 8)

    def nrm(k, shape, fan_in):
        return jax.random.normal(k, shape, jnp.float32) / jnp.sqrt(fan_in)

    return {
        "conv1_w": nrm(ks[0], (3, 3, 1, 32), 9.0),         # HWIO
        "conv1_b": 0.1 * nrm(ks[1], (1, 32), 1.0),
        "conv2_w": nrm(ks[2], (3, 3, 32, 64), 9.0 * 32),   # HWIO
        "conv2_b": 0.1 * nrm(ks[3], (1, 64), 1.0),
        "fc1_w": nrm(ks[4], (fc_in, 128), float(fc_in)),   # rows in NCHW flatten order
        "fc1_b": 0.1 * nrm(ks[5], (1, 128), 1.0),
        "fc2_w": nrm(ks[6], (128, 1), 128.0),
        "fc2_b": 0.1 * nrm(ks[7], (1, 1), 1.0),
    }


def prepare_params(params, input_size=32):
    """One-time (host) repack of the PyTorch-layout params for the kernels:
       conv weights -> im2col row layout, fc1_w rows permuted NCHW -> NHWC."""
    H4 = W4 = input_size // 4
    C1 = params["conv1_w"].shape[-1]
    C2 = params["conv2_w"].shape[-1]
    nout = params["fc1_w"].shape[1]
    fc1_w_k = (params["fc1_w"]
               .reshape(C2, H4, W4, nout)      # rows were (c, h, w)
               .transpose(1, 2, 0, 3)          # -> (h, w, c)
               .reshape(H4 * W4 * C2, nout))
    return {
        "w1r": params["conv1_w"].reshape(9, C1),
        "b1": params["conv1_b"],
        "w2r": params["conv2_w"].reshape(9 * params["conv2_w"].shape[2], C2),
        "b2": params["conv2_b"],
        "fc1_w": fc1_w_k,
        "fc1_b": params["fc1_b"],
        "fc2_w": params["fc2_w"],
        "fc2_b": params["fc2_b"],
    }


def reference_forward(x_nchw, params):
    """Pure-JAX/XLA reference of the same forward pass (PyTorch param layouts)."""
    hp = jax.lax.Precision.HIGHEST

    def conv_block(x, w, b):
        y = jax.lax.conv_general_dilated(
            x, w, window_strides=(1, 1), padding="SAME",
            dimension_numbers=("NCHW", "HWIO", "NCHW"), precision=hp)
        y = jnp.maximum(y + b.reshape(1, -1, 1, 1), 0.0)
        return jax.lax.reduce_window(y, -jnp.inf, jax.lax.max,
                                     (1, 1, 2, 2), (1, 1, 2, 2), "VALID")

    h = conv_block(x_nchw, params["conv1_w"], params["conv1_b"])
    h = conv_block(h, params["conv2_w"], params["conv2_b"])
    f = h.reshape(h.shape[0], -1)                           # NCHW flatten
    z = jnp.maximum(jnp.dot(f, params["fc1_w"], precision=hp) + params["fc1_b"], 0.0)
    z = jnp.dot(z, params["fc2_w"], precision=hp) + params["fc2_b"]
    return jax.nn.sigmoid(z)


if __name__ == "__main__":
    key = jax.random.PRNGKey(0)
    pkey, xkey = jax.random.split(key)
    params = init_params(pkey, input_size=32)
    kparams = prepare_params(params, input_size=32)

    # PyTorch-style NCHW input: batch=2, channels=1, 32x32 spatial.
    x = jax.random.normal(xkey, (2, 1, 32, 32), jnp.float32)

    out = jax.block_until_ready(simple_cnn_forward(x, kparams))
    assert out.shape == (2, 1), out.shape

    ref = reference_forward(x, params)
    max_err = float(jnp.max(jnp.abs(out - ref)))
    # Loose tolerance: MXU default-precision f32 matmuls vs. HIGHEST-precision ref.
    assert max_err < 2e-2, f"mismatch vs reference: max abs err {max_err}"

    print("KERNEL_OK")
</pallas_src>

<mosaic_0001>
module attributes {stable_mosaic.version = 11 : i64} {
  func.func @_conv_tower_kernel(%arg0: i32, %arg1: memref<1x1024x9xf32, #tpu.memory_space<vmem>>, %arg2: memref<9x32xf32, #tpu.memory_space<vmem>>, %arg3: memref<1x32xf32, #tpu.memory_space<vmem>>, %arg4: memref<288x64xf32, #tpu.memory_space<vmem>>, %arg5: memref<1x64xf32, #tpu.memory_space<vmem>>, %arg6: memref<1x64x64xf32, #tpu.memory_space<vmem>>, %arg7: memref<32x32x32xf32, #tpu.memory_space<vmem>>, %arg8: memref<16x32x32xf32, #tpu.memory_space<vmem>>, %arg9: memref<18x18x32xf32, #tpu.memory_space<vmem>>, %arg10: memref<16x16x64xf32, #tpu.memory_space<vmem>>, %arg11: memref<8x16x64xf32, #tpu.memory_space<vmem>>) attributes {dimension_semantics = [#tpu.dimension_semantics<parallel>], iteration_bounds = array<i64: 2>, scalar_prefetch = 0 : i64, scratch_operands = 5 : i64, tpu.core_type = #tpu.core_type<tc>, window_params = [{transform_indices = @transform_0, window_bounds = array<i64: 1, 1024, 9>}, {pipeline_mode = #tpu.pipeline_mode<synchronous>, transform_indices = @transform_1, window_bounds = array<i64: 9, 32>}, {pipeline_mode = #tpu.pipeline_mode<synchronous>, transform_indices = @transform_2, window_bounds = array<i64: 1, 32>}, {pipeline_mode = #tpu.pipeline_mode<synchronous>, transform_indices = @transform_3, window_bounds = array<i64: 288, 64>}, {pipeline_mode = #tpu.pipeline_mode<synchronous>, transform_indices = @transform_4, window_bounds = array<i64: 1, 64>}, {transform_indices = @transform_5, window_bounds = array<i64: 1, 64, 64>}]} {
    %c0 = arith.constant 0 : index
    %c0_0 = arith.constant 0 : index
    %c0_1 = arith.constant 0 : index
    %0 = vector.load %arg1[%c0, %c0_0, %c0_1] : memref<1x1024x9xf32, #tpu.memory_space<vmem>>, vector<1x1024x9xf32>
    %1 = vector.shape_cast %0 : vector<1x1024x9xf32> to vector<1024x9xf32>
    %c0_2 = arith.constant 0 : index
    %c0_3 = arith.constant 0 : index
    %2 = vector.load %arg2[%c0_2, %c0_3] : memref<9x32xf32, #tpu.memory_space<vmem>>, vector<9x32xf32>
    %cst = arith.constant dense<0.000000e+00> : vector<1024x32xf32>
    %3 = tpu.matmul %1, %2, %cst {dimension_numbers = #tpu.dot_dimension_numbers<[1], [0], [0], [1], [0, 0, 1, 1], [], []>} : vector<1024x9xf32>, vector<9x32xf32>, vector<1024x32xf32> -> vector<1024x32xf32>
    %c0_4 = arith.constant 0 : index
    %c0_5 = arith.constant 0 : index
    %4 = vector.load %arg3[%c0_4, %c0_5] : memref<1x32xf32, #tpu.memory_space<vmem>>, vector<1x32xf32>
    %5 = vector.broadcast %4 : vector<1x32xf32> to vector<1024x32xf32>
    %6 = arith.addf %3, %5 : vector<1024x32xf32>
    %cst_6 = arith.constant 0.000000e+00 : f32
    %7 = vector.broadcast %cst_6 : f32 to vector<1024x32xf32>
    %8 = arith.maximumf %6, %7 : vector<1024x32xf32>
    %9 = vector.shape_cast %8 : vector<1024x32xf32> to vector<32x32x32xf32>
    %c0_7 = arith.constant 0 : index
    %c0_8 = arith.constant 0 : index
    %c0_9 = arith.constant 0 : index
    %10 = vector.load %arg7[%c0_7, %c0_8, %c0_9] : memref<32x32x32xf32, #tpu.memory_space<vmem>>, vector<32x32x32xf32>
    tpu.vector_store %arg7[%c0_7, %c0_8, %c0_9], %9 {strides = array<i32>} : memref<32x32x32xf32, #tpu.memory_space<vmem>>, vector<32x32x32xf32>,
    %c0_10 = arith.constant 0 : index
    %c0_11 = arith.constant 0 : index
    %c0_12 = arith.constant 0 : index
    %11 = tpu.strided_load %arg7[%c0_10, %c0_11, %c0_12] {strides = array<i32: 2, 1, 1>} : memref<32x32x32xf32, #tpu.memory_space<vmem>>, vector<16x32x32xf32>
    %c1 = arith.constant 1 : index
    %c0_13 = arith.constant 0 : index
    %c0_14 = arith.constant 0 : index
    %12 = tpu.strided_load %arg7[%c1, %c0_13, %c0_14] {strides = array<i32: 2, 1, 1>} : memref<32x32x32xf32, #tpu.memory_space<vmem>>, vector<16x32x32xf32>
    %13 = arith.maximumf %11, %12 : vector<16x32x32xf32>
    %c0_15 = arith.constant 0 : index
    %c0_16 = arith.constant 0 : index
    %c0_17 = arith.constant 0 : index
    %14 = vector.load %arg8[%c0_15, %c0_16, %c0_17] : memref<16x32x32xf32, #tpu.memory_space<vmem>>, vector<16x32x32xf32>
    tpu.vector_store %arg8[%c0_15, %c0_16, %c0_17], %13 {strides = array<i32>} : memref<16x32x32xf32, #tpu.memory_space<vmem>>, vector<16x32x32xf32>,
    %c0_18 = arith.constant 0 : index
    %c0_19 = arith.constant 0 : index
    %c0_20 = arith.constant 0 : index
    %15 = tpu.strided_load %arg8[%c0_18, %c0_19, %c0_20] {strides = array<i32: 1, 2, 1>} : memref<16x32x32xf32, #tpu.memory_space<vmem>>, vector<16x16x32xf32>
    %c0_21 = arith.constant 0 : index
    %c1_22 = arith.constant 1 : index
    %c0_23 = arith.constant 0 : index
    %16 = tpu.strided_load %arg8[%c0_21, %c1_22, %c0_23] {strides = array<i32: 1, 2, 1>} : memref<16x32x32xf32, #tpu.memory_space<vmem>>, vector<16x16x32xf32>
    %17 = arith.maximumf %15, %16 : vector<16x16x32xf32>
    %cst_24 = arith.constant 0.000000e+00 : f32
    %18 = vector.broadcast %cst_24 : f32 to vector<18x18x32xf32>
    %c0_25 = arith.constant 0 : index
    %c0_26 = arith.constant 0 : index
    %c0_27 = arith.constant 0 : index
    %19 = vector.load %arg9[%c0_25, %c0_26, %c0_27] : memref<18x18x32xf32, #tpu.memory_space<vmem>>, vector<18x18x32xf32>
    tpu.vector_store %arg9[%c0_25, %c0_26, %c0_27], %18 {strides = array<i32>} : memref<18x18x32xf32, #tpu.memory_space<vmem>>, vector<18x18x32xf32>,
    %c1_28 = arith.constant 1 : index
    %c1_29 = arith.constant 1 : index
    %c0_30 = arith.constant 0 : index
    %20 = vector.load %arg9[%c1_28, %c1_29, %c0_30] : memref<18x18x32xf32, #tpu.memory_space<vmem>>, vector<16x16x32xf32>
    tpu.vector_store %arg9[%c1_28, %c1_29, %c0_30], %17 {strides = array<i32>} : memref<18x18x32xf32, #tpu.memory_space<vmem>>, vector<16x16x32xf32>,
    %c0_31 = arith.constant 0 : index
    %c0_32 = arith.constant 0 : index
    %c0_33 = arith.constant 0 : index
    %21 = vector.load %arg9[%c0_31, %c0_32, %c0_33] : memref<18x18x32xf32, #tpu.memory_space<vmem>>, vector<16x16x32xf32>
    %c0_34 = arith.constant 0 : index
    %c1_35 = arith.constant 1 : index
    %c0_36 = arith.constant 0 : index
    %22 = vector.load %arg9[%c0_34, %c1_35, %c0_36] : memref<18x18x32xf32, #tpu.memory_space<vmem>>, vector<16x16x32xf32>
    %c0_37 = arith.constant 0 : index
    %c2 = arith.constant 2 : index
    %c0_38 = arith.constant 0 : index
    %23 = vector.load %arg9[%c0_37, %c2, %c0_38] : memref<18x18x32xf32, #tpu.memory_space<vmem>>, vector<16x16x32xf32>
    %c1_39 = arith.constant 1 : index
    %c0_40 = arith.constant 0 : index
    %c0_41 = arith.constant 0 : index
    %24 = vector.load %arg9[%c1_39, %c0_40, %c0_41] : memref<18x18x32xf32, #tpu.memory_space<vmem>>, vector<16x16x32xf32>
    %c1_42 = arith.constant 1 : index
    %c1_43 = arith.constant 1 : index
    %c0_44 = arith.constant 0 : index
    %25 = vector.load %arg9[%c1_42, %c1_43, %c0_44] : memref<18x18x32xf32, #tpu.memory_space<vmem>>, vector<16x16x32xf32>
    %c1_45 = arith.constant 1 : index
    %c2_46 = arith.constant 2 : index
    %c0_47 = arith.constant 0 : index
    %26 = vector.load %arg9[%c1_45, %c2_46, %c0_47] : memref<18x18x32xf32, #tpu.memory_space<vmem>>, vector<16x16x32xf32>
    %c2_48 = arith.constant 2 : index
    %c0_49 = arith.constant 0 : index
    %c0_50 = arith.constant 0 : index
    %27 = vector.load %arg9[%c2_48, %c0_49, %c0_50] : memref<18x18x32xf32, #tpu.memory_space<vmem>>, vector<16x16x32xf32>
    %c2_51 = arith.constant 2 : index
    %c1_52 = arith.constant 1 : index
    %c0_53 = arith.constant 0 : index
    %28 = vector.load %arg9[%c2_51, %c1_52, %c0_53] : memref<18x18x32xf32, #tpu.memory_space<vmem>>, vector<16x16x32xf32>
    %c2_54 = arith.constant 2 : index
    %c2_55 = arith.constant 2 : index
    %c0_56 = arith.constant 0 : index
    %29 = vector.load %arg9[%c2_54, %c2_55, %c0_56] : memref<18x18x32xf32, #tpu.memory_space<vmem>>, vector<16x16x32xf32>
    %30 = tpu.concatenate %21, %22, %23, %24, %25, %26, %27, %28, %29 in 2 : vector<16x16x32xf32>, vector<16x16x32xf32>, vector<16x16x32xf32>, vector<16x16x32xf32>, vector<16x16x32xf32>, vector<16x16x32xf32>, vector<16x16x32xf32>, vector<16x16x32xf32>, vector<16x16x32xf32> -> vector<16x16x288xf32>
    %31 = vector.shape_cast %30 : vector<16x16x288xf32> to vector<256x288xf32>
    %c0_57 = arith.constant 0 : index
    %c0_58 = arith.constant 0 : index
    %32 = vector.load %arg4[%c0_57, %c0_58] : memref<288x64xf32, #tpu.memory_space<vmem>>, vector<288x64xf32>
    %cst_59 = arith.constant dense<0.000000e+00> : vector<256x64xf32>
    %33 = tpu.matmul %31, %32, %cst_59 {dimension_numbers = #tpu.dot_dimension_numbers<[1], [0], [0], [1], [0, 0, 1, 1], [], []>} : vector<256x288xf32>, vector<288x64xf32>, vector<256x64xf32> -> vector<256x64xf32>
    %c0_60 = arith.constant 0 : index
    %c0_61 = arith.constant 0 : index
    %34 = vector.load %arg5[%c0_60, %c0_61] : memref<1x64xf32, #tpu.memory_space<vmem>>, vector<1x64xf32>
    %35 = vector.broadcast %34 : vector<1x64xf32> to vector<256x64xf32>
    %36 = arith.addf %33, %35 : vector<256x64xf32>
    %cst_62 = arith.constant 0.000000e+00 : f32
    %37 = vector.broadcast %cst_62 : f32 to vector<256x64xf32>
    %38 = arith.maximumf %36, %37 : vector<256x64xf32>
    %39 = vector.shape_cast %38 : vector<256x64xf32> to vector<16x16x64xf32>
    %c0_63 = arith.constant 0 : index
    %c0_64 = arith.constant 0 : index
    %c0_65 = arith.constant 0 : index
    %40 = vector.load %arg10[%c0_63, %c0_64, %c0_65] : memref<16x16x64xf32, #tpu.memory_space<vmem>>, vector<16x16x64xf32>
    tpu.vector_store %arg10[%c0_63, %c0_64, %c0_65], %39 {strides = array<i32>} : memref<16x16x64xf32, #tpu.memory_space<vmem>>, vector<16x16x64xf32>,
    %c0_66 = arith.constant 0 : index
    %c0_67 = arith.constant 0 : index
    %c0_68 = arith.constant 0 : index
    %41 = tpu.strided_load %arg10[%c0_66, %c0_67, %c0_68] {strides = array<i32: 2, 1, 1>} : memref<16x16x64xf32, #tpu.memory_space<vmem>>, vector<8x16x64xf32>
    %c1_69 = arith.constant 1 : index
    %c0_70 = arith.constant 0 : index
    %c0_71 = arith.constant 0 : index
    %42 = tpu.strided_load %arg10[%c1_69, %c0_70, %c0_71] {strides = array<i32: 2, 1, 1>} : memref<16x16x64xf32, #tpu.memory_space<vmem>>, vector<8x16x64xf32>
    %43 = arith.maximumf %41, %42 : vector<8x16x64xf32>
    %c0_72 = arith.constant 0 : index
    %c0_73 = arith.constant 0 : index
    %c0_74 = arith.constant 0 : index
    %44 = vector.load %arg11[%c0_72, %c0_73, %c0_74] : memref<8x16x64xf32, #tpu.memory_space<vmem>>, vector<8x16x64xf32>
    tpu.vector_store %arg11[%c0_72, %c0_73, %c0_74], %43 {strides = array<i32>} : memref<8x16x64xf32, #tpu.memory_space<vmem>>, vector<8x16x64xf32>,
    %c0_75 = arith.constant 0 : index
    %c0_76 = arith.constant 0 : index
    %c0_77 = arith.constant 0 : index
    %45 = tpu.strided_load %arg11[%c0_75, %c0_76, %c0_77] {strides = array<i32: 1, 2, 1>} : memref<8x16x64xf32, #tpu.memory_space<vmem>>, vector<8x8x64xf32>
    %c0_78 = arith.constant 0 : index
    %c1_79 = arith.constant 1 : index
    %c0_80 = arith.constant 0 : index
    %46 = tpu.strided_load %arg11[%c0_78, %c1_79, %c0_80] {strides = array<i32: 1, 2, 1>} : memref<8x16x64xf32, #tpu.memory_space<vmem>>, vector<8x8x64xf32>
    %47 = arith.maximumf %45, %46 : vector<8x8x64xf32>
    %48 = vector.shape_cast %47 : vector<8x8x64xf32> to vector<64x64xf32>
    %c0_81 = arith.constant 0 : index
    %c0_82 = arith.constant 0 : index
    %c0_83 = arith.constant 0 : index
    %49 = vector.load %arg6[%c0_81, %c0_82, %c0_83] : memref<1x64x64xf32, #tpu.memory_space<vmem>>, vector<1x64x64xf32>
    %50 = vector.shape_cast %49 : vector<1x64x64xf32> to vector<64x64xf32>
    %51 = vector.shape_cast %48 : vector<64x64xf32> to vector<1x64x64xf32>
    tpu.vector_store %arg6[%c0_81, %c0_82, %c0_83], %51 {strides = array<i32>} : memref<1x64x64xf32, #tpu.memory_space<vmem>>, vector<1x64x64xf32>,
    return
  }
  func.func @transform_0(%arg0: i32) -> (i32, i32, i32) {
    %c0_i32 = arith.constant 0 : i32
    %c0_i32_0 = arith.constant 0 : i32
    %c0_i32_1 = arith.constant 0 : i32
    return %arg0, %c0_i32, %c0_i32_0 : i32, i32, i32
  }
  func.func @transform_1(%arg0: i32) -> (i32, i32) {
    %c0_i32 = arith.constant 0 : i32
    %c0_i32_0 = arith.constant 0 : i32
    %c0_i32_1 = arith.constant 0 : i32
    return %c0_i32, %c0_i32_0 : i32, i32
  }
  func.func @transform_2(%arg0: i32) -> (i32, i32) {
    %c0_i32 = arith.constant 0 : i32
    %c0_i32_0 = arith.constant 0 : i32
    %c0_i32_1 = arith.constant 0 : i32
    return %c0_i32, %c0_i32_0 : i32, i32
  }
  func.func @transform_3(%arg0: i32) -> (i32, i32) {
    %c0_i32 = arith.constant 0 : i32
    %c0_i32_0 = arith.constant 0 : i32
    %c0_i32_1 = arith.constant 0 : i32
    return %c0_i32, %c0_i32_0 : i32, i32
  }
  func.func @transform_4(%arg0: i32) -> (i32, i32) {
    %c0_i32 = arith.constant 0 : i32
    %c0_i32_0 = arith.constant 0 : i32
    %c0_i32_1 = arith.constant 0 : i32
    return %c0_i32, %c0_i32_0 : i32, i32
  }
  func.func @transform_5(%arg0: i32) -> (i32, i32, i32) {
    %c0_i32 = arith.constant 0 : i32
    %c0_i32_0 = arith.constant 0 : i32
    %c0_i32_1 = arith.constant 0 : i32
    return %arg0, %c0_i32, %c0_i32_0 : i32, i32, i32
  }
}

module attributes {stable_mosaic.version = 11 : i64} {
  func.func @_mlp_head_kernel(%arg0: i32, %arg1: memref<2x4096xf32, #tpu.memory_space<vmem>>, %arg2: memref<4096x128xf32, #tpu.memory_space<vmem>>, %arg3: memref<1x128xf32, #tpu.memory_space<vmem>>, %arg4: memref<128x1xf32, #tpu.memory_space<vmem>>, %arg5: memref<1x1xf32, #tpu.memory_space<vmem>>, %arg6: memref<2x1xf32, #tpu.memory_space<vmem>>) attributes {dimension_semantics = [#tpu.dimension_semantics<arbitrary>], iteration_bounds = array<i64: 1>, scalar_prefetch = 0 : i64, scratch_operands = 0 : i64, tpu.core_type = #tpu.core_type<tc>, window_params = [{pipeline_mode = #tpu.pipeline_mode<synchronous>, transform_indices = @transform_0, window_bounds = array<i64: 2, 4096>}, {pipeline_mode = #tpu.pipeline_mode<synchronous>, transform_indices = @transform_1, window_bounds = array<i64: 4096, 128>}, {pipeline_mode = #tpu.pipeline_mode<synchronous>, transform_indices = @transform_2, window_bounds = array<i64: 1, 128>}, {pipeline_mode = #tpu.pipeline_mode<synchronous>, transform_indices = @transform_3, window_bounds = array<i64: 128, 1>}, {pipeline_mode = #tpu.pipeline_mode<synchronous>, transform_indices = @transform_4, window_bounds = array<i64: 1, 1>}, {pipeline_mode = #tpu.pipeline_mode<synchronous>, transform_indices = @transform_5, window_bounds = array<i64: 2, 1>}]} {
    %c0 = arith.constant 0 : index
    %c0_0 = arith.constant 0 : index
    %0 = vector.load %arg1[%c0, %c0_0] : memref<2x4096xf32, #tpu.memory_space<vmem>>, vector<2x4096xf32>
    %c0_1 = arith.constant 0 : index
    %c0_2 = arith.constant 0 : index
    %1 = vector.load %arg2[%c0_1, %c0_2] : memref<4096x128xf32, #tpu.memory_space<vmem>>, vector<4096x128xf32>
    %cst = arith.constant dense<0.000000e+00> : vector<2x128xf32>
    %2 = tpu.matmul %0, %1, %cst {dimension_numbers = #tpu.dot_dimension_numbers<[1], [0], [0], [1], [0, 0, 1, 1], [], []>} : vector<2x4096xf32>, vector<4096x128xf32>, vector<2x128xf32> -> vector<2x128xf32>
    %c0_3 = arith.constant 0 : index
    %c0_4 = arith.constant 0 : index
    %3 = vector.load %arg3[%c0_3, %c0_4] : memref<1x128xf32, #tpu.memory_space<vmem>>, vector<1x128xf32>
    %4 = vector.broadcast %3 : vector<1x128xf32> to vector<2x128xf32>
    %5 = arith.addf %2, %4 : vector<2x128xf32>
    %cst_5 = arith.constant 0.000000e+00 : f32
    %6 = vector.broadcast %cst_5 : f32 to vector<2x128xf32>
    %7 = arith.maximumf %5, %6 : vector<2x128xf32>
    %c0_6 = arith.constant 0 : index
    %c0_7 = arith.constant 0 : index
    %8 = vector.load %arg4[%c0_6, %c0_7] : memref<128x1xf32, #tpu.memory_space<vmem>>, vector<128x1xf32>
    %cst_8 = arith.constant dense<0.000000e+00> : vector<2x1xf32>
    %9 = tpu.matmul %7, %8, %cst_8 {dimension_numbers = #tpu.dot_dimension_numbers<[1], [0], [0], [1], [0, 0, 1, 1], [], []>} : vector<2x128xf32>, vector<128x1xf32>, vector<2x1xf32> -> vector<2x1xf32>
    %c0_9 = arith.constant 0 : index
    %c0_10 = arith.constant 0 : index
    %10 = vector.load %arg5[%c0_9, %c0_10] : memref<1x1xf32, #tpu.memory_space<vmem>>, vector<1x1xf32>
    %11 = vector.broadcast %10 : vector<1x1xf32> to vector<2x1xf32>
    %12 = arith.addf %9, %11 : vector<2x1xf32>
    %cst_11 = arith.constant 0.000000e+00 : f32
    %13 = vector.broadcast %cst_11 : f32 to vector<2x1xf32>
    %14 = arith.subf %13, %12 : vector<2x1xf32>
    %15 = math.exp %14 : vector<2x1xf32>
    %cst_12 = arith.constant 1.000000e+00 : f32
    %16 = vector.broadcast %cst_12 : f32 to vector<2x1xf32>
    %17 = arith.addf %16, %15 : vector<2x1xf32>
    %cst_13 = arith.constant 1.000000e+00 : f32
    %18 = vector.broadcast %cst_13 : f32 to vector<2x1xf32>
    %19 = arith.divf %18, %17 : vector<2x1xf32>
    %c0_14 = arith.constant 0 : index
    %c0_15 = arith.constant 0 : index
    %20 = vector.load %arg6[%c0_14, %c0_15] : memref<2x1xf32, #tpu.memory_space<vmem>>, vector<2x1xf32>
    tpu.vector_store %arg6[%c0_14, %c0_15], %19 {strides = array<i32>} : memref<2x1xf32, #tpu.memory_space<vmem>>, vector<2x1xf32>,
    return
  }
  func.func @transform_0(%arg0: i32) -> (i32, i32) {
    %c0_i32 = arith.constant 0 : i32
    %c0_i32_0 = arith.constant 0 : i32
    %c0_i32_1 = arith.constant 0 : i32
    return %c0_i32, %c0_i32_0 : i32, i32
  }
  func.func @transform_1(%arg0: i32) -> (i32, i32) {
    %c0_i32 = arith.constant 0 : i32
    %c0_i32_0 = arith.constant 0 : i32
    %c0_i32_1 = arith.constant 0 : i32
    return %c0_i32, %c0_i32_0 : i32, i32
  }
  func.func @transform_2(%arg0: i32) -> (i32, i32) {
    %c0_i32 = arith.constant 0 : i32
    %c0_i32_0 = arith.constant 0 : i32
    %c0_i32_1 = arith.constant 0 : i32
    return %c0_i32, %c0_i32_0 : i32, i32
  }
  func.func @transform_3(%arg0: i32) -> (i32, i32) {
    %c0_i32 = arith.constant 0 : i32
    %c0_i32_0 = arith.constant 0 : i32
    %c0_i32_1 = arith.constant 0 : i32
    return %c0_i32, %c0_i32_0 : i32, i32
  }
  func.func @transform_4(%arg0: i32) -> (i32, i32) {
    %c0_i32 = arith.constant 0 : i32
    %c0_i32_0 = arith.constant 0 : i32
    %c0_i32_1 = arith.constant 0 : i32
    return %c0_i32, %c0_i32_0 : i32, i32
  }
  func.func @transform_5(%arg0: i32) -> (i32, i32) {
    %c0_i32 = arith.constant 0 : i32
    %c0_i32_0 = arith.constant 0 : i32
    %c0_i32_1 = arith.constant 0 : i32
    return %c0_i32, %c0_i32_0 : i32, i32
  }
}

</mosaic_0001>

<llo_original>
// kernel: simple_cnn_forward.3
$region0: #{simple_cnn_forward.3}
  #allocation0 [shape = 'u32[]', space=smem, size = 0x4, offset = 0x4, fixed_abs, tag = 'smem constant byte address 0x4 - core index']
  #allocation1 [shape = 'u32[144,128]{1,0:T(1,128)}', space=vmem, size = 0x12000, scoped, tag = 'internal scratch']
  #allocation2 [shape = 'f32[1,1]{1,0:T(1,128)S(1)}', space=vmem, size = 0x200, scoped, tag = 'scoped memory for simple_cnn_forward.3']
  %s0 = inlined_call_operand.vmem [shape: f32[2,4096], index: 0, kind: input, shape index: {}]
  %s1 = inlined_call_operand.vmem [shape: f32[4096,128], index: 1, kind: input, shape index: {}]
  %s2 = inlined_call_operand.vmem [shape: f32[1,128], index: 2, kind: input, shape index: {}]
  %s3 = inlined_call_operand.vmem [shape: f32[128,1], index: 3, kind: input, shape index: {}]
  %s4 = inlined_call_operand.<no memory space> [shape: f32[1,1], index: 4, kind: input, shape index: {}]
  %s5 = inlined_call_operand.vmem [shape: f32[2,1], index: 5, kind: output, shape index: {}]
  %s6 = sld [smem:[#allocation0]]
  $region30: #{simple_cnn_forward.3} parent=0
    _
  %s8 = ssub.s32 1, %s6
  %s9 = scalar_select 0, %s8, %s6
  %v10 = vstv %s4
  %11 = vst [vmem:[#allocation2] sm:$0x1] %v10
  // Predicated region
  $region2: #{simple_cnn_forward.3} parent=0 // pred_check
    _
  $region3: #{simple_cnn_forward.3} parent=0 // pred_check_branch
    %13 = sbr.rel (0) target = $region5
  $region4: #{simple_cnn_forward.3} parent=0 // pred_region
    _
  $region5: #{simple_cnn_forward.3} parent=0 // pred_fallthru
    _
  // Predicated region
  $region6: #{simple_cnn_forward.3} parent=0 // pred_check
    _
  $region7: #{simple_cnn_forward.3} parent=0 // pred_check_branch
    %15 = sbr.rel (0) target = $region9
  $region8: #{simple_cnn_forward.3} parent=0 // pred_region
    _
  $region9: #{simple_cnn_forward.3} parent=0 // pred_fallthru
    _
  // Predicated region
  $region10: #{simple_cnn_forward.3} parent=0 // pred_check
    _
  $region11: #{simple_cnn_forward.3} parent=0 // pred_check_branch
    %17 = sbr.rel (0) target = $region13
  $region12: #{simple_cnn_forward.3} parent=0 // pred_region
    _
  $region13: #{simple_cnn_forward.3} parent=0 // pred_fallthru
    _
  // Predicated region
  $region14: #{simple_cnn_forward.3} parent=0 // pred_check
    _
  $region15: #{simple_cnn_forward.3} parent=0 // pred_check_branch
    %19 = sbr.rel (0) target = $region17
  $region16: #{simple_cnn_forward.3} parent=0 // pred_region
    _
  $region17: #{simple_cnn_forward.3} parent=0 // pred_fallthru
    _
  // Predicated region
  $region18: #{simple_cnn_forward.3} parent=0 // pred_check
    _
  $region19: #{simple_cnn_forward.3} parent=0 // pred_check_branch
    %21 = sbr.rel (0) target = $region21
  $region20: #{simple_cnn_forward.3} parent=0 // pred_region
    _
  $region21: #{simple_cnn_forward.3} parent=0 // pred_fallthru
    _
  %v22 = vld [vmem:[%s0] sm:$0xff]
  %v23 = vld [vmem:[%s0 + $0x8] sm:$0xff]
  %v24 = vld [vmem:[%s0 + $0x10] sm:$0xff]
  %v25 = vld [vmem:[%s0 + $0x18] sm:$0xff]
  %v26 = vld [vmem:[%s0 + $0x20] sm:$0xff]
  %v27 = vld [vmem:[%s0 + $0x28] sm:$0xff]
  %v28 = vld [vmem:[%s0 + $0x30] sm:$0xff]
  %v29 = vld [vmem:[%s0 + $0x38] sm:$0xff]
  %v30 = vld [vmem:[%s1] sm:$0xff]
  %v31 = vld [vmem:[%s1 + $0x8] sm:$0xff]
  %v32 = vld [vmem:[%s1 + $0x10] sm:$0xff]
  %v33 = vld [vmem:[%s1 + $0x18] sm:$0xff]
  %v34 = vld [vmem:[%s1 + $0x20] sm:$0xff]
  %v35 = vld [vmem:[%s1 + $0x28] sm:$0xff]
  %v36 = vld [vmem:[%s1 + $0x30] sm:$0xff]
  %v37 = vld [vmem:[%s1 + $0x38] sm:$0xff]
  %v38 = vld [vmem:[%s1 + $0x40] sm:$0xff]
  %v39 = vld [vmem:[%s1 + $0x48] sm:$0xff]
  %v40 = vld [vmem:[%s1 + $0x50] sm:$0xff]
  %v41 = vld [vmem:[%s1 + $0x58] sm:$0xff]
  %v42 = vld [vmem:[%s1 + $0x60] sm:$0xff]
  %v43 = vld [vmem:[%s1 + $0x68] sm:$0xff]
  %v44 = vld [vmem:[%s1 + $0x70] sm:$0xff]
  %v45 = vld [vmem:[%s1 + $0x78] sm:$0xff]
  %v46 = vld [vmem:[%s1 + $0x80] sm:$0xff]
  %v47 = vld [vmem:[%s1 + $0x88] sm:$0xff]
  %v48 = vld [vmem:[%s1 + $0x90] sm:$0xff]
  %v49 = vld [vmem:[%s1 + $0x98] sm:$0xff]
  %v50 = vld [vmem:[%s1 + $0xa0] sm:$0xff]
  %v51 = vld [vmem:[%s1 + $0xa8] sm:$0xff]
  %v52 = vld [vmem:[%s1 + $0xb0] sm:$0xff]
  %v53 = vld [vmem:[%s1 + $0xb8] sm:$0xff]
  %v54 = vld [vmem:[%s1 + $0xc0] sm:$0xff]
  %v55 = vld [vmem:[%s1 + $0xc8] sm:$0xff]
  %v56 = vld [vmem:[%s1 + $0xd0] sm:$0xff]
  %v57 = vld [vmem:[%s1 + $0xd8] sm:$0xff]
  %v58 = vld [vmem:[%s1 + $0xe0] sm:$0xff]
  %v59 = vld [vmem:[%s1 + $0xe8] sm:$0xff]
  %v60 = vld [vmem:[%s1 + $0xf0] sm:$0xff]
  %v61 = vld [vmem:[%s1 + $0xf8] sm:$0xff]
  %v62 = vld [vmem:[%s1 + $0x100] sm:$0xff]
  %v63 = vld [vmem:[%s1 + $0x108] sm:$0xff]
  %v64 = vld [vmem:[%s1 + $0x110] sm:$0xff]
  %v65 = vld [vmem:[%s1 + $0x118] sm:$0xff]
  %v66 = vld [vmem:[%s1 + $0x120] sm:$0xff]
  %v67 = vld [vmem:[%s1 + $0x128] sm:$0xff]
  %v68 = vld [vmem:[%s1 + $0x130] sm:$0xff]
  %v69 = vld [vmem:[%s1 + $0x138] sm:$0xff]
  %v70 = vld [vmem:[%s1 + $0x140] sm:$0xff]
  %v71 = vld [vmem:[%s1 + $0x148] sm:$0xff]
  %v72 = vld [vmem:[%s1 + $0x150] sm:$0xff]
  %v73 = vld [vmem:[%s1 + $0x158] sm:$0xff]
  %v74 = vld [vmem:[%s1 + $0x160] sm:$0xff]
  %v75 = vld [vmem:[%s1 + $0x168] sm:$0xff]
  %v76 = vld [vmem:[%s1 + $0x170] sm:$0xff]
  %v77 = vld [vmem:[%s1 + $0x178] sm:$0xff]
  %v78 = vld [vmem:[%s1 + $0x180] sm:$0xff]
  %v79 = vld [vmem:[%s1 + $0x188] sm:$0xff]
  %v80 = vld [vmem:[%s1 + $0x190] sm:$0xff]
  %v81 = vld [vmem:[%s1 + $0x198] sm:$0xff]
  %v82 = vld [vmem:[%s1 + $0x1a0] sm:$0xff]
  %v83 = vld [vmem:[%s1 + $0x1a8] sm:$0xff]
  %v84 = vld [vmem:[%s1 + $0x1b0] sm:$0xff]
  %v85 = vld [vmem:[%s1 + $0x1b8] sm:$0xff]
  %v86 = vld [vmem:[%s1 + $0x1c0] sm:$0xff]
  %v87 = vld [vmem:[%s1 + $0x1c8] sm:$0xff]
  %v88 = vld [vmem:[%s1 + $0x1d0] sm:$0xff]
  %v89 = vld [vmem:[%s1 + $0x1d8] sm:$0xff]
  %v90 = vld [vmem:[%s1 + $0x1e0] sm:$0xff]
  %v91 = vld [vmem:[%s1 + $0x1e8] sm:$0xff]
  %v92 = vld [vmem:[%s1 + $0x1f0] sm:$0xff]
  %v93 = vld [vmem:[%s1 + $0x1f8] sm:$0xff]
  %v94 = vld [vmem:[%s1 + $0x200] sm:$0xff]
  %v95 = vld [vmem:[%s1 + $0x208] sm:$0xff]
  %v96 = vld [vmem:[%s1 + $0x210] sm:$0xff]
  %v97 = vld [vmem:[%s1 + $0x218] sm:$0xff]
  %v98 = vld [vmem:[%s1 + $0x220] sm:$0xff]
  %v99 = vld [vmem:[%s1 + $0x228] sm:$0xff]
  %v100 = vld [vmem:[%s1 + $0x230] sm:$0xff]
  %v101 = vld [vmem:[%s1 + $0x238] sm:$0xff]
  %v102 = vld [vmem:[%s1 + $0x240] sm:$0xff]
  %v103 = vld [vmem:[%s1 + $0x248] sm:$0xff]
  %v104 = vld [vmem:[%s1 + $0x250] sm:$0xff]
  %v105 = vld [vmem:[%s1 + $0x258] sm:$0xff]
  %v106 = vld [vmem:[%s1 + $0x260] sm:$0xff]
  %v107 = vld [vmem:[%s1 + $0x268] sm:$0xff]
  %v108 = vld [vmem:[%s1 + $0x270] sm:$0xff]
  %v109 = vld [vmem:[%s1 + $0x278] sm:$0xff]
  %v110 = vld [vmem:[%s1 + $0x280] sm:$0xff]
  %v111 = vld [vmem:[%s1 + $0x288] sm:$0xff]
  %v112 = vld [vmem:[%s1 + $0x290] sm:$0xff]
  %v113 = vld [vmem:[%s1 + $0x298] sm:$0xff]
  %v114 = vld [vmem:[%s1 + $0x2a0] sm:$0xff]
  %v115 = vld [vmem:[%s1 + $0x2a8] sm:$0xff]
  %v116 = vld [vmem:[%s1 + $0x2b0] sm:$0xff]
  %v117 = vld [vmem:[%s1 + $0x2b8] sm:$0xff]
  %v118 = vld [vmem:[%s1 + $0x2c0] sm:$0xff]
  %v119 = vld [vmem:[%s1 + $0x2c8] sm:$0xff]
  %v120 = vld [vmem:[%s1 + $0x2d0] sm:$0xff]
  %v121 = vld [vmem:[%s1 + $0x2d8] sm:$0xff]
  %v122 = vld [vmem:[%s1 + $0x2e0] sm:$0xff]
  %v123 = vld [vmem:[%s1 + $0x2e8] sm:$0xff]
  %v124 = vld [vmem:[%s1 + $0x2f0] sm:$0xff]
  %v125 = vld [vmem:[%s1 + $0x2f8] sm:$0xff]
  %v126 = vld [vmem:[%s1 + $0x300] sm:$0xff]
  %v127 = vld [vmem:[%s1 + $0x308] sm:$0xff]
  %v128 = vld [vmem:[%s1 + $0x310] sm:$0xff]
  %v129 = vld [vmem:[%s1 + $0x318] sm:$0xff]
  %v130 = vld [vmem:[%s1 + $0x320] sm:$0xff]
  %v131 = vld [vmem:[%s1 + $0x328] sm:$0xff]
  %v132 = vld [vmem:[%s1 + $0x330] sm:$0xff]
  %v133 = vld [vmem:[%s1 + $0x338] sm:$0xff]
  %v134 = vld [vmem:[%s1 + $0x340] sm:$0xff]
  %v135 = vld [vmem:[%s1 + $0x348] sm:$0xff]
  %v136 = vld [vmem:[%s1 + $0x350] sm:$0xff]
  %v137 = vld [vmem:[%s1 + $0x358] sm:$0xff]
  %v138 = vld [vmem:[%s1 + $0x360] sm:$0xff]
  %v139 = vld [vmem:[%s1 + $0x368] sm:$0xff]
  %v140 = vld [vmem:[%s1 + $0x370] sm:$0xff]
  %v141 = vld [vmem:[%s1 + $0x378] sm:$0xff]
  %v142 = vld [vmem:[%s1 + $0x380] sm:$0xff]
  %v143 = vld [vmem:[%s1 + $0x388] sm:$0xff]
  %v144 = vld [vmem:[%s1 + $0x390] sm:$0xff]
  %v145 = vld [vmem:[%s1 + $0x398] sm:$0xff]
  %v146 = vld [vmem:[%s1 + $0x3a0] sm:$0xff]
  %v147 = vld [vmem:[%s1 + $0x3a8] sm:$0xff]
  %v148 = vld [vmem:[%s1 + $0x3b0] sm:$0xff]
  %v149 = vld [vmem:[%s1 + $0x3b8] sm:$0xff]
  %v150 = vld [vmem:[%s1 + $0x3c0] sm:$0xff]
  %v151 = vld [vmem:[%s1 + $0x3c8] sm:$0xff]
  %v152 = vld [vmem:[%s1 + $0x3d0] sm:$0xff]
  %v153 = vld [vmem:[%s1 + $0x3d8] sm:$0xff]
  %v154 = vld [vmem:[%s1 + $0x3e0] sm:$0xff]
  %v155 = vld [vmem:[%s1 + $0x3e8] sm:$0xff]
  %v156 = vld [vmem:[%s1 + $0x3f0] sm:$0xff]
  %v157 = vld [vmem:[%s1 + $0x3f8] sm:$0xff]
  %v158 = vld [vmem:[%s1 + $0x400] sm:$0xff]
  %v159 = vld [vmem:[%s1 + $0x408] sm:$0xff]
  %v160 = vld [vmem:[%s1 + $0x410] sm:$0xff]
  %v161 = vld [vmem:[%s1 + $0x418] sm:$0xff]
  %v162 = vld [vmem:[%s1 + $0x420] sm:$0xff]
  %v163 = vld [vmem:[%s1 + $0x428] sm:$0xff]
  %v164 = vld [vmem:[%s1 + $0x430] sm:$0xff]
  %v165 = vld [vmem:[%s1 + $0x438] sm:$0xff]
  %v166 = vld [vmem:[%s1 + $0x440] sm:$0xff]
  %v167 = vld [vmem:[%s1 + $0x448] sm:$0xff]
  %v168 = vld [vmem:[%s1 + $0x450] sm:$0xff]
  %v169 = vld [vmem:[%s1 + $0x458] sm:$0xff]
  %v170 = vld [vmem:[%s1 + $0x460] sm:$0xff]
  %v171 = vld [vmem:[%s1 + $0x468] sm:$0xff]
  %v172 = vld [vmem:[%s1 + $0x470] sm:$0xff]
  %v173 = vld [vmem:[%s1 + $0x478] sm:$0xff]
  %v174 = vld [vmem:[%s1 + $0x480] sm:$0xff]
  %v175 = vld [vmem:[%s1 + $0x488] sm:$0xff]
  %v176 = vld [vmem:[%s1 + $0x490] sm:$0xff]
  %v177 = vld [vmem:[%s1 + $0x498] sm:$0xff]
  %v178 = vld [vmem:[%s1 + $0x4a0] sm:$0xff]
  %v179 = vld [vmem:[%s1 + $0x4a8] sm:$0xff]
  %v180 = vld [vmem:[%s1 + $0x4b0] sm:$0xff]
  %v181 = vld [vmem:[%s1 + $0x4b8] sm:$0xff]
  %v182 = vld [vmem:[%s1 + $0x4c0] sm:$0xff]
  %v183 = vld [vmem:[%s1 + $0x4c8] sm:$0xff]
  %v184 = vld [vmem:[%s1 + $0x4d0] sm:$0xff]
  %v185 = vld [vmem:[%s1 + $0x4d8] sm:$0xff]
  %v186 = vld [vmem:[%s1 + $0x4e0] sm:$0xff]
  %v187 = vld [vmem:[%s1 + $0x4e8] sm:$0xff]
  %v188 = vld [vmem:[%s1 + $0x4f0] sm:$0xff]
  %v189 = vld [vmem:[%s1 + $0x4f8] sm:$0xff]
  %v190 = vld [vmem:[%s1 + $0x500] sm:$0xff]
  %v191 = vld [vmem:[%s1 + $0x508] sm:$0xff]
  %v192 = vld [vmem:[%s1 + $0x510] sm:$0xff]
  %v193 = vld [vmem:[%s1 + $0x518] sm:$0xff]
  %v194 = vld [vmem:[%s1 + $0x520] sm:$0xff]
  %v195 = vld [vmem:[%s1 + $0x528] sm:$0xff]
  %v196 = vld [vmem:[%s1 + $0x530] sm:$0xff]
  %v197 = vld [vmem:[%s1 + $0x538] sm:$0xff]
  %v198 = vld [vmem:[%s1 + $0x540] sm:$0xff]
  %v199 = vld [vmem:[%s1 + $0x548] sm:$0xff]
  %v200 = vld [vmem:[%s1 + $0x550] sm:$0xff]
  %v201 = vld [vmem:[%s1 + $0x558] sm:$0xff]
  %v202 = vld [vmem:[%s1 + $0x560] sm:$0xff]
  %v203 = vld [vmem:[%s1 + $0x568] sm:$0xff]
  %v204 = vld [vmem:[%s1 + $0x570] sm:$0xff]
  %v205 = vld [vmem:[%s1 + $0x578] sm:$0xff]
  %v206 = vld [vmem:[%s1 + $0x580] sm:$0xff]
  %v207 = vld [vmem:[%s1 + $0x588] sm:$0xff]
  %v208 = vld [vmem:[%s1 + $0x590] sm:$0xff]
  %v209 = vld [vmem:[%s1 + $0x598] sm:$0xff]
  %v210 = vld [vmem:[%s1 + $0x5a0] sm:$0xff]
  %v211 = vld [vmem:[%s1 + $0x5a8] sm:$0xff]
  %v212 = vld [vmem:[%s1 + $0x5b0] sm:$0xff]
  %v213 = vld [vmem:[%s1 + $0x5b8] sm:$0xff]
  %v214 = vld [vmem:[%s1 + $0x5c0] sm:$0xff]
  %v215 = vld [vmem:[%s1 + $0x5c8] sm:$0xff]
  %v216 = vld [vmem:[%s1 + $0x5d0] sm:$0xff]
  %v217 = vld [vmem:[%s1 + $0x5d8] sm:$0xff]
  %v218 = vld [vmem:[%s1 + $0x5e0] sm:$0xff]
  %v219 = vld [vmem:[%s1 + $0x5e8] sm:$0xff]
  %v220 = vld [vmem:[%s1 + $0x5f0] sm:$0xff]
  %v221 = vld [vmem:[%s1 + $0x5f8] sm:$0xff]
  %v222 = vld [vmem:[%s1 + $0x600] sm:$0xff]
  %v223 = vld [vmem:[%s1 + $0x608] sm:$0xff]
  %v224 = vld [vmem:[%s1 + $0x610] sm:$0xff]
  %v225 = vld [vmem:[%s1 + $0x618] sm:$0xff]
  %v226 = vld [vmem:[%s1 + $0x620] sm:$0xff]
  %v227 = vld [vmem:[%s1 + $0x628] sm:$0xff]
  %v228 = vld [vmem:[%s1 + $0x630] sm:$0xff]
  %v229 = vld [vmem:[%s1 + $0x638] sm:$0xff]
  %v230 = vld [vmem:[%s1 + $0x640] sm:$0xff]
  %v231 = vld [vmem:[%s1 + $0x648] sm:$0xff]
  %v232 = vld [vmem:[%s1 + $0x650] sm:$0xff]
  %v233 = vld [vmem:[%s1 + $0x658] sm:$0xff]
  %v234 = vld [vmem:[%s1 + $0x660] sm:$0xff]
  %v235 = vld [vmem:[%s1 + $0x668] sm:$0xff]
  %v236 = vld [vmem:[%s1 + $0x670] sm:$0xff]
  %v237 = vld [vmem:[%s1 + $0x678] sm:$0xff]
  %v238 = vld [vmem:[%s1 + $0x680] sm:$0xff]
  %v239 = vld [vmem:[%s1 + $0x688] sm:$0xff]
  %v240 = vld [vmem:[%s1 + $0x690] sm:$0xff]
  %v241 = vld [vmem:[%s1 + $0x698] sm:$0xff]
  %v242 = vld [vmem:[%s1 + $0x6a0] sm:$0xff]
  %v243 = vld [vmem:[%s1 + $0x6a8] sm:$0xff]
  %v244 = vld [vmem:[%s1 + $0x6b0] sm:$0xff]
  %v245 = vld [vmem:[%s1 + $0x6b8] sm:$0xff]
  %v246 = vld [vmem:[%s1 + $0x6c0] sm:$0xff]
  %v247 = vld [vmem:[%s1 + $0x6c8] sm:$0xff]
  %v248 = vld [vmem:[%s1 + $0x6d0] sm:$0xff]
  %v249 = vld [vmem:[%s1 + $0x6d8] sm:$0xff]
  %v250 = vld [vmem:[%s1 + $0x6e0] sm:$0xff]
  %v251 = vld [vmem:[%s1 + $0x6e8] sm:$0xff]
  %v252 = vld [vmem:[%s1 + $0x6f0] sm:$0xff]
  %v253 = vld [vmem:[%s1 + $0x6f8] sm:$0xff]
  %v254 = vld [vmem:[%s1 + $0x700] sm:$0xff]
  %v255 = vld [vmem:[%s1 + $0x708] sm:$0xff]
  %v256 = vld [vmem:[%s1 + $0x710] sm:$0xff]
  %v257 = vld [vmem:[%s1 + $0x718] sm:$0xff]
  %v258 = vld [vmem:[%s1 + $0x720] sm:$0xff]
  %v259 = vld [vmem:[%s1 + $0x728] sm:$0xff]
  %v260 = vld [vmem:[%s1 + $0x730] sm:$0xff]
  %v261 = vld [vmem:[%s1 + $0x738] sm:$0xff]
  %v262 = vld [vmem:[%s1 + $0x740] sm:$0xff]
  %v263 = vld [vmem:[%s1 + $0x748] sm:$0xff]
  %v264 = vld [vmem:[%s1 + $0x750] sm:$0xff]
  %v265 = vld [vmem:[%s1 + $0x758] sm:$0xff]
  %v266 = vld [vmem:[%s1 + $0x760] sm:$0xff]
  %v267 = vld [vmem:[%s1 + $0x768] sm:$0xff]
  %v268 = vld [vmem:[%s1 + $0x770] sm:$0xff]
  %v269 = vld [vmem:[%s1 + $0x778] sm:$0xff]
  %v270 = vld [vmem:[%s1 + $0x780] sm:$0xff]
  %v271 = vld [vmem:[%s1 + $0x788] sm:$0xff]
  %v272 = vld [vmem:[%s1 + $0x790] sm:$0xff]
  %v273 = vld [vmem:[%s1 + $0x798] sm:$0xff]
  %v274 = vld [vmem:[%s1 + $0x7a0] sm:$0xff]
  %v275 = vld [vmem:[%s1 + $0x7a8] sm:$0xff]
  %v276 = vld [vmem:[%s1 + $0x7b0] sm:$0xff]
  %v277 = vld [vmem:[%s1 + $0x7b8] sm:$0xff]
  %v278 = vld [vmem:[%s1 + $0x7c0] sm:$0xff]
  %v279 = vld [vmem:[%s1 + $0x7c8] sm:$0xff]
  %v280 = vld [vmem:[%s1 + $0x7d0] sm:$0xff]
  %v281 = vld [vmem:[%s1 + $0x7d8] sm:$0xff]
  %v282 = vld [vmem:[%s1 + $0x7e0] sm:$0xff]
  %v283 = vld [vmem:[%s1 + $0x7e8] sm:$0xff]
  %v284 = vld [vmem:[%s1 + $0x7f0] sm:$0xff]
  %v285 = vld [vmem:[%s1 + $0x7f8] sm:$0xff]
  %v286 = vld [vmem:[%s1 + $0x800] sm:$0xff]
  %v287 = vld [vmem:[%s1 + $0x808] sm:$0xff]
  %v288 = vld [vmem:[%s1 + $0x810] sm:$0xff]
  %v289 = vld [vmem:[%s1 + $0x818] sm:$0xff]
  %v290 = vld [vmem:[%s1 + $0x820] sm:$0xff]
  %v291 = vld [vmem:[%s1 + $0x828] sm:$0xff]
  %v292 = vld [vmem:[%s1 + $0x830] sm:$0xff]
  %v293 = vld [vmem:[%s1 + $0x838] sm:$0xff]
  %v294 = vld [vmem:[%s1 + $0x840] sm:$0xff]
  %v295 = vld [vmem:[%s1 + $0x848] sm:$0xff]
  %v296 = vld [vmem:[%s1 + $0x850] sm:$0xff]
  %v297 = vld [vmem:[%s1 + $0x858] sm:$0xff]
  %v298 = vld [vmem:[%s1 + $0x860] sm:$0xff]
  %v299 = vld [vmem:[%s1 + $0x868] sm:$0xff]
  %v300 = vld [vmem:[%s1 + $0x870] sm:$0xff]
  %v301 = vld [vmem:[%s1 + $0x878] sm:$0xff]
  %v302 = vld [vmem:[%s1 + $0x880] sm:$0xff]
  %v303 = vld [vmem:[%s1 + $0x888] sm:$0xff]
  %v304 = vld [vmem:[%s1 + $0x890] sm:$0xff]
  %v305 = vld [vmem:[%s1 + $0x898] sm:$0xff]
  %v306 = vld [vmem:[%s1 + $0x8a0] sm:$0xff]
  %v307 = vld [vmem:[%s1 + $0x8a8] sm:$0xff]
  %v308 = vld [vmem:[%s1 + $0x8b0] sm:$0xff]
  %v309 = vld [vmem:[%s1 + $0x8b8] sm:$0xff]
  %v310 = vld [vmem:[%s1 + $0x8c0] sm:$0xff]
  %v311 = vld [vmem:[%s1 + $0x8c8] sm:$0xff]
  %v312 = vld [vmem:[%s1 + $0x8d0] sm:$0xff]
  %v313 = vld [vmem:[%s1 + $0x8d8] sm:$0xff]
  %v314 = vld [vmem:[%s1 + $0x8e0] sm:$0xff]
  %v315 = vld [vmem:[%s1 + $0x8e8] sm:$0xff]
  %v316 = vld [vmem:[%s1 + $0x8f0] sm:$0xff]
  %v317 = vld [vmem:[%s1 + $0x8f8] sm:$0xff]
  %v318 = vld [vmem:[%s1 + $0x900] sm:$0xff]
  %v319 = vld [vmem:[%s1 + $0x908] sm:$0xff]
  %v320 = vld [vmem:[%s1 + $0x910] sm:$0xff]
  %v321 = vld [vmem:[%s1 + $0x918] sm:$0xff]
  %v322 = vld [vmem:[%s1 + $0x920] sm:$0xff]
  %v323 = vld [vmem:[%s1 + $0x928] sm:$0xff]
  %v324 = vld [vmem:[%s1 + $0x930] sm:$0xff]
  %v325 = vld [vmem:[%s1 + $0x938] sm:$0xff]
  %v326 = vld [vmem:[%s1 + $0x940] sm:$0xff]
  %v327 = vld [vmem:[%s1 + $0x948] sm:$0xff]
  %v328 = vld [vmem:[%s1 + $0x950] sm:$0xff]
  %v329 = vld [vmem:[%s1 + $0x958] sm:$0xff]
  %v330 = vld [vmem:[%s1 + $0x960] sm:$0xff]
  %v331 = vld [vmem:[%s1 + $0x968] sm:$0xff]
  %v332 = vld [vmem:[%s1 + $0x970] sm:$0xff]
  %v333 = vld [vmem:[%s1 + $0x978] sm:$0xff]
  %v334 = vld [vmem:[%s1 + $0x980] sm:$0xff]
  %v335 = vld [vmem:[%s1 + $0x988] sm:$0xff]
  %v336 = vld [vmem:[%s1 + $0x990] sm:$0xff]
  %v337 = vld [vmem:[%s1 + $0x998] sm:$0xff]
  %v338 = vld [vmem:[%s1 + $0x9a0] sm:$0xff]
  %v339 = vld [vmem:[%s1 + $0x9a8] sm:$0xff]
  %v340 = vld [vmem:[%s1 + $0x9b0] sm:$0xff]
  %v341 = vld [vmem:[%s1 + $0x9b8] sm:$0xff]
  %v342 = vld [vmem:[%s1 + $0x9c0] sm:$0xff]
  %v343 = vld [vmem:[%s1 + $0x9c8] sm:$0xff]
  %v344 = vld [vmem:[%s1 + $0x9d0] sm:$0xff]
  %v345 = vld [vmem:[%s1 + $0x9d8] sm:$0xff]
  %v346 = vld [vmem:[%s1 + $0x9e0] sm:$0xff]
  %v347 = vld [vmem:[%s1 + $0x9e8] sm:$0xff]
  %v348 = vld [vmem:[%s1 + $0x9f0] sm:$0xff]
  %v349 = vld [vmem:[%s1 + $0x9f8] sm:$0xff]
  %v350 = vld [vmem:[%s1 + $0xa00] sm:$0xff]
  %v351 = vld [vmem:[%s1 + $0xa08] sm:$0xff]
  %v352 = vld [vmem:[%s1 + $0xa10] sm:$0xff]
  %v353 = vld [vmem:[%s1 + $0xa18] sm:$0xff]
  %v354 = vld [vmem:[%s1 + $0xa20] sm:$0xff]
  %v355 = vld [vmem:[%s1 + $0xa28] sm:$0xff]
  %v356 = vld [vmem:[%s1 + $0xa30] sm:$0xff]
  %v357 = vld [vmem:[%s1 + $0xa38] sm:$0xff]
  %v358 = vld [vmem:[%s1 + $0xa40] sm:$0xff]
  %v359 = vld [vmem:[%s1 + $0xa48] sm:$0xff]
  %v360 = vld [vmem:[%s1 + $0xa50] sm:$0xff]
  %v361 = vld [vmem:[%s1 + $0xa58] sm:$0xff]
  %v362 = vld [vmem:[%s1 + $0xa60] sm:$0xff]
  %v363 = vld [vmem:[%s1 + $0xa68] sm:$0xff]
  %v364 = vld [vmem:[%s1 + $0xa70] sm:$0xff]
  %v365 = vld [vmem:[%s1 + $0xa78] sm:$0xff]
  %v366 = vld [vmem:[%s1 + $0xa80] sm:$0xff]
  %v367 = vld [vmem:[%s1 + $0xa88] sm:$0xff]
  %v368 = vld [vmem:[%s1 + $0xa90] sm:$0xff]
  %v369 = vld [vmem:[%s1 + $0xa98] sm:$0xff]
  %v370 = vld [vmem:[%s1 + $0xaa0] sm:$0xff]
  %v371 = vld [vmem:[%s1 + $0xaa8] sm:$0xff]
  %v372 = vld [vmem:[%s1 + $0xab0] sm:$0xff]
  %v373 = vld [vmem:[%s1 + $0xab8] sm:$0xff]
  %v374 = vld [vmem:[%s1 + $0xac0] sm:$0xff]
  %v375 = vld [vmem:[%s1 + $0xac8] sm:$0xff]
  %v376 = vld [vmem:[%s1 + $0xad0] sm:$0xff]
  %v377 = vld [vmem:[%s1 + $0xad8] sm:$0xff]
  %v378 = vld [vmem:[%s1 + $0xae0] sm:$0xff]
  %v379 = vld [vmem:[%s1 + $0xae8] sm:$0xff]
  %v380 = vld [vmem:[%s1 + $0xaf0] sm:$0xff]
  %v381 = vld [vmem:[%s1 + $0xaf8] sm:$0xff]
  %v382 = vld [vmem:[%s1 + $0xb00] sm:$0xff]
  %v383 = vld [vmem:[%s1 + $0xb08] sm:$0xff]
  %v384 = vld [vmem:[%s1 + $0xb10] sm:$0xff]
  %v385 = vld [vmem:[%s1 + $0xb18] sm:$0xff]
  %v386 = vld [vmem:[%s1 + $0xb20] sm:$0xff]
  %v387 = vld [vmem:[%s1 + $0xb28] sm:$0xff]
  %v388 = vld [vmem:[%s1 + $0xb30] sm:$0xff]
  %v389 = vld [vmem:[%s1 + $0xb38] sm:$0xff]
  %v390 = vld [vmem:[%s1 + $0xb40] sm:$0xff]
  %v391 = vld [vmem:[%s1 + $0xb48] sm:$0xff]
  %v392 = vld [vmem:[%s1 + $0xb50] sm:$0xff]
  %v393 = vld [vmem:[%s1 + $0xb58] sm:$0xff]
  %v394 = vld [vmem:[%s1 + $0xb60] sm:$0xff]
  %v395 = vld [vmem:[%s1 + $0xb68] sm:$0xff]
  %v396 = vld [vmem:[%s1 + $0xb70] sm:$0xff]
  %v397 = vld [vmem:[%s1 + $0xb78] sm:$0xff]
  %v398 = vld [vmem:[%s1 + $0xb80] sm:$0xff]
  %v399 = vld [vmem:[%s1 + $0xb88] sm:$0xff]
  %v400 = vld [vmem:[%s1 + $0xb90] sm:$0xff]
  %v401 = vld [vmem:[%s1 + $0xb98] sm:$0xff]
  %v402 = vld [vmem:[%s1 + $0xba0] sm:$0xff]
  %v403 = vld [vmem:[%s1 + $0xba8] sm:$0xff]
  %v404 = vld [vmem:[%s1 + $0xbb0] sm:$0xff]
  %v405 = vld [vmem:[%s1 + $0xbb8] sm:$0xff]
  %v406 = vld [vmem:[%s1 + $0xbc0] sm:$0xff]
  %v407 = vld [vmem:[%s1 + $0xbc8] sm:$0xff]
  %v408 = vld [vmem:[%s1 + $0xbd0] sm:$0xff]
  %v409 = vld [vmem:[%s1 + $0xbd8] sm:$0xff]
  %v410 = vld [vmem:[%s1 + $0xbe0] sm:$0xff]
  %v411 = vld [vmem:[%s1 + $0xbe8] sm:$0xff]
  %v412 = vld [vmem:[%s1 + $0xbf0] sm:$0xff]
  %v413 = vld [vmem:[%s1 + $0xbf8] sm:$0xff]
  %v414 = vld [vmem:[%s1 + $0xc00] sm:$0xff]
  %v415 = vld [vmem:[%s1 + $0xc08] sm:$0xff]
  %v416 = vld [vmem:[%s1 + $0xc10] sm:$0xff]
  %v417 = vld [vmem:[%s1 + $0xc18] sm:$0xff]
  %v418 = vld [vmem:[%s1 + $0xc20] sm:$0xff]
  %v419 = vld [vmem:[%s1 + $0xc28] sm:$0xff]
  %v420 = vld [vmem:[%s1 + $0xc30] sm:$0xff]
  %v421 = vld [vmem:[%s1 + $0xc38] sm:$0xff]
  %v422 = vld [vmem:[%s1 + $0xc40] sm:$0xff]
  %v423 = vld [vmem:[%s1 + $0xc48] sm:$0xff]
  %v424 = vld [vmem:[%s1 + $0xc50] sm:$0xff]
  %v425 = vld [vmem:[%s1 + $0xc58] sm:$0xff]
  %v426 = vld [vmem:[%s1 + $0xc60] sm:$0xff]
  %v427 = vld [vmem:[%s1 + $0xc68] sm:$0xff]
  %v428 = vld [vmem:[%s1 + $0xc70] sm:$0xff]
  %v429 = vld [vmem:[%s1 + $0xc78] sm:$0xff]
  %v430 = vld [vmem:[%s1 + $0xc80] sm:$0xff]
  %v431 = vld [vmem:[%s1 + $0xc88] sm:$0xff]
  %v432 = vld [vmem:[%s1 + $0xc90] sm:$0xff]
  %v433 = vld [vmem:[%s1 + $0xc98] sm:$0xff]
  %v434 = vld [vmem:[%s1 + $0xca0] sm:$0xff]
  %v435 = vld [vmem:[%s1 + $0xca8] sm:$0xff]
  %v436 = vld [vmem:[%s1 + $0xcb0] sm:$0xff]
  %v437 = vld [vmem:[%s1 + $0xcb8] sm:$0xff]
  %v438 = vld [vmem:[%s1 + $0xcc0] sm:$0xff]
  %v439 = vld [vmem:[%s1 + $0xcc8] sm:$0xff]
  %v440 = vld [vmem:[%s1 + $0xcd0] sm:$0xff]
  %v441 = vld [vmem:[%s1 + $0xcd8] sm:$0xff]
  %v442 = vld [vmem:[%s1 + $0xce0] sm:$0xff]
  %v443 = vld [vmem:[%s1 + $0xce8] sm:$0xff]
  %v444 = vld [vmem:[%s1 + $0xcf0] sm:$0xff]
  %v445 = vld [vmem:[%s1 + $0xcf8] sm:$0xff]
  %v446 = vld [vmem:[%s1 + $0xd00] sm:$0xff]
  %v447 = vld [vmem:[%s1 + $0xd08] sm:$0xff]
  %v448 = vld [vmem:[%s1 + $0xd10] sm:$0xff]
  %v449 = vld [vmem:[%s1 + $0xd18] sm:$0xff]
  %v450 = vld [vmem:[%s1 + $0xd20] sm:$0xff]
  %v451 = vld [vmem:[%s1 + $0xd28] sm:$0xff]
  %v452 = vld [vmem:[%s1 + $0xd30] sm:$0xff]
  %v453 = vld [vmem:[%s1 + $0xd38] sm:$0xff]
  %v454 = vld [vmem:[%s1 + $0xd40] sm:$0xff]
  %v455 = vld [vmem:[%s1 + $0xd48] sm:$0xff]
  %v456 = vld [vmem:[%s1 + $0xd50] sm:$0xff]
  %v457 = vld [vmem:[%s1 + $0xd58] sm:$0xff]
  %v458 = vld [vmem:[%s1 + $0xd60] sm:$0xff]
  %v459 = vld [vmem:[%s1 + $0xd68] sm:$0xff]
  %v460 = vld [vmem:[%s1 + $0xd70] sm:$0xff]
  %v461 = vld [vmem:[%s1 + $0xd78] sm:$0xff]
  %v462 = vld [vmem:[%s1 + $0xd80] sm:$0xff]
  %v463 = vld [vmem:[%s1 + $0xd88] sm:$0xff]
  %v464 = vld [vmem:[%s1 + $0xd90] sm:$0xff]
  %v465 = vld [vmem:[%s1 + $0xd98] sm:$0xff]
  %v466 = vld [vmem:[%s1 + $0xda0] sm:$0xff]
  %v467 = vld [vmem:[%s1 + $0xda8] sm:$0xff]
  %v468 = vld [vmem:[%s1 + $0xdb0] sm:$0xff]
  %v469 = vld [vmem:[%s1 + $0xdb8] sm:$0xff]
  %v470 = vld [vmem:[%s1 + $0xdc0] sm:$0xff]
  %v471 = vld [vmem:[%s1 + $0xdc8] sm:$0xff]
  %v472 = vld [vmem:[%s1 + $0xdd0] sm:$0xff]
  %v473 = vld [vmem:[%s1 + $0xdd8] sm:$0xff]
  %v474 = vld [vmem:[%s1 + $0xde0] sm:$0xff]
  %v475 = vld [vmem:[%s1 + $0xde8] sm:$0xff]
  %v476 = vld [vmem:[%s1 + $0xdf0] sm:$0xff]
  %v477 = vld [vmem:[%s1 + $0xdf8] sm:$0xff]
  %v478 = vld [vmem:[%s1 + $0xe00] sm:$0xff]
  %v479 = vld [vmem:[%s1 + $0xe08] sm:$0xff]
  %v480 = vld [vmem:[%s1 + $0xe10] sm:$0xff]
  %v481 = vld [vmem:[%s1 + $0xe18] sm:$0xff]
  %v482 = vld [vmem:[%s1 + $0xe20] sm:$0xff]
  %v483 = vld [vmem:[%s1 + $0xe28] sm:$0xff]
  %v484 = vld [vmem:[%s1 + $0xe30] sm:$0xff]
  %v485 = vld [vmem:[%s1 + $0xe38] sm:$0xff]
  %v486 = vld [vmem:[%s1 + $0xe40] sm:$0xff]
  %v487 = vld [vmem:[%s1 + $0xe48] sm:$0xff]
  %v488 = vld [vmem:[%s1 + $0xe50] sm:$0xff]
  %v489 = vld [vmem:[%s1 + $0xe58] sm:$0xff]
  %v490 = vld [vmem:[%s1 + $0xe60] sm:$0xff]
  %v491 = vld [vmem:[%s1 + $0xe68] sm:$0xff]
  %v492 = vld [vmem:[%s1 + $0xe70] sm:$0xff]
  %v493 = vld [vmem:[%s1 + $0xe78] sm:$0xff]
  %v494 = vld [vmem:[%s1 + $0xe80] sm:$0xff]
  %v495 = vld [vmem:[%s1 + $0xe88] sm:$0xff]
  %v496 = vld [vmem:[%s1 + $0xe90] sm:$0xff]
  %v497 = vld [vmem:[%s1 + $0xe98] sm:$0xff]
  %v498 = vld [vmem:[%s1 + $0xea0] sm:$0xff]
  %v499 = vld [vmem:[%s1 + $0xea8] sm:$0xff]
  %v500 = vld [vmem:[%s1 + $0xeb0] sm:$0xff]
  %v501 = vld [vmem:[%s1 + $0xeb8] sm:$0xff]
  %v502 = vld [vmem:[%s1 + $0xec0] sm:$0xff]
  %v503 = vld [vmem:[%s1 + $0xec8] sm:$0xff]
  %v504 = vld [vmem:[%s1 + $0xed0] sm:$0xff]
  %v505 = vld [vmem:[%s1 + $0xed8] sm:$0xff]
  %v506 = vld [vmem:[%s1 + $0xee0] sm:$0xff]
  %v507 = vld [vmem:[%s1 + $0xee8] sm:$0xff]
  %v508 = vld [vmem:[%s1 + $0xef0] sm:$0xff]
  %v509 = vld [vmem:[%s1 + $0xef8] sm:$0xff]
  %v510 = vld [vmem:[%s1 + $0xf00] sm:$0xff]
  %v511 = vld [vmem:[%s1 + $0xf08] sm:$0xff]
  %v512 = vld [vmem:[%s1 + $0xf10] sm:$0xff]
  %v513 = vld [vmem:[%s1 + $0xf18] sm:$0xff]
  %v514 = vld [vmem:[%s1 + $0xf20] sm:$0xff]
  %v515 = vld [vmem:[%s1 + $0xf28] sm:$0xff]
  %v516 = vld [vmem:[%s1 + $0xf30] sm:$0xff]
  %v517 = vld [vmem:[%s1 + $0xf38] sm:$0xff]
  %v518 = vld [vmem:[%s1 + $0xf40] sm:$0xff]
  %v519 = vld [vmem:[%s1 + $0xf48] sm:$0xff]
  %v520 = vld [vmem:[%s1 + $0xf50] sm:$0xff]
  %v521 = vld [vmem:[%s1 + $0xf58] sm:$0xff]
  %v522 = vld [vmem:[%s1 + $0xf60] sm:$0xff]
  %v523 = vld [vmem:[%s1 + $0xf68] sm:$0xff]
  %v524 = vld [vmem:[%s1 + $0xf70] sm:$0xff]
  %v525 = vld [vmem:[%s1 + $0xf78] sm:$0xff]
  %v526 = vld [vmem:[%s1 + $0xf80] sm:$0xff]
  %v527 = vld [vmem:[%s1 + $0xf88] sm:$0xff]
  %v528 = vld [vmem:[%s1 + $0xf90] sm:$0xff]
  %v529 = vld [vmem:[%s1 + $0xf98] sm:$0xff]
  %v530 = vld [vmem:[%s1 + $0xfa0] sm:$0xff]
  %v531 = vld [vmem:[%s1 + $0xfa8] sm:$0xff]
  %v532 = vld [vmem:[%s1 + $0xfb0] sm:$0xff]
  %v533 = vld [vmem:[%s1 + $0xfb8] sm:$0xff]
  %v534 = vld [vmem:[%s1 + $0xfc0] sm:$0xff]
  %v535 = vld [vmem:[%s1 + $0xfc8] sm:$0xff]
  %v536 = vld [vmem:[%s1 + $0xfd0] sm:$0xff]
  %v537 = vld [vmem:[%s1 + $0xfd8] sm:$0xff]
  %v538 = vld [vmem:[%s1 + $0xfe0] sm:$0xff]
  %v539 = vld [vmem:[%s1 + $0xfe8] sm:$0xff]
  %v540 = vld [vmem:[%s1 + $0xff0] sm:$0xff]
  %v541 = vld [vmem:[%s1 + $0xff8] sm:$0xff]
  %v542 = vld [vmem:[%s2] sm:$0x1]
  %v544 = vlaneseq
  %v545 = vshrl.u32 %v544, 7
  %v546 = vsub.s32 0, %v545
  %v547 = vrot.slane %v542, %v546
  %v557 = vcombine.high %v22, %v22
  %v559 = vunpack.c.l.s4 1983009808
  %v560 = vunpack.c.0.s8 %v559
  %v561 = vlaneseq
  %v562 = vshrl.u32 %v561, 7
  %v563 = vsub.s32 %v560, %v562
  %v564 = vrot.slane %v22, %v563
  %v566 = vunpack.c.l.s4 1983009808
  %v567 = vunpack.c.0.s8 %v566
  %v568 = vlaneseq
  %v569 = vshrl.u32 %v568, 7
  %v570 = vsub.s32 %v567, %v569
  %v571 = vrot.slane %v557, %v570
  %v572 = vcombine.high %v564, %v564
  %v573 = vcombine.high %v571, %v571
  %v574 = vcombine.high %v23, %v23
  %v576 = vunpack.c.l.s4 1983009808
  %v577 = vunpack.c.0.s8 %v576
  %v578 = vlaneseq
  %v579 = vshrl.u32 %v578, 7
  %v580 = vsub.s32 %v577, %v579
  %v581 = vrot.slane %v23, %v580
  %v583 = vunpack.c.l.s4 1983009808
  %v584 = vunpack.c.0.s8 %v583
  %v585 = vlaneseq
  %v586 = vshrl.u32 %v585, 7
  %v587 = vsub.s32 %v584, %v586
  %v588 = vrot.slane %v574, %v587
  %v589 = vcombine.high %v581, %v581
  %v590 = vcombine.high %v588, %v588
  %v591 = vcombine.high %v24, %v24
  %v593 = vunpack.c.l.s4 1983009808
  %v594 = vunpack.c.0.s8 %v593
  %v595 = vlaneseq
  %v596 = vshrl.u32 %v595, 7
  %v597 = vsub.s32 %v594, %v596
  %v598 = vrot.slane %v24, %v597
  %v600 = vunpack.c.l.s4 1983009808
  %v601 = vunpack.c.0.s8 %v600
  %v602 = vlaneseq
  %v603 = vshrl.u32 %v602, 7
  %v604 = vsub.s32 %v601, %v603
  %v605 = vrot.slane %v591, %v604
  %v606 = vcombine.high %v598, %v598
  %v607 = vcombine.high %v605, %v605
  %v608 = vcombine.high %v25, %v25
  %v610 = vunpack.c.l.s4 1983009808
  %v611 = vunpack.c.0.s8 %v610
  %v612 = vlaneseq
  %v613 = vshrl.u32 %v612, 7
  %v614 = vsub.s32 %v611, %v613
  %v615 = vrot.slane %v25, %v614
  %v617 = vunpack.c.l.s4 1983009808
  %v618 = vunpack.c.0.s8 %v617
  %v619 = vlaneseq
  %v620 = vshrl.u32 %v619, 7
  %v621 = vsub.s32 %v618, %v620
  %v622 = vrot.slane %v608, %v621
  %v623 = vcombine.high %v615, %v615
  %v624 = vcombine.high %v622, %v622
  %v625 = vcombine.high %v26, %v26
  %v627 = vunpack.c.l.s4 1983009808
  %v628 = vunpack.c.0.s8 %v627
  %v629 = vlaneseq
  %v630 = vshrl.u32 %v629, 7
  %v631 = vsub.s32 %v628, %v630
  %v632 = vrot.slane %v26, %v631
  %v634 = vunpack.c.l.s4 1983009808
  %v635 = vunpack.c.0.s8 %v634
  %v636 = vlaneseq
  %v637 = vshrl.u32 %v636, 7
  %v638 = vsub.s32 %v635, %v637
  %v639 = vrot.slane %v625, %v638
  %v640 = vcombine.high %v632, %v632
  %v641 = vcombine.high %v639, %v639
  %v642 = vcombine.high %v27, %v27
  %v644 = vunpack.c.l.s4 1983009808
  %v645 = vunpack.c.0.s8 %v644
  %v646 = vlaneseq
  %v647 = vshrl.u32 %v646, 7
  %v648 = vsub.s32 %v645, %v647
  %v649 = vrot.slane %v27, %v648
  %v651 = vunpack.c.l.s4 1983009808
  %v652 = vunpack.c.0.s8 %v651
  %v653 = vlaneseq
  %v654 = vshrl.u32 %v653, 7
  %v655 = vsub.s32 %v652, %v654
  %v656 = vrot.slane %v642, %v655
  %v657 = vcombine.high %v649, %v649
  %v658 = vcombine.high %v656, %v656
  %v659 = vcombine.high %v28, %v28
  %v661 = vunpack.c.l.s4 1983009808
  %v662 = vunpack.c.0.s8 %v661
  %v663 = vlaneseq
  %v664 = vshrl.u32 %v663, 7
  %v665 = vsub.s32 %v662, %v664
  %v666 = vrot.slane %v28, %v665
  %v668 = vunpack.c.l.s4 1983009808
  %v669 = vunpack.c.0.s8 %v668
  %v670 = vlaneseq
  %v671 = vshrl.u32 %v670, 7
  %v672 = vsub.s32 %v669, %v671
  %v673 = vrot.slane %v659, %v672
  %v674 = vcombine.high %v666, %v666
  %v675 = vcombine.high %v673, %v673
  %v676 = vcombine.high %v29, %v29
  %v678 = vunpack.c.l.s4 1983009808
  %v679 = vunpack.c.0.s8 %v678
  %v680 = vlaneseq
  %v681 = vshrl.u32 %v680, 7
  %v682 = vsub.s32 %v679, %v681
  %v683 = vrot.slane %v29, %v682
  %v685 = vunpack.c.l.s4 1983009808
  %v686 = vunpack.c.0.s8 %v685
  %v687 = vlaneseq
  %v688 = vshrl.u32 %v687, 7
  %v689 = vsub.s32 %v686, %v688
  %v690 = vrot.slane %v676, %v689
  %v691 = vcombine.high %v683, %v683
  %v692 = vcombine.high %v690, %v690
  %725 = vmatprep.subr.mxu0 0.0
  %726 = vmatpush1.msra.mxu0 %v45
  %727 = vmatprep.subr.mxu0 0.0
  %728 = vmatpush1.msra.mxu0 %v44
  %729 = vmatprep.subr.mxu0 0.0
  %730 = vmatpush1.msra.mxu0 %v43
  %731 = vmatprep.subr.mxu0 0.0
  %732 = vmatpush1.msra.mxu0 %v42
  %733 = vmatprep.subr.mxu0 0.0
  %734 = vmatpush1.msra.mxu0 %v41
  %735 = vmatprep.subr.mxu0 0.0
  %736 = vmatpush1.msra.mxu0 %v40
  %737 = vmatprep.subr.mxu0 0.0
  %738 = vmatpush1.msra.mxu0 %v39
  %739 = vmatprep.subr.mxu0 0.0
  %740 = vmatpush1.msra.mxu0 %v38
  %741 = vmatprep.subr.mxu0 0.0
  %742 = vmatpush1.msra.mxu0 %v37
  %743 = vmatprep.subr.mxu0 0.0
  %744 = vmatpush1.msra.mxu0 %v36
  %745 = vmatprep.subr.mxu0 0.0
  %746 = vmatpush1.msra.mxu0 %v35
  %747 = vmatprep.subr.mxu0 0.0
  %748 = vmatpush1.msra.mxu0 %v34
  %749 = vmatprep.subr.mxu0 0.0
  %750 = vmatpush1.msra.mxu0 %v33
  %751 = vmatprep.subr.mxu0 0.0
  %752 = vmatpush1.msra.mxu0 %v32
  %753 = vmatprep.subr.mxu0 0.0
  %754 = vmatpush1.msra.mxu0 %v31
  %755 = vmatprep.subr.mxu0 0.0
  %756 = vmatpush1.msra.mxu0 %v30
  %757 = vmatprep.subr.mxu0 0.0
  %758 = vmatpush2.msra.mxu0 %v61
  %759 = vmatprep.subr.mxu0 0.0
  %760 = vmatpush2.msra.mxu0 %v60
  %761 = vmatprep.subr.mxu0 0.0
  %762 = vmatpush2.msra.mxu0 %v59
  %763 = vmatprep.subr.mxu0 0.0
  %764 = vmatpush2.msra.mxu0 %v58
  %765 = vmatprep.subr.mxu0 0.0
  %766 = vmatpush2.msra.mxu0 %v57
  %767 = vmatprep.subr.mxu0 0.0
  %768 = vmatpush2.msra.mxu0 %v56
  %769 = vmatprep.subr.mxu0 0.0
  %770 = vmatpush2.msra.mxu0 %v55
  %771 = vmatprep.subr.mxu0 0.0
  %772 = vmatpush2.msra.mxu0 %v54
  %773 = vmatprep.subr.mxu0 0.0
  %774 = vmatpush2.msra.mxu0 %v53
  %775 = vmatprep.subr.mxu0 0.0
  %776 = vmatpush2.msra.mxu0 %v52
  %777 = vmatprep.subr.mxu0 0.0
  %778 = vmatpush2.msra.mxu0 %v51
  %779 = vmatprep.subr.mxu0 0.0
  %780 = vmatpush2.msra.mxu0 %v50
  %781 = vmatprep.subr.mxu0 0.0
  %782 = vmatpush2.msra.mxu0 %v49
  %783 = vmatprep.subr.mxu0 0.0
  %784 = vmatpush2.msra.mxu0 %v48
  %785 = vmatprep.subr.mxu0 0.0
  %786 = vmatpush2.msra.mxu0 %v47
  %787 = vmatprep.subr.mxu0 0.0
  %788 = vmatpush2.msra.mxu0 %v46
  %789 = vmatprep.mubr.f32.mxu0 %v572
  %790 = vmatmul.mubr.f32.gmra.mxu0 %v564
  %v791 = vpop.f32.mrf.mxu0
  %v792 = vadd.f32 %v547, %v791
  %v793 = vpop.f32.mrf.mxu0
  %794 = vdwg.mxu0
  %795 = vmatprep.subr.mxu0 0.0
  %796 = vmatpush1.msra.mxu0 %v77
  %797 = vmatprep.subr.mxu0 0.0
  %798 = vmatpush1.msra.mxu0 %v76
  %799 = vmatprep.subr.mxu0 0.0
  %800 = vmatpush1.msra.mxu0 %v75
  %801 = vmatprep.subr.mxu0 0.0
  %802 = vmatpush1.msra.mxu0 %v74
  %803 = vmatprep.subr.mxu0 0.0
  %804 = vmatpush1.msra.mxu0 %v73
  %805 = vmatprep.subr.mxu0 0.0
  %806 = vmatpush1.msra.mxu0 %v72
  %807 = vmatprep.subr.mxu0 0.0
  %808 = vmatpush1.msra.mxu0 %v71
  %809 = vmatprep.subr.mxu0 0.0
  %810 = vmatpush1.msra.mxu0 %v70
  %811 = vmatprep.subr.mxu0 0.0
  %812 = vmatpush1.msra.mxu0 %v69
  %813 = vmatprep.subr.mxu0 0.0
  %814 = vmatpush1.msra.mxu0 %v68
  %815 = vmatprep.subr.mxu0 0.0
  %816 = vmatpush1.msra.mxu0 %v67
  %817 = vmatprep.subr.mxu0 0.0
  %818 = vmatpush1.msra.mxu0 %v66
  %819 = vmatprep.subr.mxu0 0.0
  %820 = vmatpush1.msra.mxu0 %v65
  %821 = vmatprep.subr.mxu0 0.0
  %822 = vmatpush1.msra.mxu0 %v64
  %823 = vmatprep.subr.mxu0 0.0
  %824 = vmatpush1.msra.mxu0 %v63
  %825 = vmatprep.subr.mxu0 0.0
  %826 = vmatpush1.msra.mxu0 %v62
  %827 = vmatprep.subr.mxu0 0.0
  %828 = vmatpush2.msra.mxu0 %v93
  %829 = vmatprep.subr.mxu0 0.0
  %830 = vmatpush2.msra.mxu0 %v92
  %831 = vmatprep.subr.mxu0 0.0
  %832 = vmatpush2.msra.mxu0 %v91
  %833 = vmatprep.subr.mxu0 0.0
  %834 = vmatpush2.msra.mxu0 %v90
  %835 = vmatprep.subr.mxu0 0.0
  %836 = vmatpush2.msra.mxu0 %v89
  %837 = vmatprep.subr.mxu0 0.0
  %838 = vmatpush2.msra.mxu0 %v88
  %839 = vmatprep.subr.mxu0 0.0
  %840 = vmatpush2.msra.mxu0 %v87
  %841 = vmatprep.subr.mxu0 0.0
  %842 = vmatpush2.msra.mxu0 %v86
  %843 = vmatprep.subr.mxu0 0.0
  %844 = vmatpush2.msra.mxu0 %v85
  %845 = vmatprep.subr.mxu0 0.0
  %846 = vmatpush2.msra.mxu0 %v84
  %847 = vmatprep.subr.mxu0 0.0
  %848 = vmatpush2.msra.mxu0 %v83
  %849 = vmatprep.subr.mxu0 0.0
  %850 = vmatpush2.msra.mxu0 %v82
  %851 = vmatprep.subr.mxu0 0.0
  %852 = vmatpush2.msra.mxu0 %v81
  %853 = vmatprep.subr.mxu0 0.0
  %854 = vmatpush2.msra.mxu0 %v80
  %855 = vmatprep.subr.mxu0 0.0
  %856 = vmatpush2.msra.mxu0 %v79
  %857 = vmatprep.subr.mxu0 0.0
  %858 = vmatpush2.msra.mxu0 %v78
  %859 = vmatprep.mubr.f32.mxu0 %v573
  %860 = vmatmul.mubr.f32.gmra.mxu0 %v571
  %v861 = vpop.f32.mrf.mxu0
  %v862 = vadd.f32 %v792, %v861
  %v863 = vpop.f32.mrf.mxu0
  %864 = vdwg.mxu0
  %865 = vmatprep.subr.mxu0 0.0
  %866 = vmatpush1.msra.mxu0 %v109
  %867 = vmatprep.subr.mxu0 0.0
  %868 = vmatpush1.msra.mxu0 %v108
  %869 = vmatprep.subr.mxu0 0.0
  %870 = vmatpush1.msra.mxu0 %v107
  %871 = vmatprep.subr.mxu0 0.0
  %872 = vmatpush1.msra.mxu0 %v106
  %873 = vmatprep.subr.mxu0 0.0
  %874 = vmatpush1.msra.mxu0 %v105
  %875 = vmatprep.subr.mxu0 0.0
  %876 = vmatpush1.msra.mxu0 %v104
  %877 = vmatprep.subr.mxu0 0.0
  %878 = vmatpush1.msra.mxu0 %v103
  %879 = vmatprep.subr.mxu0 0.0
  %880 = vmatpush1.msra.mxu0 %v102
  %881 = vmatprep.subr.mxu0 0.0
  %882 = vmatpush1.msra.mxu0 %v101
  %883 = vmatprep.subr.mxu0 0.0
  %884 = vmatpush1.msra.mxu0 %v100
  %885 = vmatprep.subr.mxu0 0.0
  %886 = vmatpush1.msra.mxu0 %v99
  %887 = vmatprep.subr.mxu0 0.0
  %888 = vmatpush1.msra.mxu0 %v98
  %889 = vmatprep.subr.mxu0 0.0
  %890 = vmatpush1.msra.mxu0 %v97
  %891 = vmatprep.subr.mxu0 0.0
  %892 = vmatpush1.msra.mxu0 %v96
  %893 = vmatprep.subr.mxu0 0.0
  %894 = vmatpush1.msra.mxu0 %v95
  %895 = vmatprep.subr.mxu0 0.0
  %896 = vmatpush1.msra.mxu0 %v94
  %897 = vmatprep.subr.mxu0 0.0
  %898 = vmatpush2.msra.mxu0 %v125
  %899 = vmatprep.subr.mxu0 0.0
  %900 = vmatpush2.msra.mxu0 %v124
  %901 = vmatprep.subr.mxu0 0.0
  %902 = vmatpush2.msra.mxu0 %v123
  %903 = vmatprep.subr.mxu0 0.0
  %904 = vmatpush2.msra.mxu0 %v122
  %905 = vmatprep.subr.mxu0 0.0
  %906 = vmatpush2.msra.mxu0 %v121
  %907 = vmatprep.subr.mxu0 0.0
  %908 = vmatpush2.msra.mxu0 %v120
  %909 = vmatprep.subr.mxu0 0.0
  %910 = vmatpush2.msra.mxu0 %v119
  %911 = vmatprep.subr.mxu0 0.0
  %912 = vmatpush2.msra.mxu0 %v118
  %913 = vmatprep.subr.mxu0 0.0
  %914 = vmatpush2.msra.mxu0 %v117
  %915 = vmatprep.subr.mxu0 0.0
  %916 = vmatpush2.msra.mxu0 %v116
  %917 = vmatprep.subr.mxu0 0.0
  %918 = vmatpush2.msra.mxu0 %v115
  %919 = vmatprep.subr.mxu0 0.0
  %920 = vmatpush2.msra.mxu0 %v114
  %921 = vmatprep.subr.mxu0 0.0
  %922 = vmatpush2.msra.mxu0 %v113
  %923 = vmatprep.subr.mxu0 0.0
  %924 = vmatpush2.msra.mxu0 %v112
  %925 = vmatprep.subr.mxu0 0.0
  %926 = vmatpush2.msra.mxu0 %v111
  %927 = vmatprep.subr.mxu0 0.0
  %928 = vmatpush2.msra.mxu0 %v110
  %929 = vmatprep.mubr.f32.mxu0 %v589
  %930 = vmatmul.mubr.f32.gmra.mxu0 %v581
  %v931 = vpop.f32.mrf.mxu0
  %v932 = vadd.f32 %v862, %v931
  %v933 = vpop.f32.mrf.mxu0
  %934 = vdwg.mxu0
  %935 = vmatprep.subr.mxu0 0.0
  %936 = vmatpush1.msra.mxu0 %v141
  %937 = vmatprep.subr.mxu0 0.0
  %938 = vmatpush1.msra.mxu0 %v140
  %939 = vmatprep.subr.mxu0 0.0
  %940 = vmatpush1.msra.mxu0 %v139
  %941 = vmatprep.subr.mxu0 0.0
  %942 = vmatpush1.msra.mxu0 %v138
  %943 = vmatprep.subr.mxu0 0.0
  %944 = vmatpush1.msra.mxu0 %v137
  %945 = vmatprep.subr.mxu0 0.0
  %946 = vmatpush1.msra.mxu0 %v136
  %947 = vmatprep.subr.mxu0 0.0
  %948 = vmatpush1.msra.mxu0 %v135
  %949 = vmatprep.subr.mxu0 0.0
  %950 = vmatpush1.msra.mxu0 %v134
  %951 = vmatprep.subr.mxu0 0.0
  %952 = vmatpush1.msra.mxu0 %v133
  %953 = vmatprep.subr.mxu0 0.0
  %954 = vmatpush1.msra.mxu0 %v132
  %955 = vmatprep.subr.mxu0 0.0
  %956 = vmatpush1.msra.mxu0 %v131
  %957 = vmatprep.subr.mxu0 0.0
  %958 = vmatpush1.msra.mxu0 %v130
  %959 = vmatprep.subr.mxu0 0.0
  %960 = vmatpush1.msra.mxu0 %v129
  %961 = vmatprep.subr.mxu0 0.0
  %962 = vmatpush1.msra.mxu0 %v128
  %963 = vmatprep.subr.mxu0 0.0
  %964 = vmatpush1.msra.mxu0 %v127
  %965 = vmatprep.subr.mxu0 0.0
  %966 = vmatpush1.msra.mxu0 %v126
  %967 = vmatprep.subr.mxu0 0.0
  %968 = vmatpush2.msra.mxu0 %v157
  %969 = vmatprep.subr.mxu0 0.0
  %970 = vmatpush2.msra.mxu0 %v156
  %971 = vmatprep.subr.mxu0 0.0
  %972 = vmatpush2.msra.mxu0 %v155
  %973 = vmatprep.subr.mxu0 0.0
  %974 = vmatpush2.msra.mxu0 %v154
  %975 = vmatprep.subr.mxu0 0.0
  %976 = vmatpush2.msra.mxu0 %v153
  %977 = vmatprep.subr.mxu0 0.0
  %978 = vmatpush2.msra.mxu0 %v152
  %979 = vmatprep.subr.mxu0 0.0
  %980 = vmatpush2.msra.mxu0 %v151
  %981 = vmatprep.subr.mxu0 0.0
  %982 = vmatpush2.msra.mxu0 %v150
  %983 = vmatprep.subr.mxu0 0.0
  %984 = vmatpush2.msra.mxu0 %v149
  %985 = vmatprep.subr.mxu0 0.0
  %986 = vmatpush2.msra.mxu0 %v148
  %987 = vmatprep.subr.mxu0 0.0
  %988 = vmatpush2.msra.mxu0 %v147
  %989 = vmatprep.subr.mxu0 0.0
  %990 = vmatpush2.msra.mxu0 %v146
  %991 = vmatprep.subr.mxu0 0.0
  %992 = vmatpush2.msra.mxu0 %v145
  %993 = vmatprep.subr.mxu0 0.0
  %994 = vmatpush2.msra.mxu0 %v144
  %995 = vmatprep.subr.mxu0 0.0
  %996 = vmatpush2.msra.mxu0 %v143
  %997 = vmatprep.subr.mxu0 0.0
  %998 = vmatpush2.msra.mxu0 %v142
  %999 = vmatprep.mubr.f32.mxu0 %v590
  %1000 = vmatmul.mubr.f32.gmra.mxu0 %v588
  %v1001 = vpop.f32.mrf.mxu0
  %v1002 = vadd.f32 %v932, %v1001
  %v1003 = vpop.f32.mrf.mxu0
  %1004 = vdwg.mxu0
  %1005 = vmatprep.subr.mxu0 0.0
  %1006 = vmatpush1.msra.mxu0 %v173
  %1007 = vmatprep.subr.mxu0 0.0
  %1008 = vmatpush1.msra.mxu0 %v172
  %1009 = vmatprep.subr.mxu0 0.0
  %1010 = vmatpush1.msra.mxu0 %v171
  %1011 = vmatprep.subr.mxu0 0.0
  %1012 = vmatpush1.msra.mxu0 %v170
  %1013 = vmatprep.subr.mxu0 0.0
  %1014 = vmatpush1.msra.mxu0 %v169
  %1015 = vmatprep.subr.mxu0 0.0
  %1016 = vmatpush1.msra.mxu0 %v168
  %1017 = vmatprep.subr.mxu0 0.0
  %1018 = vmatpush1.msra.mxu0 %v167
  %1019 = vmatprep.subr.mxu0 0.0
  %1020 = vmatpush1.msra.mxu0 %v166
  %1021 = vmatprep.subr.mxu0 0.0
  %1022 = vmatpush1.msra.mxu0 %v165
  %1023 = vmatprep.subr.mxu0 0.0
  %1024 = vmatpush1.msra.mxu0 %v164
  %1025 = vmatprep.subr.mxu0 0.0
  %1026 = vmatpush1.msra.mxu0 %v163
  %1027 = vmatprep.subr.mxu0 0.0
  %1028 = vmatpush1.msra.mxu0 %v162
  %1029 = vmatprep.subr.mxu0 0.0
  %1030 = vmatpush1.msra.mxu0 %v161
  %1031 = vmatprep.subr.mxu0 0.0
  %1032 = vmatpush1.msra.mxu0 %v160
  %1033 = vmatprep.subr.mxu0 0.0
  %1034 = vmatpush1.msra.mxu0 %v159
  %1035 = vmatprep.subr.mxu0 0.0
  %1036 = vmatpush1.msra.mxu0 %v158
  %1037 = vmatprep.subr.mxu0 0.0
  %1038 = vmatpush2.msra.mxu0 %v189
  %1039 = vmatprep.subr.mxu0 0.0
  %1040 = vmatpush2.msra.mxu0 %v188
  %1041 = vmatprep.subr.mxu0 0.0
  %1042 = vmatpush2.msra.mxu0 %v187
  %1043 = vmatprep.subr.mxu0 0.0
  %1044 = vmatpush2.msra.mxu0 %v186
  %1045 = vmatprep.subr.mxu0 0.0
  %1046 = vmatpush2.msra.mxu0 %v185
  %1047 = vmatprep.subr.mxu0 0.0
  %1048 = vmatpush2.msra.mxu0 %v184
  %1049 = vmatprep.subr.mxu0 0.0
  %1050 = vmatpush2.msra.mxu0 %v183
  %1051 = vmatprep.subr.mxu0 0.0
  %1052 = vmatpush2.msra.mxu0 %v182
  %1053 = vmatprep.subr.mxu0 0.0
  %1054 = vmatpush2.msra.mxu0 %v181
  %1055 = vmatprep.subr.mxu0 0.0
  %1056 = vmatpush2.msra.mxu0 %v180
  %1057 = vmatprep.subr.mxu0 0.0
  %1058 = vmatpush2.msra.mxu0 %v179
  %1059 = vmatprep.subr.mxu0 0.0
  %1060 = vmatpush2.msra.mxu0 %v178
  %1061 = vmatprep.subr.mxu0 0.0
  %1062 = vmatpush2.msra.mxu0 %v177
  %1063 = vmatprep.subr.mxu0 0.0
  %1064 = vmatpush2.msra.mxu0 %v176
  %1065 = vmatprep.subr.mxu0 0.0
  %1066 = vmatpush2.msra.mxu0 %v175
  %1067 = vmatprep.subr.mxu0 0.0
  %1068 = vmatpush2.msra.mxu0 %v174
  %1069 = vmatprep.mubr.f32.mxu0 %v606
  %1070 = vmatmul.mubr.f32.gmra.mxu0 %v598
  %v1071 = vpop.f32.mrf.mxu0
  %v1072 = vadd.f32 %v1002, %v1071
  %v1073 = vpop.f32.mrf.mxu0
  %1074 = vdwg.mxu0
  %1075 = vmatprep.subr.mxu0 0.0
  %1076 = vmatpush1.msra.mxu0 %v205
  %1077 = vmatprep.subr.mxu0 0.0
  %1078 = vmatpush1.msra.mxu0 %v204
  %1079 = vmatprep.subr.mxu0 0.0
  %1080 = vmatpush1.msra.mxu0 %v203
  %1081 = vmatprep.subr.mxu0 0.0
  %1082 = vmatpush1.msra.mxu0 %v202
  %1083 = vmatprep.subr.mxu0 0.0
  %1084 = vmatpush1.msra.mxu0 %v201
  %1085 = vmatprep.subr.mxu0 0.0
  %1086 = vmatpush1.msra.mxu0 %v200
  %1087 = vmatprep.subr.mxu0 0.0
  %1088 = vmatpush1.msra.mxu0 %v199
  %1089 = vmatprep.subr.mxu0 0.0
  %1090 = vmatpush1.msra.mxu0 %v198
  %1091 = vmatprep.subr.mxu0 0.0
  %1092 = vmatpush1.msra.mxu0 %v197
  %1093 = vmatprep.subr.mxu0 0.0
  %1094 = vmatpush1.msra.mxu0 %v196
  %1095 = vmatprep.subr.mxu0 0.0
  %1096 = vmatpush1.msra.mxu0 %v195
  %1097 = vmatprep.subr.mxu0 0.0
  %1098 = vmatpush1.msra.mxu0 %v194
  %1099 = vmatprep.subr.mxu0 0.0
  %1100 = vmatpush1.msra.mxu0 %v193
  %1101 = vmatprep.subr.mxu0 0.0
  %1102 = vmatpush1.msra.mxu0 %v192
  %1103 = vmatprep.subr.mxu0 0.0
  %1104 = vmatpush1.msra.mxu0 %v191
  %1105 = vmatprep.subr.mxu0 0.0
  %1106 = vmatpush1.msra.mxu0 %v190
  %1107 = vmatprep.subr.mxu0 0.0
  %1108 = vmatpush2.msra.mxu0 %v221
  %1109 = vmatprep.subr.mxu0 0.0
  %1110 = vmatpush2.msra.mxu0 %v220
  %1111 = vmatprep.subr.mxu0 0.0
  %1112 = vmatpush2.msra.mxu0 %v219
  %1113 = vmatprep.subr.mxu0 0.0
  %1114 = vmatpush2.msra.mxu0 %v218
  %1115 = vmatprep.subr.mxu0 0.0
  %1116 = vmatpush2.msra.mxu0 %v217
  %1117 = vmatprep.subr.mxu0 0.0
  %1118 = vmatpush2.msra.mxu0 %v216
  %1119 = vmatprep.subr.mxu0 0.0
  %1120 = vmatpush2.msra.mxu0 %v215
  %1121 = vmatprep.subr.mxu0 0.0
  %1122 = vmatpush2.msra.mxu0 %v214
  %1123 = vmatprep.subr.mxu0 0.0
  %1124 = vmatpush2.msra.mxu0 %v213
  %1125 = vmatprep.subr.mxu0 0.0
  %1126 = vmatpush2.msra.mxu0 %v212
  %1127 = vmatprep.subr.mxu0 0.0
  %1128 = vmatpush2.msra.mxu0 %v211
  %1129 = vmatprep.subr.mxu0 0.0
  %1130 = vmatpush2.msra.mxu0 %v210
  %1131 = vmatprep.subr.mxu0 0.0
  %1132 = vmatpush2.msra.mxu0 %v209
  %1133 = vmatprep.subr.mxu0 0.0
  %1134 = vmatpush2.msra.mxu0 %v208
  %1135 = vmatprep.subr.mxu0 0.0
  %1136 = vmatpush2.msra.mxu0 %v207
  %1137 = vmatprep.subr.mxu0 0.0
  %1138 = vmatpush2.msra.mxu0 %v206
  %1139 = vmatprep.mubr.f32.mxu0 %v607
  %1140 = vmatmul.mubr.f32.gmra.mxu0 %v605
  %v1141 = vpop.f32.mrf.mxu0
  %v1142 = vadd.f32 %v1072, %v1141
  %v1143 = vpop.f32.mrf.mxu0
  %1144 = vdwg.mxu0
  %1145 = vmatprep.subr.mxu0 0.0
  %1146 = vmatpush1.msra.mxu0 %v237
  %1147 = vmatprep.subr.mxu0 0.0
  %1148 = vmatpush1.msra.mxu0 %v236
  %1149 = vmatprep.subr.mxu0 0.0
  %1150 = vmatpush1.msra.mxu0 %v235
  %1151 = vmatprep.subr.mxu0 0.0
  %1152 = vmatpush1.msra.mxu0 %v234
  %1153 = vmatprep.subr.mxu0 0.0
  %1154 = vmatpush1.msra.mxu0 %v233
  %1155 = vmatprep.subr.mxu0 0.0
  %1156 = vmatpush1.msra.mxu0 %v232
  %1157 = vmatprep.subr.mxu0 0.0
  %1158 = vmatpush1.msra.mxu0 %v231
  %1159 = vmatprep.subr.mxu0 0.0
  %1160 = vmatpush1.msra.mxu0 %v230
  %1161 = vmatprep.subr.mxu0 0.0
  %1162 = vmatpush1.msra.mxu0 %v229
  %1163 = vmatprep.subr.mxu0 0.0
  %1164 = vmatpush1.msra.mxu0 %v228
  %1165 = vmatprep.subr.mxu0 0.0
  %1166 = vmatpush1.msra.mxu0 %v227
  %1167 = vmatprep.subr.mxu0 0.0
  %1168 = vmatpush1.msra.mxu0 %v226
  %1169 = vmatprep.subr.mxu0 0.0
  %1170 = vmatpush1.msra.mxu0 %v225
  %1171 = vmatprep.subr.mxu0 0.0
  %1172 = vmatpush1.msra.mxu0 %v224
  %1173 = vmatprep.subr.mxu0 0.0
  %1174 = vmatpush1.msra.mxu0 %v223
  %1175 = vmatprep.subr.mxu0 0.0
  %1176 = vmatpush1.msra.mxu0 %v222
  %1177 = vmatprep.subr.mxu0 0.0
  %1178 = vmatpush2.msra.mxu0 %v253
  %1179 = vmatprep.subr.mxu0 0.0
  %1180 = vmatpush2.msra.mxu0 %v252
  %1181 = vmatprep.subr.mxu0 0.0
  %1182 = vmatpush2.msra.mxu0 %v251
  %1183 = vmatprep.subr.mxu0 0.0
  %1184 = vmatpush2.msra.mxu0 %v250
  %1185 = vmatprep.subr.mxu0 0.0
  %1186 = vmatpush2.msra.mxu0 %v249
  %1187 = vmatprep.subr.mxu0 0.0
  %1188 = vmatpush2.msra.mxu0 %v248
  %1189 = vmatprep.subr.mxu0 0.0
  %1190 = vmatpush2.msra.mxu0 %v247
  %1191 = vmatprep.subr.mxu0 0.0
  %1192 = vmatpush2.msra.mxu0 %v246
  %1193 = vmatprep.subr.mxu0 0.0
  %1194 = vmatpush2.msra.mxu0 %v245
  %1195 = vmatprep.subr.mxu0 0.0
  %1196 = vmatpush2.msra.mxu0 %v244
  %1197 = vmatprep.subr.mxu0 0.0
  %1198 = vmatpush2.msra.mxu0 %v243
  %1199 = vmatprep.subr.mxu0 0.0
  %1200 = vmatpush2.msra.mxu0 %v242
  %1201 = vmatprep.subr.mxu0 0.0
  %1202 = vmatpush2.msra.mxu0 %v241
  %1203 = vmatprep.subr.mxu0 0.0
  %1204 = vmatpush2.msra.mxu0 %v240
  %1205 = vmatprep.subr.mxu0 0.0
  %1206 = vmatpush2.msra.mxu0 %v239
  %1207 = vmatprep.subr.mxu0 0.0
  %1208 = vmatpush2.msra.mxu0 %v238
  %1209 = vmatprep.mubr.f32.mxu0 %v623
  %1210 = vmatmul.mubr.f32.gmra.mxu0 %v615
  %v1211 = vpop.f32.mrf.mxu0
  %v1212 = vadd.f32 %v1142, %v1211
  %v1213 = vpop.f32.mrf.mxu0
  %1214 = vdwg.mxu0
  %1215 = vmatprep.subr.mxu0 0.0
  %1216 = vmatpush1.msra.mxu0 %v269
  %1217 = vmatprep.subr.mxu0 0.0
  %1218 = vmatpush1.msra.mxu0 %v268
  %1219 = vmatprep.subr.mxu0 0.0
  %1220 = vmatpush1.msra.mxu0 %v267
  %1221 = vmatprep.subr.mxu0 0.0
  %1222 = vmatpush1.msra.mxu0 %v266
  %1223 = vmatprep.subr.mxu0 0.0
  %1224 = vmatpush1.msra.mxu0 %v265
  %1225 = vmatprep.subr.mxu0 0.0
  %1226 = vmatpush1.msra.mxu0 %v264
  %1227 = vmatprep.subr.mxu0 0.0
  %1228 = vmatpush1.msra.mxu0 %v263
  %1229 = vmatprep.subr.mxu0 0.0
  %1230 = vmatpush1.msra.mxu0 %v262
  %1231 = vmatprep.subr.mxu0 0.0
  %1232 = vmatpush1.msra.mxu0 %v261
  %1233 = vmatprep.subr.mxu0 0.0
  %1234 = vmatpush1.msra.mxu0 %v260
  %1235 = vmatprep.subr.mxu0 0.0
  %1236 = vmatpush1.msra.mxu0 %v259
  %1237 = vmatprep.subr.mxu0 0.0
  %1238 = vmatpush1.msra.mxu0 %v258
  %1239 = vmatprep.subr.mxu0 0.0
  %1240 = vmatpush1.msra.mxu0 %v257
  %1241 = vmatprep.subr.mxu0 0.0
  %1242 = vmatpush1.msra.mxu0 %v256
  %1243 = vmatprep.subr.mxu0 0.0
  %1244 = vmatpush1.msra.mxu0 %v255
  %1245 = vmatprep.subr.mxu0 0.0
  %1246 = vmatpush1.msra.mxu0 %v254
  %1247 = vmatprep.subr.mxu0 0.0
  %1248 = vmatpush2.msra.mxu0 %v285
  %1249 = vmatprep.subr.mxu0 0.0
  %1250 = vmatpush2.msra.mxu0 %v284
  %1251 = vmatprep.subr.mxu0 0.0
  %1252 = vmatpush2.msra.mxu0 %v283
  %1253 = vmatprep.subr.mxu0 0.0
  %1254 = vmatpush2.msra.mxu0 %v282
  %1255 = vmatprep.subr.mxu0 0.0
  %1256 = vmatpush2.msra.mxu0 %v281
  %1257 = vmatprep.subr.mxu0 0.0
  %1258 = vmatpush2.msra.mxu0 %v280
  %1259 = vmatprep.subr.mxu0 0.0
  %1260 = vmatpush2.msra.mxu0 %v279
  %1261 = vmatprep.subr.mxu0 0.0
  %1262 = vmatpush2.msra.mxu0 %v278
  %1263 = vmatprep.subr.mxu0 0.0
  %1264 = vmatpush2.msra.mxu0 %v277
  %1265 = vmatprep.subr.mxu0 0.0
  %1266 = vmatpush2.msra.mxu0 %v276
  %1267 = vmatprep.subr.mxu0 0.0
  %1268 = vmatpush2.msra.mxu0 %v275
  %1269 = vmatprep.subr.mxu0 0.0
  %1270 = vmatpush2.msra.mxu0 %v274
  %1271 = vmatprep.subr.mxu0 0.0
  %1272 = vmatpush2.msra.mxu0 %v273
  %1273 = vmatprep.subr.mxu0 0.0
  %1274 = vmatpush2.msra.mxu0 %v272
  %1275 = vmatprep.subr.mxu0 0.0
  %1276 = vmatpush2.msra.mxu0 %v271
  %1277 = vmatprep.subr.mxu0 0.0
  %1278 = vmatpush2.msra.mxu0 %v270
  %1279 = vmatprep.mubr.f32.mxu0 %v624
  %1280 = vmatmul.mubr.f32.gmra.mxu0 %v622
  %v1281 = vpop.f32.mrf.mxu0
  %v1282 = vadd.f32 %v1212, %v1281
  %v1283 = vpop.f32.mrf.mxu0
  %1284 = vdwg.mxu0
  %1285 = vmatprep.subr.mxu0 0.0
  %1286 = vmatpush1.msra.mxu0 %v301
  %1287 = vmatprep.subr.mxu0 0.0
  %1288 = vmatpush1.msra.mxu0 %v300
  %1289 = vmatprep.subr.mxu0 0.0
  %1290 = vmatpush1.msra.mxu0 %v299
  %1291 = vmatprep.subr.mxu0 0.0
  %1292 = vmatpush1.msra.mxu0 %v298
  %1293 = vmatprep.subr.mxu0 0.0
  %1294 = vmatpush1.msra.mxu0 %v297
  %1295 = vmatprep.subr.mxu0 0.0
  %1296 = vmatpush1.msra.mxu0 %v296
  %1297 = vmatprep.subr.mxu0 0.0
  %1298 = vmatpush1.msra.mxu0 %v295
  %1299 = vmatprep.subr.mxu0 0.0
  %1300 = vmatpush1.msra.mxu0 %v294
  %1301 = vmatprep.subr.mxu0 0.0
  %1302 = vmatpush1.msra.mxu0 %v293
  %1303 = vmatprep.subr.mxu0 0.0
  %1304 = vmatpush1.msra.mxu0 %v292
  %1305 = vmatprep.subr.mxu0 0.0
  %1306 = vmatpush1.msra.mxu0 %v291
  %1307 = vmatprep.subr.mxu0 0.0
  %1308 = vmatpush1.msra.mxu0 %v290
  %1309 = vmatprep.subr.mxu0 0.0
  %1310 = vmatpush1.msra.mxu0 %v289
  %1311 = vmatprep.subr.mxu0 0.0
  %1312 = vmatpush1.msra.mxu0 %v288
  %1313 = vmatprep.subr.mxu0 0.0
  %1314 = vmatpush1.msra.mxu0 %v287
  %1315 = vmatprep.subr.mxu0 0.0
  %1316 = vmatpush1.msra.mxu0 %v286
  %1317 = vmatprep.subr.mxu0 0.0
  %1318 = vmatpush2.msra.mxu0 %v317
  %1319 = vmatprep.subr.mxu0 0.0
  %1320 = vmatpush2.msra.mxu0 %v316
  %1321 = vmatprep.subr.mxu0 0.0
  %1322 = vmatpush2.msra.mxu0 %v315
  %1323 = vmatprep.subr.mxu0 0.0
  %1324 = vmatpush2.msra.mxu0 %v314
  %1325 = vmatprep.subr.mxu0 0.0
  %1326 = vmatpush2.msra.mxu0 %v313
  %1327 = vmatprep.subr.mxu0 0.0
  %1328 = vmatpush2.msra.mxu0 %v312
  %1329 = vmatprep.subr.mxu0 0.0
  %1330 = vmatpush2.msra.mxu0 %v311
  %1331 = vmatprep.subr.mxu0 0.0
  %1332 = vmatpush2.msra.mxu0 %v310
  %1333 = vmatprep.subr.mxu0 0.0
  %1334 = vmatpush2.msra.mxu0 %v309
  %1335 = vmatprep.subr.mxu0 0.0
  %1336 = vmatpush2.msra.mxu0 %v308
  %1337 = vmatprep.subr.mxu0 0.0
  %1338 = vmatpush2.msra.mxu0 %v307
  %1339 = vmatprep.subr.mxu0 0.0
  %1340 = vmatpush2.msra.mxu0 %v306
  %1341 = vmatprep.subr.mxu0 0.0
  %1342 = vmatpush2.msra.mxu0 %v305
  %1343 = vmatprep.subr.mxu0 0.0
  %1344 = vmatpush2.msra.mxu0 %v304
  %1345 = vmatprep.subr.mxu0 0.0
  %1346 = vmatpush2.msra.mxu0 %v303
  %1347 = vmatprep.subr.mxu0 0.0
  %1348 = vmatpush2.msra.mxu0 %v302
  %1349 = vmatprep.mubr.f32.mxu0 %v640
  %1350 = vmatmul.mubr.f32.gmra.mxu0 %v632
  %v1351 = vpop.f32.mrf.mxu0
  %v1352 = vadd.f32 %v1282, %v1351
  %v1353 = vpop.f32.mrf.mxu0
  %1354 = vdwg.mxu0
  %1355 = vmatprep.subr.mxu0 0.0
  %1356 = vmatpush1.msra.mxu0 %v333
  %1357 = vmatprep.subr.mxu0 0.0
  %1358 = vmatpush1.msra.mxu0 %v332
  %1359 = vmatprep.subr.mxu0 0.0
  %1360 = vmatpush1.msra.mxu0 %v331
  %1361 = vmatprep.subr.mxu0 0.0
  %1362 = vmatpush1.msra.mxu0 %v330
  %1363 = vmatprep.subr.mxu0 0.0
  %1364 = vmatpush1.msra.mxu0 %v329
  %1365 = vmatprep.subr.mxu0 0.0
  %1366 = vmatpush1.msra.mxu0 %v328
  %1367 = vmatprep.subr.mxu0 0.0
  %1368 = vmatpush1.msra.mxu0 %v327
  %1369 = vmatprep.subr.mxu0 0.0
  %1370 = vmatpush1.msra.mxu0 %v326
  %1371 = vmatprep.subr.mxu0 0.0
  %1372 = vmatpush1.msra.mxu0 %v325
  %1373 = vmatprep.subr.mxu0 0.0
  %1374 = vmatpush1.msra.mxu0 %v324
  %1375 = vmatprep.subr.mxu0 0.0
  %1376 = vmatpush1.msra.mxu0 %v323
  %1377 = vmatprep.subr.mxu0 0.0
  %1378 = vmatpush1.msra.mxu0 %v322
  %1379 = vmatprep.subr.mxu0 0.0
  %1380 = vmatpush1.msra.mxu0 %v321
  %1381 = vmatprep.subr.mxu0 0.0
  %1382 = vmatpush1.msra.mxu0 %v320
  %1383 = vmatprep.subr.mxu0 0.0
  %1384 = vmatpush1.msra.mxu0 %v319
  %1385 = vmatprep.subr.mxu0 0.0
  %1386 = vmatpush1.msra.mxu0 %v318
  %1387 = vmatprep.subr.mxu0 0.0
  %1388 = vmatpush2.msra.mxu0 %v349
  %1389 = vmatprep.subr.mxu0 0.0
  %1390 = vmatpush2.msra.mxu0 %v348
  %1391 = vmatprep.subr.mxu0 0.0
  %1392 = vmatpush2.msra.mxu0 %v347
  %1393 = vmatprep.subr.mxu0 0.0
  %1394 = vmatpush2.msra.mxu0 %v346
  %1395 = vmatprep.subr.mxu0 0.0
  %1396 = vmatpush2.msra.mxu0 %v345
  %1397 = vmatprep.subr.mxu0 0.0
  %1398 = vmatpush2.msra.mxu0 %v344
  %1399 = vmatprep.subr.mxu0 0.0
  %1400 = vmatpush2.msra.mxu0 %v343
  %1401 = vmatprep.subr.mxu0 0.0
  %1402 = vmatpush2.msra.mxu0 %v342
  %1403 = vmatprep.subr.mxu0 0.0
  %1404 = vmatpush2.msra.mxu0 %v341
  %1405 = vmatprep.subr.mxu0 0.0
  %1406 = vmatpush2.msra.mxu0 %v340
  %1407 = vmatprep.subr.mxu0 0.0
  %1408 = vmatpush2.msra.mxu0 %v339
  %1409 = vmatprep.subr.mxu0 0.0
  %1410 = vmatpush2.msra.mxu0 %v338
  %1411 = vmatprep.subr.mxu0 0.0
  %1412 = vmatpush2.msra.mxu0 %v337
  %1413 = vmatprep.subr.mxu0 0.0
  %1414 = vmatpush2.msra.mxu0 %v336
  %1415 = vmatprep.subr.mxu0 0.0
  %1416 = vmatpush2.msra.mxu0 %v335
  %1417 = vmatprep.subr.mxu0 0.0
  %1418 = vmatpush2.msra.mxu0 %v334
  %1419 = vmatprep.mubr.f32.mxu0 %v641
  %1420 = vmatmul.mubr.f32.gmra.mxu0 %v639
  %v1421 = vpop.f32.mrf.mxu0
  %v1422 = vadd.f32 %v1352, %v1421
  %v1423 = vpop.f32.mrf.mxu0
  %1424 = vdwg.mxu0
  %1425 = vmatprep.subr.mxu0 0.0
  %1426 = vmatpush1.msra.mxu0 %v365
  %1427 = vmatprep.subr.mxu0 0.0
  %1428 = vmatpush1.msra.mxu0 %v364
  %1429 = vmatprep.subr.mxu0 0.0
  %1430 = vmatpush1.msra.mxu0 %v363
  %1431 = vmatprep.subr.mxu0 0.0
  %1432 = vmatpush1.msra.mxu0 %v362
  %1433 = vmatprep.subr.mxu0 0.0
  %1434 = vmatpush1.msra.mxu0 %v361
  %1435 = vmatprep.subr.mxu0 0.0
  %1436 = vmatpush1.msra.mxu0 %v360
  %1437 = vmatprep.subr.mxu0 0.0
  %1438 = vmatpush1.msra.mxu0 %v359
  %1439 = vmatprep.subr.mxu0 0.0
  %1440 = vmatpush1.msra.mxu0 %v358
  %1441 = vmatprep.subr.mxu0 0.0
  %1442 = vmatpush1.msra.mxu0 %v357
  %1443 = vmatprep.subr.mxu0 0.0
  %1444 = vmatpush1.msra.mxu0 %v356
  %1445 = vmatprep.subr.mxu0 0.0
  %1446 = vmatpush1.msra.mxu0 %v355
  %1447 = vmatprep.subr.mxu0 0.0
  %1448 = vmatpush1.msra.mxu0 %v354
  %1449 = vmatprep.subr.mxu0 0.0
  %1450 = vmatpush1.msra.mxu0 %v353
  %1451 = vmatprep.subr.mxu0 0.0
  %1452 = vmatpush1.msra.mxu0 %v352
  %1453 = vmatprep.subr.mxu0 0.0
  %1454 = vmatpush1.msra.mxu0 %v351
  %1455 = vmatprep.subr.mxu0 0.0
  %1456 = vmatpush1.msra.mxu0 %v350
  %1457 = vmatprep.subr.mxu0 0.0
  %1458 = vmatpush2.msra.mxu0 %v381
  %1459 = vmatprep.subr.mxu0 0.0
  %1460 = vmatpush2.msra.mxu0 %v380
  %1461 = vmatprep.subr.mxu0 0.0
  %1462 = vmatpush2.msra.mxu0 %v379
  %1463 = vmatprep.subr.mxu0 0.0
  %1464 = vmatpush2.msra.mxu0 %v378
  %1465 = vmatprep.subr.mxu0 0.0
  %1466 = vmatpush2.msra.mxu0 %v377
  %1467 = vmatprep.subr.mxu0 0.0
  %1468 = vmatpush2.msra.mxu0 %v376
  %1469 = vmatprep.subr.mxu0 0.0
  %1470 = vmatpush2.msra.mxu0 %v375
  %1471 = vmatprep.subr.mxu0 0.0
  %1472 = vmatpush2.msra.mxu0 %v374
  %1473 = vmatprep.subr.mxu0 0.0
  %1474 = vmatpush2.msra.mxu0 %v373
  %1475 = vmatprep.subr.mxu0 0.0
  %1476 = vmatpush2.msra.mxu0 %v372
  %1477 = vmatprep.subr.mxu0 0.0
  %1478 = vmatpush2.msra.mxu0 %v371
  %1479 = vmatprep.subr.mxu0 0.0
  %1480 = vmatpush2.msra.mxu0 %v370
  %1481 = vmatprep.subr.mxu0 0.0
  %1482 = vmatpush2.msra.mxu0 %v369
  %1483 = vmatprep.subr.mxu0 0.0
  %1484 = vmatpush2.msra.mxu0 %v368
  %1485 = vmatprep.subr.mxu0 0.0
  %1486 = vmatpush2.msra.mxu0 %v367
  %1487 = vmatprep.subr.mxu0 0.0
  %1488 = vmatpush2.msra.mxu0 %v366
  %1489 = vmatprep.mubr.f32.mxu0 %v657
  %1490 = vmatmul.mubr.f32.gmra.mxu0 %v649
  %v1491 = vpop.f32.mrf.mxu0
  %v1492 = vadd.f32 %v1422, %v1491
  %v1493 = vpop.f32.mrf.mxu0
  %1494 = vdwg.mxu0
  %1495 = vmatprep.subr.mxu0 0.0
  %1496 = vmatpush1.msra.mxu0 %v397
  %1497 = vmatprep.subr.mxu0 0.0
  %1498 = vmatpush1.msra.mxu0 %v396
  %1499 = vmatprep.subr.mxu0 0.0
  %1500 = vmatpush1.msra.mxu0 %v395
  %1501 = vmatprep.subr.mxu0 0.0
  %1502 = vmatpush1.msra.mxu0 %v394
  %1503 = vmatprep.subr.mxu0 0.0
  %1504 = vmatpush1.msra.mxu0 %v393
  %1505 = vmatprep.subr.mxu0 0.0
  %1506 = vmatpush1.msra.mxu0 %v392
  %1507 = vmatprep.subr.mxu0 0.0
  %1508 = vmatpush1.msra.mxu0 %v391
  %1509 = vmatprep.subr.mxu0 0.0
  %1510 = vmatpush1.msra.mxu0 %v390
  %1511 = vmatprep.subr.mxu0 0.0
  %1512 = vmatpush1.msra.mxu0 %v389
  %1513 = vmatprep.subr.mxu0 0.0
  %1514 = vmatpush1.msra.mxu0 %v388
  %1515 = vmatprep.subr.mxu0 0.0
  %1516 = vmatpush1.msra.mxu0 %v387
  %1517 = vmatprep.subr.mxu0 0.0
  %1518 = vmatpush1.msra.mxu0 %v386
  %1519 = vmatprep.subr.mxu0 0.0
  %1520 = vmatpush1.msra.mxu0 %v385
  %1521 = vmatprep.subr.mxu0 0.0
  %1522 = vmatpush1.msra.mxu0 %v384
  %1523 = vmatprep.subr.mxu0 0.0
  %1524 = vmatpush1.msra.mxu0 %v383
  %1525 = vmatprep.subr.mxu0 0.0
  %1526 = vmatpush1.msra.mxu0 %v382
  %1527 = vmatprep.subr.mxu0 0.0
  %1528 = vmatpush2.msra.mxu0 %v413
  %1529 = vmatprep.subr.mxu0 0.0
  %1530 = vmatpush2.msra.mxu0 %v412
  %1531 = vmatprep.subr.mxu0 0.0
  %1532 = vmatpush2.msra.mxu0 %v411
  %1533 = vmatprep.subr.mxu0 0.0
  %1534 = vmatpush2.msra.mxu0 %v410
  %1535 = vmatprep.subr.mxu0 0.0
  %1536 = vmatpush2.msra.mxu0 %v409
  %1537 = vmatprep.subr.mxu0 0.0
  %1538 = vmatpush2.msra.mxu0 %v408
  %1539 = vmatprep.subr.mxu0 0.0
  %1540 = vmatpush2.msra.mxu0 %v407
  %1541 = vmatprep.subr.mxu0 0.0
  %1542 = vmatpush2.msra.mxu0 %v406
  %1543 = vmatprep.subr.mxu0 0.0
  %1544 = vmatpush2.msra.mxu0 %v405
  %1545 = vmatprep.subr.mxu0 0.0
  %1546 = vmatpush2.msra.mxu0 %v404
  %1547 = vmatprep.subr.mxu0 0.0
  %1548 = vmatpush2.msra.mxu0 %v403
  %1549 = vmatprep.subr.mxu0 0.0
  %1550 = vmatpush2.msra.mxu0 %v402
  %1551 = vmatprep.subr.mxu0 0.0
  %1552 = vmatpush2.msra.mxu0 %v401
  %1553 = vmatprep.subr.mxu0 0.0
  %1554 = vmatpush2.msra.mxu0 %v400
  %1555 = vmatprep.subr.mxu0 0.0
  %1556 = vmatpush2.msra.mxu0 %v399
  %1557 = vmatprep.subr.mxu0 0.0
  %1558 = vmatpush2.msra.mxu0 %v398
  %1559 = vmatprep.mubr.f32.mxu0 %v658
  %1560 = vmatmul.mubr.f32.gmra.mxu0 %v656
  %v1561 = vpop.f32.mrf.mxu0
  %v1562 = vadd.f32 %v1492, %v1561
  %v1563 = vpop.f32.mrf.mxu0
  %1564 = vdwg.mxu0
  %1565 = vmatprep.subr.mxu0 0.0
  %1566 = vmatpush1.msra.mxu0 %v429
  %1567 = vmatprep.subr.mxu0 0.0
  %1568 = vmatpush1.msra.mxu0 %v428
  %1569 = vmatprep.subr.mxu0 0.0
  %1570 = vmatpush1.msra.mxu0 %v427
  %1571 = vmatprep.subr.mxu0 0.0
  %1572 = vmatpush1.msra.mxu0 %v426
  %1573 = vmatprep.subr.mxu0 0.0
  %1574 = vmatpush1.msra.mxu0 %v425
  %1575 = vmatprep.subr.mxu0 0.0
  %1576 = vmatpush1.msra.mxu0 %v424
  %1577 = vmatprep.subr.mxu0 0.0
  %1578 = vmatpush1.msra.mxu0 %v423
  %1579 = vmatprep.subr.mxu0 0.0
  %1580 = vmatpush1.msra.mxu0 %v422
  %1581 = vmatprep.subr.mxu0 0.0
  %1582 = vmatpush1.msra.mxu0 %v421
  %1583 = vmatprep.subr.mxu0 0.0
  %1584 = vmatpush1.msra.mxu0 %v420
  %1585 = vmatprep.subr.mxu0 0.0
  %1586 = vmatpush1.msra.mxu0 %v419
  %1587 = vmatprep.subr.mxu0 0.0
  %1588 = vmatpush1.msra.mxu0 %v418
  %1589 = vmatprep.subr.mxu0 0.0
  %1590 = vmatpush1.msra.mxu0 %v417
  %1591 = vmatprep.subr.mxu0 0.0
  %1592 = vmatpush1.msra.mxu0 %v416
  %1593 = vmatprep.subr.mxu0 0.0
  %1594 = vmatpush1.msra.mxu0 %v415
  %1595 = vmatprep.subr.mxu0 0.0
  %1596 = vmatpush1.msra.mxu0 %v414
  %1597 = vmatprep.subr.mxu0 0.0
  %1598 = vmatpush2.msra.mxu0 %v445
  %1599 = vmatprep.subr.mxu0 0.0
  %1600 = vmatpush2.msra.mxu0 %v444
  %1601 = vmatprep.subr.mxu0 0.0
  %1602 = vmatpush2.msra.mxu0 %v443
  %1603 = vmatprep.subr.mxu0 0.0
  %1604 = vmatpush2.msra.mxu0 %v442
  %1605 = vmatprep.subr.mxu0 0.0
  %1606 = vmatpush2.msra.mxu0 %v441
  %1607 = vmatprep.subr.mxu0 0.0
  %1608 = vmatpush2.msra.mxu0 %v440
  %1609 = vmatprep.subr.mxu0 0.0
  %1610 = vmatpush2.msra.mxu0 %v439
  %1611 = vmatprep.subr.mxu0 0.0
  %1612 = vmatpush2.msra.mxu0 %v438
  %1613 = vmatprep.subr.mxu0 0.0
  %1614 = vmatpush2.msra.mxu0 %v437
  %1615 = vmatprep.subr.mxu0 0.0
  %1616 = vmatpush2.msra.mxu0 %v436
  %1617 = vmatprep.subr.mxu0 0.0
  %1618 = vmatpush2.msra.mxu0 %v435
  %1619 = vmatprep.subr.mxu0 0.0
  %1620 = vmatpush2.msra.mxu0 %v434
  %1621 = vmatprep.subr.mxu0 0.0
  %1622 = vmatpush2.msra.mxu0 %v433
  %1623 = vmatprep.subr.mxu0 0.0
  %1624 = vmatpush2.msra.mxu0 %v432
  %1625 = vmatprep.subr.mxu0 0.0
  %1626 = vmatpush2.msra.mxu0 %v431
  %1627 = vmatprep.subr.mxu0 0.0
  %1628 = vmatpush2.msra.mxu0 %v430
  %1629 = vmatprep.mubr.f32.mxu0 %v674
  %1630 = vmatmul.mubr.f32.gmra.mxu0 %v666
  %v1631 = vpop.f32.mrf.mxu0
  %v1632 = vadd.f32 %v1562, %v1631
  %v1633 = vpop.f32.mrf.mxu0
  %1634 = vdwg.mxu0
  %1635 = vmatprep.subr.mxu0 0.0
  %1636 = vmatpush1.msra.mxu0 %v461
  %1637 = vmatprep.subr.mxu0 0.0
  %1638 = vmatpush1.msra.mxu0 %v460
  %1639 = vmatprep.subr.mxu0 0.0
  %1640 = vmatpush1.msra.mxu0 %v459
  %1641 = vmatprep.subr.mxu0 0.0
  %1642 = vmatpush1.msra.mxu0 %v458
  %1643 = vmatprep.subr.mxu0 0.0
  %1644 = vmatpush1.msra.mxu0 %v457
  %1645 = vmatprep.subr.mxu0 0.0
  %1646 = vmatpush1.msra.mxu0 %v456
  %1647 = vmatprep.subr.mxu0 0.0
  %1648 = vmatpush1.msra.mxu0 %v455
  %1649 = vmatprep.subr.mxu0 0.0
  %1650 = vmatpush1.msra.mxu0 %v454
  %1651 = vmatprep.subr.mxu0 0.0
  %1652 = vmatpush1.msra.mxu0 %v453
  %1653 = vmatprep.subr.mxu0 0.0
  %1654 = vmatpush1.msra.mxu0 %v452
  %1655 = vmatprep.subr.mxu0 0.0
  %1656 = vmatpush1.msra.mxu0 %v451
  %1657 = vmatprep.subr.mxu0 0.0
  %1658 = vmatpush1.msra.mxu0 %v450
  %1659 = vmatprep.subr.mxu0 0.0
  %1660 = vmatpush1.msra.mxu0 %v449
  %1661 = vmatprep.subr.mxu0 0.0
  %1662 = vmatpush1.msra.mxu0 %v448
  %1663 = vmatprep.subr.mxu0 0.0
  %1664 = vmatpush1.msra.mxu0 %v447
  %1665 = vmatprep.subr.mxu0 0.0
  %1666 = vmatpush1.msra.mxu0 %v446
  %1667 = vmatprep.subr.mxu0 0.0
  %1668 = vmatpush2.msra.mxu0 %v477
  %1669 = vmatprep.subr.mxu0 0.0
  %1670 = vmatpush2.msra.mxu0 %v476
  %1671 = vmatprep.subr.mxu0 0.0
  %1672 = vmatpush2.msra.mxu0 %v475
  %1673 = vmatprep.subr.mxu0 0.0
  %1674 = vmatpush2.msra.mxu0 %v474
  %1675 = vmatprep.subr.mxu0 0.0
  %1676 = vmatpush2.msra.mxu0 %v473
  %1677 = vmatprep.subr.mxu0 0.0
  %1678 = vmatpush2.msra.mxu0 %v472
  %1679 = vmatprep.subr.mxu0 0.0
  %1680 = vmatpush2.msra.mxu0 %v471
  %1681 = vmatprep.subr.mxu0 0.0
  %1682 = vmatpush2.msra.mxu0 %v470
  %1683 = vmatprep.subr.mxu0 0.0
  %1684 = vmatpush2.msra.mxu0 %v469
  %1685 = vmatprep.subr.mxu0 0.0
  %1686 = vmatpush2.msra.mxu0 %v468
  %1687 = vmatprep.subr.mxu0 0.0
  %1688 = vmatpush2.msra.mxu0 %v467
  %1689 = vmatprep.subr.mxu0 0.0
  %1690 = vmatpush2.msra.mxu0 %v466
  %1691 = vmatprep.subr.mxu0 0.0
  %1692 = vmatpush2.msra.mxu0 %v465
  %1693 = vmatprep.subr.mxu0 0.0
  %1694 = vmatpush2.msra.mxu0 %v464
  %1695 = vmatprep.subr.mxu0 0.0
  %1696 = vmatpush2.msra.mxu0 %v463
  %1697 = vmatprep.subr.mxu0 0.0
  %1698 = vmatpush2.msra.mxu0 %v462
  %1699 = vmatprep.mubr.f32.mxu0 %v675
  %1700 = vmatmul.mubr.f32.gmra.mxu0 %v673
  %v1701 = vpop.f32.mrf.mxu0
  %v1702 = vadd.f32 %v1632, %v1701
  %v1703 = vpop.f32.mrf.mxu0
  %1704 = vdwg.mxu0
  %1705 = vmatprep.subr.mxu0 0.0
  %1706 = vmatpush1.msra.mxu0 %v493
  %1707 = vmatprep.subr.mxu0 0.0
  %1708 = vmatpush1.msra.mxu0 %v492
  %1709 = vmatprep.subr.mxu0 0.0
  %1710 = vmatpush1.msra.mxu0 %v491
  %1711 = vmatprep.subr.mxu0 0.0
  %1712 = vmatpush1.msra.mxu0 %v490
  %1713 = vmatprep.subr.mxu0 0.0
  %1714 = vmatpush1.msra.mxu0 %v489
  %1715 = vmatprep.subr.mxu0 0.0
  %1716 = vmatpush1.msra.mxu0 %v488
  %1717 = vmatprep.subr.mxu0 0.0
  %1718 = vmatpush1.msra.mxu0 %v487
  %1719 = vmatprep.subr.mxu0 0.0
  %1720 = vmatpush1.msra.mxu0 %v486
  %1721 = vmatprep.subr.mxu0 0.0
  %1722 = vmatpush1.msra.mxu0 %v485
  %1723 = vmatprep.subr.mxu0 0.0
  %1724 = vmatpush1.msra.mxu0 %v484
  %1725 = vmatprep.subr.mxu0 0.0
  %1726 = vmatpush1.msra.mxu0 %v483
  %1727 = vmatprep.subr.mxu0 0.0
  %1728 = vmatpush1.msra.mxu0 %v482
  %1729 = vmatprep.subr.mxu0 0.0
  %1730 = vmatpush1.msra.mxu0 %v481
  %1731 = vmatprep.subr.mxu0 0.0
  %1732 = vmatpush1.msra.mxu0 %v480
  %1733 = vmatprep.subr.mxu0 0.0
  %1734 = vmatpush1.msra.mxu0 %v479
  %1735 = vmatprep.subr.mxu0 0.0
  %1736 = vmatpush1.msra.mxu0 %v478
  %1737 = vmatprep.subr.mxu0 0.0
  %1738 = vmatpush2.msra.mxu0 %v509
  %1739 = vmatprep.subr.mxu0 0.0
  %1740 = vmatpush2.msra.mxu0 %v508
  %1741 = vmatprep.subr.mxu0 0.0
  %1742 = vmatpush2.msra.mxu0 %v507
  %1743 = vmatprep.subr.mxu0 0.0
  %1744 = vmatpush2.msra.mxu0 %v506
  %1745 = vmatprep.subr.mxu0 0.0
  %1746 = vmatpush2.msra.mxu0 %v505
  %1747 = vmatprep.subr.mxu0 0.0
  %1748 = vmatpush2.msra.mxu0 %v504
  %1749 = vmatprep.subr.mxu0 0.0
  %1750 = vmatpush2.msra.mxu0 %v503
  %1751 = vmatprep.subr.mxu0 0.0
  %1752 = vmatpush2.msra.mxu0 %v502
  %1753 = vmatprep.subr.mxu0 0.0
  %1754 = vmatpush2.msra.mxu0 %v501
  %1755 = vmatprep.subr.mxu0 0.0
  %1756 = vmatpush2.msra.mxu0 %v500
  %1757 = vmatprep.subr.mxu0 0.0
  %1758 = vmatpush2.msra.mxu0 %v499
  %1759 = vmatprep.subr.mxu0 0.0
  %1760 = vmatpush2.msra.mxu0 %v498
  %1761 = vmatprep.subr.mxu0 0.0
  %1762 = vmatpush2.msra.mxu0 %v497
  %1763 = vmatprep.subr.mxu0 0.0
  %1764 = vmatpush2.msra.mxu0 %v496
  %1765 = vmatprep.subr.mxu0 0.0
  %1766 = vmatpush2.msra.mxu0 %v495
  %1767 = vmatprep.subr.mxu0 0.0
  %1768 = vmatpush2.msra.mxu0 %v494
  %1769 = vmatprep.mubr.f32.mxu0 %v691
  %1770 = vmatmul.mubr.f32.gmra.mxu0 %v683
  %v1771 = vpop.f32.mrf.mxu0
  %v1772 = vadd.f32 %v1702, %v1771
  %v1773 = vpop.f32.mrf.mxu0
  %1774 = vdwg.mxu0
  %1775 = vmatprep.subr.mxu0 0.0
  %1776 = vmatpush1.msra.mxu0 %v525
  %1777 = vmatprep.subr.mxu0 0.0
  %1778 = vmatpush1.msra.mxu0 %v524
  %1779 = vmatprep.subr.mxu0 0.0
  %1780 = vmatpush1.msra.mxu0 %v523
  %1781 = vmatprep.subr.mxu0 0.0
  %1782 = vmatpush1.msra.mxu0 %v522
  %1783 = vmatprep.subr.mxu0 0.0
  %1784 = vmatpush1.msra.mxu0 %v521
  %1785 = vmatprep.subr.mxu0 0.0
  %1786 = vmatpush1.msra.mxu0 %v520
  %1787 = vmatprep.subr.mxu0 0.0
  %1788 = vmatpush1.msra.mxu0 %v519
  %1789 = vmatprep.subr.mxu0 0.0
  %1790 = vmatpush1.msra.mxu0 %v518
  %1791 = vmatprep.subr.mxu0 0.0
  %1792 = vmatpush1.msra.mxu0 %v517
  %1793 = vmatprep.subr.mxu0 0.0
  %1794 = vmatpush1.msra.mxu0 %v516
  %1795 = vmatprep.subr.mxu0 0.0
  %1796 = vmatpush1.msra.mxu0 %v515
  %1797 = vmatprep.subr.mxu0 0.0
  %1798 = vmatpush1.msra.mxu0 %v514
  %1799 = vmatprep.subr.mxu0 0.0
  %1800 = vmatpush1.msra.mxu0 %v513
  %1801 = vmatprep.subr.mxu0 0.0
  %1802 = vmatpush1.msra.mxu0 %v512
  %1803 = vmatprep.subr.mxu0 0.0
  %1804 = vmatpush1.msra.mxu0 %v511
  %1805 = vmatprep.subr.mxu0 0.0
  %1806 = vmatpush1.msra.mxu0 %v510
  %1807 = vmatprep.subr.mxu0 0.0
  %1808 = vmatpush2.msra.mxu0 %v541
  %1809 = vmatprep.subr.mxu0 0.0
  %1810 = vmatpush2.msra.mxu0 %v540
  %1811 = vmatprep.subr.mxu0 0.0
  %1812 = vmatpush2.msra.mxu0 %v539
  %1813 = vmatprep.subr.mxu0 0.0
  %1814 = vmatpush2.msra.mxu0 %v538
  %1815 = vmatprep.subr.mxu0 0.0
  %1816 = vmatpush2.msra.mxu0 %v537
  %1817 = vmatprep.subr.mxu0 0.0
  %1818 = vmatpush2.msra.mxu0 %v536
  %1819 = vmatprep.subr.mxu0 0.0
  %1820 = vmatpush2.msra.mxu0 %v535
  %1821 = vmatprep.subr.mxu0 0.0
  %1822 = vmatpush2.msra.mxu0 %v534
  %1823 = vmatprep.subr.mxu0 0.0
  %1824 = vmatpush2.msra.mxu0 %v533
  %1825 = vmatprep.subr.mxu0 0.0
  %1826 = vmatpush2.msra.mxu0 %v532
  %1827 = vmatprep.subr.mxu0 0.0
  %1828 = vmatpush2.msra.mxu0 %v531
  %1829 = vmatprep.subr.mxu0 0.0
  %1830 = vmatpush2.msra.mxu0 %v530
  %1831 = vmatprep.subr.mxu0 0.0
  %1832 = vmatpush2.msra.mxu0 %v529
  %1833 = vmatprep.subr.mxu0 0.0
  %1834 = vmatpush2.msra.mxu0 %v528
  %1835 = vmatprep.subr.mxu0 0.0
  %1836 = vmatpush2.msra.mxu0 %v527
  %1837 = vmatprep.subr.mxu0 0.0
  %1838 = vmatpush2.msra.mxu0 %v526
  %1839 = vmatprep.mubr.f32.mxu0 %v692
  %1840 = vmatmul.mubr.f32.gmra.mxu0 %v690
  %v1841 = vpop.f32.mrf.mxu0
  %v1842 = vadd.f32 %v1772, %v1841
  %v1843 = vpop.f32.mrf.mxu0
  %1844 = vdwg.mxu0
  %v1845 = vmax.f32 %v1842, 0.0
  %v1846 = vld [vmem:[%s3] sm:$0xff]
  %v1847 = vld [vmem:[%s3 + $0x8] sm:$0xff]
  %v1848 = vld [vmem:[%s3 + $0x10] sm:$0xff]
  %v1849 = vld [vmem:[%s3 + $0x18] sm:$0xff]
  %v1850 = vld [vmem:[%s3 + $0x20] sm:$0xff]
  %v1851 = vld [vmem:[%s3 + $0x28] sm:$0xff]
  %v1852 = vld [vmem:[%s3 + $0x30] sm:$0xff]
  %v1853 = vld [vmem:[%s3 + $0x38] sm:$0xff]
  %v1854 = vld [vmem:[%s3 + $0x40] sm:$0xff]
  %v1855 = vld [vmem:[%s3 + $0x48] sm:$0xff]
  %v1856 = vld [vmem:[%s3 + $0x50] sm:$0xff]
  %v1857 = vld [vmem:[%s3 + $0x58] sm:$0xff]
  %v1858 = vld [vmem:[%s3 + $0x60] sm:$0xff]
  %v1859 = vld [vmem:[%s3 + $0x68] sm:$0xff]
  %v1860 = vld [vmem:[%s3 + $0x70] sm:$0xff]
  %v1861 = vld [vmem:[%s3 + $0x78] sm:$0xff]
  %v1862 = vld [vmem:[#allocation2] sm:$0x1]
  %v1864 = vlaneseq
  %v1865 = vshrl.u32 %v1864, 7
  %v1866 = vsub.s32 0, %v1865
  %v1867 = vrot.slane %v1862, %v1866
  %1869 = vmatprep.subr.mxu0 0.0
  %1870 = vmatpush1.msra.mxu0 %v1861
  %1871 = vmatprep.subr.mxu0 0.0
  %1872 = vmatpush1.msra.mxu0 %v1860
  %1873 = vmatprep.subr.mxu0 0.0
  %1874 = vmatpush1.msra.mxu0 %v1859
  %1875 = vmatprep.subr.mxu0 0.0
  %1876 = vmatpush1.msra.mxu0 %v1858
  %1877 = vmatprep.subr.mxu0 0.0
  %1878 = vmatpush1.msra.mxu0 %v1857
  %1879 = vmatprep.subr.mxu0 0.0
  %1880 = vmatpush1.msra.mxu0 %v1856
  %1881 = vmatprep.subr.mxu0 0.0
  %1882 = vmatpush1.msra.mxu0 %v1855
  %1883 = vmatprep.subr.mxu0 0.0
  %1884 = vmatpush1.msra.mxu0 %v1854
  %1885 = vmatprep.subr.mxu0 0.0
  %1886 = vmatpush1.msra.mxu0 %v1853
  %1887 = vmatprep.subr.mxu0 0.0
  %1888 = vmatpush1.msra.mxu0 %v1852
  %1889 = vmatprep.subr.mxu0 0.0
  %1890 = vmatpush1.msra.mxu0 %v1851
  %1891 = vmatprep.subr.mxu0 0.0
  %1892 = vmatpush1.msra.mxu0 %v1850
  %1893 = vmatprep.subr.mxu0 0.0
  %1894 = vmatpush1.msra.mxu0 %v1849
  %1895 = vmatprep.subr.mxu0 0.0
  %1896 = vmatpush1.msra.mxu0 %v1848
  %1897 = vmatprep.subr.mxu0 0.0
  %1898 = vmatpush1.msra.mxu0 %v1847
  %1899 = vmatprep.subr.mxu0 0.0
  %1900 = vmatpush1.msra.mxu0 %v1846
  %1901 = vmatprep.subr.mxu0 0.0
  %1902 = vmatpush2.msra.mxu0 0.0
  %1903 = vmatprep.subr.mxu0 0.0
  %1904 = vmatpush2.msra.mxu0 0.0
  %1905 = vmatprep.subr.mxu0 0.0
  %1906 = vmatpush2.msra.mxu0 0.0
  %1907 = vmatprep.subr.mxu0 0.0
  %1908 = vmatpush2.msra.mxu0 0.0
  %1909 = vmatprep.subr.mxu0 0.0
  %1910 = vmatpush2.msra.mxu0 0.0
  %1911 = vmatprep.subr.mxu0 0.0
  %1912 = vmatpush2.msra.mxu0 0.0
  %1913 = vmatprep.subr.mxu0 0.0
  %1914 = vmatpush2.msra.mxu0 0.0
  %1915 = vmatprep.subr.mxu0 0.0
  %1916 = vmatpush2.msra.mxu0 0.0
  %1917 = vmatprep.subr.mxu0 0.0
  %1918 = vmatpush2.msra.mxu0 0.0
  %1919 = vmatprep.subr.mxu0 0.0
  %1920 = vmatpush2.msra.mxu0 0.0
  %1921 = vmatprep.subr.mxu0 0.0
  %1922 = vmatpush2.msra.mxu0 0.0
  %1923 = vmatprep.subr.mxu0 0.0
  %1924 = vmatpush2.msra.mxu0 0.0
  %1925 = vmatprep.subr.mxu0 0.0
  %1926 = vmatpush2.msra.mxu0 0.0
  %1927 = vmatprep.subr.mxu0 0.0
  %1928 = vmatpush2.msra.mxu0 0.0
  %1929 = vmatprep.subr.mxu0 0.0
  %1930 = vmatpush2.msra.mxu0 0.0
  %1931 = vmatprep.subr.mxu0 0.0
  %1932 = vmatpush2.msra.mxu0 0.0
  %1933 = vmatprep.mubr.f32.mxu0 0.0
  %1934 = vmatmul.mubr.f32.gmra.mxu0 %v1845
  %v1935 = vpop.f32.mrf.mxu0
  %v1936 = vadd.f32 %v1867, %v1935
  %v1937 = vpop.f32.mrf.mxu0
  %1938 = vdwg.mxu0
  %v1939 = vsub.f32 0.0, %v1936
  %v1940 = vmul.f32 %v1939, 1.442695
  %v1941 = vpow.pop %v1940
  %v1942 = vadd.f32 %v1941, 1.0
  %v1943 = vrcp.pop %v1942
  %v1944 = vmul.f32 1.0, %v1943
  %vm1945 = vcmask 1024
  %1946 = vst.msk [vmem:[%s5] sm:$0x3] %vm1945, %v1944
  // Predicated region
  $region22: #{simple_cnn_forward.3} parent=0 // pred_check
    _
  $region23: #{simple_cnn_forward.3} parent=0 // pred_check_branch
    %1948 = sbr.rel (0) target = $region25
  $region24: #{simple_cnn_forward.3} parent=0 // pred_region
    _
  $region25: #{simple_cnn_forward.3} parent=0 // pred_fallthru
    _
  // Predicated region
  $region26: #{simple_cnn_forward.3} parent=0 // pred_check
    _
  $region27: #{simple_cnn_forward.3} parent=0 // pred_check_branch
    %1950 = sbr.rel (0) target = $region29
  $region28: #{simple_cnn_forward.3} parent=0 // pred_region
    _
  $region29: #{simple_cnn_forward.3} parent=0 // pred_fallthru
    _

// kernel: simple_cnn_forward.2
$region0: #{simple_cnn_forward.2}
  #allocation0 [shape = 'u32[]', space=smem, size = 0x4, offset = 0x4, fixed_abs, tag = 'smem constant byte address 0x4 - core index']
  #allocation1 [shape = 'u32[144,128]{1,0:T(1,128)}', space=vmem, size = 0x12000, scoped, tag = 'internal scratch']
  #allocation2 [shape = 'f32[32,32,32]{2,1,0:T(8,128)}', space=vmem, size = 0x80000, scoped, tag = 'scratch operand']
  #allocation3 [shape = 'f32[16,32,32]{2,1,0:T(8,128)}', space=vmem, size = 0x40000, scoped, tag = 'scratch operand']
  #allocation4 [shape = 'f32[18,18,32]{2,1,0:T(8,128)}', space=vmem, size = 0x36000, scoped, tag = 'scratch operand']
  #allocation5 [shape = 'f32[16,16,64]{2,1,0:T(8,128)}', space=vmem, size = 0x20000, scoped, tag = 'scratch operand']
  #allocation6 [shape = 'f32[8,16,64]{2,1,0:T(8,128)}', space=vmem, size = 0x10000, scoped, tag = 'scratch operand']
  %s0 = inlined_call_operand.vmem [shape: f32[2,1024,9], index: 0, kind: input, shape index: {}]
  %s1 = inlined_call_operand.vmem [shape: f32[9,32], index: 1, kind: input, shape index: {}]
  %s2 = inlined_call_operand.vmem [shape: f32[1,32], index: 2, kind: input, shape index: {}]
  %s3 = inlined_call_operand.vmem [shape: f32[288,64], index: 3, kind: input, shape index: {}]
  %s4 = inlined_call_operand.vmem [shape: f32[1,64], index: 4, kind: input, shape index: {}]
  %s5 = inlined_call_operand.vmem [shape: f32[2,64,64], index: 5, kind: output, shape index: {}]
  %s6 = sld [smem:[#allocation0]]
  $region53: #{simple_cnn_forward.2} parent=0
    _
  %s8 = ssub.s32 1, %s6
  %s9 = scalar_select 0, %s8, %s6
  loop: start=0, step=1, limit=4
  $region2: #{simple_cnn_forward.2} parent=0 // loop_pre_header
    _
  $region3: #{simple_cnn_forward.2} parent=0 // loop_header
    %s11 = sphi 0, %s15
    %p12 = scmp.ge.s32.totalorder %s11, 4
    %s21 = sphi 0, %s23
    %s24 = sphi 0, %s21
    %s25 = sphi 0, %s24
    %s41 = sphi 0, %s25
    %s45 = sphi 0, %s45
    %s47 = sphi 0, %s45
    %s48 = sphi 0, %s47
    %s62 = sphi 0, %s48
    %s66 = sphi 0, %s66
    %s68 = sphi 0, %s66
    %s69 = sphi 0, %s68
    %s83 = sphi 0, %s69
    %s87 = sphi 0, %s87
    %s89 = sphi 0, %s87
    %s90 = sphi 0, %s89
    %s104 = sphi 0, %s90
    %s108 = sphi 0, %s108
    %s110 = sphi 0, %s108
    %s111 = sphi 0, %s110
    %s125 = sphi 0, %s111
    %s131 = sphi 0, %s133
    %s134 = sphi 0, %s131
    %s135 = sphi 0, %s134
    %s151 = sphi 0, %s135
  $region4: #{simple_cnn_forward.2} parent=0 // loop_header_branch
    %14 = sbr.rel (%p12) target = $region8
  $region5: #{simple_cnn_forward.2} parent=0 // loop_body
    %s16 = ssub.s32 %s11, 1
    %s17 = ssub.s32 %s11, 2
    %s18 = sadd.s32 %s11, 1
    %s19 = ssub.s32 %s11, %s18
    %p20 = scmp.eq.s32.totalorder %s19, 0
    %s22 = sadd.s32 %s21, 1
    %s23 = scalar_select %p20, %s21, %s22
    %p26 = pneg %p20
    %p27 = scmp.eq.s32.totalorder %s11, 1
    %p28 = por %p26, %p27
    %p29 = scmp.ne.s32.totalorder %s21, %s24
    %p30 = scmp.eq.s32.totalorder %s11, 0
    %p31 = por %p29, %p30
    %p32 = scmp.ne.s32.totalorder %s21, %s24
    %p33 = scmp.eq.s32.totalorder %s16, 1
    %p34 = por %p32, %p33
    %p35 = scmp.ne.s32.totalorder %s24, %s25
    %p36 = scmp.eq.s32.totalorder %s16, 0
    %p37 = por %p35, %p36
    %p38 = scmp.ne.s32.totalorder %s24, %s25
    %p39 = scmp.eq.s32.totalorder %s17, 1
    %p40 = por %p38, %p39
    %p42 = scmp.ne.s32.totalorder %s25, %s41
    %p43 = scmp.eq.s32.totalorder %s17, 0
    %p44 = por %p42, %p43
    %s46 = sadd.s32 %s45, 1
    %p49 = scmp.eq.s32.totalorder %s11, 1
    %p50 = scmp.ne.s32.totalorder %s45, %s47
    %p51 = scmp.eq.s32.totalorder %s11, 0
    %p52 = por %p50, %p51
    %p53 = scmp.ne.s32.totalorder %s45, %s47
    %p54 = scmp.eq.s32.totalorder %s16, 1
    %p55 = por %p53, %p54
    %p56 = scmp.ne.s32.totalorder %s47, %s48
    %p57 = scmp.eq.s32.totalorder %s16, 0
    %p58 = por %p56, %p57
    %p59 = scmp.ne.s32.totalorder %s47, %s48
    %p60 = scmp.eq.s32.totalorder %s17, 1
    %p61 = por %p59, %p60
    %p63 = scmp.ne.s32.totalorder %s48, %s62
    %p64 = scmp.eq.s32.totalorder %s17, 0
    %p65 = por %p63, %p64
    %s67 = sadd.s32 %s66, 1
    %p70 = scmp.eq.s32.totalorder %s11, 1
    %p71 = scmp.ne.s32.totalorder %s66, %s68
    %p72 = scmp.eq.s32.totalorder %s11, 0
    %p73 = por %p71, %p72
    %p74 = scmp.ne.s32.totalorder %s66, %s68
    %p75 = scmp.eq.s32.totalorder %s16, 1
    %p76 = por %p74, %p75
    %p77 = scmp.ne.s32.totalorder %s68, %s69
    %p78 = scmp.eq.s32.totalorder %s16, 0
    %p79 = por %p77, %p78
    %p80 = scmp.ne.s32.totalorder %s68, %s69
    %p81 = scmp.eq.s32.totalorder %s17, 1
    %p82 = por %p80, %p81
    %p84 = scmp.ne.s32.totalorder %s69, %s83
    %p85 = scmp.eq.s32.totalorder %s17, 0
    %p86 = por %p84, %p85
    %s88 = sadd.s32 %s87, 1
    %p91 = scmp.eq.s32.totalorder %s11, 1
    %p92 = scmp.ne.s32.totalorder %s87, %s89
    %p93 = scmp.eq.s32.totalorder %s11, 0
    %p94 = por %p92, %p93
    %p95 = scmp.ne.s32.totalorder %s87, %s89
    %p96 = scmp.eq.s32.totalorder %s16, 1
    %p97 = por %p95, %p96
    %p98 = scmp.ne.s32.totalorder %s89, %s90
    %p99 = scmp.eq.s32.totalorder %s16, 0
    %p100 = por %p98, %p99
    %p101 = scmp.ne.s32.totalorder %s89, %s90
    %p102 = scmp.eq.s32.totalorder %s17, 1
    %p103 = por %p101, %p102
    %p105 = scmp.ne.s32.totalorder %s90, %s104
    %p106 = scmp.eq.s32.totalorder %s17, 0
    %p107 = por %p105, %p106
    %s109 = sadd.s32 %s108, 1
    %p112 = scmp.eq.s32.totalorder %s11, 1
    %p113 = scmp.ne.s32.totalorder %s108, %s110
    %p114 = scmp.eq.s32.totalorder %s11, 0
    %p115 = por %p113, %p114
    %p116 = scmp.ne.s32.totalorder %s108, %s110
    %p117 = scmp.eq.s32.totalorder %s16, 1
    %p118 = por %p116, %p117
    %p119 = scmp.ne.s32.totalorder %s110, %s111
    %p120 = scmp.eq.s32.totalorder %s16, 0
    %p121 = por %p119, %p120
    %p122 = scmp.ne.s32.totalorder %s110, %s111
    %p123 = scmp.eq.s32.totalorder %s17, 1
    %p124 = por %p122, %p123
    %p126 = scmp.ne.s32.totalorder %s111, %s125
    %p127 = scmp.eq.s32.totalorder %s17, 0
    %p128 = por %p126, %p127
    %s129 = ssub.s32 %s11, %s18
    %p130 = scmp.eq.s32.totalorder %s129, 0
    %s132 = sadd.s32 %s131, 1
    %s133 = scalar_select %p130, %s131, %s132
    %p136 = pneg %p130
    %p137 = scmp.eq.s32.totalorder %s11, 1
    %p138 = por %p136, %p137
    %p139 = scmp.ne.s32.totalorder %s131, %s134
    %p140 = scmp.eq.s32.totalorder %s11, 0
    %p141 = por %p139, %p140
    %p142 = scmp.ne.s32.totalorder %s131, %s134
    %p143 = scmp.eq.s32.totalorder %s16, 1
    %p144 = por %p142, %p143
    %p145 = scmp.ne.s32.totalorder %s134, %s135
    %p146 = scmp.eq.s32.totalorder %s16, 0
    %p147 = por %p145, %p146
    %p148 = scmp.ne.s32.totalorder %s134, %s135
    %p149 = scmp.eq.s32.totalorder %s17, 1
    %p150 = por %p148, %p149
    %p152 = scmp.ne.s32.totalorder %s135, %s151
    %p153 = scmp.eq.s32.totalorder %s17, 0
    %p154 = por %p152, %p153
    %p155 = scmp.le.s32.totalorder 1, %s11
    %p156 = scmp.lt.s32.totalorder %s11, 3
    %p157 = pnand %p155, %p156
    %p158 = pneg %p157
    // Predicated region
    $region9: #{simple_cnn_forward.2} parent=5 // pred_check
      _
    $region10: #{simple_cnn_forward.2} parent=5 // pred_check_branch
      %160 = sbr.rel (%p157) target = $region12
    $region11: #{simple_cnn_forward.2} parent=5 // pred_region
      %s161 = ssub.s32 %s11, 1
      // Predicated region
      $region13: #{simple_cnn_forward.2} parent=11 // pred_check
        %p162 = pneg %p58
      $region14: #{simple_cnn_forward.2} parent=11 // pred_check_branch
        %164 = sbr.rel (%p162) target = $region16
      $region15: #{simple_cnn_forward.2} parent=11 // pred_region
        _
      $region16: #{simple_cnn_forward.2} parent=11 // pred_fallthru
        _
      // Predicated region
      $region17: #{simple_cnn_forward.2} parent=11 // pred_check
        %p165 = pneg %p79
      $region18: #{simple_cnn_forward.2} parent=11 // pred_check_branch
        %167 = sbr.rel (%p165) target = $region20
      $region19: #{simple_cnn_forward.2} parent=11 // pred_region
        _
      $region20: #{simple_cnn_forward.2} parent=11 // pred_fallthru
        _
      // Predicated region
      $region21: #{simple_cnn_forward.2} parent=11 // pred_check
        %p168 = pneg %p100
      $region22: #{simple_cnn_forward.2} parent=11 // pred_check_branch
        %170 = sbr.rel (%p168) target = $region24
      $region23: #{simple_cnn_forward.2} parent=11 // pred_region
        _
      $region24: #{simple_cnn_forward.2} parent=11 // pred_fallthru
        _
      // Predicated region
      $region25: #{simple_cnn_forward.2} parent=11 // pred_check
        %p171 = pneg %p121
      $region26: #{simple_cnn_forward.2} parent=11 // pred_check_branch
        %173 = sbr.rel (%p171) target = $region28
      $region27: #{simple_cnn_forward.2} parent=11 // pred_region
        _
      $region28: #{simple_cnn_forward.2} parent=11 // pred_fallthru
        _
    $region12: #{simple_cnn_forward.2} parent=5 // pred_fallthru
      _
    %p174 = scmp.lt.s32.totalorder %s11, 2
    // Predicated region
    $region29: #{simple_cnn_forward.2} parent=5 // pred_check
      %p175 = pneg %p174
    $region30: #{simple_cnn_forward.2} parent=5 // pred_check_branch
      %177 = sbr.rel (%p175) target = $region32
    $region31: #{simple_cnn_forward.2} parent=5 // pred_region
      // Predicated region
      $region33: #{simple_cnn_forward.2} parent=31 // pred_check
        %p178 = pneg %p31
      $region34: #{simple_cnn_forward.2} parent=31 // pred_check_branch
        %180 = sbr.rel (%p178) target = $region36
      $region35: #{simple_cnn_forward.2} parent=31 // pred_region
        %p181 = scmp.lt.s32.totalorder %s11, 1
        %s182 = scalar_select %p181, %s11, 1
        %s183 = smul.addr %s182, 128
        %s184 = smul.addr %s183, 8
        %s185 = scalar_lea.vmem %s0, %s184
      $region36: #{simple_cnn_forward.2} parent=31 // pred_fallthru
        _
    $region32: #{simple_cnn_forward.2} parent=5 // pred_fallthru
      _
    %p186 = scmp.le.s32.totalorder 1, %s11
    %p187 = scmp.lt.s32.totalorder %s11, 3
    %p188 = pnand %p186, %p187
    %p189 = pneg %p188
    // Predicated region
    $region37: #{simple_cnn_forward.2} parent=5 // pred_check
      _
    $region38: #{simple_cnn_forward.2} parent=5 // pred_check_branch
      %191 = sbr.rel (%p188) target = $region40
    $region39: #{simple_cnn_forward.2} parent=5 // pred_region
      %s192 = ssub.s32 %s11, 1
      %p193 = scmp.lt.s32.totalorder %s16, 1
      %s194 = scalar_select %p193, %s16, 1
      %s195 = smul.addr %s194, 128
      %s196 = smul.addr %s195, 8
      %s197 = scalar_lea.vmem %s0, %s196
      %p198 = pneg %p37
      %p199 = pneg %p34
      %p200 = pneg %p58
      %p201 = pneg %p55
      %p202 = pneg %p79
      %p203 = pneg %p76
      %p204 = pneg %p100
      %p205 = pneg %p97
      %p206 = pneg %p121
      %p207 = pneg %p118
      %p208 = pneg %p147
      %p209 = pneg %p144
      %p210 = scmp.lt.s32.totalorder %s16, 1
      %s211 = scalar_select %p210, %s16, 1
      %s212 = smul.addr %s211, 8
      %s213 = smul.addr %s212, 8
      %s214 = scalar_lea.vmem %s5, %s213
      %p215 = scmp.lt.s32.totalorder %s16, 1
      %s216 = scalar_select %p215, %s16, 1
      %s217 = smul.addr %s216, 128
      %s218 = smul.addr %s217, 8
      %s219 = scalar_lea.vmem %s0, %s218
      %p220 = scmp.lt.s32.totalorder %s16, 1
      %s221 = scalar_select %p220, %s16, 1
      %s222 = smul.addr %s221, 8
      %s223 = smul.addr %s222, 8
      %s224 = scalar_lea.vmem %s5, %s223
      %v225 = vld [vmem:[%s219] sm:$0xff]
      %v226 = vld [vmem:[%s219 + $0x8] sm:$0xff]
      %v227 = vld [vmem:[%s219 + $0x10] sm:$0xff]
      %v228 = vld [vmem:[%s219 + $0x18] sm:$0xff]
      %v229 = vld [vmem:[%s219 + $0x20] sm:$0xff]
      %v230 = vld [vmem:[%s219 + $0x28] sm:$0xff]
      %v231 = vld [vmem:[%s219 + $0x30] sm:$0xff]
      %v232 = vld [vmem:[%s219 + $0x38] sm:$0xff]
      %v233 = vld [vmem:[%s219 + $0x40] sm:$0xff]
      %v234 = vld [vmem:[%s219 + $0x48] sm:$0xff]
      %v235 = vld [vmem:[%s219 + $0x50] sm:$0xff]
      %v236 = vld [vmem:[%s219 + $0x58] sm:$0xff]
      %v237 = vld [vmem:[%s219 + $0x60] sm:$0xff]
      %v238 = vld [vmem:[%s219 + $0x68] sm:$0xff]
      %v239 = vld [vmem:[%s219 + $0x70] sm:$0xff]
      %v240 = vld [vmem:[%s219 + $0x78] sm:$0xff]
      %v241 = vld [vmem:[%s219 + $0x80] sm:$0xff]
      %v242 = vld [vmem:[%s219 + $0x88] sm:$0xff]
      %v243 = vld [vmem:[%s219 + $0x90] sm:$0xff]
      %v244 = vld [vmem:[%s219 + $0x98] sm:$0xff]
      %v245 = vld [vmem:[%s219 + $0xa0] sm:$0xff]
      %v246 = vld [vmem:[%s219 + $0xa8] sm:$0xff]
      %v247 = vld [vmem:[%s219 + $0xb0] sm:$0xff]
      %v248 = vld [vmem:[%s219 + $0xb8] sm:$0xff]
      %v249 = vld [vmem:[%s219 + $0xc0] sm:$0xff]
      %v250 = vld [vmem:[%s219 + $0xc8] sm:$0xff]
      %v251 = vld [vmem:[%s219 + $0xd0] sm:$0xff]
      %v252 = vld [vmem:[%s219 + $0xd8] sm:$0xff]
      %v253 = vld [vmem:[%s219 + $0xe0] sm:$0xff]
      %v254 = vld [vmem:[%s219 + $0xe8] sm:$0xff]
      %v255 = vld [vmem:[%s219 + $0xf0] sm:$0xff]
      %v256 = vld [vmem:[%s219 + $0xf8] sm:$0xff]
      %v257 = vld [vmem:[%s219 + $0x100] sm:$0xff]
      %v258 = vld [vmem:[%s219 + $0x108] sm:$0xff]
      %v259 = vld [vmem:[%s219 + $0x110] sm:$0xff]
      %v260 = vld [vmem:[%s219 + $0x118] sm:$0xff]
      %v261 = vld [vmem:[%s219 + $0x120] sm:$0xff]
      %v262 = vld [vmem:[%s219 + $0x128] sm:$0xff]
      %v263 = vld [vmem:[%s219 + $0x130] sm:$0xff]
      %v264 = vld [vmem:[%s219 + $0x138] sm:$0xff]
      %v265 = vld [vmem:[%s219 + $0x140] sm:$0xff]
      %v266 = vld [vmem:[%s219 + $0x148] sm:$0xff]
      %v267 = vld [vmem:[%s219 + $0x150] sm:$0xff]
      %v268 = vld [vmem:[%s219 + $0x158] sm:$0xff]
      %v269 = vld [vmem:[%s219 + $0x160] sm:$0xff]
      %v270 = vld [vmem:[%s219 + $0x168] sm:$0xff]
      %v271 = vld [vmem:[%s219 + $0x170] sm:$0xff]
      %v272 = vld [vmem:[%s219 + $0x178] sm:$0xff]
      %v273 = vld [vmem:[%s219 + $0x180] sm:$0xff]
      %v274 = vld [vmem:[%s219 + $0x188] sm:$0xff]
      %v275 = vld [vmem:[%s219 + $0x190] sm:$0xff]
      %v276 = vld [vmem:[%s219 + $0x198] sm:$0xff]
      %v277 = vld [vmem:[%s219 + $0x1a0] sm:$0xff]
      %v278 = vld [vmem:[%s219 + $0x1a8] sm:$0xff]
      %v279 = vld [vmem:[%s219 + $0x1b0] sm:$0xff]
      %v280 = vld [vmem:[%s219 + $0x1b8] sm:$0xff]
      %v281 = vld [vmem:[%s219 + $0x1c0] sm:$0xff]
      %v282 = vld [vmem:[%s219 + $0x1c8] sm:$0xff]
      %v283 = vld [vmem:[%s219 + $0x1d0] sm:$0xff]
      %v284 = vld [vmem:[%s219 + $0x1d8] sm:$0xff]
      %v285 = vld [vmem:[%s219 + $0x1e0] sm:$0xff]
      %v286 = vld [vmem:[%s219 + $0x1e8] sm:$0xff]
      %v287 = vld [vmem:[%s219 + $0x1f0] sm:$0xff]
      %v288 = vld [vmem:[%s219 + $0x1f8] sm:$0xff]
      %v289 = vld [vmem:[%s219 + $0x200] sm:$0xff]
      %v290 = vld [vmem:[%s219 + $0x208] sm:$0xff]
      %v291 = vld [vmem:[%s219 + $0x210] sm:$0xff]
      %v292 = vld [vmem:[%s219 + $0x218] sm:$0xff]
      %v293 = vld [vmem:[%s219 + $0x220] sm:$0xff]
      %v294 = vld [vmem:[%s219 + $0x228] sm:$0xff]
      %v295 = vld [vmem:[%s219 + $0x230] sm:$0xff]
      %v296 = vld [vmem:[%s219 + $0x238] sm:$0xff]
      %v297 = vld [vmem:[%s219 + $0x240] sm:$0xff]
      %v298 = vld [vmem:[%s219 + $0x248] sm:$0xff]
      %v299 = vld [vmem:[%s219 + $0x250] sm:$0xff]
      %v300 = vld [vmem:[%s219 + $0x258] sm:$0xff]
      %v301 = vld [vmem:[%s219 + $0x260] sm:$0xff]
      %v302 = vld [vmem:[%s219 + $0x268] sm:$0xff]
      %v303 = vld [vmem:[%s219 + $0x270] sm:$0xff]
      %v304 = vld [vmem:[%s219 + $0x278] sm:$0xff]
      %v305 = vld [vmem:[%s219 + $0x280] sm:$0xff]
      %v306 = vld [vmem:[%s219 + $0x288] sm:$0xff]
      %v307 = vld [vmem:[%s219 + $0x290] sm:$0xff]
      %v308 = vld [vmem:[%s219 + $0x298] sm:$0xff]
      %v309 = vld [vmem:[%s219 + $0x2a0] sm:$0xff]
      %v310 = vld [vmem:[%s219 + $0x2a8] sm:$0xff]
      %v311 = vld [vmem:[%s219 + $0x2b0] sm:$0xff]
      %v312 = vld [vmem:[%s219 + $0x2b8] sm:$0xff]
      %v313 = vld [vmem:[%s219 + $0x2c0] sm:$0xff]
      %v314 = vld [vmem:[%s219 + $0x2c8] sm:$0xff]
      %v315 = vld [vmem:[%s219 + $0x2d0] sm:$0xff]
      %v316 = vld [vmem:[%s219 + $0x2d8] sm:$0xff]
      %v317 = vld [vmem:[%s219 + $0x2e0] sm:$0xff]
      %v318 = vld [vmem:[%s219 + $0x2e8] sm:$0xff]
      %v319 = vld [vmem:[%s219 + $0x2f0] sm:$0xff]
      %v320 = vld [vmem:[%s219 + $0x2f8] sm:$0xff]
      %v321 = vld [vmem:[%s219 + $0x300] sm:$0xff]
      %v322 = vld [vmem:[%s219 + $0x308] sm:$0xff]
      %v323 = vld [vmem:[%s219 + $0x310] sm:$0xff]
      %v324 = vld [vmem:[%s219 + $0x318] sm:$0xff]
      %v325 = vld [vmem:[%s219 + $0x320] sm:$0xff]
      %v326 = vld [vmem:[%s219 + $0x328] sm:$0xff]
      %v327 = vld [vmem:[%s219 + $0x330] sm:$0xff]
      %v328 = vld [vmem:[%s219 + $0x338] sm:$0xff]
      %v329 = vld [vmem:[%s219 + $0x340] sm:$0xff]
      %v330 = vld [vmem:[%s219 + $0x348] sm:$0xff]
      %v331 = vld [vmem:[%s219 + $0x350] sm:$0xff]
      %v332 = vld [vmem:[%s219 + $0x358] sm:$0xff]
      %v333 = vld [vmem:[%s219 + $0x360] sm:$0xff]
      %v334 = vld [vmem:[%s219 + $0x368] sm:$0xff]
      %v335 = vld [vmem:[%s219 + $0x370] sm:$0xff]
      %v336 = vld [vmem:[%s219 + $0x378] sm:$0xff]
      %v337 = vld [vmem:[%s219 + $0x380] sm:$0xff]
      %v338 = vld [vmem:[%s219 + $0x388] sm:$0xff]
      %v339 = vld [vmem:[%s219 + $0x390] sm:$0xff]
      %v340 = vld [vmem:[%s219 + $0x398] sm:$0xff]
      %v341 = vld [vmem:[%s219 + $0x3a0] sm:$0xff]
      %v342 = vld [vmem:[%s219 + $0x3a8] sm:$0xff]
      %v343 = vld [vmem:[%s219 + $0x3b0] sm:$0xff]
      %v344 = vld [vmem:[%s219 + $0x3b8] sm:$0xff]
      %v345 = vld [vmem:[%s219 + $0x3c0] sm:$0xff]
      %v346 = vld [vmem:[%s219 + $0x3c8] sm:$0xff]
      %v347 = vld [vmem:[%s219 + $0x3d0] sm:$0xff]
      %v348 = vld [vmem:[%s219 + $0x3d8] sm:$0xff]
      %v349 = vld [vmem:[%s219 + $0x3e0] sm:$0xff]
      %v350 = vld [vmem:[%s219 + $0x3e8] sm:$0xff]
      %v351 = vld [vmem:[%s219 + $0x3f0] sm:$0xff]
      %v352 = vld [vmem:[%s219 + $0x3f8] sm:$0xff]
      %v353 = vld [vmem:[%s1] sm:$0xff]
      %v354 = vld [vmem:[%s1 + $0x8] sm:$0x1]
      %v355 = vld [vmem:[%s2] sm:$0x1]
      %v357 = vlaneseq
      %v358 = vshrl.u32 %v357, 7
      %v359 = vsub.s32 0, %v358
      %v360 = vrot.slane %v355, %v359
      %vm362 = vcmask 72704
      %v364 = vsel %vm362, %v225, 0
      %v367 = vsel %vm362, %v226, 0
      %v370 = vsel %vm362, %v227, 0
      %v373 = vsel %vm362, %v228, 0
      %v376 = vsel %vm362, %v229, 0
      %v379 = vsel %vm362, %v230, 0
      %v382 = vsel %vm362, %v231, 0
      %v385 = vsel %vm362, %v232, 0
      %v388 = vsel %vm362, %v233, 0
      %v391 = vsel %vm362, %v234, 0
      %v394 = vsel %vm362, %v235, 0
      %v397 = vsel %vm362, %v236, 0
      %v400 = vsel %vm362, %v237, 0
      %v403 = vsel %vm362, %v238, 0
      %v406 = vsel %vm362, %v239, 0
      %v409 = vsel %vm362, %v240, 0
      %v412 = vsel %vm362, %v241, 0
      %v415 = vsel %vm362, %v242, 0
      %v418 = vsel %vm362, %v243, 0
      %v421 = vsel %vm362, %v244, 0
      %v424 = vsel %vm362, %v245, 0
      %v427 = vsel %vm362, %v246, 0
      %v430 = vsel %vm362, %v247, 0
      %v433 = vsel %vm362, %v248, 0
      %v436 = vsel %vm362, %v249, 0
      %v439 = vsel %vm362, %v250, 0
      %v442 = vsel %vm362, %v251, 0
      %v445 = vsel %vm362, %v252, 0
      %v448 = vsel %vm362, %v253, 0
      %v451 = vsel %vm362, %v254, 0
      %v454 = vsel %vm362, %v255, 0
      %v457 = vsel %vm362, %v256, 0
      %v460 = vsel %vm362, %v257, 0
      %v463 = vsel %vm362, %v258, 0
      %v466 = vsel %vm362, %v259, 0
      %v469 = vsel %vm362, %v260, 0
      %v472 = vsel %vm362, %v261, 0
      %v475 = vsel %vm362, %v262, 0
      %v478 = vsel %vm362, %v263, 0
      %v481 = vsel %vm362, %v264, 0
      %v484 = vsel %vm362, %v265, 0
      %v487 = vsel %vm362, %v266, 0
      %v490 = vsel %vm362, %v267, 0
      %v493 = vsel %vm362, %v268, 0
      %v496 = vsel %vm362, %v269, 0
      %v499 = vsel %vm362, %v270, 0
      %v502 = vsel %vm362, %v271, 0
      %v505 = vsel %vm362, %v272, 0
      %v508 = vsel %vm362, %v273, 0
      %v511 = vsel %vm362, %v274, 0
      %v514 = vsel %vm362, %v275, 0
      %v517 = vsel %vm362, %v276, 0
      %v520 = vsel %vm362, %v277, 0
      %v523 = vsel %vm362, %v278, 0
      %v526 = vsel %vm362, %v279, 0
      %v529 = vsel %vm362, %v280, 0
      %v532 = vsel %vm362, %v281, 0
      %v535 = vsel %vm362, %v282, 0
      %v538 = vsel %vm362, %v283, 0
      %v541 = vsel %vm362, %v284, 0
      %v544 = vsel %vm362, %v285, 0
      %v547 = vsel %vm362, %v286, 0
      %v550 = vsel %vm362, %v287, 0
      %v553 = vsel %vm362, %v288, 0
      %v556 = vsel %vm362, %v289, 0
      %v559 = vsel %vm362, %v290, 0
      %v562 = vsel %vm362, %v291, 0
      %v565 = vsel %vm362, %v292, 0
      %v568 = vsel %vm362, %v293, 0
      %v571 = vsel %vm362, %v294, 0
      %v574 = vsel %vm362, %v295, 0
      %v577 = vsel %vm362, %v296, 0
      %v580 = vsel %vm362, %v297, 0
      %v583 = vsel %vm362, %v298, 0
      %v586 = vsel %vm362, %v299, 0
      %v589 = vsel %vm362, %v300, 0
      %v592 = vsel %vm362, %v301, 0
      %v595 = vsel %vm362, %v302, 0
      %v598 = vsel %vm362, %v303, 0
      %v601 = vsel %vm362, %v304, 0
      %v604 = vsel %vm362, %v305, 0
      %v607 = vsel %vm362, %v306, 0
      %v610 = vsel %vm362, %v307, 0
      %v613 = vsel %vm362, %v308, 0
      %v616 = vsel %vm362, %v309, 0
      %v619 = vsel %vm362, %v310, 0
      %v622 = vsel %vm362, %v311, 0
      %v625 = vsel %vm362, %v312, 0
      %v628 = vsel %vm362, %v313, 0
      %v631 = vsel %vm362, %v314, 0
      %v634 = vsel %vm362, %v315, 0
      %v637 = vsel %vm362, %v316, 0
      %v640 = vsel %vm362, %v317, 0
      %v643 = vsel %vm362, %v318, 0
      %v646 = vsel %vm362, %v319, 0
      %v649 = vsel %vm362, %v320, 0
      %v652 = vsel %vm362, %v321, 0
      %v655 = vsel %vm362, %v322, 0
      %v658 = vsel %vm362, %v323, 0
      %v661 = vsel %vm362, %v324, 0
      %v664 = vsel %vm362, %v325, 0
      %v667 = vsel %vm362, %v326, 0
      %v670 = vsel %vm362, %v327, 0
      %v673 = vsel %vm362, %v328, 0
      %v676 = vsel %vm362, %v329, 0
      %v679 = vsel %vm362, %v330, 0
      %v682 = vsel %vm362, %v331, 0
      %v685 = vsel %vm362, %v332, 0
      %v688 = vsel %vm362, %v333, 0
      %v691 = vsel %vm362, %v334, 0
      %v694 = vsel %vm362, %v335, 0
      %v697 = vsel %vm362, %v336, 0
      %v700 = vsel %vm362, %v337, 0
      %v703 = vsel %vm362, %v338, 0
      %v706 = vsel %vm362, %v339, 0
      %v709 = vsel %vm362, %v340, 0
      %v712 = vsel %vm362, %v341, 0
      %v715 = vsel %vm362, %v342, 0
      %v718 = vsel %vm362, %v343, 0
      %v721 = vsel %vm362, %v344, 0
      %v724 = vsel %vm362, %v345, 0
      %v727 = vsel %vm362, %v346, 0
      %v730 = vsel %vm362, %v347, 0
      %v733 = vsel %vm362, %v348, 0
      %v736 = vsel %vm362, %v349, 0
      %v739 = vsel %vm362, %v350, 0
      %v742 = vsel %vm362, %v351, 0
      %v745 = vsel %vm362, %v352, 0
      %vm747 = vcmask 1040384
      %v749 = vsel %vm747, %v354, 0
      %751 = vmatprep.subr.mxu0 0.0
      %752 = vmatpush1.msra.mxu0 0.0
      %753 = vmatprep.subr.mxu0 0.0
      %754 = vmatpush1.msra.mxu0 0.0
      %755 = vmatprep.subr.mxu0 0.0
      %756 = vmatpush1.msra.mxu0 0.0
      %757 = vmatprep.subr.mxu0 0.0
      %758 = vmatpush1.msra.mxu0 0.0
      %759 = vmatprep.subr.mxu0 0.0
      %760 = vmatpush1.msra.mxu0 0.0
      %761 = vmatprep.subr.mxu0 0.0
      %762 = vmatpush1.msra.mxu0 0.0
      %763 = vmatprep.subr.mxu0 0.0
      %764 = vmatpush1.msra.mxu0 0.0
      %765 = vmatprep.subr.mxu0 0.0
      %766 = vmatpush1.msra.mxu0 0.0
      %767 = vmatprep.subr.mxu0 0.0
      %768 = vmatpush1.msra.mxu0 0.0
      %769 = vmatprep.subr.mxu0 0.0
      %770 = vmatpush1.msra.mxu0 0.0
      %771 = vmatprep.subr.mxu0 0.0
      %772 = vmatpush1.msra.mxu0 0.0
      %773 = vmatprep.subr.mxu0 0.0
      %774 = vmatpush1.msra.mxu0 0.0
      %775 = vmatprep.subr.mxu0 0.0
      %776 = vmatpush1.msra.mxu0 0.0
      %777 = vmatprep.subr.mxu0 0.0
      %778 = vmatpush1.msra.mxu0 0.0
      %779 = vmatprep.subr.mxu0 0.0
      %780 = vmatpush1.msra.mxu0 %v749
      %781 = vmatprep.subr.mxu0 0.0
      %782 = vmatpush1.msra.mxu0 %v353
      %783 = vmatprep.subr.mxu0 0.0
      %784 = vmatpush2.msra.mxu0 0.0
      %785 = vmatprep.subr.mxu0 0.0
      %786 = vmatpush2.msra.mxu0 0.0
      %787 = vmatprep.subr.mxu0 0.0
      %788 = vmatpush2.msra.mxu0 0.0
      %789 = vmatprep.subr.mxu0 0.0
      %790 = vmatpush2.msra.mxu0 0.0
      %791 = vmatprep.subr.mxu0 0.0
      %792 = vmatpush2.msra.mxu0 0.0
      %793 = vmatprep.subr.mxu0 0.0
      %794 = vmatpush2.msra.mxu0 0.0
      %795 = vmatprep.subr.mxu0 0.0
      %796 = vmatpush2.msra.mxu0 0.0
      %797 = vmatprep.subr.mxu0 0.0
      %798 = vmatpush2.msra.mxu0 0.0
      %799 = vmatprep.subr.mxu0 0.0
      %800 = vmatpush2.msra.mxu0 0.0
      %801 = vmatprep.subr.mxu0 0.0
      %802 = vmatpush2.msra.mxu0 0.0
      %803 = vmatprep.subr.mxu0 0.0
      %804 = vmatpush2.msra.mxu0 0.0
      %805 = vmatprep.subr.mxu0 0.0
      %806 = vmatpush2.msra.mxu0 0.0
      %807 = vmatprep.subr.mxu0 0.0
      %808 = vmatpush2.msra.mxu0 0.0
      %809 = vmatprep.subr.mxu0 0.0
      %810 = vmatpush2.msra.mxu0 0.0
      %811 = vmatprep.subr.mxu0 0.0
      %812 = vmatpush2.msra.mxu0 0.0
      %813 = vmatprep.subr.mxu0 0.0
      %814 = vmatpush2.msra.mxu0 0.0
      %815 = vmatprep.mubr.f32.mxu0 0.0
      %816 = vmatmul.mubr.f32.gmra.mxu0 %v364
      %v817 = vpop.f32.mrf.mxu0
      %v818 = vadd.f32 %v360, %v817
      %v819 = vpop.f32.mrf.mxu0
      %820 = vmatprep.mubr.f32.mxu0 0.0
      %821 = vmatmul.mubr.f32.gmra.mxu0 %v367
      %v822 = vpop.f32.mrf.mxu0
      %v823 = vadd.f32 %v360, %v822
      %v824 = vpop.f32.mrf.mxu0
      %825 = vmatprep.mubr.f32.mxu0 0.0
      %826 = vmatmul.mubr.f32.gmra.mxu0 %v370
      %v827 = vpop.f32.mrf.mxu0
      %v828 = vadd.f32 %v360, %v827
      %v829 = vpop.f32.mrf.mxu0
      %830 = vmatprep.mubr.f32.mxu0 0.0
      %831 = vmatmul.mubr.f32.gmra.mxu0 %v373
      %v832 = vpop.f32.mrf.mxu0
      %v833 = vadd.f32 %v360, %v832
      %v834 = vpop.f32.mrf.mxu0
      %835 = vmatprep.mubr.f32.mxu0 0.0
      %836 = vmatmul.mubr.f32.gmra.mxu0 %v376
      %v837 = vpop.f32.mrf.mxu0
      %v838 = vadd.f32 %v360, %v837
      %v839 = vpop.f32.mrf.mxu0
      %840 = vmatprep.mubr.f32.mxu0 0.0
      %841 = vmatmul.mubr.f32.gmra.mxu0 %v379
      %v842 = vpop.f32.mrf.mxu0
      %v843 = vadd.f32 %v360, %v842
      %v844 = vpop.f32.mrf.mxu0
      %845 = vmatprep.mubr.f32.mxu0 0.0
      %846 = vmatmul.mubr.f32.gmra.mxu0 %v382
      %v847 = vpop.f32.mrf.mxu0
      %v848 = vadd.f32 %v360, %v847
      %v849 = vpop.f32.mrf.mxu0
      %850 = vmatprep.mubr.f32.mxu0 0.0
      %851 = vmatmul.mubr.f32.gmra.mxu0 %v385
      %v852 = vpop.f32.mrf.mxu0
      %v853 = vadd.f32 %v360, %v852
      %v854 = vpop.f32.mrf.mxu0
      %855 = vmatprep.mubr.f32.mxu0 0.0
      %856 = vmatmul.mubr.f32.gmra.mxu0 %v388
      %v857 = vpop.f32.mrf.mxu0
      %v858 = vadd.f32 %v360, %v857
      %v859 = vpop.f32.mrf.mxu0
      %860 = vmatprep.mubr.f32.mxu0 0.0
      %861 = vmatmul.mubr.f32.gmra.mxu0 %v391
      %v862 = vpop.f32.mrf.mxu0
      %v863 = vadd.f32 %v360, %v862
      %v864 = vpop.f32.mrf.mxu0
      %865 = vmatprep.mubr.f32.mxu0 0.0
      %866 = vmatmul.mubr.f32.gmra.mxu0 %v394
      %v867 = vpop.f32.mrf.mxu0
      %v868 = vadd.f32 %v360, %v867
      %v869 = vpop.f32.mrf.mxu0
      %870 = vmatprep.mubr.f32.mxu0 0.0
      %871 = vmatmul.mubr.f32.gmra.mxu0 %v397
      %v872 = vpop.f32.mrf.mxu0
      %v873 = vadd.f32 %v360, %v872
      %v874 = vpop.f32.mrf.mxu0
      %875 = vmatprep.mubr.f32.mxu0 0.0
      %876 = vmatmul.mubr.f32.gmra.mxu0 %v400
      %v877 = vpop.f32.mrf.mxu0
      %v878 = vadd.f32 %v360, %v877
      %v879 = vpop.f32.mrf.mxu0
      %880 = vmatprep.mubr.f32.mxu0 0.0
      %881 = vmatmul.mubr.f32.gmra.mxu0 %v403
      %v882 = vpop.f32.mrf.mxu0
      %v883 = vadd.f32 %v360, %v882
      %v884 = vpop.f32.mrf.mxu0
      %885 = vmatprep.mubr.f32.mxu0 0.0
      %886 = vmatmul.mubr.f32.gmra.mxu0 %v406
      %v887 = vpop.f32.mrf.mxu0
      %v888 = vadd.f32 %v360, %v887
      %v889 = vpop.f32.mrf.mxu0
      %890 = vmatprep.mubr.f32.mxu0 0.0
      %891 = vmatmul.mubr.f32.gmra.mxu0 %v409
      %v892 = vpop.f32.mrf.mxu0
      %v893 = vadd.f32 %v360, %v892
      %v894 = vpop.f32.mrf.mxu0
      %895 = vmatprep.mubr.f32.mxu0 0.0
      %896 = vmatmul.mubr.f32.gmra.mxu0 %v412
      %v897 = vpop.f32.mrf.mxu0
      %v898 = vadd.f32 %v360, %v897
      %v899 = vpop.f32.mrf.mxu0
      %900 = vmatprep.mubr.f32.mxu0 0.0
      %901 = vmatmul.mubr.f32.gmra.mxu0 %v415
      %v902 = vpop.f32.mrf.mxu0
      %v903 = vadd.f32 %v360, %v902
      %v904 = vpop.f32.mrf.mxu0
      %905 = vmatprep.mubr.f32.mxu0 0.0
      %906 = vmatmul.mubr.f32.gmra.mxu0 %v418
      %v907 = vpop.f32.mrf.mxu0
      %v908 = vadd.f32 %v360, %v907
      %v909 = vpop.f32.mrf.mxu0
      %910 = vmatprep.mubr.f32.mxu0 0.0
      %911 = vmatmul.mubr.f32.gmra.mxu0 %v421
      %v912 = vpop.f32.mrf.mxu0
      %v913 = vadd.f32 %v360, %v912
      %v914 = vpop.f32.mrf.mxu0
      %915 = vmatprep.mubr.f32.mxu0 0.0
      %916 = vmatmul.mubr.f32.gmra.mxu0 %v424
      %v917 = vpop.f32.mrf.mxu0
      %v918 = vadd.f32 %v360, %v917
      %v919 = vpop.f32.mrf.mxu0
      %920 = vmatprep.mubr.f32.mxu0 0.0
      %921 = vmatmul.mubr.f32.gmra.mxu0 %v427
      %v922 = vpop.f32.mrf.mxu0
      %v923 = vadd.f32 %v360, %v922
      %v924 = vpop.f32.mrf.mxu0
      %925 = vmatprep.mubr.f32.mxu0 0.0
      %926 = vmatmul.mubr.f32.gmra.mxu0 %v430
      %v927 = vpop.f32.mrf.mxu0
      %v928 = vadd.f32 %v360, %v927
      %v929 = vpop.f32.mrf.mxu0
      %930 = vmatprep.mubr.f32.mxu0 0.0
      %931 = vmatmul.mubr.f32.gmra.mxu0 %v433
      %v932 = vpop.f32.mrf.mxu0
      %v933 = vadd.f32 %v360, %v932
      %v934 = vpop.f32.mrf.mxu0
      %935 = vmatprep.mubr.f32.mxu0 0.0
      %936 = vmatmul.mubr.f32.gmra.mxu0 %v436
      %v937 = vpop.f32.mrf.mxu0
      %v938 = vadd.f32 %v360, %v937
      %v939 = vpop.f32.mrf.mxu0
      %940 = vmatprep.mubr.f32.mxu0 0.0
      %941 = vmatmul.mubr.f32.gmra.mxu0 %v439
      %v942 = vpop.f32.mrf.mxu0
      %v943 = vadd.f32 %v360, %v942
      %v944 = vpop.f32.mrf.mxu0
      %945 = vmatprep.mubr.f32.mxu0 0.0
      %946 = vmatmul.mubr.f32.gmra.mxu0 %v442
      %v947 = vpop.f32.mrf.mxu0
      %v948 = vadd.f32 %v360, %v947
      %v949 = vpop.f32.mrf.mxu0
      %950 = vmatprep.mubr.f32.mxu0 0.0
      %951 = vmatmul.mubr.f32.gmra.mxu0 %v445
      %v952 = vpop.f32.mrf.mxu0
      %v953 = vadd.f32 %v360, %v952
      %v954 = vpop.f32.mrf.mxu0
      %955 = vmatprep.mubr.f32.mxu0 0.0
      %956 = vmatmul.mubr.f32.gmra.mxu0 %v448
      %v957 = vpop.f32.mrf.mxu0
      %v958 = vadd.f32 %v360, %v957
      %v959 = vpop.f32.mrf.mxu0
      %960 = vmatprep.mubr.f32.mxu0 0.0
      %961 = vmatmul.mubr.f32.gmra.mxu0 %v451
      %v962 = vpop.f32.mrf.mxu0
      %v963 = vadd.f32 %v360, %v962
      %v964 = vpop.f32.mrf.mxu0
      %965 = vmatprep.mubr.f32.mxu0 0.0
      %966 = vmatmul.mubr.f32.gmra.mxu0 %v454
      %v967 = vpop.f32.mrf.mxu0
      %v968 = vadd.f32 %v360, %v967
      %v969 = vpop.f32.mrf.mxu0
      %970 = vmatprep.mubr.f32.mxu0 0.0
      %971 = vmatmul.mubr.f32.gmra.mxu0 %v457
      %v972 = vpop.f32.mrf.mxu0
      %v973 = vadd.f32 %v360, %v972
      %v974 = vpop.f32.mrf.mxu0
      %975 = vmatprep.mubr.f32.mxu0 0.0
      %976 = vmatmul.mubr.f32.gmra.mxu0 %v460
      %v977 = vpop.f32.mrf.mxu0
      %v978 = vadd.f32 %v360, %v977
      %v979 = vpop.f32.mrf.mxu0
      %980 = vmatprep.mubr.f32.mxu0 0.0
      %981 = vmatmul.mubr.f32.gmra.mxu0 %v463
      %v982 = vpop.f32.mrf.mxu0
      %v983 = vadd.f32 %v360, %v982
      %v984 = vpop.f32.mrf.mxu0
      %985 = vmatprep.mubr.f32.mxu0 0.0
      %986 = vmatmul.mubr.f32.gmra.mxu0 %v466
      %v987 = vpop.f32.mrf.mxu0
      %v988 = vadd.f32 %v360, %v987
      %v989 = vpop.f32.mrf.mxu0
      %990 = vmatprep.mubr.f32.mxu0 0.0
      %991 = vmatmul.mubr.f32.gmra.mxu0 %v469
      %v992 = vpop.f32.mrf.mxu0
      %v993 = vadd.f32 %v360, %v992
      %v994 = vpop.f32.mrf.mxu0
      %995 = vmatprep.mubr.f32.mxu0 0.0
      %996 = vmatmul.mubr.f32.gmra.mxu0 %v472
      %v997 = vpop.f32.mrf.mxu0
      %v998 = vadd.f32 %v360, %v997
      %v999 = vpop.f32.mrf.mxu0
      %1000 = vmatprep.mubr.f32.mxu0 0.0
      %1001 = vmatmul.mubr.f32.gmra.mxu0 %v475
      %v1002 = vpop.f32.mrf.mxu0
      %v1003 = vadd.f32 %v360, %v1002
      %v1004 = vpop.f32.mrf.mxu0
      %1005 = vmatprep.mubr.f32.mxu0 0.0
      %1006 = vmatmul.mubr.f32.gmra.mxu0 %v478
      %v1007 = vpop.f32.mrf.mxu0
      %v1008 = vadd.f32 %v360, %v1007
      %v1009 = vpop.f32.mrf.mxu0
      %1010 = vmatprep.mubr.f32.mxu0 0.0
      %1011 = vmatmul.mubr.f32.gmra.mxu0 %v481
      %v1012 = vpop.f32.mrf.mxu0
      %v1013 = vadd.f32 %v360, %v1012
      %v1014 = vpop.f32.mrf.mxu0
      %1015 = vmatprep.mubr.f32.mxu0 0.0
      %1016 = vmatmul.mubr.f32.gmra.mxu0 %v484
      %v1017 = vpop.f32.mrf.mxu0
      %v1018 = vadd.f32 %v360, %v1017
      %v1019 = vpop.f32.mrf.mxu0
      %1020 = vmatprep.mubr.f32.mxu0 0.0
      %1021 = vmatmul.mubr.f32.gmra.mxu0 %v487
      %v1022 = vpop.f32.mrf.mxu0
      %v1023 = vadd.f32 %v360, %v1022
      %v1024 = vpop.f32.mrf.mxu0
      %1025 = vmatprep.mubr.f32.mxu0 0.0
      %1026 = vmatmul.mubr.f32.gmra.mxu0 %v490
      %v1027 = vpop.f32.mrf.mxu0
      %v1028 = vadd.f32 %v360, %v1027
      %v1029 = vpop.f32.mrf.mxu0
      %1030 = vmatprep.mubr.f32.mxu0 0.0
      %1031 = vmatmul.mubr.f32.gmra.mxu0 %v493
      %v1032 = vpop.f32.mrf.mxu0
      %v1033 = vadd.f32 %v360, %v1032
      %v1034 = vpop.f32.mrf.mxu0
      %1035 = vmatprep.mubr.f32.mxu0 0.0
      %1036 = vmatmul.mubr.f32.gmra.mxu0 %v496
      %v1037 = vpop.f32.mrf.mxu0
      %v1038 = vadd.f32 %v360, %v1037
      %v1039 = vpop.f32.mrf.mxu0
      %1040 = vmatprep.mubr.f32.mxu0 0.0
      %1041 = vmatmul.mubr.f32.gmra.mxu0 %v499
      %v1042 = vpop.f32.mrf.mxu0
      %v1043 = vadd.f32 %v360, %v1042
      %v1044 = vpop.f32.mrf.mxu0
      %1045 = vmatprep.mubr.f32.mxu0 0.0
      %1046 = vmatmul.mubr.f32.gmra.mxu0 %v502
      %v1047 = vpop.f32.mrf.mxu0
      %v1048 = vadd.f32 %v360, %v1047
      %v1049 = vpop.f32.mrf.mxu0
      %1050 = vmatprep.mubr.f32.mxu0 0.0
      %1051 = vmatmul.mubr.f32.gmra.mxu0 %v505
      %v1052 = vpop.f32.mrf.mxu0
      %v1053 = vadd.f32 %v360, %v1052
      %v1054 = vpop.f32.mrf.mxu0
      %1055 = vmatprep.mubr.f32.mxu0 0.0
      %1056 = vmatmul.mubr.f32.gmra.mxu0 %v508
      %v1057 = vpop.f32.mrf.mxu0
      %v1058 = vadd.f32 %v360, %v1057
      %v1059 = vpop.f32.mrf.mxu0
      %1060 = vmatprep.mubr.f32.mxu0 0.0
      %1061 = vmatmul.mubr.f32.gmra.mxu0 %v511
      %v1062 = vpop.f32.mrf.mxu0
      %v1063 = vadd.f32 %v360, %v1062
      %v1064 = vpop.f32.mrf.mxu0
      %1065 = vmatprep.mubr.f32.mxu0 0.0
      %1066 = vmatmul.mubr.f32.gmra.mxu0 %v514
      %v1067 = vpop.f32.mrf.mxu0
      %v1068 = vadd.f32 %v360, %v1067
      %v1069 = vpop.f32.mrf.mxu0
      %1070 = vmatprep.mubr.f32.mxu0 0.0
      %1071 = vmatmul.mubr.f32.gmra.mxu0 %v517
      %v1072 = vpop.f32.mrf.mxu0
      %v1073 = vadd.f32 %v360, %v1072
      %v1074 = vpop.f32.mrf.mxu0
      %1075 = vmatprep.mubr.f32.mxu0 0.0
      %1076 = vmatmul.mubr.f32.gmra.mxu0 %v520
      %v1077 = vpop.f32.mrf.mxu0
      %v1078 = vadd.f32 %v360, %v1077
      %v1079 = vpop.f32.mrf.mxu0
      %1080 = vmatprep.mubr.f32.mxu0 0.0
      %1081 = vmatmul.mubr.f32.gmra.mxu0 %v523
      %v1082 = vpop.f32.mrf.mxu0
      %v1083 = vadd.f32 %v360, %v1082
      %v1084 = vpop.f32.mrf.mxu0
      %1085 = vmatprep.mubr.f32.mxu0 0.0
      %1086 = vmatmul.mubr.f32.gmra.mxu0 %v526
      %v1087 = vpop.f32.mrf.mxu0
      %v1088 = vadd.f32 %v360, %v1087
      %v1089 = vpop.f32.mrf.mxu0
      %1090 = vmatprep.mubr.f32.mxu0 0.0
      %1091 = vmatmul.mubr.f32.gmra.mxu0 %v529
      %v1092 = vpop.f32.mrf.mxu0
      %v1093 = vadd.f32 %v360, %v1092
      %v1094 = vpop.f32.mrf.mxu0
      %1095 = vmatprep.mubr.f32.mxu0 0.0
      %1096 = vmatmul.mubr.f32.gmra.mxu0 %v532
      %v1097 = vpop.f32.mrf.mxu0
      %v1098 = vadd.f32 %v360, %v1097
      %v1099 = vpop.f32.mrf.mxu0
      %1100 = vmatprep.mubr.f32.mxu0 0.0
      %1101 = vmatmul.mubr.f32.gmra.mxu0 %v535
      %v1102 = vpop.f32.mrf.mxu0
      %v1103 = vadd.f32 %v360, %v1102
      %v1104 = vpop.f32.mrf.mxu0
      %1105 = vmatprep.mubr.f32.mxu0 0.0
      %1106 = vmatmul.mubr.f32.gmra.mxu0 %v538
      %v1107 = vpop.f32.mrf.mxu0
      %v1108 = vadd.f32 %v360, %v1107
      %v1109 = vpop.f32.mrf.mxu0
      %1110 = vmatprep.mubr.f32.mxu0 0.0
      %1111 = vmatmul.mubr.f32.gmra.mxu0 %v541
      %v1112 = vpop.f32.mrf.mxu0
      %v1113 = vadd.f32 %v360, %v1112
      %v1114 = vpop.f32.mrf.mxu0
      %1115 = vmatprep.mubr.f32.mxu0 0.0
      %1116 = vmatmul.mubr.f32.gmra.mxu0 %v544
      %v1117 = vpop.f32.mrf.mxu0
      %v1118 = vadd.f32 %v360, %v1117
      %v1119 = vpop.f32.mrf.mxu0
      %1120 = vmatprep.mubr.f32.mxu0 0.0
      %1121 = vmatmul.mubr.f32.gmra.mxu0 %v547
      %v1122 = vpop.f32.mrf.mxu0
      %v1123 = vadd.f32 %v360, %v1122
      %v1124 = vpop.f32.mrf.mxu0
      %1125 = vmatprep.mubr.f32.mxu0 0.0
      %1126 = vmatmul.mubr.f32.gmra.mxu0 %v550
      %v1127 = vpop.f32.mrf.mxu0
      %v1128 = vadd.f32 %v360, %v1127
      %v1129 = vpop.f32.mrf.mxu0
      %1130 = vmatprep.mubr.f32.mxu0 0.0
      %1131 = vmatmul.mubr.f32.gmra.mxu0 %v553
      %v1132 = vpop.f32.mrf.mxu0
      %v1133 = vadd.f32 %v360, %v1132
      %v1134 = vpop.f32.mrf.mxu0
      %1135 = vmatprep.mubr.f32.mxu0 0.0
      %1136 = vmatmul.mubr.f32.gmra.mxu0 %v556
      %v1137 = vpop.f32.mrf.mxu0
      %v1138 = vadd.f32 %v360, %v1137
      %v1139 = vpop.f32.mrf.mxu0
      %1140 = vmatprep.mubr.f32.mxu0 0.0
      %1141 = vmatmul.mubr.f32.gmra.mxu0 %v559
      %v1142 = vpop.f32.mrf.mxu0
      %v1143 = vadd.f32 %v360, %v1142
      %v1144 = vpop.f32.mrf.mxu0
      %1145 = vmatprep.mubr.f32.mxu0 0.0
      %1146 = vmatmul.mubr.f32.gmra.mxu0 %v562
      %v1147 = vpop.f32.mrf.mxu0
      %v1148 = vadd.f32 %v360, %v1147
      %v1149 = vpop.f32.mrf.mxu0
      %1150 = vmatprep.mubr.f32.mxu0 0.0
      %1151 = vmatmul.mubr.f32.gmra.mxu0 %v565
      %v1152 = vpop.f32.mrf.mxu0
      %v1153 = vadd.f32 %v360, %v1152
      %v1154 = vpop.f32.mrf.mxu0
      %1155 = vmatprep.mubr.f32.mxu0 0.0
      %1156 = vmatmul.mubr.f32.gmra.mxu0 %v568
      %v1157 = vpop.f32.mrf.mxu0
      %v1158 = vadd.f32 %v360, %v1157
      %v1159 = vpop.f32.mrf.mxu0
      %1160 = vmatprep.mubr.f32.mxu0 0.0
      %1161 = vmatmul.mubr.f32.gmra.mxu0 %v571
      %v1162 = vpop.f32.mrf.mxu0
      %v1163 = vadd.f32 %v360, %v1162
      %v1164 = vpop.f32.mrf.mxu0
      %1165 = vmatprep.mubr.f32.mxu0 0.0
      %1166 = vmatmul.mubr.f32.gmra.mxu0 %v574
      %v1167 = vpop.f32.mrf.mxu0
      %v1168 = vadd.f32 %v360, %v1167
      %v1169 = vpop.f32.mrf.mxu0
      %1170 = vmatprep.mubr.f32.mxu0 0.0
      %1171 = vmatmul.mubr.f32.gmra.mxu0 %v577
      %v1172 = vpop.f32.mrf.mxu0
      %v1173 = vadd.f32 %v360, %v1172
      %v1174 = vpop.f32.mrf.mxu0
      %1175 = vmatprep.mubr.f32.mxu0 0.0
      %1176 = vmatmul.mubr.f32.gmra.mxu0 %v580
      %v1177 = vpop.f32.mrf.mxu0
      %v1178 = vadd.f32 %v360, %v1177
      %v1179 = vpop.f32.mrf.mxu0
      %1180 = vmatprep.mubr.f32.mxu0 0.0
      %1181 = vmatmul.mubr.f32.gmra.mxu0 %v583
      %v1182 = vpop.f32.mrf.mxu0
      %v1183 = vadd.f32 %v360, %v1182
      %v1184 = vpop.f32.mrf.mxu0
      %1185 = vmatprep.mubr.f32.mxu0 0.0
      %1186 = vmatmul.mubr.f32.gmra.mxu0 %v586
      %v1187 = vpop.f32.mrf.mxu0
      %v1188 = vadd.f32 %v360, %v1187
      %v1189 = vpop.f32.mrf.mxu0
      %1190 = vmatprep.mubr.f32.mxu0 0.0
      %1191 = vmatmul.mubr.f32.gmra.mxu0 %v589
      %v1192 = vpop.f32.mrf.mxu0
      %v1193 = vadd.f32 %v360, %v1192
      %v1194 = vpop.f32.mrf.mxu0
      %1195 = vmatprep.mubr.f32.mxu0 0.0
      %1196 = vmatmul.mubr.f32.gmra.mxu0 %v592
      %v1197 = vpop.f32.mrf.mxu0
      %v1198 = vadd.f32 %v360, %v1197
      %v1199 = vpop.f32.mrf.mxu0
      %1200 = vmatprep.mubr.f32.mxu0 0.0
      %1201 = vmatmul.mubr.f32.gmra.mxu0 %v595
      %v1202 = vpop.f32.mrf.mxu0
      %v1203 = vadd.f32 %v360, %v1202
      %v1204 = vpop.f32.mrf.mxu0
      %1205 = vmatprep.mubr.f32.mxu0 0.0
      %1206 = vmatmul.mubr.f32.gmra.mxu0 %v598
      %v1207 = vpop.f32.mrf.mxu0
      %v1208 = vadd.f32 %v360, %v1207
      %v1209 = vpop.f32.mrf.mxu0
      %1210 = vmatprep.mubr.f32.mxu0 0.0
      %1211 = vmatmul.mubr.f32.gmra.mxu0 %v601
      %v1212 = vpop.f32.mrf.mxu0
      %v1213 = vadd.f32 %v360, %v1212
      %v1214 = vpop.f32.mrf.mxu0
      %1215 = vmatprep.mubr.f32.mxu0 0.0
      %1216 = vmatmul.mubr.f32.gmra.mxu0 %v604
      %v1217 = vpop.f32.mrf.mxu0
      %v1218 = vadd.f32 %v360, %v1217
      %v1219 = vpop.f32.mrf.mxu0
      %1220 = vmatprep.mubr.f32.mxu0 0.0
      %1221 = vmatmul.mubr.f32.gmra.mxu0 %v607
      %v1222 = vpop.f32.mrf.mxu0
      %v1223 = vadd.f32 %v360, %v1222
      %v1224 = vpop.f32.mrf.mxu0
      %1225 = vmatprep.mubr.f32.mxu0 0.0
      %1226 = vmatmul.mubr.f32.gmra.mxu0 %v610
      %v1227 = vpop.f32.mrf.mxu0
      %v1228 = vadd.f32 %v360, %v1227
      %v1229 = vpop.f32.mrf.mxu0
      %1230 = vmatprep.mubr.f32.mxu0 0.0
      %1231 = vmatmul.mubr.f32.gmra.mxu0 %v613
      %v1232 = vpop.f32.mrf.mxu0
      %v1233 = vadd.f32 %v360, %v1232
      %v1234 = vpop.f32.mrf.mxu0
      %1235 = vmatprep.mubr.f32.mxu0 0.0
      %1236 = vmatmul.mubr.f32.gmra.mxu0 %v616
      %v1237 = vpop.f32.mrf.mxu0
      %v1238 = vadd.f32 %v360, %v1237
      %v1239 = vpop.f32.mrf.mxu0
      %1240 = vmatprep.mubr.f32.mxu0 0.0
      %1241 = vmatmul.mubr.f32.gmra.mxu0 %v619
      %v1242 = vpop.f32.mrf.mxu0
      %v1243 = vadd.f32 %v360, %v1242
      %v1244 = vpop.f32.mrf.mxu0
      %1245 = vmatprep.mubr.f32.mxu0 0.0
      %1246 = vmatmul.mubr.f32.gmra.mxu0 %v622
      %v1247 = vpop.f32.mrf.mxu0
      %v1248 = vadd.f32 %v360, %v1247
      %v1249 = vpop.f32.mrf.mxu0
      %1250 = vmatprep.mubr.f32.mxu0 0.0
      %1251 = vmatmul.mubr.f32.gmra.mxu0 %v625
      %v1252 = vpop.f32.mrf.mxu0
      %v1253 = vadd.f32 %v360, %v1252
      %v1254 = vpop.f32.mrf.mxu0
      %1255 = vmatprep.mubr.f32.mxu0 0.0
      %1256 = vmatmul.mubr.f32.gmra.mxu0 %v628
      %v1257 = vpop.f32.mrf.mxu0
      %v1258 = vadd.f32 %v360, %v1257
      %v1259 = vpop.f32.mrf.mxu0
      %1260 = vmatprep.mubr.f32.mxu0 0.0
      %1261 = vmatmul.mubr.f32.gmra.mxu0 %v631
      %v1262 = vpop.f32.mrf.mxu0
      %v1263 = vadd.f32 %v360, %v1262
      %v1264 = vpop.f32.mrf.mxu0
      %1265 = vmatprep.mubr.f32.mxu0 0.0
      %1266 = vmatmul.mubr.f32.gmra.mxu0 %v634
      %v1267 = vpop.f32.mrf.mxu0
      %v1268 = vadd.f32 %v360, %v1267
      %v1269 = vpop.f32.mrf.mxu0
      %1270 = vmatprep.mubr.f32.mxu0 0.0
      %1271 = vmatmul.mubr.f32.gmra.mxu0 %v637
      %v1272 = vpop.f32.mrf.mxu0
      %v1273 = vadd.f32 %v360, %v1272
      %v1274 = vpop.f32.mrf.mxu0
      %1275 = vmatprep.mubr.f32.mxu0 0.0
      %1276 = vmatmul.mubr.f32.gmra.mxu0 %v640
      %v1277 = vpop.f32.mrf.mxu0
      %v1278 = vadd.f32 %v360, %v1277
      %v1279 = vpop.f32.mrf.mxu0
      %1280 = vmatprep.mubr.f32.mxu0 0.0
      %1281 = vmatmul.mubr.f32.gmra.mxu0 %v643
      %v1282 = vpop.f32.mrf.mxu0
      %v1283 = vadd.f32 %v360, %v1282
      %v1284 = vpop.f32.mrf.mxu0
      %1285 = vmatprep.mubr.f32.mxu0 0.0
      %1286 = vmatmul.mubr.f32.gmra.mxu0 %v646
      %v1287 = vpop.f32.mrf.mxu0
      %v1288 = vadd.f32 %v360, %v1287
      %v1289 = vpop.f32.mrf.mxu0
      %1290 = vmatprep.mubr.f32.mxu0 0.0
      %1291 = vmatmul.mubr.f32.gmra.mxu0 %v649
      %v1292 = vpop.f32.mrf.mxu0
      %v1293 = vadd.f32 %v360, %v1292
      %v1294 = vpop.f32.mrf.mxu0
      %1295 = vmatprep.mubr.f32.mxu0 0.0
      %1296 = vmatmul.mubr.f32.gmra.mxu0 %v652
      %v1297 = vpop.f32.mrf.mxu0
      %v1298 = vadd.f32 %v360, %v1297
      %v1299 = vpop.f32.mrf.mxu0
      %1300 = vmatprep.mubr.f32.mxu0 0.0
      %1301 = vmatmul.mubr.f32.gmra.mxu0 %v655
      %v1302 = vpop.f32.mrf.mxu0
      %v1303 = vadd.f32 %v360, %v1302
      %v1304 = vpop.f32.mrf.mxu0
      %1305 = vmatprep.mubr.f32.mxu0 0.0
      %1306 = vmatmul.mubr.f32.gmra.mxu0 %v658
      %v1307 = vpop.f32.mrf.mxu0
      %v1308 = vadd.f32 %v360, %v1307
      %v1309 = vpop.f32.mrf.mxu0
      %1310 = vmatprep.mubr.f32.mxu0 0.0
      %1311 = vmatmul.mubr.f32.gmra.mxu0 %v661
      %v1312 = vpop.f32.mrf.mxu0
      %v1313 = vadd.f32 %v360, %v1312
      %v1314 = vpop.f32.mrf.mxu0
      %1315 = vmatprep.mubr.f32.mxu0 0.0
      %1316 = vmatmul.mubr.f32.gmra.mxu0 %v664
      %v1317 = vpop.f32.mrf.mxu0
      %v1318 = vadd.f32 %v360, %v1317
      %v1319 = vpop.f32.mrf.mxu0
      %1320 = vmatprep.mubr.f32.mxu0 0.0
      %1321 = vmatmul.mubr.f32.gmra.mxu0 %v667
      %v1322 = vpop.f32.mrf.mxu0
      %v1323 = vadd.f32 %v360, %v1322
      %v1324 = vpop.f32.mrf.mxu0
      %1325 = vmatprep.mubr.f32.mxu0 0.0
      %1326 = vmatmul.mubr.f32.gmra.mxu0 %v670
      %v1327 = vpop.f32.mrf.mxu0
      %v1328 = vadd.f32 %v360, %v1327
      %v1329 = vpop.f32.mrf.mxu0
      %1330 = vmatprep.mubr.f32.mxu0 0.0
      %1331 = vmatmul.mubr.f32.gmra.mxu0 %v673
      %v1332 = vpop.f32.mrf.mxu0
      %v1333 = vadd.f32 %v360, %v1332
      %v1334 = vpop.f32.mrf.mxu0
      %1335 = vmatprep.mubr.f32.mxu0 0.0
      %1336 = vmatmul.mubr.f32.gmra.mxu0 %v676
      %v1337 = vpop.f32.mrf.mxu0
      %v1338 = vadd.f32 %v360, %v1337
      %v1339 = vpop.f32.mrf.mxu0
      %1340 = vmatprep.mubr.f32.mxu0 0.0
      %1341 = vmatmul.mubr.f32.gmra.mxu0 %v679
      %v1342 = vpop.f32.mrf.mxu0
      %v1343 = vadd.f32 %v360, %v1342
      %v1344 = vpop.f32.mrf.mxu0
      %1345 = vmatprep.mubr.f32.mxu0 0.0
      %1346 = vmatmul.mubr.f32.gmra.mxu0 %v682
      %v1347 = vpop.f32.mrf.mxu0
      %v1348 = vadd.f32 %v360, %v1347
      %v1349 = vpop.f32.mrf.mxu0
      %1350 = vmatprep.mubr.f32.mxu0 0.0
      %1351 = vmatmul.mubr.f32.gmra.mxu0 %v685
      %v1352 = vpop.f32.mrf.mxu0
      %v1353 = vadd.f32 %v360, %v1352
      %v1354 = vpop.f32.mrf.mxu0
      %1355 = vmatprep.mubr.f32.mxu0 0.0
      %1356 = vmatmul.mubr.f32.gmra.mxu0 %v688
      %v1357 = vpop.f32.mrf.mxu0
      %v1358 = vadd.f32 %v360, %v1357
      %v1359 = vpop.f32.mrf.mxu0
      %1360 = vmatprep.mubr.f32.mxu0 0.0
      %1361 = vmatmul.mubr.f32.gmra.mxu0 %v691
      %v1362 = vpop.f32.mrf.mxu0
      %v1363 = vadd.f32 %v360, %v1362
      %v1364 = vpop.f32.mrf.mxu0
      %1365 = vmatprep.mubr.f32.mxu0 0.0
      %1366 = vmatmul.mubr.f32.gmra.mxu0 %v694
      %v1367 = vpop.f32.mrf.mxu0
      %v1368 = vadd.f32 %v360, %v1367
      %v1369 = vpop.f32.mrf.mxu0
      %1370 = vmatprep.mubr.f32.mxu0 0.0
      %1371 = vmatmul.mubr.f32.gmra.mxu0 %v697
      %v1372 = vpop.f32.mrf.mxu0
      %v1373 = vadd.f32 %v360, %v1372
      %v1374 = vpop.f32.mrf.mxu0
      %1375 = vmatprep.mubr.f32.mxu0 0.0
      %1376 = vmatmul.mubr.f32.gmra.mxu0 %v700
      %v1377 = vpop.f32.mrf.mxu0
      %v1378 = vadd.f32 %v360, %v1377
      %v1379 = vpop.f32.mrf.mxu0
      %1380 = vmatprep.mubr.f32.mxu0 0.0
      %1381 = vmatmul.mubr.f32.gmra.mxu0 %v703
      %v1382 = vpop.f32.mrf.mxu0
      %v1383 = vadd.f32 %v360, %v1382
      %v1384 = vpop.f32.mrf.mxu0
      %1385 = vmatprep.mubr.f32.mxu0 0.0
      %1386 = vmatmul.mubr.f32.gmra.mxu0 %v706
      %v1387 = vpop.f32.mrf.mxu0
      %v1388 = vadd.f32 %v360, %v1387
      %v1389 = vpop.f32.mrf.mxu0
      %1390 = vmatprep.mubr.f32.mxu0 0.0
      %1391 = vmatmul.mubr.f32.gmra.mxu0 %v709
      %v1392 = vpop.f32.mrf.mxu0
      %v1393 = vadd.f32 %v360, %v1392
      %v1394 = vpop.f32.mrf.mxu0
      %1395 = vmatprep.mubr.f32.mxu0 0.0
      %1396 = vmatmul.mubr.f32.gmra.mxu0 %v712
      %v1397 = vpop.f32.mrf.mxu0
      %v1398 = vadd.f32 %v360, %v1397
      %v1399 = vpop.f32.mrf.mxu0
      %1400 = vmatprep.mubr.f32.mxu0 0.0
      %1401 = vmatmul.mubr.f32.gmra.mxu0 %v715
      %v1402 = vpop.f32.mrf.mxu0
      %v1403 = vadd.f32 %v360, %v1402
      %v1404 = vpop.f32.mrf.mxu0
      %1405 = vmatprep.mubr.f32.mxu0 0.0
      %1406 = vmatmul.mubr.f32.gmra.mxu0 %v718
      %v1407 = vpop.f32.mrf.mxu0
      %v1408 = vadd.f32 %v360, %v1407
      %v1409 = vpop.f32.mrf.mxu0
      %1410 = vmatprep.mubr.f32.mxu0 0.0
      %1411 = vmatmul.mubr.f32.gmra.mxu0 %v721
      %v1412 = vpop.f32.mrf.mxu0
      %v1413 = vadd.f32 %v360, %v1412
      %v1414 = vpop.f32.mrf.mxu0
      %1415 = vmatprep.mubr.f32.mxu0 0.0
      %1416 = vmatmul.mubr.f32.gmra.mxu0 %v724
      %v1417 = vpop.f32.mrf.mxu0
      %v1418 = vadd.f32 %v360, %v1417
      %v1419 = vpop.f32.mrf.mxu0
      %1420 = vmatprep.mubr.f32.mxu0 0.0
      %1421 = vmatmul.mubr.f32.gmra.mxu0 %v727
      %v1422 = vpop.f32.mrf.mxu0
      %v1423 = vadd.f32 %v360, %v1422
      %v1424 = vpop.f32.mrf.mxu0
      %1425 = vmatprep.mubr.f32.mxu0 0.0
      %1426 = vmatmul.mubr.f32.gmra.mxu0 %v730
      %v1427 = vpop.f32.mrf.mxu0
      %v1428 = vadd.f32 %v360, %v1427
      %v1429 = vpop.f32.mrf.mxu0
      %1430 = vmatprep.mubr.f32.mxu0 0.0
      %1431 = vmatmul.mubr.f32.gmra.mxu0 %v733
      %v1432 = vpop.f32.mrf.mxu0
      %v1433 = vadd.f32 %v360, %v1432
      %v1434 = vpop.f32.mrf.mxu0
      %1435 = vmatprep.mubr.f32.mxu0 0.0
      %1436 = vmatmul.mubr.f32.gmra.mxu0 %v736
      %v1437 = vpop.f32.mrf.mxu0
      %v1438 = vadd.f32 %v360, %v1437
      %v1439 = vpop.f32.mrf.mxu0
      %1440 = vmatprep.mubr.f32.mxu0 0.0
      %1441 = vmatmul.mubr.f32.gmra.mxu0 %v739
      %v1442 = vpop.f32.mrf.mxu0
      %v1443 = vadd.f32 %v360, %v1442
      %v1444 = vpop.f32.mrf.mxu0
      %1445 = vmatprep.mubr.f32.mxu0 0.0
      %1446 = vmatmul.mubr.f32.gmra.mxu0 %v742
      %v1447 = vpop.f32.mrf.mxu0
      %v1448 = vadd.f32 %v360, %v1447
      %v1449 = vpop.f32.mrf.mxu0
      %1450 = vmatprep.mubr.f32.mxu0 0.0
      %1451 = vmatmul.mubr.f32.gmra.mxu0 %v745
      %v1452 = vpop.f32.mrf.mxu0
      %v1453 = vadd.f32 %v360, %v1452
      %v1454 = vpop.f32.mrf.mxu0
      %1455 = vdwg.mxu0
      %v1456 = vmax.f32 %v818, 0.0
      %v1457 = vmax.f32 %v823, 0.0
      %v1458 = vmax.f32 %v828, 0.0
      %v1459 = vmax.f32 %v833, 0.0
      %v1460 = vmax.f32 %v838, 0.0
      %v1461 = vmax.f32 %v843, 0.0
      %v1462 = vmax.f32 %v848, 0.0
      %v1463 = vmax.f32 %v853, 0.0
      %v1464 = vmax.f32 %v858, 0.0
      %v1465 = vmax.f32 %v863, 0.0
      %v1466 = vmax.f32 %v868, 0.0
      %v1467 = vmax.f32 %v873, 0.0
      %v1468 = vmax.f32 %v878, 0.0
      %v1469 = vmax.f32 %v883, 0.0
      %v1470 = vmax.f32 %v888, 0.0
      %v1471 = vmax.f32 %v893, 0.0
      %v1472 = vmax.f32 %v898, 0.0
      %v1473 = vmax.f32 %v903, 0.0
      %v1474 = vmax.f32 %v908, 0.0
      %v1475 = vmax.f32 %v913, 0.0
      %v1476 = vmax.f32 %v918, 0.0
      %v1477 = vmax.f32 %v923, 0.0
      %v1478 = vmax.f32 %v928, 0.0
      %v1479 = vmax.f32 %v933, 0.0
      %v1480 = vmax.f32 %v938, 0.0
      %v1481 = vmax.f32 %v943, 0.0
      %v1482 = vmax.f32 %v948, 0.0
      %v1483 = vmax.f32 %v953, 0.0
      %v1484 = vmax.f32 %v958, 0.0
      %v1485 = vmax.f32 %v963, 0.0
      %v1486 = vmax.f32 %v968, 0.0
      %v1487 = vmax.f32 %v973, 0.0
      %v1488 = vmax.f32 %v978, 0.0
      %v1489 = vmax.f32 %v983, 0.0
      %v1490 = vmax.f32 %v988, 0.0
      %v1491 = vmax.f32 %v993, 0.0
      %v1492 = vmax.f32 %v998, 0.0
      %v1493 = vmax.f32 %v1003, 0.0
      %v1494 = vmax.f32 %v1008, 0.0
      %v1495 = vmax.f32 %v1013, 0.0
      %v1496 = vmax.f32 %v1018, 0.0
      %v1497 = vmax.f32 %v1023, 0.0
      %v1498 = vmax.f32 %v1028, 0.0
      %v1499 = vmax.f32 %v1033, 0.0
      %v1500 = vmax.f32 %v1038, 0.0
      %v1501 = vmax.f32 %v1043, 0.0
      %v1502 = vmax.f32 %v1048, 0.0
      %v1503 = vmax.f32 %v1053, 0.0
      %v1504 = vmax.f32 %v1058, 0.0
      %v1505 = vmax.f32 %v1063, 0.0
      %v1506 = vmax.f32 %v1068, 0.0
      %v1507 = vmax.f32 %v1073, 0.0
      %v1508 = vmax.f32 %v1078, 0.0
      %v1509 = vmax.f32 %v1083, 0.0
      %v1510 = vmax.f32 %v1088, 0.0
      %v1511 = vmax.f32 %v1093, 0.0
      %v1512 = vmax.f32 %v1098, 0.0
      %v1513 = vmax.f32 %v1103, 0.0
      %v1514 = vmax.f32 %v1108, 0.0
      %v1515 = vmax.f32 %v1113, 0.0
      %v1516 = vmax.f32 %v1118, 0.0
      %v1517 = vmax.f32 %v1123, 0.0
      %v1518 = vmax.f32 %v1128, 0.0
      %v1519 = vmax.f32 %v1133, 0.0
      %v1520 = vmax.f32 %v1138, 0.0
      %v1521 = vmax.f32 %v1143, 0.0
      %v1522 = vmax.f32 %v1148, 0.0
      %v1523 = vmax.f32 %v1153, 0.0
      %v1524 = vmax.f32 %v1158, 0.0
      %v1525 = vmax.f32 %v1163, 0.0
      %v1526 = vmax.f32 %v1168, 0.0
      %v1527 = vmax.f32 %v1173, 0.0
      %v1528 = vmax.f32 %v1178, 0.0
      %v1529 = vmax.f32 %v1183, 0.0
      %v1530 = vmax.f32 %v1188, 0.0
      %v1531 = vmax.f32 %v1193, 0.0
      %v1532 = vmax.f32 %v1198, 0.0
      %v1533 = vmax.f32 %v1203, 0.0
      %v1534 = vmax.f32 %v1208, 0.0
      %v1535 = vmax.f32 %v1213, 0.0
      %v1536 = vmax.f32 %v1218, 0.0
      %v1537 = vmax.f32 %v1223, 0.0
      %v1538 = vmax.f32 %v1228, 0.0
      %v1539 = vmax.f32 %v1233, 0.0
      %v1540 = vmax.f32 %v1238, 0.0
      %v1541 = vmax.f32 %v1243, 0.0
      %v1542 = vmax.f32 %v1248, 0.0
      %v1543 = vmax.f32 %v1253, 0.0
      %v1544 = vmax.f32 %v1258, 0.0
      %v1545 = vmax.f32 %v1263, 0.0
      %v1546 = vmax.f32 %v1268, 0.0
      %v1547 = vmax.f32 %v1273, 0.0
      %v1548 = vmax.f32 %v1278, 0.0
      %v1549 = vmax.f32 %v1283, 0.0
      %v1550 = vmax.f32 %v1288, 0.0
      %v1551 = vmax.f32 %v1293, 0.0
      %v1552 = vmax.f32 %v1298, 0.0
      %v1553 = vmax.f32 %v1303, 0.0
      %v1554 = vmax.f32 %v1308, 0.0
      %v1555 = vmax.f32 %v1313, 0.0
      %v1556 = vmax.f32 %v1318, 0.0
      %v1557 = vmax.f32 %v1323, 0.0
      %v1558 = vmax.f32 %v1328, 0.0
      %v1559 = vmax.f32 %v1333, 0.0
      %v1560 = vmax.f32 %v1338, 0.0
      %v1561 = vmax.f32 %v1343, 0.0
      %v1562 = vmax.f32 %v1348, 0.0
      %v1563 = vmax.f32 %v1353, 0.0
      %v1564 = vmax.f32 %v1358, 0.0
      %v1565 = vmax.f32 %v1363, 0.0
      %v1566 = vmax.f32 %v1368, 0.0
      %v1567 = vmax.f32 %v1373, 0.0
      %v1568 = vmax.f32 %v1378, 0.0
      %v1569 = vmax.f32 %v1383, 0.0
      %v1570 = vmax.f32 %v1388, 0.0
      %v1571 = vmax.f32 %v1393, 0.0
      %v1572 = vmax.f32 %v1398, 0.0
      %v1573 = vmax.f32 %v1403, 0.0
      %v1574 = vmax.f32 %v1408, 0.0
      %v1575 = vmax.f32 %v1413, 0.0
      %v1576 = vmax.f32 %v1418, 0.0
      %v1577 = vmax.f32 %v1423, 0.0
      %v1578 = vmax.f32 %v1428, 0.0
      %v1579 = vmax.f32 %v1433, 0.0
      %v1580 = vmax.f32 %v1438, 0.0
      %v1581 = vmax.f32 %v1443, 0.0
      %v1582 = vmax.f32 %v1448, 0.0
      %v1583 = vmax.f32 %v1453, 0.0
      %vm1584 = vcmask 261120
      %1585 = vst.msk [vmem:[#allocation2] sm:$0xff] %vm1584, %v1456
      %1586 = vst.msk [vmem:[#allocation2 + $0x8] sm:$0xff] %vm1584, %v1457
      %1587 = vst.msk [vmem:[#allocation2 + $0x10] sm:$0xff] %vm1584, %v1458
      %1588 = vst.msk [vmem:[#allocation2 + $0x18] sm:$0xff] %vm1584, %v1459
      %1589 = vst.msk [vmem:[#allocation2 + $0x20] sm:$0xff] %vm1584, %v1460
      %1590 = vst.msk [vmem:[#allocation2 + $0x28] sm:$0xff] %vm1584, %v1461
      %1591 = vst.msk [vmem:[#allocation2 + $0x30] sm:$0xff] %vm1584, %v1462
      %1592 = vst.msk [vmem:[#allocation2 + $0x38] sm:$0xff] %vm1584, %v1463
      %1593 = vst.msk [vmem:[#allocation2 + $0x40] sm:$0xff] %vm1584, %v1464
      %1594 = vst.msk [vmem:[#allocation2 + $0x48] sm:$0xff] %vm1584, %v1465
      %1595 = vst.msk [vmem:[#allocation2 + $0x50] sm:$0xff] %vm1584, %v1466
      %1596 = vst.msk [vmem:[#allocation2 + $0x58] sm:$0xff] %vm1584, %v1467
      %1597 = vst.msk [vmem:[#allocation2 + $0x60] sm:$0xff] %vm1584, %v1468
      %1598 = vst.msk [vmem:[#allocation2 + $0x68] sm:$0xff] %vm1584, %v1469
      %1599 = vst.msk [vmem:[#allocation2 + $0x70] sm:$0xff] %vm1584, %v1470
      %1600 = vst.msk [vmem:[#allocation2 + $0x78] sm:$0xff] %vm1584, %v1471
      %1601 = vst.msk [vmem:[#allocation2 + $0x80] sm:$0xff] %vm1584, %v1472
      %1602 = vst.msk [vmem:[#allocation2 + $0x88] sm:$0xff] %vm1584, %v1473
      %1603 = vst.msk [vmem:[#allocation2 + $0x90] sm:$0xff] %vm1584, %v1474
      %1604 = vst.msk [vmem:[#allocation2 + $0x98] sm:$0xff] %vm1584, %v1475
      %1605 = vst.msk [vmem:[#allocation2 + $0xa0] sm:$0xff] %vm1584, %v1476
      %1606 = vst.msk [vmem:[#allocation2 + $0xa8] sm:$0xff] %vm1584, %v1477
      %1607 = vst.msk [vmem:[#allocation2 + $0xb0] sm:$0xff] %vm1584, %v1478
      %1608 = vst.msk [vmem:[#allocation2 + $0xb8] sm:$0xff] %vm1584, %v1479
      %1609 = vst.msk [vmem:[#allocation2 + $0xc0] sm:$0xff] %vm1584, %v1480
      %1610 = vst.msk [vmem:[#allocation2 + $0xc8] sm:$0xff] %vm1584, %v1481
      %1611 = vst.msk [vmem:[#allocation2 + $0xd0] sm:$0xff] %vm1584, %v1482
      %1612 = vst.msk [vmem:[#allocation2 + $0xd8] sm:$0xff] %vm1584, %v1483
      %1613 = vst.msk [vmem:[#allocation2 + $0xe0] sm:$0xff] %vm1584, %v1484
      %1614 = vst.msk [vmem:[#allocation2 + $0xe8] sm:$0xff] %vm1584, %v1485
      %1615 = vst.msk [vmem:[#allocation2 + $0xf0] sm:$0xff] %vm1584, %v1486
      %1616 = vst.msk [vmem:[#allocation2 + $0xf8] sm:$0xff] %vm1584, %v1487
      %1617 = vst.msk [vmem:[#allocation2 + $0x100] sm:$0xff] %vm1584, %v1488
      %1618 = vst.msk [vmem:[#allocation2 + $0x108] sm:$0xff] %vm1584, %v1489
      %1619 = vst.msk [vmem:[#allocation2 + $0x110] sm:$0xff] %vm1584, %v1490
      %1620 = vst.msk [vmem:[#allocation2 + $0x118] sm:$0xff] %vm1584, %v1491
      %1621 = vst.msk [vmem:[#allocation2 + $0x120] sm:$0xff] %vm1584, %v1492
      %1622 = vst.msk [vmem:[#allocation2 + $0x128] sm:$0xff] %vm1584, %v1493
      %1623 = vst.msk [vmem:[#allocation2 + $0x130] sm:$0xff] %vm1584, %v1494
      %1624 = vst.msk [vmem:[#allocation2 + $0x138] sm:$0xff] %vm1584, %v1495
      %1625 = vst.msk [vmem:[#allocation2 + $0x140] sm:$0xff] %vm1584, %v1496
      %1626 = vst.msk [vmem:[#allocation2 + $0x148] sm:$0xff] %vm1584, %v1497
      %1627 = vst.msk [vmem:[#allocation2 + $0x150] sm:$0xff] %vm1584, %v1498
      %1628 = vst.msk [vmem:[#allocation2 + $0x158] sm:$0xff] %vm1584, %v1499
      %1629 = vst.msk [vmem:[#allocation2 + $0x160] sm:$0xff] %vm1584, %v1500
      %1630 = vst.msk [vmem:[#allocation2 + $0x168] sm:$0xff] %vm1584, %v1501
      %1631 = vst.msk [vmem:[#allocation2 + $0x170] sm:$0xff] %vm1584, %v1502
      %1632 = vst.msk [vmem:[#allocation2 + $0x178] sm:$0xff] %vm1584, %v1503
      %1633 = vst.msk [vmem:[#allocation2 + $0x180] sm:$0xff] %vm1584, %v1504
      %1634 = vst.msk [vmem:[#allocation2 + $0x188] sm:$0xff] %vm1584, %v1505
      %1635 = vst.msk [vmem:[#allocation2 + $0x190] sm:$0xff] %vm1584, %v1506
      %1636 = vst.msk [vmem:[#allocation2 + $0x198] sm:$0xff] %vm1584, %v1507
      %1637 = vst.msk [vmem:[#allocation2 + $0x1a0] sm:$0xff] %vm1584, %v1508
      %1638 = vst.msk [vmem:[#allocation2 + $0x1a8] sm:$0xff] %vm1584, %v1509
      %1639 = vst.msk [vmem:[#allocation2 + $0x1b0] sm:$0xff] %vm1584, %v1510
      %1640 = vst.msk [vmem:[#allocation2 + $0x1b8] sm:$0xff] %vm1584, %v1511
      %1641 = vst.msk [vmem:[#allocation2 + $0x1c0] sm:$0xff] %vm1584, %v1512
      %1642 = vst.msk [vmem:[#allocation2 + $0x1c8] sm:$0xff] %vm1584, %v1513
      %1643 = vst.msk [vmem:[#allocation2 + $0x1d0] sm:$0xff] %vm1584, %v1514
      %1644 = vst.msk [vmem:[#allocation2 + $0x1d8] sm:$0xff] %vm1584, %v1515
      %1645 = vst.msk [vmem:[#allocation2 + $0x1e0] sm:$0xff] %vm1584, %v1516
      %1646 = vst.msk [vmem:[#allocation2 + $0x1e8] sm:$0xff] %vm1584, %v1517
      %1647 = vst.msk [vmem:[#allocation2 + $0x1f0] sm:$0xff] %vm1584, %v1518
      %1648 = vst.msk [vmem:[#allocation2 + $0x1f8] sm:$0xff] %vm1584, %v1519
      %1649 = vst.msk [vmem:[#allocation2 + $0x200] sm:$0xff] %vm1584, %v1520
      %1650 = vst.msk [vmem:[#allocation2 + $0x208] sm:$0xff] %vm1584, %v1521
      %1651 = vst.msk [vmem:[#allocation2 + $0x210] sm:$0xff] %vm1584, %v1522
      %1652 = vst.msk [vmem:[#allocation2 + $0x218] sm:$0xff] %vm1584, %v1523
      %1653 = vst.msk [vmem:[#allocation2 + $0x220] sm:$0xff] %vm1584, %v1524
      %1654 = vst.msk [vmem:[#allocation2 + $0x228] sm:$0xff] %vm1584, %v1525
      %1655 = vst.msk [vmem:[#allocation2 + $0x230] sm:$0xff] %vm1584, %v1526
      %1656 = vst.msk [vmem:[#allocation2 + $0x238] sm:$0xff] %vm1584, %v1527
      %1657 = vst.msk [vmem:[#allocation2 + $0x240] sm:$0xff] %vm1584, %v1528
      %1658 = vst.msk [vmem:[#allocation2 + $0x248] sm:$0xff] %vm1584, %v1529
      %1659 = vst.msk [vmem:[#allocation2 + $0x250] sm:$0xff] %vm1584, %v1530
      %1660 = vst.msk [vmem:[#allocation2 + $0x258] sm:$0xff] %vm1584, %v1531
      %1661 = vst.msk [vmem:[#allocation2 + $0x260] sm:$0xff] %vm1584, %v1532
      %1662 = vst.msk [vmem:[#allocation2 + $0x268] sm:$0xff] %vm1584, %v1533
      %1663 = vst.msk [vmem:[#allocation2 + $0x270] sm:$0xff] %vm1584, %v1534
      %1664 = vst.msk [vmem:[#allocation2 + $0x278] sm:$0xff] %vm1584, %v1535
      %1665 = vst.msk [vmem:[#allocation2 + $0x280] sm:$0xff] %vm1584, %v1536
      %1666 = vst.msk [vmem:[#allocation2 + $0x288] sm:$0xff] %vm1584, %v1537
      %1667 = vst.msk [vmem:[#allocation2 + $0x290] sm:$0xff] %vm1584, %v1538
      %1668 = vst.msk [vmem:[#allocation2 + $0x298] sm:$0xff] %vm1584, %v1539
      %1669 = vst.msk [vmem:[#allocation2 + $0x2a0] sm:$0xff] %vm1584, %v1540
      %1670 = vst.msk [vmem:[#allocation2 + $0x2a8] sm:$0xff] %vm1584, %v1541
      %1671 = vst.msk [vmem:[#allocation2 + $0x2b0] sm:$0xff] %vm1584, %v1542
      %1672 = vst.msk [vmem:[#allocation2 + $0x2b8] sm:$0xff] %vm1584, %v1543
      %1673 = vst.msk [vmem:[#allocation2 + $0x2c0] sm:$0xff] %vm1584, %v1544
      %1674 = vst.msk [vmem:[#allocation2 + $0x2c8] sm:$0xff] %vm1584, %v1545
      %1675 = vst.msk [vmem:[#allocation2 + $0x2d0] sm:$0xff] %vm1584, %v1546
      %1676 = vst.msk [vmem:[#allocation2 + $0x2d8] sm:$0xff] %vm1584, %v1547
      %1677 = vst.msk [vmem:[#allocation2 + $0x2e0] sm:$0xff] %vm1584, %v1548
      %1678 = vst.msk [vmem:[#allocation2 + $0x2e8] sm:$0xff] %vm1584, %v1549
      %1679 = vst.msk [vmem:[#allocation2 + $0x2f0] sm:$0xff] %vm1584, %v1550
      %1680 = vst.msk [vmem:[#allocation2 + $0x2f8] sm:$0xff] %vm1584, %v1551
      %1681 = vst.msk [vmem:[#allocation2 + $0x300] sm:$0xff] %vm1584, %v1552
      %1682 = vst.msk [vmem:[#allocation2 + $0x308] sm:$0xff] %vm1584, %v1553
      %1683 = vst.msk [vmem:[#allocation2 + $0x310] sm:$0xff] %vm1584, %v1554
      %1684 = vst.msk [vmem:[#allocation2 + $0x318] sm:$0xff] %vm1584, %v1555
      %1685 = vst.msk [vmem:[#allocation2 + $0x320] sm:$0xff] %vm1584, %v1556
      %1686 = vst.msk [vmem:[#allocation2 + $0x328] sm:$0xff] %vm1584, %v1557
      %1687 = vst.msk [vmem:[#allocation2 + $0x330] sm:$0xff] %vm1584, %v1558
      %1688 = vst.msk [vmem:[#allocation2 + $0x338] sm:$0xff] %vm1584, %v1559
      %1689 = vst.msk [vmem:[#allocation2 + $0x340] sm:$0xff] %vm1584, %v1560
      %1690 = vst.msk [vmem:[#allocation2 + $0x348] sm:$0xff] %vm1584, %v1561
      %1691 = vst.msk [vmem:[#allocation2 + $0x350] sm:$0xff] %vm1584, %v1562
      %1692 = vst.msk [vmem:[#allocation2 + $0x358] sm:$0xff] %vm1584, %v1563
      %1693 = vst.msk [vmem:[#allocation2 + $0x360] sm:$0xff] %vm1584, %v1564
      %1694 = vst.msk [vmem:[#allocation2 + $0x368] sm:$0xff] %vm1584, %v1565
      %1695 = vst.msk [vmem:[#allocation2 + $0x370] sm:$0xff] %vm1584, %v1566
      %1696 = vst.msk [vmem:[#allocation2 + $0x378] sm:$0xff] %vm1584, %v1567
      %1697 = vst.msk [vmem:[#allocation2 + $0x380] sm:$0xff] %vm1584, %v1568
      %1698 = vst.msk [vmem:[#allocation2 + $0x388] sm:$0xff] %vm1584, %v1569
      %1699 = vst.msk [vmem:[#allocation2 + $0x390] sm:$0xff] %vm1584, %v1570
      %1700 = vst.msk [vmem:[#allocation2 + $0x398] sm:$0xff] %vm1584, %v1571
      %1701 = vst.msk [vmem:[#allocation2 + $0x3a0] sm:$0xff] %vm1584, %v1572
      %1702 = vst.msk [vmem:[#allocation2 + $0x3a8] sm:$0xff] %vm1584, %v1573
      %1703 = vst.msk [vmem:[#allocation2 + $0x3b0] sm:$0xff] %vm1584, %v1574
      %1704 = vst.msk [vmem:[#allocation2 + $0x3b8] sm:$0xff] %vm1584, %v1575
      %1705 = vst.msk [vmem:[#allocation2 + $0x3c0] sm:$0xff] %vm1584, %v1576
      %1706 = vst.msk [vmem:[#allocation2 + $0x3c8] sm:$0xff] %vm1584, %v1577
      %1707 = vst.msk [vmem:[#allocation2 + $0x3d0] sm:$0xff] %vm1584, %v1578
      %1708 = vst.msk [vmem:[#allocation2 + $0x3d8] sm:$0xff] %vm1584, %v1579
      %1709 = vst.msk [vmem:[#allocation2 + $0x3e0] sm:$0xff] %vm1584, %v1580
      %1710 = vst.msk [vmem:[#allocation2 + $0x3e8] sm:$0xff] %vm1584, %v1581
      %1711 = vst.msk [vmem:[#allocation2 + $0x3f0] sm:$0xff] %vm1584, %v1582
      %1712 = vst.msk [vmem:[#allocation2 + $0x3f8] sm:$0xff] %vm1584, %v1583
      %v1713 = vld [vmem:[#allocation2] sm:$0xff]
      %v1714 = vld [vmem:[#allocation2 + $0x8] sm:$0xff]
      %v1715 = vld [vmem:[#allocation2 + $0x10] sm:$0xff]
      %v1716 = vld [vmem:[#allocation2 + $0x18] sm:$0xff]
      %v1717 = vld [vmem:[#allocation2 + $0x40] sm:$0xff]
      %v1718 = vld [vmem:[#allocation2 + $0x48] sm:$0xff]
      %v1719 = vld [vmem:[#allocation2 + $0x50] sm:$0xff]
      %v1720 = vld [vmem:[#allocation2 + $0x58] sm:$0xff]
      %v1721 = vld [vmem:[#allocation2 + $0x80] sm:$0xff]
      %v1722 = vld [vmem:[#allocation2 + $0x88] sm:$0xff]
      %v1723 = vld [vmem:[#allocation2 + $0x90] sm:$0xff]
      %v1724 = vld [vmem:[#allocation2 + $0x98] sm:$0xff]
      %v1725 = vld [vmem:[#allocation2 + $0xc0] sm:$0xff]
      %v1726 = vld [vmem:[#allocation2 + $0xc8] sm:$0xff]
      %v1727 = vld [vmem:[#allocation2 + $0xd0] sm:$0xff]
      %v1728 = vld [vmem:[#allocation2 + $0xd8] sm:$0xff]
      %v1729 = vld [vmem:[#allocation2 + $0x100] sm:$0xff]
      %v1730 = vld [vmem:[#allocation2 + $0x108] sm:$0xff]
      %v1731 = vld [vmem:[#allocation2 + $0x110] sm:$0xff]
      %v1732 = vld [vmem:[#allocation2 + $0x118] sm:$0xff]
      %v1733 = vld [vmem:[#allocation2 + $0x140] sm:$0xff]
      %v1734 = vld [vmem:[#allocation2 + $0x148] sm:$0xff]
      %v1735 = vld [vmem:[#allocation2 + $0x150] sm:$0xff]
      %v1736 = vld [vmem:[#allocation2 + $0x158] sm:$0xff]
      %v1737 = vld [vmem:[#allocation2 + $0x180] sm:$0xff]
      %v1738 = vld [vmem:[#allocation2 + $0x188] sm:$0xff]
      %v1739 = vld [vmem:[#allocation2 + $0x190] sm:$0xff]
      %v1740 = vld [vmem:[#allocation2 + $0x198] sm:$0xff]
      %v1741 = vld [vmem:[#allocation2 + $0x1c0] sm:$0xff]
      %v1742 = vld [vmem:[#allocation2 + $0x1c8] sm:$0xff]
      %v1743 = vld [vmem:[#allocation2 + $0x1d0] sm:$0xff]
      %v1744 = vld [vmem:[#allocation2 + $0x1d8] sm:$0xff]
      %v1745 = vld [vmem:[#allocation2 + $0x200] sm:$0xff]
      %v1746 = vld [vmem:[#allocation2 + $0x208] sm:$0xff]
      %v1747 = vld [vmem:[#allocation2 + $0x210] sm:$0xff]
      %v1748 = vld [vmem:[#allocation2 + $0x218] sm:$0xff]
      %v1749 = vld [vmem:[#allocation2 + $0x240] sm:$0xff]
      %v1750 = vld [vmem:[#allocation2 + $0x248] sm:$0xff]
      %v1751 = vld [vmem:[#allocation2 + $0x250] sm:$0xff]
      %v1752 = vld [vmem:[#allocation2 + $0x258] sm:$0xff]
      %v1753 = vld [vmem:[#allocation2 + $0x280] sm:$0xff]
      %v1754 = vld [vmem:[#allocation2 + $0x288] sm:$0xff]
      %v1755 = vld [vmem:[#allocation2 + $0x290] sm:$0xff]
      %v1756 = vld [vmem:[#allocation2 + $0x298] sm:$0xff]
      %v1757 = vld [vmem:[#allocation2 + $0x2c0] sm:$0xff]
      %v1758 = vld [vmem:[#allocation2 + $0x2c8] sm:$0xff]
      %v1759 = vld [vmem:[#allocation2 + $0x2d0] sm:$0xff]
      %v1760 = vld [vmem:[#allocation2 + $0x2d8] sm:$0xff]
      %v1761 = vld [vmem:[#allocation2 + $0x300] sm:$0xff]
      %v1762 = vld [vmem:[#allocation2 + $0x308] sm:$0xff]
      %v1763 = vld [vmem:[#allocation2 + $0x310] sm:$0xff]
      %v1764 = vld [vmem:[#allocation2 + $0x318] sm:$0xff]
      %v1765 = vld [vmem:[#allocation2 + $0x340] sm:$0xff]
      %v1766 = vld [vmem:[#allocation2 + $0x348] sm:$0xff]
      %v1767 = vld [vmem:[#allocation2 + $0x350] sm:$0xff]
      %v1768 = vld [vmem:[#allocation2 + $0x358] sm:$0xff]
      %v1769 = vld [vmem:[#allocation2 + $0x380] sm:$0xff]
      %v1770 = vld [vmem:[#allocation2 + $0x388] sm:$0xff]
      %v1771 = vld [vmem:[#allocation2 + $0x390] sm:$0xff]
      %v1772 = vld [vmem:[#allocation2 + $0x398] sm:$0xff]
      %v1773 = vld [vmem:[#allocation2 + $0x3c0] sm:$0xff]
      %v1774 = vld [vmem:[#allocation2 + $0x3c8] sm:$0xff]
      %v1775 = vld [vmem:[#allocation2 + $0x3d0] sm:$0xff]
      %v1776 = vld [vmem:[#allocation2 + $0x3d8] sm:$0xff]
      %s1777 = scalar_lea.vmem [#allocation2], 32
      %v1778 = vld [vmem:[%s1777] sm:$0xff]
      %v1779 = vld [vmem:[%s1777 + $0x8] sm:$0xff]
      %v1780 = vld [vmem:[%s1777 + $0x10] sm:$0xff]
      %v1781 = vld [vmem:[%s1777 + $0x18] sm:$0xff]
      %v1782 = vld [vmem:[%s1777 + $0x40] sm:$0xff]
      %v1783 = vld [vmem:[%s1777 + $0x48] sm:$0xff]
      %v1784 = vld [vmem:[%s1777 + $0x50] sm:$0xff]
      %v1785 = vld [vmem:[%s1777 + $0x58] sm:$0xff]
      %v1786 = vld [vmem:[%s1777 + $0x80] sm:$0xff]
      %v1787 = vld [vmem:[%s1777 + $0x88] sm:$0xff]
      %v1788 = vld [vmem:[%s1777 + $0x90] sm:$0xff]
      %v1789 = vld [vmem:[%s1777 + $0x98] sm:$0xff]
      %v1790 = vld [vmem:[%s1777 + $0xc0] sm:$0xff]
      %v1791 = vld [vmem:[%s1777 + $0xc8] sm:$0xff]
      %v1792 = vld [vmem:[%s1777 + $0xd0] sm:$0xff]
      %v1793 = vld [vmem:[%s1777 + $0xd8] sm:$0xff]
      %v1794 = vld [vmem:[%s1777 + $0x100] sm:$0xff]
      %v1795 = vld [vmem:[%s1777 + $0x108] sm:$0xff]
      %v1796 = vld [vmem:[%s1777 + $0x110] sm:$0xff]
      %v1797 = vld [vmem:[%s1777 + $0x118] sm:$0xff]
      %v1798 = vld [vmem:[%s1777 + $0x140] sm:$0xff]
      %v1799 = vld [vmem:[%s1777 + $0x148] sm:$0xff]
      %v1800 = vld [vmem:[%s1777 + $0x150] sm:$0xff]
      %v1801 = vld [vmem:[%s1777 + $0x158] sm:$0xff]
      %v1802 = vld [vmem:[%s1777 + $0x180] sm:$0xff]
      %v1803 = vld [vmem:[%s1777 + $0x188] sm:$0xff]
      %v1804 = vld [vmem:[%s1777 + $0x190] sm:$0xff]
      %v1805 = vld [vmem:[%s1777 + $0x198] sm:$0xff]
      %v1806 = vld [vmem:[%s1777 + $0x1c0] sm:$0xff]
      %v1807 = vld [vmem:[%s1777 + $0x1c8] sm:$0xff]
      %v1808 = vld [vmem:[%s1777 + $0x1d0] sm:$0xff]
      %v1809 = vld [vmem:[%s1777 + $0x1d8] sm:$0xff]
      %v1810 = vld [vmem:[%s1777 + $0x200] sm:$0xff]
      %v1811 = vld [vmem:[%s1777 + $0x208] sm:$0xff]
      %v1812 = vld [vmem:[%s1777 + $0x210] sm:$0xff]
      %v1813 = vld [vmem:[%s1777 + $0x218] sm:$0xff]
      %v1814 = vld [vmem:[%s1777 + $0x240] sm:$0xff]
      %v1815 = vld [vmem:[%s1777 + $0x248] sm:$0xff]
      %v1816 = vld [vmem:[%s1777 + $0x250] sm:$0xff]
      %v1817 = vld [vmem:[%s1777 + $0x258] sm:$0xff]
      %v1818 = vld [vmem:[%s1777 + $0x280] sm:$0xff]
      %v1819 = vld [vmem:[%s1777 + $0x288] sm:$0xff]
      %v1820 = vld [vmem:[%s1777 + $0x290] sm:$0xff]
      %v1821 = vld [vmem:[%s1777 + $0x298] sm:$0xff]
      %v1822 = vld [vmem:[%s1777 + $0x2c0] sm:$0xff]
      %v1823 = vld [vmem:[%s1777 + $0x2c8] sm:$0xff]
      %v1824 = vld [vmem:[%s1777 + $0x2d0] sm:$0xff]
      %v1825 = vld [vmem:[%s1777 + $0x2d8] sm:$0xff]
      %v1826 = vld [vmem:[%s1777 + $0x300] sm:$0xff]
      %v1827 = vld [vmem:[%s1777 + $0x308] sm:$0xff]
      %v1828 = vld [vmem:[%s1777 + $0x310] sm:$0xff]
      %v1829 = vld [vmem:[%s1777 + $0x318] sm:$0xff]
      %v1830 = vld [vmem:[%s1777 + $0x340] sm:$0xff]
      %v1831 = vld [vmem:[%s1777 + $0x348] sm:$0xff]
      %v1832 = vld [vmem:[%s1777 + $0x350] sm:$0xff]
      %v1833 = vld [vmem:[%s1777 + $0x358] sm:$0xff]
      %v1834 = vld [vmem:[%s1777 + $0x380] sm:$0xff]
      %v1835 = vld [vmem:[%s1777 + $0x388] sm:$0xff]
      %v1836 = vld [vmem:[%s1777 + $0x390] sm:$0xff]
      %v1837 = vld [vmem:[%s1777 + $0x398] sm:$0xff]
      %v1838 = vld [vmem:[%s1777 + $0x3c0] sm:$0xff]
      %v1839 = vld [vmem:[%s1777 + $0x3c8] sm:$0xff]
      %v1840 = vld [vmem:[%s1777 + $0x3d0] sm:$0xff]
      %v1841 = vld [vmem:[%s1777 + $0x3d8] sm:$0xff]
      %v1842 = vmax.f32 %v1713, %v1778
      %v1843 = vmax.f32 %v1714, %v1779
      %v1844 = vmax.f32 %v1715, %v1780
      %v1845 = vmax.f32 %v1716, %v1781
      %v1846 = vmax.f32 %v1717, %v1782
      %v1847 = vmax.f32 %v1718, %v1783
      %v1848 = vmax.f32 %v1719, %v1784
      %v1849 = vmax.f32 %v1720, %v1785
      %v1850 = vmax.f32 %v1721, %v1786
      %v1851 = vmax.f32 %v1722, %v1787
      %v1852 = vmax.f32 %v1723, %v1788
      %v1853 = vmax.f32 %v1724, %v1789
      %v1854 = vmax.f32 %v1725, %v1790
      %v1855 = vmax.f32 %v1726, %v1791
      %v1856 = vmax.f32 %v1727, %v1792
      %v1857 = vmax.f32 %v1728, %v1793
      %v1858 = vmax.f32 %v1729, %v1794
      %v1859 = vmax.f32 %v1730, %v1795
      %v1860 = vmax.f32 %v1731, %v1796
      %v1861 = vmax.f32 %v1732, %v1797
      %v1862 = vmax.f32 %v1733, %v1798
      %v1863 = vmax.f32 %v1734, %v1799
      %v1864 = vmax.f32 %v1735, %v1800
      %v1865 = vmax.f32 %v1736, %v1801
      %v1866 = vmax.f32 %v1737, %v1802
      %v1867 = vmax.f32 %v1738, %v1803
      %v1868 = vmax.f32 %v1739, %v1804
      %v1869 = vmax.f32 %v1740, %v1805
      %v1870 = vmax.f32 %v1741, %v1806
      %v1871 = vmax.f32 %v1742, %v1807
      %v1872 = vmax.f32 %v1743, %v1808
      %v1873 = vmax.f32 %v1744, %v1809
      %v1874 = vmax.f32 %v1745, %v1810
      %v1875 = vmax.f32 %v1746, %v1811
      %v1876 = vmax.f32 %v1747, %v1812
      %v1877 = vmax.f32 %v1748, %v1813
      %v1878 = vmax.f32 %v1749, %v1814
      %v1879 = vmax.f32 %v1750, %v1815
      %v1880 = vmax.f32 %v1751, %v1816
      %v1881 = vmax.f32 %v1752, %v1817
      %v1882 = vmax.f32 %v1753, %v1818
      %v1883 = vmax.f32 %v1754, %v1819
      %v1884 = vmax.f32 %v1755, %v1820
      %v1885 = vmax.f32 %v1756, %v1821
      %v1886 = vmax.f32 %v1757, %v1822
      %v1887 = vmax.f32 %v1758, %v1823
      %v1888 = vmax.f32 %v1759, %v1824
      %v1889 = vmax.f32 %v1760, %v1825
      %v1890 = vmax.f32 %v1761, %v1826
      %v1891 = vmax.f32 %v1762, %v1827
      %v1892 = vmax.f32 %v1763, %v1828
      %v1893 = vmax.f32 %v1764, %v1829
      %v1894 = vmax.f32 %v1765, %v1830
      %v1895 = vmax.f32 %v1766, %v1831
      %v1896 = vmax.f32 %v1767, %v1832
      %v1897 = vmax.f32 %v1768, %v1833
      %v1898 = vmax.f32 %v1769, %v1834
      %v1899 = vmax.f32 %v1770, %v1835
      %v1900 = vmax.f32 %v1771, %v1836
      %v1901 = vmax.f32 %v1772, %v1837
      %v1902 = vmax.f32 %v1773, %v1838
      %v1903 = vmax.f32 %v1774, %v1839
      %v1904 = vmax.f32 %v1775, %v1840
      %v1905 = vmax.f32 %v1776, %v1841
      %1906 = vst.msk [vmem:[#allocation3] sm:$0xff] %vm1584, %v1842
      %1907 = vst.msk [vmem:[#allocation3 + $0x8] sm:$0xff] %vm1584, %v1843
      %1908 = vst.msk [vmem:[#allocation3 + $0x10] sm:$0xff] %vm1584, %v1844
      %1909 = vst.msk [vmem:[#allocation3 + $0x18] sm:$0xff] %vm1584, %v1845
      %1910 = vst.msk [vmem:[#allocation3 + $0x20] sm:$0xff] %vm1584, %v1846
      %1911 = vst.msk [vmem:[#allocation3 + $0x28] sm:$0xff] %vm1584, %v1847
      %1912 = vst.msk [vmem:[#allocation3 + $0x30] sm:$0xff] %vm1584, %v1848
      %1913 = vst.msk [vmem:[#allocation3 + $0x38] sm:$0xff] %vm1584, %v1849
      %1914 = vst.msk [vmem:[#allocation3 + $0x40] sm:$0xff] %vm1584, %v1850
      %1915 = vst.msk [vmem:[#allocation3 + $0x48] sm:$0xff] %vm1584, %v1851
      %1916 = vst.msk [vmem:[#allocation3 + $0x50] sm:$0xff] %vm1584, %v1852
      %1917 = vst.msk [vmem:[#allocation3 + $0x58] sm:$0xff] %vm1584, %v1853
      %1918 = vst.msk [vmem:[#allocation3 + $0x60] sm:$0xff] %vm1584, %v1854
      %1919 = vst.msk [vmem:[#allocation3 + $0x68] sm:$0xff] %vm1584, %v1855
      %1920 = vst.msk [vmem:[#allocation3 + $0x70] sm:$0xff] %vm1584, %v1856
      %1921 = vst.msk [vmem:[#allocation3 + $0x78] sm:$0xff] %vm1584, %v1857
      %1922 = vst.msk [vmem:[#allocation3 + $0x80] sm:$0xff] %vm1584, %v1858
      %1923 = vst.msk [vmem:[#allocation3 + $0x88] sm:$0xff] %vm1584, %v1859
      %1924 = vst.msk [vmem:[#allocation3 + $0x90] sm:$0xff] %vm1584, %v1860
      %1925 = vst.msk [vmem:[#allocation3 + $0x98] sm:$0xff] %vm1584, %v1861
      %1926 = vst.msk [vmem:[#allocation3 + $0xa0] sm:$0xff] %vm1584, %v1862
      %1927 = vst.msk [vmem:[#allocation3 + $0xa8] sm:$0xff] %vm1584, %v1863
      %1928 = vst.msk [vmem:[#allocation3 + $0xb0] sm:$0xff] %vm1584, %v1864
      %1929 = vst.msk [vmem:[#allocation3 + $0xb8] sm:$0xff] %vm1584, %v1865
      %1930 = vst.msk [vmem:[#allocation3 + $0xc0] sm:$0xff] %vm1584, %v1866
      %1931 = vst.msk [vmem:[#allocation3 + $0xc8] sm:$0xff] %vm1584, %v1867
      %1932 = vst.msk [vmem:[#allocation3 + $0xd0] sm:$0xff] %vm1584, %v1868
      %1933 = vst.msk [vmem:[#allocation3 + $0xd8] sm:$0xff] %vm1584, %v1869
      %1934 = vst.msk [vmem:[#allocation3 + $0xe0] sm:$0xff] %vm1584, %v1870
      %1935 = vst.msk [vmem:[#allocation3 + $0xe8] sm:$0xff] %vm1584, %v1871
      %1936 = vst.msk [vmem:[#allocation3 + $0xf0] sm:$0xff] %vm1584, %v1872
      %1937 = vst.msk [vmem:[#allocation3 + $0xf8] sm:$0xff] %vm1584, %v1873
      %1938 = vst.msk [vmem:[#allocation3 + $0x100] sm:$0xff] %vm1584, %v1874
      %1939 = vst.msk [vmem:[#allocation3 + $0x108] sm:$0xff] %vm1584, %v1875
      %1940 = vst.msk [vmem:[#allocation3 + $0x110] sm:$0xff] %vm1584, %v1876
      %1941 = vst.msk [vmem:[#allocation3 + $0x118] sm:$0xff] %vm1584, %v1877
      %1942 = vst.msk [vmem:[#allocation3 + $0x120] sm:$0xff] %vm1584, %v1878
      %1943 = vst.msk [vmem:[#allocation3 + $0x128] sm:$0xff] %vm1584, %v1879
      %1944 = vst.msk [vmem:[#allocation3 + $0x130] sm:$0xff] %vm1584, %v1880
      %1945 = vst.msk [vmem:[#allocation3 + $0x138] sm:$0xff] %vm1584, %v1881
      %1946 = vst.msk [vmem:[#allocation3 + $0x140] sm:$0xff] %vm1584, %v1882
      %1947 = vst.msk [vmem:[#allocation3 + $0x148] sm:$0xff] %vm1584, %v1883
      %1948 = vst.msk [vmem:[#allocation3 + $0x150] sm:$0xff] %vm1584, %v1884
      %1949 = vst.msk [vmem:[#allocation3 + $0x158] sm:$0xff] %vm1584, %v1885
      %1950 = vst.msk [vmem:[#allocation3 + $0x160] sm:$0xff] %vm1584, %v1886
      %1951 = vst.msk [vmem:[#allocation3 + $0x168] sm:$0xff] %vm1584, %v1887
      %1952 = vst.msk [vmem:[#allocation3 + $0x170] sm:$0xff] %vm1584, %v1888
      %1953 = vst.msk [vmem:[#allocation3 + $0x178] sm:$0xff] %vm1584, %v1889
      %1954 = vst.msk [vmem:[#allocation3 + $0x180] sm:$0xff] %vm1584, %v1890
      %1955 = vst.msk [vmem:[#allocation3 + $0x188] sm:$0xff] %vm1584, %v1891
      %1956 = vst.msk [vmem:[#allocation3 + $0x190] sm:$0xff] %vm1584, %v1892
      %1957 = vst.msk [vmem:[#allocation3 + $0x198] sm:$0xff] %vm1584, %v1893
      %1958 = vst.msk [vmem:[#allocation3 + $0x1a0] sm:$0xff] %vm1584, %v1894
      %1959 = vst.msk [vmem:[#allocation3 + $0x1a8] sm:$0xff] %vm1584, %v1895
      %1960 = vst.msk [vmem:[#allocation3 + $0x1b0] sm:$0xff] %vm1584, %v1896
      %1961 = vst.msk [vmem:[#allocation3 + $0x1b8] sm:$0xff] %vm1584, %v1897
      %1962 = vst.msk [vmem:[#allocation3 + $0x1c0] sm:$0xff] %vm1584, %v1898
      %1963 = vst.msk [vmem:[#allocation3 + $0x1c8] sm:$0xff] %vm1584, %v1899
      %1964 = vst.msk [vmem:[#allocation3 + $0x1d0] sm:$0xff] %vm1584, %v1900
      %1965 = vst.msk [vmem:[#allocation3 + $0x1d8] sm:$0xff] %vm1584, %v1901
      %1966 = vst.msk [vmem:[#allocation3 + $0x1e0] sm:$0xff] %vm1584, %v1902
      %1967 = vst.msk [vmem:[#allocation3 + $0x1e8] sm:$0xff] %vm1584, %v1903
      %1968 = vst.msk [vmem:[#allocation3 + $0x1f0] sm:$0xff] %vm1584, %v1904
      %1969 = vst.msk [vmem:[#allocation3 + $0x1f8] sm:$0xff] %vm1584, %v1905
      %v1970 = vld [vmem:[#allocation3] ss:$2 sm:$0xff]
      %s1971 = scalar_lea.vmem [#allocation3], 16
      %v1972 = vld [vmem:[%s1971] ss:$2 sm:$0xff]
      %s1973 = scalar_lea.vmem [#allocation3], 32
      %v1974 = vld [vmem:[%s1973] ss:$2 sm:$0xff]
      %s1975 = scalar_lea.vmem [#allocation3], 48
      %v1976 = vld [vmem:[%s1975] ss:$2 sm:$0xff]
      %s1977 = scalar_lea.vmem [#allocation3], 64
      %v1978 = vld [vmem:[%s1977] ss:$2 sm:$0xff]
      %s1979 = scalar_lea.vmem [#allocation3], 80
      %v1980 = vld [vmem:[%s1979] ss:$2 sm:$0xff]
      %s1981 = scalar_lea.vmem [#allocation3], 96
      %v1982 = vld [vmem:[%s1981] ss:$2 sm:$0xff]
      %s1983 = scalar_lea.vmem [#allocation3], 112
      %v1984 = vld [vmem:[%s1983] ss:$2 sm:$0xff]
      %s1985 = scalar_lea.vmem [#allocation3], 128
      %v1986 = vld [vmem:[%s1985] ss:$2 sm:$0xff]
      %s1987 = scalar_lea.vmem [#allocation3], 144
      %v1988 = vld [vmem:[%s1987] ss:$2 sm:$0xff]
      %s1989 = scalar_lea.vmem [#allocation3], 160
      %v1990 = vld [vmem:[%s1989] ss:$2 sm:$0xff]
      %s1991 = scalar_lea.vmem [#allocation3], 176
      %v1992 = vld [vmem:[%s1991] ss:$2 sm:$0xff]
      %s1993 = scalar_lea.vmem [#allocation3], 192
      %v1994 = vld [vmem:[%s1993] ss:$2 sm:$0xff]
      %s1995 = scalar_lea.vmem [#allocation3], 208
      %v1996 = vld [vmem:[%s1995] ss:$2 sm:$0xff]
      %s1997 = scalar_lea.vmem [#allocation3], 224
      %v1998 = vld [vmem:[%s1997] ss:$2 sm:$0xff]
      %s1999 = scalar_lea.vmem [#allocation3], 240
      %v2000 = vld [vmem:[%s1999] ss:$2 sm:$0xff]
      %s2001 = scalar_lea.vmem [#allocation3], 256
      %v2002 = vld [vmem:[%s2001] ss:$2 sm:$0xff]
      %s2003 = scalar_lea.vmem [#allocation3], 272
      %v2004 = vld [vmem:[%s2003] ss:$2 sm:$0xff]
      %s2005 = scalar_lea.vmem [#allocation3], 288
      %v2006 = vld [vmem:[%s2005] ss:$2 sm:$0xff]
      %s2007 = scalar_lea.vmem [#allocation3], 304
      %v2008 = vld [vmem:[%s2007] ss:$2 sm:$0xff]
      %s2009 = scalar_lea.vmem [#allocation3], 320
      %v2010 = vld [vmem:[%s2009] ss:$2 sm:$0xff]
      %s2011 = scalar_lea.vmem [#allocation3], 336
      %v2012 = vld [vmem:[%s2011] ss:$2 sm:$0xff]
      %s2013 = scalar_lea.vmem [#allocation3], 352
      %v2014 = vld [vmem:[%s2013] ss:$2 sm:$0xff]
      %s2015 = scalar_lea.vmem [#allocation3], 368
      %v2016 = vld [vmem:[%s2015] ss:$2 sm:$0xff]
      %s2017 = scalar_lea.vmem [#allocation3], 384
      %v2018 = vld [vmem:[%s2017] ss:$2 sm:$0xff]
      %s2019 = scalar_lea.vmem [#allocation3], 400
      %v2020 = vld [vmem:[%s2019] ss:$2 sm:$0xff]
      %s2021 = scalar_lea.vmem [#allocation3], 416
      %v2022 = vld [vmem:[%s2021] ss:$2 sm:$0xff]
      %s2023 = scalar_lea.vmem [#allocation3], 432
      %v2024 = vld [vmem:[%s2023] ss:$2 sm:$0xff]
      %s2025 = scalar_lea.vmem [#allocation3], 448
      %v2026 = vld [vmem:[%s2025] ss:$2 sm:$0xff]
      %s2027 = scalar_lea.vmem [#allocation3], 464
      %v2028 = vld [vmem:[%s2027] ss:$2 sm:$0xff]
      %s2029 = scalar_lea.vmem [#allocation3], 480
      %v2030 = vld [vmem:[%s2029] ss:$2 sm:$0xff]
      %s2031 = scalar_lea.vmem [#allocation3], 496
      %v2032 = vld [vmem:[%s2031] ss:$2 sm:$0xff]
      %s2033 = scalar_lea.vmem [#allocation3], 1
      %v2034 = vld [vmem:[%s2033] ss:$2 sm:$0xff]
      %s2035 = scalar_lea.vmem [#allocation3], 17
      %v2036 = vld [vmem:[%s2035] ss:$2 sm:$0xff]
      %s2037 = scalar_lea.vmem [#allocation3], 33
      %v2038 = vld [vmem:[%s2037] ss:$2 sm:$0xff]
      %s2039 = scalar_lea.vmem [#allocation3], 49
      %v2040 = vld [vmem:[%s2039] ss:$2 sm:$0xff]
      %s2041 = scalar_lea.vmem [#allocation3], 65
      %v2042 = vld [vmem:[%s2041] ss:$2 sm:$0xff]
      %s2043 = scalar_lea.vmem [#allocation3], 81
      %v2044 = vld [vmem:[%s2043] ss:$2 sm:$0xff]
      %s2045 = scalar_lea.vmem [#allocation3], 97
      %v2046 = vld [vmem:[%s2045] ss:$2 sm:$0xff]
      %s2047 = scalar_lea.vmem [#allocation3], 113
      %v2048 = vld [vmem:[%s2047] ss:$2 sm:$0xff]
      %s2049 = scalar_lea.vmem [#allocation3], 129
      %v2050 = vld [vmem:[%s2049] ss:$2 sm:$0xff]
      %s2051 = scalar_lea.vmem [#allocation3], 145
      %v2052 = vld [vmem:[%s2051] ss:$2 sm:$0xff]
      %s2053 = scalar_lea.vmem [#allocation3], 161
      %v2054 = vld [vmem:[%s2053] ss:$2 sm:$0xff]
      %s2055 = scalar_lea.vmem [#allocation3], 177
      %v2056 = vld [vmem:[%s2055] ss:$2 sm:$0xff]
      %s2057 = scalar_lea.vmem [#allocation3], 193
      %v2058 = vld [vmem:[%s2057] ss:$2 sm:$0xff]
      %s2059 = scalar_lea.vmem [#allocation3], 209
      %v2060 = vld [vmem:[%s2059] ss:$2 sm:$0xff]
      %s2061 = scalar_lea.vmem [#allocation3], 225
      %v2062 = vld [vmem:[%s2061] ss:$2 sm:$0xff]
      %s2063 = scalar_lea.vmem [#allocation3], 241
      %v2064 = vld [vmem:[%s2063] ss:$2 sm:$0xff]
      %s2065 = scalar_lea.vmem [#allocation3], 257
      %v2066 = vld [vmem:[%s2065] ss:$2 sm:$0xff]
      %s2067 = scalar_lea.vmem [#allocation3], 273
      %v2068 = vld [vmem:[%s2067] ss:$2 sm:$0xff]
      %s2069 = scalar_lea.vmem [#allocation3], 289
      %v2070 = vld [vmem:[%s2069] ss:$2 sm:$0xff]
      %s2071 = scalar_lea.vmem [#allocation3], 305
      %v2072 = vld [vmem:[%s2071] ss:$2 sm:$0xff]
      %s2073 = scalar_lea.vmem [#allocation3], 321
      %v2074 = vld [vmem:[%s2073] ss:$2 sm:$0xff]
      %s2075 = scalar_lea.vmem [#allocation3], 337
      %v2076 = vld [vmem:[%s2075] ss:$2 sm:$0xff]
      %s2077 = scalar_lea.vmem [#allocation3], 353
      %v2078 = vld [vmem:[%s2077] ss:$2 sm:$0xff]
      %s2079 = scalar_lea.vmem [#allocation3], 369
      %v2080 = vld [vmem:[%s2079] ss:$2 sm:$0xff]
      %s2081 = scalar_lea.vmem [#allocation3], 385
      %v2082 = vld [vmem:[%s2081] ss:$2 sm:$0xff]
      %s2083 = scalar_lea.vmem [#allocation3], 401
      %v2084 = vld [vmem:[%s2083] ss:$2 sm:$0xff]
      %s2085 = scalar_lea.vmem [#allocation3], 417
      %v2086 = vld [vmem:[%s2085] ss:$2 sm:$0xff]
      %s2087 = scalar_lea.vmem [#allocation3], 433
      %v2088 = vld [vmem:[%s2087] ss:$2 sm:$0xff]
      %s2089 = scalar_lea.vmem [#allocation3], 449
      %v2090 = vld [vmem:[%s2089] ss:$2 sm:$0xff]
      %s2091 = scalar_lea.vmem [#allocation3], 465
      %v2092 = vld [vmem:[%s2091] ss:$2 sm:$0xff]
      %s2093 = scalar_lea.vmem [#allocation3], 481
      %v2094 = vld [vmem:[%s2093] ss:$2 sm:$0xff]
      %s2095 = scalar_lea.vmem [#allocation3], 497
      %v2096 = vld [vmem:[%s2095] ss:$2 sm:$0xff]
      %v2097 = vmax.f32 %v1970, %v2034
      %v2098 = vmax.f32 %v1972, %v2036
      %v2099 = vmax.f32 %v1974, %v2038
      %v2100 = vmax.f32 %v1976, %v2040
      %v2101 = vmax.f32 %v1978, %v2042
      %v2102 = vmax.f32 %v1980, %v2044
      %v2103 = vmax.f32 %v1982, %v2046
      %v2104 = vmax.f32 %v1984, %v2048
      %v2105 = vmax.f32 %v1986, %v2050
      %v2106 = vmax.f32 %v1988, %v2052
      %v2107 = vmax.f32 %v1990, %v2054
      %v2108 = vmax.f32 %v1992, %v2056
      %v2109 = vmax.f32 %v1994, %v2058
      %v2110 = vmax.f32 %v1996, %v2060
      %v2111 = vmax.f32 %v1998, %v2062
      %v2112 = vmax.f32 %v2000, %v2064
      %v2113 = vmax.f32 %v2002, %v2066
      %v2114 = vmax.f32 %v2004, %v2068
      %v2115 = vmax.f32 %v2006, %v2070
      %v2116 = vmax.f32 %v2008, %v2072
      %v2117 = vmax.f32 %v2010, %v2074
      %v2118 = vmax.f32 %v2012, %v2076
      %v2119 = vmax.f32 %v2014, %v2078
      %v2120 = vmax.f32 %v2016, %v2080
      %v2121 = vmax.f32 %v2018, %v2082
      %v2122 = vmax.f32 %v2020, %v2084
      %v2123 = vmax.f32 %v2022, %v2086
      %v2124 = vmax.f32 %v2024, %v2088
      %v2125 = vmax.f32 %v2026, %v2090
      %v2126 = vmax.f32 %v2028, %v2092
      %v2127 = vmax.f32 %v2030, %v2094
      %v2128 = vmax.f32 %v2032, %v2096
      %2129 = vst.msk [vmem:[#allocation4] sm:$0xff] %vm1584, 0.0
      %2130 = vst.msk [vmem:[#allocation4 + $0x8] sm:$0xff] %vm1584, 0.0
      %vm2131 = vcmask 254976
      %2132 = vst.msk [vmem:[#allocation4 + $0x10] sm:$0x3] %vm2131, 0.0
      %2133 = vst.msk [vmem:[#allocation4 + $0x18] sm:$0xff] %vm1584, 0.0
      %2134 = vst.msk [vmem:[#allocation4 + $0x20] sm:$0xff] %vm1584, 0.0
      %2135 = vst.msk [vmem:[#allocation4 + $0x28] sm:$0x3] %vm2131, 0.0
      %2136 = vst.msk [vmem:[#allocation4 + $0x30] sm:$0xff] %vm1584, 0.0
      %2137 = vst.msk [vmem:[#allocation4 + $0x38] sm:$0xff] %vm1584, 0.0
      %2138 = vst.msk [vmem:[#allocation4 + $0x40] sm:$0x3] %vm2131, 0.0
      %2139 = vst.msk [vmem:[#allocation4 + $0x48] sm:$0xff] %vm1584, 0.0
      %2140 = vst.msk [vmem:[#allocation4 + $0x50] sm:$0xff] %vm1584, 0.0
      %2141 = vst.msk [vmem:[#allocation4 + $0x58] sm:$0x3] %vm2131, 0.0
      %2142 = vst.msk [vmem:[#allocation4 + $0x60] sm:$0xff] %vm1584, 0.0
      %2143 = vst.msk [vmem:[#allocation4 + $0x68] sm:$0xff] %vm1584, 0.0
      %2144 = vst.msk [vmem:[#allocation4 + $0x70] sm:$0x3] %vm2131, 0.0
      %2145 = vst.msk [vmem:[#allocation4 + $0x78] sm:$0xff] %vm1584, 0.0
      %2146 = vst.msk [vmem:[#allocation4 + $0x80] sm:$0xff] %vm1584, 0.0
      %2147 = vst.msk [vmem:[#allocation4 + $0x88] sm:$0x3] %vm2131, 0.0
      %2148 = vst.msk [vmem:[#allocation4 + $0x90] sm:$0xff] %vm1584, 0.0
      %2149 = vst.msk [vmem:[#allocation4 + $0x98] sm:$0xff] %vm1584, 0.0
      %2150 = vst.msk [vmem:[#allocation4 + $0xa0] sm:$0x3] %vm2131, 0.0
      %2151 = vst.msk [vmem:[#allocation4 + $0xa8] sm:$0xff] %vm1584, 0.0
      %2152 = vst.msk [vmem:[#allocation4 + $0xb0] sm:$0xff] %vm1584, 0.0
      %2153 = vst.msk [vmem:[#allocation4 + $0xb8] sm:$0x3] %vm2131, 0.0
      %2154 = vst.msk [vmem:[#allocation4 + $0xc0] sm:$0xff] %vm1584, 0.0
      %2155 = vst.msk [vmem:[#allocation4 + $0xc8] sm:$0xff] %vm1584, 0.0
      %2156 = vst.msk [vmem:[#allocation4 + $0xd0] sm:$0x3] %vm2131, 0.0
      %2157 = vst.msk [vmem:[#allocation4 + $0xd8] sm:$0xff] %vm1584, 0.0
      %2158 = vst.msk [vmem:[#allocation4 + $0xe0] sm:$0xff] %vm1584, 0.0
      %2159 = vst.msk [vmem:[#allocation4 + $0xe8] sm:$0x3] %vm2131, 0.0
      %2160 = vst.msk [vmem:[#allocation4 + $0xf0] sm:$0xff] %vm1584, 0.0
      %2161 = vst.msk [vmem:[#allocation4 + $0xf8] sm:$0xff] %vm1584, 0.0
      %2162 = vst.msk [vmem:[#allocation4 + $0x100] sm:$0x3] %vm2131, 0.0
      %2163 = vst.msk [vmem:[#allocation4 + $0x108] sm:$0xff] %vm1584, 0.0
      %2164 = vst.msk [vmem:[#allocation4 + $0x110] sm:$0xff] %vm1584, 0.0
      %2165 = vst.msk [vmem:[#allocation4 + $0x118] sm:$0x3] %vm2131, 0.0
      %2166 = vst.msk [vmem:[#allocation4 + $0x120] sm:$0xff] %vm1584, 0.0
      %2167 = vst.msk [vmem:[#allocation4 + $0x128] sm:$0xff] %vm1584, 0.0
      %2168 = vst.msk [vmem:[#allocation4 + $0x130] sm:$0x3] %vm2131, 0.0
      %2169 = vst.msk [vmem:[#allocation4 + $0x138] sm:$0xff] %vm1584, 0.0
      %2170 = vst.msk [vmem:[#allocation4 + $0x140] sm:$0xff] %vm1584, 0.0
      %2171 = vst.msk [vmem:[#allocation4 + $0x148] sm:$0x3] %vm2131, 0.0
      %2172 = vst.msk [vmem:[#allocation4 + $0x150] sm:$0xff] %vm1584, 0.0
      %2173 = vst.msk [vmem:[#allocation4 + $0x158] sm:$0xff] %vm1584, 0.0
      %2174 = vst.msk [vmem:[#allocation4 + $0x160] sm:$0x3] %vm2131, 0.0
      %2175 = vst.msk [vmem:[#allocation4 + $0x168] sm:$0xff] %vm1584, 0.0
      %2176 = vst.msk [vmem:[#allocation4 + $0x170] sm:$0xff] %vm1584, 0.0
      %2177 = vst.msk [vmem:[#allocation4 + $0x178] sm:$0x3] %vm2131, 0.0
      %2178 = vst.msk [vmem:[#allocation4 + $0x180] sm:$0xff] %vm1584, 0.0
      %2179 = vst.msk [vmem:[#allocation4 + $0x188] sm:$0xff] %vm1584, 0.0
      %2180 = vst.msk [vmem:[#allocation4 + $0x190] sm:$0x3] %vm2131, 0.0
      %2181 = vst.msk [vmem:[#allocation4 + $0x198] sm:$0xff] %vm1584, 0.0
      %2182 = vst.msk [vmem:[#allocation4 + $0x1a0] sm:$0xff] %vm1584, 0.0
      %2183 = vst.msk [vmem:[#allocation4 + $0x1a8] sm:$0x3] %vm2131, 0.0
      %s2184 = scalar_lea.vmem [#allocation4], 24
      %2185 = vst.msk [vmem:[%s2184 + $0x1] sm:$0xff] %vm1584, %v2097
      %2186 = vst.msk [vmem:[%s2184 + $0x9] sm:$0xff] %vm1584, %v2098
      %2187 = vst.msk [vmem:[%s2184 + $0x19] sm:$0xff] %vm1584, %v2099
      %2188 = vst.msk [vmem:[%s2184 + $0x21] sm:$0xff] %vm1584, %v2100
      %2189 = vst.msk [vmem:[%s2184 + $0x31] sm:$0xff] %vm1584, %v2101
      %2190 = vst.msk [vmem:[%s2184 + $0x39] sm:$0xff] %vm1584, %v2102
      %2191 = vst.msk [vmem:[%s2184 + $0x49] sm:$0xff] %vm1584, %v2103
      %2192 = vst.msk [vmem:[%s2184 + $0x51] sm:$0xff] %vm1584, %v2104
      %2193 = vst.msk [vmem:[%s2184 + $0x61] sm:$0xff] %vm1584, %v2105
      %2194 = vst.msk [vmem:[%s2184 + $0x69] sm:$0xff] %vm1584, %v2106
      %2195 = vst.msk [vmem:[%s2184 + $0x79] sm:$0xff] %vm1584, %v2107
      %2196 = vst.msk [vmem:[%s2184 + $0x81] sm:$0xff] %vm1584, %v2108
      %2197 = vst.msk [vmem:[%s2184 + $0x91] sm:$0xff] %vm1584, %v2109
      %2198 = vst.msk [vmem:[%s2184 + $0x99] sm:$0xff] %vm1584, %v2110
      %2199 = vst.msk [vmem:[%s2184 + $0xa9] sm:$0xff] %vm1584, %v2111
      %2200 = vst.msk [vmem:[%s2184 + $0xb1] sm:$0xff] %vm1584, %v2112
      %2201 = vst.msk [vmem:[%s2184 + $0xc1] sm:$0xff] %vm1584, %v2113
      %2202 = vst.msk [vmem:[%s2184 + $0xc9] sm:$0xff] %vm1584, %v2114
      %2203 = vst.msk [vmem:[%s2184 + $0xd9] sm:$0xff] %vm1584, %v2115
      %2204 = vst.msk [vmem:[%s2184 + $0xe1] sm:$0xff] %vm1584, %v2116
      %2205 = vst.msk [vmem:[%s2184 + $0xf1] sm:$0xff] %vm1584, %v2117
      %2206 = vst.msk [vmem:[%s2184 + $0xf9] sm:$0xff] %vm1584, %v2118
      %2207 = vst.msk [vmem:[%s2184 + $0x109] sm:$0xff] %vm1584, %v2119
      %2208 = vst.msk [vmem:[%s2184 + $0x111] sm:$0xff] %vm1584, %v2120
      %2209 = vst.msk [vmem:[%s2184 + $0x121] sm:$0xff] %vm1584, %v2121
      %2210 = vst.msk [vmem:[%s2184 + $0x129] sm:$0xff] %vm1584, %v2122
      %2211 = vst.msk [vmem:[%s2184 + $0x139] sm:$0xff] %vm1584, %v2123
      %2212 = vst.msk [vmem:[%s2184 + $0x141] sm:$0xff] %vm1584, %v2124
      %2213 = vst.msk [vmem:[%s2184 + $0x151] sm:$0xff] %vm1584, %v2125
      %2214 = vst.msk [vmem:[%s2184 + $0x159] sm:$0xff] %vm1584, %v2126
      %2215 = vst.msk [vmem:[%s2184 + $0x169] sm:$0xff] %vm1584, %v2127
      %2216 = vst.msk [vmem:[%s2184 + $0x171] sm:$0xff] %vm1584, %v2128
      %v2217 = vld [vmem:[#allocation4] sm:$0xff]
      %v2218 = vld [vmem:[#allocation4 + $0x8] sm:$0xff]
      %v2219 = vld [vmem:[#allocation4 + $0x18] sm:$0xff]
      %v2220 = vld [vmem:[#allocation4 + $0x20] sm:$0xff]
      %v2221 = vld [vmem:[#allocation4 + $0x30] sm:$0xff]
      %v2222 = vld [vmem:[#allocation4 + $0x38] sm:$0xff]
      %v2223 = vld [vmem:[#allocation4 + $0x48] sm:$0xff]
      %v2224 = vld [vmem:[#allocation4 + $0x50] sm:$0xff]
      %v2225 = vld [vmem:[#allocation4 + $0x60] sm:$0xff]
      %v2226 = vld [vmem:[#allocation4 + $0x68] sm:$0xff]
      %v2227 = vld [vmem:[#allocation4 + $0x78] sm:$0xff]
      %v2228 = vld [vmem:[#allocation4 + $0x80] sm:$0xff]
      %v2229 = vld [vmem:[#allocation4 + $0x90] sm:$0xff]
      %v2230 = vld [vmem:[#allocation4 + $0x98] sm:$0xff]
      %v2231 = vld [vmem:[#allocation4 + $0xa8] sm:$0xff]
      %v2232 = vld [vmem:[#allocation4 + $0xb0] sm:$0xff]
      %v2233 = vld [vmem:[#allocation4 + $0xc0] sm:$0xff]
      %v2234 = vld [vmem:[#allocation4 + $0xc8] sm:$0xff]
      %v2235 = vld [vmem:[#allocation4 + $0xd8] sm:$0xff]
      %v2236 = vld [vmem:[#allocation4 + $0xe0] sm:$0xff]
      %v2237 = vld [vmem:[#allocation4 + $0xf0] sm:$0xff]
      %v2238 = vld [vmem:[#allocation4 + $0xf8] sm:$0xff]
      %v2239 = vld [vmem:[#allocation4 + $0x108] sm:$0xff]
      %v2240 = vld [vmem:[#allocation4 + $0x110] sm:$0xff]
      %v2241 = vld [vmem:[#allocation4 + $0x120] sm:$0xff]
      %v2242 = vld [vmem:[#allocation4 + $0x128] sm:$0xff]
      %v2243 = vld [vmem:[#allocation4 + $0x138] sm:$0xff]
      %v2244 = vld [vmem:[#allocation4 + $0x140] sm:$0xff]
      %v2245 = vld [vmem:[#allocation4 + $0x150] sm:$0xff]
      %v2246 = vld [vmem:[#allocation4 + $0x158] sm:$0xff]
      %v2247 = vld [vmem:[#allocation4 + $0x168] sm:$0xff]
      %v2248 = vld [vmem:[#allocation4 + $0x170] sm:$0xff]
      %v2249 = vld [vmem:[#allocation4 + $0x1] sm:$0xff]
      %v2250 = vld [vmem:[#allocation4 + $0x9] sm:$0xff]
      %v2251 = vld [vmem:[#allocation4 + $0x19] sm:$0xff]
      %v2252 = vld [vmem:[#allocation4 + $0x21] sm:$0xff]
      %v2253 = vld [vmem:[#allocation4 + $0x31] sm:$0xff]
      %v2254 = vld [vmem:[#allocation4 + $0x39] sm:$0xff]
      %v2255 = vld [vmem:[#allocation4 + $0x49] sm:$0xff]
      %v2256 = vld [vmem:[#allocation4 + $0x51] sm:$0xff]
      %v2257 = vld [vmem:[#allocation4 + $0x61] sm:$0xff]
      %v2258 = vld [vmem:[#allocation4 + $0x69] sm:$0xff]
      %v2259 = vld [vmem:[#allocation4 + $0x79] sm:$0xff]
      %v2260 = vld [vmem:[#allocation4 + $0x81] sm:$0xff]
      %v2261 = vld [vmem:[#allocation4 + $0x91] sm:$0xff]
      %v2262 = vld [vmem:[#allocation4 + $0x99] sm:$0xff]
      %v2263 = vld [vmem:[#allocation4 + $0xa9] sm:$0xff]
      %v2264 = vld [vmem:[#allocation4 + $0xb1] sm:$0xff]
      %v2265 = vld [vmem:[#allocation4 + $0xc1] sm:$0xff]
      %v2266 = vld [vmem:[#allocation4 + $0xc9] sm:$0xff]
      %v2267 = vld [vmem:[#allocation4 + $0xd9] sm:$0xff]
      %v2268 = vld [vmem:[#allocation4 + $0xe1] sm:$0xff]
      %v2269 = vld [vmem:[#allocation4 + $0xf1] sm:$0xff]
      %v2270 = vld [vmem:[#allocation4 + $0xf9] sm:$0xff]
      %v2271 = vld [vmem:[#allocation4 + $0x109] sm:$0xff]
      %v2272 = vld [vmem:[#allocation4 + $0x111] sm:$0xff]
      %v2273 = vld [vmem:[#allocation4 + $0x121] sm:$0xff]
      %v2274 = vld [vmem:[#allocation4 + $0x129] sm:$0xff]
      %v2275 = vld [vmem:[#allocation4 + $0x139] sm:$0xff]
      %v2276 = vld [vmem:[#allocation4 + $0x141] sm:$0xff]
      %v2277 = vld [vmem:[#allocation4 + $0x151] sm:$0xff]
      %v2278 = vld [vmem:[#allocation4 + $0x159] sm:$0xff]
      %v2279 = vld [vmem:[#allocation4 + $0x169] sm:$0xff]
      %v2280 = vld [vmem:[#allocation4 + $0x171] sm:$0xff]
      %v2281 = vld [vmem:[#allocation4 + $0x2] sm:$0xff]
      %v2282 = vld [vmem:[#allocation4 + $0xa] sm:$0xff]
      %v2283 = vld [vmem:[#allocation4 + $0x1a] sm:$0xff]
      %v2284 = vld [vmem:[#allocation4 + $0x22] sm:$0xff]
      %v2285 = vld [vmem:[#allocation4 + $0x32] sm:$0xff]
      %v2286 = vld [vmem:[#allocation4 + $0x3a] sm:$0xff]
      %v2287 = vld [vmem:[#allocation4 + $0x4a] sm:$0xff]
      %v2288 = vld [vmem:[#allocation4 + $0x52] sm:$0xff]
      %v2289 = vld [vmem:[#allocation4 + $0x62] sm:$0xff]
      %v2290 = vld [vmem:[#allocation4 + $0x6a] sm:$0xff]
      %v2291 = vld [vmem:[#allocation4 + $0x7a] sm:$0xff]
      %v2292 = vld [vmem:[#allocation4 + $0x82] sm:$0xff]
      %v2293 = vld [vmem:[#allocation4 + $0x92] sm:$0xff]
      %v2294 = vld [vmem:[#allocation4 + $0x9a] sm:$0xff]
      %v2295 = vld [vmem:[#allocation4 + $0xaa] sm:$0xff]
      %v2296 = vld [vmem:[#allocation4 + $0xb2] sm:$0xff]
      %v2297 = vld [vmem:[#allocation4 + $0xc2] sm:$0xff]
      %v2298 = vld [vmem:[#allocation4 + $0xca] sm:$0xff]
      %v2299 = vld [vmem:[#allocation4 + $0xda] sm:$0xff]
      %v2300 = vld [vmem:[#allocation4 + $0xe2] sm:$0xff]
      %v2301 = vld [vmem:[#allocation4 + $0xf2] sm:$0xff]
      %v2302 = vld [vmem:[#allocation4 + $0xfa] sm:$0xff]
      %v2303 = vld [vmem:[#allocation4 + $0x10a] sm:$0xff]
      %v2304 = vld [vmem:[#allocation4 + $0x112] sm:$0xff]
      %v2305 = vld [vmem:[#allocation4 + $0x122] sm:$0xff]
      %v2306 = vld [vmem:[#allocation4 + $0x12a] sm:$0xff]
      %v2307 = vld [vmem:[#allocation4 + $0x13a] sm:$0xff]
      %v2308 = vld [vmem:[#allocation4 + $0x142] sm:$0xff]
      %v2309 = vld [vmem:[#allocation4 + $0x152] sm:$0xff]
      %v2310 = vld [vmem:[#allocation4 + $0x15a] sm:$0xff]
      %v2311 = vld [vmem:[#allocation4 + $0x16a] sm:$0xff]
      %v2312 = vld [vmem:[#allocation4 + $0x172] sm:$0xff]
      %v2313 = vld [vmem:[%s2184] sm:$0xff]
      %v2314 = vld [vmem:[%s2184 + $0x8] sm:$0xff]
      %v2315 = vld [vmem:[%s2184 + $0x18] sm:$0xff]
      %v2316 = vld [vmem:[%s2184 + $0x20] sm:$0xff]
      %v2317 = vld [vmem:[%s2184 + $0x30] sm:$0xff]
      %v2318 = vld [vmem:[%s2184 + $0x38] sm:$0xff]
      %v2319 = vld [vmem:[%s2184 + $0x48] sm:$0xff]
      %v2320 = vld [vmem:[%s2184 + $0x50] sm:$0xff]
      %v2321 = vld [vmem:[%s2184 + $0x60] sm:$0xff]
      %v2322 = vld [vmem:[%s2184 + $0x68] sm:$0xff]
      %v2323 = vld [vmem:[%s2184 + $0x78] sm:$0xff]
      %v2324 = vld [vmem:[%s2184 + $0x80] sm:$0xff]
      %v2325 = vld [vmem:[%s2184 + $0x90] sm:$0xff]
      %v2326 = vld [vmem:[%s2184 + $0x98] sm:$0xff]
      %v2327 = vld [vmem:[%s2184 + $0xa8] sm:$0xff]
      %v2328 = vld [vmem:[%s2184 + $0xb0] sm:$0xff]
      %v2329 = vld [vmem:[%s2184 + $0xc0] sm:$0xff]
      %v2330 = vld [vmem:[%s2184 + $0xc8] sm:$0xff]
      %v2331 = vld [vmem:[%s2184 + $0xd8] sm:$0xff]
      %v2332 = vld [vmem:[%s2184 + $0xe0] sm:$0xff]
      %v2333 = vld [vmem:[%s2184 + $0xf0] sm:$0xff]
      %v2334 = vld [vmem:[%s2184 + $0xf8] sm:$0xff]
      %v2335 = vld [vmem:[%s2184 + $0x108] sm:$0xff]
      %v2336 = vld [vmem:[%s2184 + $0x110] sm:$0xff]
      %v2337 = vld [vmem:[%s2184 + $0x120] sm:$0xff]
      %v2338 = vld [vmem:[%s2184 + $0x128] sm:$0xff]
      %v2339 = vld [vmem:[%s2184 + $0x138] sm:$0xff]
      %v2340 = vld [vmem:[%s2184 + $0x140] sm:$0xff]
      %v2341 = vld [vmem:[%s2184 + $0x150] sm:$0xff]
      %v2342 = vld [vmem:[%s2184 + $0x158] sm:$0xff]
      %v2343 = vld [vmem:[%s2184 + $0x168] sm:$0xff]
      %v2344 = vld [vmem:[%s2184 + $0x170] sm:$0xff]
      %v2345 = vld [vmem:[%s2184 + $0x1] sm:$0xff]
      %v2346 = vld [vmem:[%s2184 + $0x9] sm:$0xff]
      %v2347 = vld [vmem:[%s2184 + $0x19] sm:$0xff]
      %v2348 = vld [vmem:[%s2184 + $0x21] sm:$0xff]
      %v2349 = vld [vmem:[%s2184 + $0x31] sm:$0xff]
      %v2350 = vld [vmem:[%s2184 + $0x39] sm:$0xff]
      %v2351 = vld [vmem:[%s2184 + $0x49] sm:$0xff]
      %v2352 = vld [vmem:[%s2184 + $0x51] sm:$0xff]
      %v2353 = vld [vmem:[%s2184 + $0x61] sm:$0xff]
      %v2354 = vld [vmem:[%s2184 + $0x69] sm:$0xff]
      %v2355 = vld [vmem:[%s2184 + $0x79] sm:$0xff]
      %v2356 = vld [vmem:[%s2184 + $0x81] sm:$0xff]
      %v2357 = vld [vmem:[%s2184 + $0x91] sm:$0xff]
      %v2358 = vld [vmem:[%s2184 + $0x99] sm:$0xff]
      %v2359 = vld [vmem:[%s2184 + $0xa9] sm:$0xff]
      %v2360 = vld [vmem:[%s2184 + $0xb1] sm:$0xff]
      %v2361 = vld [vmem:[%s2184 + $0xc1] sm:$0xff]
      %v2362 = vld [vmem:[%s2184 + $0xc9] sm:$0xff]
      %v2363 = vld [vmem:[%s2184 + $0xd9] sm:$0xff]
      %v2364 = vld [vmem:[%s2184 + $0xe1] sm:$0xff]
      %v2365 = vld [vmem:[%s2184 + $0xf1] sm:$0xff]
      %v2366 = vld [vmem:[%s2184 + $0xf9] sm:$0xff]
      %v2367 = vld [vmem:[%s2184 + $0x109] sm:$0xff]
      %v2368 = vld [vmem:[%s2184 + $0x111] sm:$0xff]
      %v2369 = vld [vmem:[%s2184 + $0x121] sm:$0xff]
      %v2370 = vld [vmem:[%s2184 + $0x129] sm:$0xff]
      %v2371 = vld [vmem:[%s2184 + $0x139] sm:$0xff]
      %v2372 = vld [vmem:[%s2184 + $0x141] sm:$0xff]
      %v2373 = vld [vmem:[%s2184 + $0x151] sm:$0xff]
      %v2374 = vld [vmem:[%s2184 + $0x159] sm:$0xff]
      %v2375 = vld [vmem:[%s2184 + $0x169] sm:$0xff]
      %v2376 = vld [vmem:[%s2184 + $0x171] sm:$0xff]
      %v2377 = vld [vmem:[%s2184 + $0x2] sm:$0xff]
      %v2378 = vld [vmem:[%s2184 + $0xa] sm:$0xff]
      %v2379 = vld [vmem:[%s2184 + $0x1a] sm:$0xff]
      %v2380 = vld [vmem:[%s2184 + $0x22] sm:$0xff]
      %v2381 = vld [vmem:[%s2184 + $0x32] sm:$0xff]
      %v2382 = vld [vmem:[%s2184 + $0x3a] sm:$0xff]
      %v2383 = vld [vmem:[%s2184 + $0x4a] sm:$0xff]
      %v2384 = vld [vmem:[%s2184 + $0x52] sm:$0xff]
      %v2385 = vld [vmem:[%s2184 + $0x62] sm:$0xff]
      %v2386 = vld [vmem:[%s2184 + $0x6a] sm:$0xff]
      %v2387 = vld [vmem:[%s2184 + $0x7a] sm:$0xff]
      %v2388 = vld [vmem:[%s2184 + $0x82] sm:$0xff]
      %v2389 = vld [vmem:[%s2184 + $0x92] sm:$0xff]
      %v2390 = vld [vmem:[%s2184 + $0x9a] sm:$0xff]
      %v2391 = vld [vmem:[%s2184 + $0xaa] sm:$0xff]
      %v2392 = vld [vmem:[%s2184 + $0xb2] sm:$0xff]
      %v2393 = vld [vmem:[%s2184 + $0xc2] sm:$0xff]
      %v2394 = vld [vmem:[%s2184 + $0xca] sm:$0xff]
      %v2395 = vld [vmem:[%s2184 + $0xda] sm:$0xff]
      %v2396 = vld [vmem:[%s2184 + $0xe2] sm:$0xff]
      %v2397 = vld [vmem:[%s2184 + $0xf2] sm:$0xff]
      %v2398 = vld [vmem:[%s2184 + $0xfa] sm:$0xff]
      %v2399 = vld [vmem:[%s2184 + $0x10a] sm:$0xff]
      %v2400 = vld [vmem:[%s2184 + $0x112] sm:$0xff]
      %v2401 = vld [vmem:[%s2184 + $0x122] sm:$0xff]
      %v2402 = vld [vmem:[%s2184 + $0x12a] sm:$0xff]
      %v2403 = vld [vmem:[%s2184 + $0x13a] sm:$0xff]
      %v2404 = vld [vmem:[%s2184 + $0x142] sm:$0xff]
      %v2405 = vld [vmem:[%s2184 + $0x152] sm:$0xff]
      %v2406 = vld [vmem:[%s2184 + $0x15a] sm:$0xff]
      %v2407 = vld [vmem:[%s2184 + $0x16a] sm:$0xff]
      %v2408 = vld [vmem:[%s2184 + $0x172] sm:$0xff]
      %s2409 = scalar_lea.vmem [#allocation4], 48
      %v2410 = vld [vmem:[%s2409] sm:$0xff]
      %v2411 = vld [vmem:[%s2409 + $0x8] sm:$0xff]
      %v2412 = vld [vmem:[%s2409 + $0x18] sm:$0xff]
      %v2413 = vld [vmem:[%s2409 + $0x20] sm:$0xff]
      %v2414 = vld [vmem:[%s2409 + $0x30] sm:$0xff]
      %v2415 = vld [vmem:[%s2409 + $0x38] sm:$0xff]
      %v2416 = vld [vmem:[%s2409 + $0x48] sm:$0xff]
      %v2417 = vld [vmem:[%s2409 + $0x50] sm:$0xff]
      %v2418 = vld [vmem:[%s2409 + $0x60] sm:$0xff]
      %v2419 = vld [vmem:[%s2409 + $0x68] sm:$0xff]
      %v2420 = vld [vmem:[%s2409 + $0x78] sm:$0xff]
      %v2421 = vld [vmem:[%s2409 + $0x80] sm:$0xff]
      %v2422 = vld [vmem:[%s2409 + $0x90] sm:$0xff]
      %v2423 = vld [vmem:[%s2409 + $0x98] sm:$0xff]
      %v2424 = vld [vmem:[%s2409 + $0xa8] sm:$0xff]
      %v2425 = vld [vmem:[%s2409 + $0xb0] sm:$0xff]
      %v2426 = vld [vmem:[%s2409 + $0xc0] sm:$0xff]
      %v2427 = vld [vmem:[%s2409 + $0xc8] sm:$0xff]
      %v2428 = vld [vmem:[%s2409 + $0xd8] sm:$0xff]
      %v2429 = vld [vmem:[%s2409 + $0xe0] sm:$0xff]
      %v2430 = vld [vmem:[%s2409 + $0xf0] sm:$0xff]
      %v2431 = vld [vmem:[%s2409 + $0xf8] sm:$0xff]
      %v2432 = vld [vmem:[%s2409 + $0x108] sm:$0xff]
      %v2433 = vld [vmem:[%s2409 + $0x110] sm:$0xff]
      %v2434 = vld [vmem:[%s2409 + $0x120] sm:$0xff]
      %v2435 = vld [vmem:[%s2409 + $0x128] sm:$0xff]
      %v2436 = vld [vmem:[%s2409 + $0x138] sm:$0xff]
      %v2437 = vld [vmem:[%s2409 + $0x140] sm:$0xff]
      %v2438 = vld [vmem:[%s2409 + $0x150] sm:$0xff]
      %v2439 = vld [vmem:[%s2409 + $0x158] sm:$0xff]
      %v2440 = vld [vmem:[%s2409 + $0x168] sm:$0xff]
      %v2441 = vld [vmem:[%s2409 + $0x170] sm:$0xff]
      %v2442 = vld [vmem:[%s2409 + $0x1] sm:$0xff]
      %v2443 = vld [vmem:[%s2409 + $0x9] sm:$0xff]
      %v2444 = vld [vmem:[%s2409 + $0x19] sm:$0xff]
      %v2445 = vld [vmem:[%s2409 + $0x21] sm:$0xff]
      %v2446 = vld [vmem:[%s2409 + $0x31] sm:$0xff]
      %v2447 = vld [vmem:[%s2409 + $0x39] sm:$0xff]
      %v2448 = vld [vmem:[%s2409 + $0x49] sm:$0xff]
      %v2449 = vld [vmem:[%s2409 + $0x51] sm:$0xff]
      %v2450 = vld [vmem:[%s2409 + $0x61] sm:$0xff]
      %v2451 = vld [vmem:[%s2409 + $0x69] sm:$0xff]
      %v2452 = vld [vmem:[%s2409 + $0x79] sm:$0xff]
      %v2453 = vld [vmem:[%s2409 + $0x81] sm:$0xff]
      %v2454 = vld [vmem:[%s2409 + $0x91] sm:$0xff]
      %v2455 = vld [vmem:[%s2409 + $0x99] sm:$0xff]
      %v2456 = vld [vmem:[%s2409 + $0xa9] sm:$0xff]
      %v2457 = vld [vmem:[%s2409 + $0xb1] sm:$0xff]
      %v2458 = vld [vmem:[%s2409 + $0xc1] sm:$0xff]
      %v2459 = vld [vmem:[%s2409 + $0xc9] sm:$0xff]
      %v2460 = vld [vmem:[%s2409 + $0xd9] sm:$0xff]
      %v2461 = vld [vmem:[%s2409 + $0xe1] sm:$0xff]
      %v2462 = vld [vmem:[%s2409 + $0xf1] sm:$0xff]
      %v2463 = vld [vmem:[%s2409 + $0xf9] sm:$0xff]
      %v2464 = vld [vmem:[%s2409 + $0x109] sm:$0xff]
      %v2465 = vld [vmem:[%s2409 + $0x111] sm:$0xff]
      %v2466 = vld [vmem:[%s2409 + $0x121] sm:$0xff]
      %v2467 = vld [vmem:[%s2409 + $0x129] sm:$0xff]
      %v2468 = vld [vmem:[%s2409 + $0x139] sm:$0xff]
      %v2469 = vld [vmem:[%s2409 + $0x141] sm:$0xff]
      %v2470 = vld [vmem:[%s2409 + $0x151] sm:$0xff]
      %v2471 = vld [vmem:[%s2409 + $0x159] sm:$0xff]
      %v2472 = vld [vmem:[%s2409 + $0x169] sm:$0xff]
      %v2473 = vld [vmem:[%s2409 + $0x171] sm:$0xff]
      %v2474 = vld [vmem:[%s2409 + $0x2] sm:$0xff]
      %v2475 = vld [vmem:[%s2409 + $0xa] sm:$0xff]
      %v2476 = vld [vmem:[%s2409 + $0x1a] sm:$0xff]
      %v2477 = vld [vmem:[%s2409 + $0x22] sm:$0xff]
      %v2478 = vld [vmem:[%s2409 + $0x32] sm:$0xff]
      %v2479 = vld [vmem:[%s2409 + $0x3a] sm:$0xff]
      %v2480 = vld [vmem:[%s2409 + $0x4a] sm:$0xff]
      %v2481 = vld [vmem:[%s2409 + $0x52] sm:$0xff]
      %v2482 = vld [vmem:[%s2409 + $0x62] sm:$0xff]
      %v2483 = vld [vmem:[%s2409 + $0x6a] sm:$0xff]
      %v2484 = vld [vmem:[%s2409 + $0x7a] sm:$0xff]
      %v2485 = vld [vmem:[%s2409 + $0x82] sm:$0xff]
      %v2486 = vld [vmem:[%s2409 + $0x92] sm:$0xff]
      %v2487 = vld [vmem:[%s2409 + $0x9a] sm:$0xff]
      %v2488 = vld [vmem:[%s2409 + $0xaa] sm:$0xff]
      %v2489 = vld [vmem:[%s2409 + $0xb2] sm:$0xff]
      %v2490 = vld [vmem:[%s2409 + $0xc2] sm:$0xff]
      %v2491 = vld [vmem:[%s2409 + $0xca] sm:$0xff]
      %v2492 = vld [vmem:[%s2409 + $0xda] sm:$0xff]
      %v2493 = vld [vmem:[%s2409 + $0xe2] sm:$0xff]
      %v2494 = vld [vmem:[%s2409 + $0xf2] sm:$0xff]
      %v2495 = vld [vmem:[%s2409 + $0xfa] sm:$0xff]
      %v2496 = vld [vmem:[%s2409 + $0x10a] sm:$0xff]
      %v2497 = vld [vmem:[%s2409 + $0x112] sm:$0xff]
      %v2498 = vld [vmem:[%s2409 + $0x122] sm:$0xff]
      %v2499 = vld [vmem:[%s2409 + $0x12a] sm:$0xff]
      %v2500 = vld [vmem:[%s2409 + $0x13a] sm:$0xff]
      %v2501 = vld [vmem:[%s2409 + $0x142] sm:$0xff]
      %v2502 = vld [vmem:[%s2409 + $0x152] sm:$0xff]
      %v2503 = vld [vmem:[%s2409 + $0x15a] sm:$0xff]
      %v2504 = vld [vmem:[%s2409 + $0x16a] sm:$0xff]
      %v2505 = vld [vmem:[%s2409 + $0x172] sm:$0xff]
      %2538 = vrot.lane.b32.xlu0 %v2249, 32
      %v2539 = vpop.permute.xlu0 %2538
      %2540 = vrot.lane.b32.xlu0 %v2250, 32
      %v2541 = vpop.permute.xlu0 %2540
      %2542 = vrot.lane.b32.xlu0 %v2251, 32
      %v2543 = vpop.permute.xlu0 %2542
      %2544 = vrot.lane.b32.xlu0 %v2252, 32
      %v2545 = vpop.permute.xlu0 %2544
      %2546 = vrot.lane.b32.xlu0 %v2253, 32
      %v2547 = vpop.permute.xlu0 %2546
      %2548 = vrot.lane.b32.xlu0 %v2254, 32
      %v2549 = vpop.permute.xlu0 %2548
      %2550 = vrot.lane.b32.xlu0 %v2255, 32
      %v2551 = vpop.permute.xlu0 %2550
      %2552 = vrot.lane.b32.xlu0 %v2256, 32
      %v2553 = vpop.permute.xlu0 %2552
      %2554 = vrot.lane.b32.xlu0 %v2257, 32
      %v2555 = vpop.permute.xlu0 %2554
      %2556 = vrot.lane.b32.xlu0 %v2258, 32
      %v2557 = vpop.permute.xlu0 %2556
      %2558 = vrot.lane.b32.xlu0 %v2259, 32
      %v2559 = vpop.permute.xlu0 %2558
      %2560 = vrot.lane.b32.xlu0 %v2260, 32
      %v2561 = vpop.permute.xlu0 %2560
      %2562 = vrot.lane.b32.xlu0 %v2261, 32
      %v2563 = vpop.permute.xlu0 %2562
      %2564 = vrot.lane.b32.xlu0 %v2262, 32
      %v2565 = vpop.permute.xlu0 %2564
      %2566 = vrot.lane.b32.xlu0 %v2263, 32
      %v2567 = vpop.permute.xlu0 %2566
      %2568 = vrot.lane.b32.xlu0 %v2264, 32
      %v2569 = vpop.permute.xlu0 %2568
      %2570 = vrot.lane.b32.xlu0 %v2265, 32
      %v2571 = vpop.permute.xlu0 %2570
      %2572 = vrot.lane.b32.xlu0 %v2266, 32
      %v2573 = vpop.permute.xlu0 %2572
      %2574 = vrot.lane.b32.xlu0 %v2267, 32
      %v2575 = vpop.permute.xlu0 %2574
      %2576 = vrot.lane.b32.xlu0 %v2268, 32
      %v2577 = vpop.permute.xlu0 %2576
      %2578 = vrot.lane.b32.xlu0 %v2269, 32
      %v2579 = vpop.permute.xlu0 %2578
      %2580 = vrot.lane.b32.xlu0 %v2270, 32
      %v2581 = vpop.permute.xlu0 %2580
      %2582 = vrot.lane.b32.xlu0 %v2271, 32
      %v2583 = vpop.permute.xlu0 %2582
      %2584 = vrot.lane.b32.xlu0 %v2272, 32
      %v2585 = vpop.permute.xlu0 %2584
      %2586 = vrot.lane.b32.xlu0 %v2273, 32
      %v2587 = vpop.permute.xlu0 %2586
      %2588 = vrot.lane.b32.xlu0 %v2274, 32
      %v2589 = vpop.permute.xlu0 %2588
      %2590 = vrot.lane.b32.xlu0 %v2275, 32
      %v2591 = vpop.permute.xlu0 %2590
      %2592 = vrot.lane.b32.xlu0 %v2276, 32
      %v2593 = vpop.permute.xlu0 %2592
      %2594 = vrot.lane.b32.xlu0 %v2277, 32
      %v2595 = vpop.permute.xlu0 %2594
      %2596 = vrot.lane.b32.xlu0 %v2278, 32
      %v2597 = vpop.permute.xlu0 %2596
      %2598 = vrot.lane.b32.xlu0 %v2279, 32
      %v2599 = vpop.permute.xlu0 %2598
      %2600 = vrot.lane.b32.xlu0 %v2280, 32
      %v2601 = vpop.permute.xlu0 %2600
      %2666 = vrot.lane.b32.xlu0 %v2281, 64
      %v2667 = vpop.permute.xlu0 %2666
      %2668 = vrot.lane.b32.xlu0 %v2282, 64
      %v2669 = vpop.permute.xlu0 %2668
      %2670 = vrot.lane.b32.xlu0 %v2283, 64
      %v2671 = vpop.permute.xlu0 %2670
      %2672 = vrot.lane.b32.xlu0 %v2284, 64
      %v2673 = vpop.permute.xlu0 %2672
      %2674 = vrot.lane.b32.xlu0 %v2285, 64
      %v2675 = vpop.permute.xlu0 %2674
      %2676 = vrot.lane.b32.xlu0 %v2286, 64
      %v2677 = vpop.permute.xlu0 %2676
      %2678 = vrot.lane.b32.xlu0 %v2287, 64
      %v2679 = vpop.permute.xlu0 %2678
      %2680 = vrot.lane.b32.xlu0 %v2288, 64
      %v2681 = vpop.permute.xlu0 %2680
      %2682 = vrot.lane.b32.xlu0 %v2289, 64
      %v2683 = vpop.permute.xlu0 %2682
      %2684 = vrot.lane.b32.xlu0 %v2290, 64
      %v2685 = vpop.permute.xlu0 %2684
      %2686 = vrot.lane.b32.xlu0 %v2291, 64
      %v2687 = vpop.permute.xlu0 %2686
      %2688 = vrot.lane.b32.xlu0 %v2292, 64
      %v2689 = vpop.permute.xlu0 %2688
      %2690 = vrot.lane.b32.xlu0 %v2293, 64
      %v2691 = vpop.permute.xlu0 %2690
      %2692 = vrot.lane.b32.xlu0 %v2294, 64
      %v2693 = vpop.permute.xlu0 %2692
      %2694 = vrot.lane.b32.xlu0 %v2295, 64
      %v2695 = vpop.permute.xlu0 %2694
      %2696 = vrot.lane.b32.xlu0 %v2296, 64
      %v2697 = vpop.permute.xlu0 %2696
      %2698 = vrot.lane.b32.xlu0 %v2297, 64
      %v2699 = vpop.permute.xlu0 %2698
      %2700 = vrot.lane.b32.xlu0 %v2298, 64
      %v2701 = vpop.permute.xlu0 %2700
      %2702 = vrot.lane.b32.xlu0 %v2299, 64
      %v2703 = vpop.permute.xlu0 %2702
      %2704 = vrot.lane.b32.xlu0 %v2300, 64
      %v2705 = vpop.permute.xlu0 %2704
      %2706 = vrot.lane.b32.xlu0 %v2301, 64
      %v2707 = vpop.permute.xlu0 %2706
      %2708 = vrot.lane.b32.xlu0 %v2302, 64
      %v2709 = vpop.permute.xlu0 %2708
      %2710 = vrot.lane.b32.xlu0 %v2303, 64
      %v2711 = vpop.permute.xlu0 %2710
      %2712 = vrot.lane.b32.xlu0 %v2304, 64
      %v2713 = vpop.permute.xlu0 %2712
      %2714 = vrot.lane.b32.xlu0 %v2305, 64
      %v2715 = vpop.permute.xlu0 %2714
      %2716 = vrot.lane.b32.xlu0 %v2306, 64
      %v2717 = vpop.permute.xlu0 %2716
      %2718 = vrot.lane.b32.xlu0 %v2307, 64
      %v2719 = vpop.permute.xlu0 %2718
      %2720 = vrot.lane.b32.xlu0 %v2308, 64
      %v2721 = vpop.permute.xlu0 %2720
      %2722 = vrot.lane.b32.xlu0 %v2309, 64
      %v2723 = vpop.permute.xlu0 %2722
      %2724 = vrot.lane.b32.xlu0 %v2310, 64
      %v2725 = vpop.permute.xlu0 %2724
      %2726 = vrot.lane.b32.xlu0 %v2311, 64
      %v2727 = vpop.permute.xlu0 %2726
      %2728 = vrot.lane.b32.xlu0 %v2312, 64
      %v2729 = vpop.permute.xlu0 %2728
      %2794 = vrot.lane.b32.xlu0 %v2313, 96
      %v2795 = vpop.permute.xlu0 %2794
      %2796 = vrot.lane.b32.xlu0 %v2314, 96
      %v2797 = vpop.permute.xlu0 %2796
      %2798 = vrot.lane.b32.xlu0 %v2315, 96
      %v2799 = vpop.permute.xlu0 %2798
      %2800 = vrot.lane.b32.xlu0 %v2316, 96
      %v2801 = vpop.permute.xlu0 %2800
      %2802 = vrot.lane.b32.xlu0 %v2317, 96
      %v2803 = vpop.permute.xlu0 %2802
      %2804 = vrot.lane.b32.xlu0 %v2318, 96
      %v2805 = vpop.permute.xlu0 %2804
      %2806 = vrot.lane.b32.xlu0 %v2319, 96
      %v2807 = vpop.permute.xlu0 %2806
      %2808 = vrot.lane.b32.xlu0 %v2320, 96
      %v2809 = vpop.permute.xlu0 %2808
      %2810 = vrot.lane.b32.xlu0 %v2321, 96
      %v2811 = vpop.permute.xlu0 %2810
      %2812 = vrot.lane.b32.xlu0 %v2322, 96
      %v2813 = vpop.permute.xlu0 %2812
      %2814 = vrot.lane.b32.xlu0 %v2323, 96
      %v2815 = vpop.permute.xlu0 %2814
      %2816 = vrot.lane.b32.xlu0 %v2324, 96
      %v2817 = vpop.permute.xlu0 %2816
      %2818 = vrot.lane.b32.xlu0 %v2325, 96
      %v2819 = vpop.permute.xlu0 %2818
      %2820 = vrot.lane.b32.xlu0 %v2326, 96
      %v2821 = vpop.permute.xlu0 %2820
      %2822 = vrot.lane.b32.xlu0 %v2327, 96
      %v2823 = vpop.permute.xlu0 %2822
      %2824 = vrot.lane.b32.xlu0 %v2328, 96
      %v2825 = vpop.permute.xlu0 %2824
      %2826 = vrot.lane.b32.xlu0 %v2329, 96
      %v2827 = vpop.permute.xlu0 %2826
      %2828 = vrot.lane.b32.xlu0 %v2330, 96
      %v2829 = vpop.permute.xlu0 %2828
      %2830 = vrot.lane.b32.xlu0 %v2331, 96
      %v2831 = vpop.permute.xlu0 %2830
      %2832 = vrot.lane.b32.xlu0 %v2332, 96
      %v2833 = vpop.permute.xlu0 %2832
      %2834 = vrot.lane.b32.xlu0 %v2333, 96
      %v2835 = vpop.permute.xlu0 %2834
      %2836 = vrot.lane.b32.xlu0 %v2334, 96
      %v2837 = vpop.permute.xlu0 %2836
      %2838 = vrot.lane.b32.xlu0 %v2335, 96
      %v2839 = vpop.permute.xlu0 %2838
      %2840 = vrot.lane.b32.xlu0 %v2336, 96
      %v2841 = vpop.permute.xlu0 %2840
      %2842 = vrot.lane.b32.xlu0 %v2337, 96
      %v2843 = vpop.permute.xlu0 %2842
      %2844 = vrot.lane.b32.xlu0 %v2338, 96
      %v2845 = vpop.permute.xlu0 %2844
      %2846 = vrot.lane.b32.xlu0 %v2339, 96
      %v2847 = vpop.permute.xlu0 %2846
      %2848 = vrot.lane.b32.xlu0 %v2340, 96
      %v2849 = vpop.permute.xlu0 %2848
      %2850 = vrot.lane.b32.xlu0 %v2341, 96
      %v2851 = vpop.permute.xlu0 %2850
      %2852 = vrot.lane.b32.xlu0 %v2342, 96
      %v2853 = vpop.permute.xlu0 %2852
      %2854 = vrot.lane.b32.xlu0 %v2343, 96
      %v2855 = vpop.permute.xlu0 %2854
      %2856 = vrot.lane.b32.xlu0 %v2344, 96
      %v2857 = vpop.permute.xlu0 %2856
      %2922 = vrot.lane.b32.xlu0 %v2377, 32
      %v2923 = vpop.permute.xlu0 %2922
      %2924 = vrot.lane.b32.xlu0 %v2378, 32
      %v2925 = vpop.permute.xlu0 %2924
      %2926 = vrot.lane.b32.xlu0 %v2379, 32
      %v2927 = vpop.permute.xlu0 %2926
      %2928 = vrot.lane.b32.xlu0 %v2380, 32
      %v2929 = vpop.permute.xlu0 %2928
      %2930 = vrot.lane.b32.xlu0 %v2381, 32
      %v2931 = vpop.permute.xlu0 %2930
      %2932 = vrot.lane.b32.xlu0 %v2382, 32
      %v2933 = vpop.permute.xlu0 %2932
      %2934 = vrot.lane.b32.xlu0 %v2383, 32
      %v2935 = vpop.permute.xlu0 %2934
      %2936 = vrot.lane.b32.xlu0 %v2384, 32
      %v2937 = vpop.permute.xlu0 %2936
      %2938 = vrot.lane.b32.xlu0 %v2385, 32
      %v2939 = vpop.permute.xlu0 %2938
      %2940 = vrot.lane.b32.xlu0 %v2386, 32
      %v2941 = vpop.permute.xlu0 %2940
      %2942 = vrot.lane.b32.xlu0 %v2387, 32
      %v2943 = vpop.permute.xlu0 %2942
      %2944 = vrot.lane.b32.xlu0 %v2388, 32
      %v2945 = vpop.permute.xlu0 %2944
      %2946 = vrot.lane.b32.xlu0 %v2389, 32
      %v2947 = vpop.permute.xlu0 %2946
      %2948 = vrot.lane.b32.xlu0 %v2390, 32
      %v2949 = vpop.permute.xlu0 %2948
      %2950 = vrot.lane.b32.xlu0 %v2391, 32
      %v2951 = vpop.permute.xlu0 %2950
      %2952 = vrot.lane.b32.xlu0 %v2392, 32
      %v2953 = vpop.permute.xlu0 %2952
      %2954 = vrot.lane.b32.xlu0 %v2393, 32
      %v2955 = vpop.permute.xlu0 %2954
      %2956 = vrot.lane.b32.xlu0 %v2394, 32
      %v2957 = vpop.permute.xlu0 %2956
      %2958 = vrot.lane.b32.xlu0 %v2395, 32
      %v2959 = vpop.permute.xlu0 %2958
      %2960 = vrot.lane.b32.xlu0 %v2396, 32
      %v2961 = vpop.permute.xlu0 %2960
      %2962 = vrot.lane.b32.xlu0 %v2397, 32
      %v2963 = vpop.permute.xlu0 %2962
      %2964 = vrot.lane.b32.xlu0 %v2398, 32
      %v2965 = vpop.permute.xlu0 %2964
      %2966 = vrot.lane.b32.xlu0 %v2399, 32
      %v2967 = vpop.permute.xlu0 %2966
      %2968 = vrot.lane.b32.xlu0 %v2400, 32
      %v2969 = vpop.permute.xlu0 %2968
      %2970 = vrot.lane.b32.xlu0 %v2401, 32
      %v2971 = vpop.permute.xlu0 %2970
      %2972 = vrot.lane.b32.xlu0 %v2402, 32
      %v2973 = vpop.permute.xlu0 %2972
      %2974 = vrot.lane.b32.xlu0 %v2403, 32
      %v2975 = vpop.permute.xlu0 %2974
      %2976 = vrot.lane.b32.xlu0 %v2404, 32
      %v2977 = vpop.permute.xlu0 %2976
      %2978 = vrot.lane.b32.xlu0 %v2405, 32
      %v2979 = vpop.permute.xlu0 %2978
      %2980 = vrot.lane.b32.xlu0 %v2406, 32
      %v2981 = vpop.permute.xlu0 %2980
      %2982 = vrot.lane.b32.xlu0 %v2407, 32
      %v2983 = vpop.permute.xlu0 %2982
      %2984 = vrot.lane.b32.xlu0 %v2408, 32
      %v2985 = vpop.permute.xlu0 %2984
      %3050 = vrot.lane.b32.xlu0 %v2410, 64
      %v3051 = vpop.permute.xlu0 %3050
      %3052 = vrot.lane.b32.xlu0 %v2411, 64
      %v3053 = vpop.permute.xlu0 %3052
      %3054 = vrot.lane.b32.xlu0 %v2412, 64
      %v3055 = vpop.permute.xlu0 %3054
      %3056 = vrot.lane.b32.xlu0 %v2413, 64
      %v3057 = vpop.permute.xlu0 %3056
      %3058 = vrot.lane.b32.xlu0 %v2414, 64
      %v3059 = vpop.permute.xlu0 %3058
      %3060 = vrot.lane.b32.xlu0 %v2415, 64
      %v3061 = vpop.permute.xlu0 %3060
      %3062 = vrot.lane.b32.xlu0 %v2416, 64
      %v3063 = vpop.permute.xlu0 %3062
      %3064 = vrot.lane.b32.xlu0 %v2417, 64
      %v3065 = vpop.permute.xlu0 %3064
      %3066 = vrot.lane.b32.xlu0 %v2418, 64
      %v3067 = vpop.permute.xlu0 %3066
      %3068 = vrot.lane.b32.xlu0 %v2419, 64
      %v3069 = vpop.permute.xlu0 %3068
      %3070 = vrot.lane.b32.xlu0 %v2420, 64
      %v3071 = vpop.permute.xlu0 %3070
      %3072 = vrot.lane.b32.xlu0 %v2421, 64
      %v3073 = vpop.permute.xlu0 %3072
      %3074 = vrot.lane.b32.xlu0 %v2422, 64
      %v3075 = vpop.permute.xlu0 %3074
      %3076 = vrot.lane.b32.xlu0 %v2423, 64
      %v3077 = vpop.permute.xlu0 %3076
      %3078 = vrot.lane.b32.xlu0 %v2424, 64
      %v3079 = vpop.permute.xlu0 %3078
      %3080 = vrot.lane.b32.xlu0 %v2425, 64
      %v3081 = vpop.permute.xlu0 %3080
      %3082 = vrot.lane.b32.xlu0 %v2426, 64
      %v3083 = vpop.permute.xlu0 %3082
      %3084 = vrot.lane.b32.xlu0 %v2427, 64
      %v3085 = vpop.permute.xlu0 %3084
      %3086 = vrot.lane.b32.xlu0 %v2428, 64
      %v3087 = vpop.permute.xlu0 %3086
      %3088 = vrot.lane.b32.xlu0 %v2429, 64
      %v3089 = vpop.permute.xlu0 %3088
      %3090 = vrot.lane.b32.xlu0 %v2430, 64
      %v3091 = vpop.permute.xlu0 %3090
      %3092 = vrot.lane.b32.xlu0 %v2431, 64
      %v3093 = vpop.permute.xlu0 %3092
      %3094 = vrot.lane.b32.xlu0 %v2432, 64
      %v3095 = vpop.permute.xlu0 %3094
      %3096 = vrot.lane.b32.xlu0 %v2433, 64
      %v3097 = vpop.permute.xlu0 %3096
      %3098 = vrot.lane.b32.xlu0 %v2434, 64
      %v3099 = vpop.permute.xlu0 %3098
      %3100 = vrot.lane.b32.xlu0 %v2435, 64
      %v3101 = vpop.permute.xlu0 %3100
      %3102 = vrot.lane.b32.xlu0 %v2436, 64
      %v3103 = vpop.permute.xlu0 %3102
      %3104 = vrot.lane.b32.xlu0 %v2437, 64
      %v3105 = vpop.permute.xlu0 %3104
      %3106 = vrot.lane.b32.xlu0 %v2438, 64
      %v3107 = vpop.permute.xlu0 %3106
      %3108 = vrot.lane.b32.xlu0 %v2439, 64
      %v3109 = vpop.permute.xlu0 %3108
      %3110 = vrot.lane.b32.xlu0 %v2440, 64
      %v3111 = vpop.permute.xlu0 %3110
      %3112 = vrot.lane.b32.xlu0 %v2441, 64
      %v3113 = vpop.permute.xlu0 %3112
      %3178 = vrot.lane.b32.xlu0 %v2442, 96
      %v3179 = vpop.permute.xlu0 %3178
      %3180 = vrot.lane.b32.xlu0 %v2443, 96
      %v3181 = vpop.permute.xlu0 %3180
      %3182 = vrot.lane.b32.xlu0 %v2444, 96
      %v3183 = vpop.permute.xlu0 %3182
      %3184 = vrot.lane.b32.xlu0 %v2445, 96
      %v3185 = vpop.permute.xlu0 %3184
      %3186 = vrot.lane.b32.xlu0 %v2446, 96
      %v3187 = vpop.permute.xlu0 %3186
      %3188 = vrot.lane.b32.xlu0 %v2447, 96
      %v3189 = vpop.permute.xlu0 %3188
      %3190 = vrot.lane.b32.xlu0 %v2448, 96
      %v3191 = vpop.permute.xlu0 %3190
      %3192 = vrot.lane.b32.xlu0 %v2449, 96
      %v3193 = vpop.permute.xlu0 %3192
      %3194 = vrot.lane.b32.xlu0 %v2450, 96
      %v3195 = vpop.permute.xlu0 %3194
      %3196 = vrot.lane.b32.xlu0 %v2451, 96
      %v3197 = vpop.permute.xlu0 %3196
      %3198 = vrot.lane.b32.xlu0 %v2452, 96
      %v3199 = vpop.permute.xlu0 %3198
      %3200 = vrot.lane.b32.xlu0 %v2453, 96
      %v3201 = vpop.permute.xlu0 %3200
      %3202 = vrot.lane.b32.xlu0 %v2454, 96
      %v3203 = vpop.permute.xlu0 %3202
      %3204 = vrot.lane.b32.xlu0 %v2455, 96
      %v3205 = vpop.permute.xlu0 %3204
      %3206 = vrot.lane.b32.xlu0 %v2456, 96
      %v3207 = vpop.permute.xlu0 %3206
      %3208 = vrot.lane.b32.xlu0 %v2457, 96
      %v3209 = vpop.permute.xlu0 %3208
      %3210 = vrot.lane.b32.xlu0 %v2458, 96
      %v3211 = vpop.permute.xlu0 %3210
      %3212 = vrot.lane.b32.xlu0 %v2459, 96
      %v3213 = vpop.permute.xlu0 %3212
      %3214 = vrot.lane.b32.xlu0 %v2460, 96
      %v3215 = vpop.permute.xlu0 %3214
      %3216 = vrot.lane.b32.xlu0 %v2461, 96
      %v3217 = vpop.permute.xlu0 %3216
      %3218 = vrot.lane.b32.xlu0 %v2462, 96
      %v3219 = vpop.permute.xlu0 %3218
      %3220 = vrot.lane.b32.xlu0 %v2463, 96
      %v3221 = vpop.permute.xlu0 %3220
      %3222 = vrot.lane.b32.xlu0 %v2464, 96
      %v3223 = vpop.permute.xlu0 %3222
      %3224 = vrot.lane.b32.xlu0 %v2465, 96
      %v3225 = vpop.permute.xlu0 %3224
      %3226 = vrot.lane.b32.xlu0 %v2466, 96
      %v3227 = vpop.permute.xlu0 %3226
      %3228 = vrot.lane.b32.xlu0 %v2467, 96
      %v3229 = vpop.permute.xlu0 %3228
      %3230 = vrot.lane.b32.xlu0 %v2468, 96
      %v3231 = vpop.permute.xlu0 %3230
      %3232 = vrot.lane.b32.xlu0 %v2469, 96
      %v3233 = vpop.permute.xlu0 %3232
      %3234 = vrot.lane.b32.xlu0 %v2470, 96
      %v3235 = vpop.permute.xlu0 %3234
      %3236 = vrot.lane.b32.xlu0 %v2471, 96
      %v3237 = vpop.permute.xlu0 %3236
      %3238 = vrot.lane.b32.xlu0 %v2472, 96
      %v3239 = vpop.permute.xlu0 %3238
      %3240 = vrot.lane.b32.xlu0 %v2473, 96
      %v3241 = vpop.permute.xlu0 %3240
      %v3274 = vsel %vm1584, %v2217, %v2539
      %v3275 = vsel %vm1584, %v2218, %v2541
      %v3276 = vsel %vm1584, %v2219, %v2543
      %v3277 = vsel %vm1584, %v2220, %v2545
      %v3278 = vsel %vm1584, %v2221, %v2547
      %v3279 = vsel %vm1584, %v2222, %v2549
      %v3280 = vsel %vm1584, %v2223, %v2551
      %v3281 = vsel %vm1584, %v2224, %v2553
      %v3282 = vsel %vm1584, %v2225, %v2555
      %v3283 = vsel %vm1584, %v2226, %v2557
      %v3284 = vsel %vm1584, %v2227, %v2559
      %v3285 = vsel %vm1584, %v2228, %v2561
      %v3286 = vsel %vm1584, %v2229, %v2563
      %v3287 = vsel %vm1584, %v2230, %v2565
      %v3288 = vsel %vm1584, %v2231, %v2567
      %v3289 = vsel %vm1584, %v2232, %v2569
      %v3290 = vsel %vm1584, %v2233, %v2571
      %v3291 = vsel %vm1584, %v2234, %v2573
      %v3292 = vsel %vm1584, %v2235, %v2575
      %v3293 = vsel %vm1584, %v2236, %v2577
      %v3294 = vsel %vm1584, %v2237, %v2579
      %v3295 = vsel %vm1584, %v2238, %v2581
      %v3296 = vsel %vm1584, %v2239, %v2583
      %v3297 = vsel %vm1584, %v2240, %v2585
      %v3298 = vsel %vm1584, %v2241, %v2587
      %v3299 = vsel %vm1584, %v2242, %v2589
      %v3300 = vsel %vm1584, %v2243, %v2591
      %v3301 = vsel %vm1584, %v2244, %v2593
      %v3302 = vsel %vm1584, %v2245, %v2595
      %v3303 = vsel %vm1584, %v2246, %v2597
      %v3304 = vsel %vm1584, %v2247, %v2599
      %v3305 = vsel %vm1584, %v2248, %v2601
      %vm3306 = vcmask 523264
      %v3307 = vsel %vm3306, %v3274, %v2667
      %v3308 = vsel %vm3306, %v3275, %v2669
      %v3309 = vsel %vm3306, %v3276, %v2671
      %v3310 = vsel %vm3306, %v3277, %v2673
      %v3311 = vsel %vm3306, %v3278, %v2675
      %v3312 = vsel %vm3306, %v3279, %v2677
      %v3313 = vsel %vm3306, %v3280, %v2679
      %v3314 = vsel %vm3306, %v3281, %v2681
      %v3315 = vsel %vm3306, %v3282, %v2683
      %v3316 = vsel %vm3306, %v3283, %v2685
      %v3317 = vsel %vm3306, %v3284, %v2687
      %v3318 = vsel %vm3306, %v3285, %v2689
      %v3319 = vsel %vm3306, %v3286, %v2691
      %v3320 = vsel %vm3306, %v3287, %v2693
      %v3321 = vsel %vm3306, %v3288, %v2695
      %v3322 = vsel %vm3306, %v3289, %v2697
      %v3323 = vsel %vm3306, %v3290, %v2699
      %v3324 = vsel %vm3306, %v3291, %v2701
      %v3325 = vsel %vm3306, %v3292, %v2703
      %v3326 = vsel %vm3306, %v3293, %v2705
      %v3327 = vsel %vm3306, %v3294, %v2707
      %v3328 = vsel %vm3306, %v3295, %v2709
      %v3329 = vsel %vm3306, %v3296, %v2711
      %v3330 = vsel %vm3306, %v3297, %v2713
      %v3331 = vsel %vm3306, %v3298, %v2715
      %v3332 = vsel %vm3306, %v3299, %v2717
      %v3333 = vsel %vm3306, %v3300, %v2719
      %v3334 = vsel %vm3306, %v3301, %v2721
      %v3335 = vsel %vm3306, %v3302, %v2723
      %v3336 = vsel %vm3306, %v3303, %v2725
      %v3337 = vsel %vm3306, %v3304, %v2727
      %v3338 = vsel %vm3306, %v3305, %v2729
      %vm3339 = vcmask 785408
      %v3340 = vsel %vm3339, %v3307, %v2795
      %v3341 = vsel %vm3339, %v3308, %v2797
      %v3342 = vsel %vm3339, %v3309, %v2799
      %v3343 = vsel %vm3339, %v3310, %v2801
      %v3344 = vsel %vm3339, %v3311, %v2803
      %v3345 = vsel %vm3339, %v3312, %v2805
      %v3346 = vsel %vm3339, %v3313, %v2807
      %v3347 = vsel %vm3339, %v3314, %v2809
      %v3348 = vsel %vm3339, %v3315, %v2811
      %v3349 = vsel %vm3339, %v3316, %v2813
      %v3350 = vsel %vm3339, %v3317, %v2815
      %v3351 = vsel %vm3339, %v3318, %v2817
      %v3352 = vsel %vm3339, %v3319, %v2819
      %v3353 = vsel %vm3339, %v3320, %v2821
      %v3354 = vsel %vm3339, %v3321, %v2823
      %v3355 = vsel %vm3339, %v3322, %v2825
      %v3356 = vsel %vm3339, %v3323, %v2827
      %v3357 = vsel %vm3339, %v3324, %v2829
      %v3358 = vsel %vm3339, %v3325, %v2831
      %v3359 = vsel %vm3339, %v3326, %v2833
      %v3360 = vsel %vm3339, %v3327, %v2835
      %v3361 = vsel %vm3339, %v3328, %v2837
      %v3362 = vsel %vm3339, %v3329, %v2839
      %v3363 = vsel %vm3339, %v3330, %v2841
      %v3364 = vsel %vm3339, %v3331, %v2843
      %v3365 = vsel %vm3339, %v3332, %v2845
      %v3366 = vsel %vm3339, %v3333, %v2847
      %v3367 = vsel %vm3339, %v3334, %v2849
      %v3368 = vsel %vm3339, %v3335, %v2851
      %v3369 = vsel %vm3339, %v3336, %v2853
      %v3370 = vsel %vm3339, %v3337, %v2855
      %v3371 = vsel %vm3339, %v3338, %v2857
      %v3372 = vsel %vm1584, %v2345, %v2923
      %v3373 = vsel %vm1584, %v2346, %v2925
      %v3374 = vsel %vm1584, %v2347, %v2927
      %v3375 = vsel %vm1584, %v2348, %v2929
      %v3376 = vsel %vm1584, %v2349, %v2931
      %v3377 = vsel %vm1584, %v2350, %v2933
      %v3378 = vsel %vm1584, %v2351, %v2935
      %v3379 = vsel %vm1584, %v2352, %v2937
      %v3380 = vsel %vm1584, %v2353, %v2939
      %v3381 = vsel %vm1584, %v2354, %v2941
      %v3382 = vsel %vm1584, %v2355, %v2943
      %v3383 = vsel %vm1584, %v2356, %v2945
      %v3384 = vsel %vm1584, %v2357, %v2947
      %v3385 = vsel %vm1584, %v2358, %v2949
      %v3386 = vsel %vm1584, %v2359, %v2951
      %v3387 = vsel %vm1584, %v2360, %v2953
      %v3388 = vsel %vm1584, %v2361, %v2955
      %v3389 = vsel %vm1584, %v2362, %v2957
      %v3390 = vsel %vm1584, %v2363, %v2959
      %v3391 = vsel %vm1584, %v2364, %v2961
      %v3392 = vsel %vm1584, %v2365, %v2963
      %v3393 = vsel %vm1584, %v2366, %v2965
      %v3394 = vsel %vm1584, %v2367, %v2967
      %v3395 = vsel %vm1584, %v2368, %v2969
      %v3396 = vsel %vm1584, %v2369, %v2971
      %v3397 = vsel %vm1584, %v2370, %v2973
      %v3398 = vsel %vm1584, %v2371, %v2975
      %v3399 = vsel %vm1584, %v2372, %v2977
      %v3400 = vsel %vm1584, %v2373, %v2979
      %v3401 = vsel %vm1584, %v2374, %v2981
      %v3402 = vsel %vm1584, %v2375, %v2983
      %v3403 = vsel %vm1584, %v2376, %v2985
      %v3404 = vsel %vm3306, %v3372, %v3051
      %v3405 = vsel %vm3306, %v3373, %v3053
      %v3406 = vsel %vm3306, %v3374, %v3055
      %v3407 = vsel %vm3306, %v3375, %v3057
      %v3408 = vsel %vm3306, %v3376, %v3059
      %v3409 = vsel %vm3306, %v3377, %v3061
      %v3410 = vsel %vm3306, %v3378, %v3063
      %v3411 = vsel %vm3306, %v3379, %v3065
      %v3412 = vsel %vm3306, %v3380, %v3067
      %v3413 = vsel %vm3306, %v3381, %v3069
      %v3414 = vsel %vm3306, %v3382, %v3071
      %v3415 = vsel %vm3306, %v3383, %v3073
      %v3416 = vsel %vm3306, %v3384, %v3075
      %v3417 = vsel %vm3306, %v3385, %v3077
      %v3418 = vsel %vm3306, %v3386, %v3079
      %v3419 = vsel %vm3306, %v3387, %v3081
      %v3420 = vsel %vm3306, %v3388, %v3083
      %v3421 = vsel %vm3306, %v3389, %v3085
      %v3422 = vsel %vm3306, %v3390, %v3087
      %v3423 = vsel %vm3306, %v3391, %v3089
      %v3424 = vsel %vm3306, %v3392, %v3091
      %v3425 = vsel %vm3306, %v3393, %v3093
      %v3426 = vsel %vm3306, %v3394, %v3095
      %v3427 = vsel %vm3306, %v3395, %v3097
      %v3428 = vsel %vm3306, %v3396, %v3099
      %v3429 = vsel %vm3306, %v3397, %v3101
      %v3430 = vsel %vm3306, %v3398, %v3103
      %v3431 = vsel %vm3306, %v3399, %v3105
      %v3432 = vsel %vm3306, %v3400, %v3107
      %v3433 = vsel %vm3306, %v3401, %v3109
      %v3434 = vsel %vm3306, %v3402, %v3111
      %v3435 = vsel %vm3306, %v3403, %v3113
      %v3436 = vsel %vm3339, %v3404, %v3179
      %v3437 = vsel %vm3339, %v3405, %v3181
      %v3438 = vsel %vm3339, %v3406, %v3183
      %v3439 = vsel %vm3339, %v3407, %v3185
      %v3440 = vsel %vm3339, %v3408, %v3187
      %v3441 = vsel %vm3339, %v3409, %v3189
      %v3442 = vsel %vm3339, %v3410, %v3191
      %v3443 = vsel %vm3339, %v3411, %v3193
      %v3444 = vsel %vm3339, %v3412, %v3195
      %v3445 = vsel %vm3339, %v3413, %v3197
      %v3446 = vsel %vm3339, %v3414, %v3199
      %v3447 = vsel %vm3339, %v3415, %v3201
      %v3448 = vsel %vm3339, %v3416, %v3203
      %v3449 = vsel %vm3339, %v3417, %v3205
      %v3450 = vsel %vm3339, %v3418, %v3207
      %v3451 = vsel %vm3339, %v3419, %v3209
      %v3452 = vsel %vm3339, %v3420, %v3211
      %v3453 = vsel %vm3339, %v3421, %v3213
      %v3454 = vsel %vm3339, %v3422, %v3215
      %v3455 = vsel %vm3339, %v3423, %v3217
      %v3456 = vsel %vm3339, %v3424, %v3219
      %v3457 = vsel %vm3339, %v3425, %v3221
      %v3458 = vsel %vm3339, %v3426, %v3223
      %v3459 = vsel %vm3339, %v3427, %v3225
      %v3460 = vsel %vm3339, %v3428, %v3227
      %v3461 = vsel %vm3339, %v3429, %v3229
      %v3462 = vsel %vm3339, %v3430, %v3231
      %v3463 = vsel %vm3339, %v3431, %v3233
      %v3464 = vsel %vm3339, %v3432, %v3235
      %v3465 = vsel %vm3339, %v3433, %v3237
      %v3466 = vsel %vm3339, %v3434, %v3239
      %v3467 = vsel %vm3339, %v3435, %v3241
      %v3468 = vld [vmem:[%s3] sm:$0xff]
      %v3469 = vld [vmem:[%s3 + $0x8] sm:$0xff]
      %v3470 = vld [vmem:[%s3 + $0x10] sm:$0xff]
      %v3471 = vld [vmem:[%s3 + $0x18] sm:$0xff]
      %v3472 = vld [vmem:[%s3 + $0x20] sm:$0xff]
      %v3473 = vld [vmem:[%s3 + $0x28] sm:$0xff]
      %v3474 = vld [vmem:[%s3 + $0x30] sm:$0xff]
      %v3475 = vld [vmem:[%s3 + $0x38] sm:$0xff]
      %v3476 = vld [vmem:[%s3 + $0x40] sm:$0xff]
      %v3477 = vld [vmem:[%s3 + $0x48] sm:$0xff]
      %v3478 = vld [vmem:[%s3 + $0x50] sm:$0xff]
      %v3479 = vld [vmem:[%s3 + $0x58] sm:$0xff]
      %v3480 = vld [vmem:[%s3 + $0x60] sm:$0xff]
      %v3481 = vld [vmem:[%s3 + $0x68] sm:$0xff]
      %v3482 = vld [vmem:[%s3 + $0x70] sm:$0xff]
      %v3483 = vld [vmem:[%s3 + $0x78] sm:$0xff]
      %v3484 = vld [vmem:[%s3 + $0x80] sm:$0xff]
      %v3485 = vld [vmem:[%s3 + $0x88] sm:$0xff]
      %v3486 = vld [vmem:[%s3 + $0x90] sm:$0xff]
      %v3487 = vld [vmem:[%s3 + $0x98] sm:$0xff]
      %v3488 = vld [vmem:[%s3 + $0xa0] sm:$0xff]
      %v3489 = vld [vmem:[%s3 + $0xa8] sm:$0xff]
      %v3490 = vld [vmem:[%s3 + $0xb0] sm:$0xff]
      %v3491 = vld [vmem:[%s3 + $0xb8] sm:$0xff]
      %v3492 = vld [vmem:[%s3 + $0xc0] sm:$0xff]
      %v3493 = vld [vmem:[%s3 + $0xc8] sm:$0xff]
      %v3494 = vld [vmem:[%s3 + $0xd0] sm:$0xff]
      %v3495 = vld [vmem:[%s3 + $0xd8] sm:$0xff]
      %v3496 = vld [vmem:[%s3 + $0xe0] sm:$0xff]
      %v3497 = vld [vmem:[%s3 + $0xe8] sm:$0xff]
      %v3498 = vld [vmem:[%s3 + $0xf0] sm:$0xff]
      %v3499 = vld [vmem:[%s3 + $0xf8] sm:$0xff]
      %v3500 = vld [vmem:[%s3 + $0x100] sm:$0xff]
      %v3501 = vld [vmem:[%s3 + $0x108] sm:$0xff]
      %v3502 = vld [vmem:[%s3 + $0x110] sm:$0xff]
      %v3503 = vld [vmem:[%s3 + $0x118] sm:$0xff]
      %v3504 = vld [vmem:[%s4] sm:$0x1]
      %v3506 = vlaneseq
      %v3507 = vshrl.u32 %v3506, 7
      %v3508 = vsub.s32 0, %v3507
      %v3509 = vrot.slane %v3504, %v3508
      %v3512 = vsel %vm1584, %v2474, 0
      %v3515 = vsel %vm1584, %v2475, 0
      %v3518 = vsel %vm1584, %v2476, 0
      %v3521 = vsel %vm1584, %v2477, 0
      %v3524 = vsel %vm1584, %v2478, 0
      %v3527 = vsel %vm1584, %v2479, 0
      %v3530 = vsel %vm1584, %v2480, 0
      %v3533 = vsel %vm1584, %v2481, 0
      %v3536 = vsel %vm1584, %v2482, 0
      %v3539 = vsel %vm1584, %v2483, 0
      %v3542 = vsel %vm1584, %v2484, 0
      %v3545 = vsel %vm1584, %v2485, 0
      %v3548 = vsel %vm1584, %v2486, 0
      %v3551 = vsel %vm1584, %v2487, 0
      %v3554 = vsel %vm1584, %v2488, 0
      %v3557 = vsel %vm1584, %v2489, 0
      %v3560 = vsel %vm1584, %v2490, 0
      %v3563 = vsel %vm1584, %v2491, 0
      %v3566 = vsel %vm1584, %v2492, 0
      %v3569 = vsel %vm1584, %v2493, 0
      %v3572 = vsel %vm1584, %v2494, 0
      %v3575 = vsel %vm1584, %v2495, 0
      %v3578 = vsel %vm1584, %v2496, 0
      %v3581 = vsel %vm1584, %v2497, 0
      %v3584 = vsel %vm1584, %v2498, 0
      %v3587 = vsel %vm1584, %v2499, 0
      %v3590 = vsel %vm1584, %v2500, 0
      %v3593 = vsel %vm1584, %v2501, 0
      %v3596 = vsel %vm1584, %v2502, 0
      %v3599 = vsel %vm1584, %v2503, 0
      %v3602 = vsel %vm1584, %v2504, 0
      %v3605 = vsel %vm1584, %v2505, 0
      %3607 = vmatprep.subr.mxu0 0.0
      %3608 = vmatpush1.msra.mxu0 %v3483
      %3609 = vmatprep.subr.mxu0 0.0
      %3610 = vmatpush1.msra.mxu0 %v3482
      %3611 = vmatprep.subr.mxu0 0.0
      %3612 = vmatpush1.msra.mxu0 %v3481
      %3613 = vmatprep.subr.mxu0 0.0
      %3614 = vmatpush1.msra.mxu0 %v3480
      %3615 = vmatprep.subr.mxu0 0.0
      %3616 = vmatpush1.msra.mxu0 %v3479
      %3617 = vmatprep.subr.mxu0 0.0
      %3618 = vmatpush1.msra.mxu0 %v3478
      %3619 = vmatprep.subr.mxu0 0.0
      %3620 = vmatpush1.msra.mxu0 %v3477
      %3621 = vmatprep.subr.mxu0 0.0
      %3622 = vmatpush1.msra.mxu0 %v3476
      %3623 = vmatprep.subr.mxu0 0.0
      %3624 = vmatpush1.msra.mxu0 %v3475
      %3625 = vmatprep.subr.mxu0 0.0
      %3626 = vmatpush1.msra.mxu0 %v3474
      %3627 = vmatprep.subr.mxu0 0.0
      %3628 = vmatpush1.msra.mxu0 %v3473
      %3629 = vmatprep.subr.mxu0 0.0
      %3630 = vmatpush1.msra.mxu0 %v3472
      %3631 = vmatprep.subr.mxu0 0.0
      %3632 = vmatpush1.msra.mxu0 %v3471
      %3633 = vmatprep.subr.mxu0 0.0
      %3634 = vmatpush1.msra.mxu0 %v3470
      %3635 = vmatprep.subr.mxu0 0.0
      %3636 = vmatpush1.msra.mxu0 %v3469
      %3637 = vmatprep.subr.mxu0 0.0
      %3638 = vmatpush1.msra.mxu0 %v3468
      %3639 = vmatprep.subr.mxu0 0.0
      %3640 = vmatpush2.msra.mxu0 %v3499
      %3641 = vmatprep.subr.mxu0 0.0
      %3642 = vmatpush2.msra.mxu0 %v3498
      %3643 = vmatprep.subr.mxu0 0.0
      %3644 = vmatpush2.msra.mxu0 %v3497
      %3645 = vmatprep.subr.mxu0 0.0
      %3646 = vmatpush2.msra.mxu0 %v3496
      %3647 = vmatprep.subr.mxu0 0.0
      %3648 = vmatpush2.msra.mxu0 %v3495
      %3649 = vmatprep.subr.mxu0 0.0
      %3650 = vmatpush2.msra.mxu0 %v3494
      %3651 = vmatprep.subr.mxu0 0.0
      %3652 = vmatpush2.msra.mxu0 %v3493
      %3653 = vmatprep.subr.mxu0 0.0
      %3654 = vmatpush2.msra.mxu0 %v3492
      %3655 = vmatprep.subr.mxu0 0.0
      %3656 = vmatpush2.msra.mxu0 %v3491
      %3657 = vmatprep.subr.mxu0 0.0
      %3658 = vmatpush2.msra.mxu0 %v3490
      %3659 = vmatprep.subr.mxu0 0.0
      %3660 = vmatpush2.msra.mxu0 %v3489
      %3661 = vmatprep.subr.mxu0 0.0
      %3662 = vmatpush2.msra.mxu0 %v3488
      %3663 = vmatprep.subr.mxu0 0.0
      %3664 = vmatpush2.msra.mxu0 %v3487
      %3665 = vmatprep.subr.mxu0 0.0
      %3666 = vmatpush2.msra.mxu0 %v3486
      %3667 = vmatprep.subr.mxu0 0.0
      %3668 = vmatpush2.msra.mxu0 %v3485
      %3669 = vmatprep.subr.mxu0 0.0
      %3670 = vmatpush2.msra.mxu0 %v3484
      %3671 = vmatprep.mubr.f32.mxu0 %v3436
      %3672 = vmatmul.mubr.f32.gmra.mxu0 %v3340
      %v3673 = vpop.f32.mrf.mxu0
      %v3674 = vadd.f32 %v3509, %v3673
      %v3675 = vpop.f32.mrf.mxu0
      %3676 = vmatprep.mubr.f32.mxu0 %v3437
      %3677 = vmatmul.mubr.f32.gmra.mxu0 %v3341
      %v3678 = vpop.f32.mrf.mxu0
      %v3679 = vadd.f32 %v3509, %v3678
      %v3680 = vpop.f32.mrf.mxu0
      %3681 = vmatprep.mubr.f32.mxu0 %v3438
      %3682 = vmatmul.mubr.f32.gmra.mxu0 %v3342
      %v3683 = vpop.f32.mrf.mxu0
      %v3684 = vadd.f32 %v3509, %v3683
      %v3685 = vpop.f32.mrf.mxu0
      %3686 = vmatprep.mubr.f32.mxu0 %v3439
      %3687 = vmatmul.mubr.f32.gmra.mxu0 %v3343
      %v3688 = vpop.f32.mrf.mxu0
      %v3689 = vadd.f32 %v3509, %v3688
      %v3690 = vpop.f32.mrf.mxu0
      %3691 = vmatprep.mubr.f32.mxu0 %v3440
      %3692 = vmatmul.mubr.f32.gmra.mxu0 %v3344
      %v3693 = vpop.f32.mrf.mxu0
      %v3694 = vadd.f32 %v3509, %v3693
      %v3695 = vpop.f32.mrf.mxu0
      %3696 = vmatprep.mubr.f32.mxu0 %v3441
      %3697 = vmatmul.mubr.f32.gmra.mxu0 %v3345
      %v3698 = vpop.f32.mrf.mxu0
      %v3699 = vadd.f32 %v3509, %v3698
      %v3700 = vpop.f32.mrf.mxu0
      %3701 = vmatprep.mubr.f32.mxu0 %v3442
      %3702 = vmatmul.mubr.f32.gmra.mxu0 %v3346
      %v3703 = vpop.f32.mrf.mxu0
      %v3704 = vadd.f32 %v3509, %v3703
      %v3705 = vpop.f32.mrf.mxu0
      %3706 = vmatprep.mubr.f32.mxu0 %v3443
      %3707 = vmatmul.mubr.f32.gmra.mxu0 %v3347
      %v3708 = vpop.f32.mrf.mxu0
      %v3709 = vadd.f32 %v3509, %v3708
      %v3710 = vpop.f32.mrf.mxu0
      %3711 = vmatprep.mubr.f32.mxu0 %v3444
      %3712 = vmatmul.mubr.f32.gmra.mxu0 %v3348
      %v3713 = vpop.f32.mrf.mxu0
      %v3714 = vadd.f32 %v3509, %v3713
      %v3715 = vpop.f32.mrf.mxu0
      %3716 = vmatprep.mubr.f32.mxu0 %v3445
      %3717 = vmatmul.mubr.f32.gmra.mxu0 %v3349
      %v3718 = vpop.f32.mrf.mxu0
      %v3719 = vadd.f32 %v3509, %v3718
      %v3720 = vpop.f32.mrf.mxu0
      %3721 = vmatprep.mubr.f32.mxu0 %v3446
      %3722 = vmatmul.mubr.f32.gmra.mxu0 %v3350
      %v3723 = vpop.f32.mrf.mxu0
      %v3724 = vadd.f32 %v3509, %v3723
      %v3725 = vpop.f32.mrf.mxu0
      %3726 = vmatprep.mubr.f32.mxu0 %v3447
      %3727 = vmatmul.mubr.f32.gmra.mxu0 %v3351
      %v3728 = vpop.f32.mrf.mxu0
      %v3729 = vadd.f32 %v3509, %v3728
      %v3730 = vpop.f32.mrf.mxu0
      %3731 = vmatprep.mubr.f32.mxu0 %v3448
      %3732 = vmatmul.mubr.f32.gmra.mxu0 %v3352
      %v3733 = vpop.f32.mrf.mxu0
      %v3734 = vadd.f32 %v3509, %v3733
      %v3735 = vpop.f32.mrf.mxu0
      %3736 = vmatprep.mubr.f32.mxu0 %v3449
      %3737 = vmatmul.mubr.f32.gmra.mxu0 %v3353
      %v3738 = vpop.f32.mrf.mxu0
      %v3739 = vadd.f32 %v3509, %v3738
      %v3740 = vpop.f32.mrf.mxu0
      %3741 = vmatprep.mubr.f32.mxu0 %v3450
      %3742 = vmatmul.mubr.f32.gmra.mxu0 %v3354
      %v3743 = vpop.f32.mrf.mxu0
      %v3744 = vadd.f32 %v3509, %v3743
      %v3745 = vpop.f32.mrf.mxu0
      %3746 = vmatprep.mubr.f32.mxu0 %v3451
      %3747 = vmatmul.mubr.f32.gmra.mxu0 %v3355
      %v3748 = vpop.f32.mrf.mxu0
      %v3749 = vadd.f32 %v3509, %v3748
      %v3750 = vpop.f32.mrf.mxu0
      %3751 = vmatprep.mubr.f32.mxu0 %v3452
      %3752 = vmatmul.mubr.f32.gmra.mxu0 %v3356
      %v3753 = vpop.f32.mrf.mxu0
      %v3754 = vadd.f32 %v3509, %v3753
      %v3755 = vpop.f32.mrf.mxu0
      %3756 = vmatprep.mubr.f32.mxu0 %v3453
      %3757 = vmatmul.mubr.f32.gmra.mxu0 %v3357
      %v3758 = vpop.f32.mrf.mxu0
      %v3759 = vadd.f32 %v3509, %v3758
      %v3760 = vpop.f32.mrf.mxu0
      %3761 = vmatprep.mubr.f32.mxu0 %v3454
      %3762 = vmatmul.mubr.f32.gmra.mxu0 %v3358
      %v3763 = vpop.f32.mrf.mxu0
      %v3764 = vadd.f32 %v3509, %v3763
      %v3765 = vpop.f32.mrf.mxu0
      %3766 = vmatprep.mubr.f32.mxu0 %v3455
      %3767 = vmatmul.mubr.f32.gmra.mxu0 %v3359
      %v3768 = vpop.f32.mrf.mxu0
      %v3769 = vadd.f32 %v3509, %v3768
      %v3770 = vpop.f32.mrf.mxu0
      %3771 = vmatprep.mubr.f32.mxu0 %v3456
      %3772 = vmatmul.mubr.f32.gmra.mxu0 %v3360
      %v3773 = vpop.f32.mrf.mxu0
      %v3774 = vadd.f32 %v3509, %v3773
      %v3775 = vpop.f32.mrf.mxu0
      %3776 = vmatprep.mubr.f32.mxu0 %v3457
      %3777 = vmatmul.mubr.f32.gmra.mxu0 %v3361
      %v3778 = vpop.f32.mrf.mxu0
      %v3779 = vadd.f32 %v3509, %v3778
      %v3780 = vpop.f32.mrf.mxu0
      %3781 = vmatprep.mubr.f32.mxu0 %v3458
      %3782 = vmatmul.mubr.f32.gmra.mxu0 %v3362
      %v3783 = vpop.f32.mrf.mxu0
      %v3784 = vadd.f32 %v3509, %v3783
      %v3785 = vpop.f32.mrf.mxu0
      %3786 = vmatprep.mubr.f32.mxu0 %v3459
      %3787 = vmatmul.mubr.f32.gmra.mxu0 %v3363
      %v3788 = vpop.f32.mrf.mxu0
      %v3789 = vadd.f32 %v3509, %v3788
      %v3790 = vpop.f32.mrf.mxu0
      %3791 = vmatprep.mubr.f32.mxu0 %v3460
      %3792 = vmatmul.mubr.f32.gmra.mxu0 %v3364
      %v3793 = vpop.f32.mrf.mxu0
      %v3794 = vadd.f32 %v3509, %v3793
      %v3795 = vpop.f32.mrf.mxu0
      %3796 = vmatprep.mubr.f32.mxu0 %v3461
      %3797 = vmatmul.mubr.f32.gmra.mxu0 %v3365
      %v3798 = vpop.f32.mrf.mxu0
      %v3799 = vadd.f32 %v3509, %v3798
      %v3800 = vpop.f32.mrf.mxu0
      %3801 = vmatprep.mubr.f32.mxu0 %v3462
      %3802 = vmatmul.mubr.f32.gmra.mxu0 %v3366
      %v3803 = vpop.f32.mrf.mxu0
      %v3804 = vadd.f32 %v3509, %v3803
      %v3805 = vpop.f32.mrf.mxu0
      %3806 = vmatprep.mubr.f32.mxu0 %v3463
      %3807 = vmatmul.mubr.f32.gmra.mxu0 %v3367
      %v3808 = vpop.f32.mrf.mxu0
      %v3809 = vadd.f32 %v3509, %v3808
      %v3810 = vpop.f32.mrf.mxu0
      %3811 = vmatprep.mubr.f32.mxu0 %v3464
      %3812 = vmatmul.mubr.f32.gmra.mxu0 %v3368
      %v3813 = vpop.f32.mrf.mxu0
      %v3814 = vadd.f32 %v3509, %v3813
      %v3815 = vpop.f32.mrf.mxu0
      %3816 = vmatprep.mubr.f32.mxu0 %v3465
      %3817 = vmatmul.mubr.f32.gmra.mxu0 %v3369
      %v3818 = vpop.f32.mrf.mxu0
      %v3819 = vadd.f32 %v3509, %v3818
      %v3820 = vpop.f32.mrf.mxu0
      %3821 = vmatprep.mubr.f32.mxu0 %v3466
      %3822 = vmatmul.mubr.f32.gmra.mxu0 %v3370
      %v3823 = vpop.f32.mrf.mxu0
      %v3824 = vadd.f32 %v3509, %v3823
      %v3825 = vpop.f32.mrf.mxu0
      %3826 = vmatprep.mubr.f32.mxu0 %v3467
      %3827 = vmatmul.mubr.f32.gmra.mxu0 %v3371
      %v3828 = vpop.f32.mrf.mxu0
      %v3829 = vadd.f32 %v3509, %v3828
      %v3830 = vpop.f32.mrf.mxu0
      %3831 = vdwg.mxu0
      %3832 = vmatprep.subr.mxu0 0.0
      %3833 = vmatpush1.msra.mxu0 0.0
      %3834 = vmatprep.subr.mxu0 0.0
      %3835 = vmatpush1.msra.mxu0 0.0
      %3836 = vmatprep.subr.mxu0 0.0
      %3837 = vmatpush1.msra.mxu0 0.0
      %3838 = vmatprep.subr.mxu0 0.0
      %3839 = vmatpush1.msra.mxu0 0.0
      %3840 = vmatprep.subr.mxu0 0.0
      %3841 = vmatpush1.msra.mxu0 0.0
      %3842 = vmatprep.subr.mxu0 0.0
      %3843 = vmatpush1.msra.mxu0 0.0
      %3844 = vmatprep.subr.mxu0 0.0
      %3845 = vmatpush1.msra.mxu0 0.0
      %3846 = vmatprep.subr.mxu0 0.0
      %3847 = vmatpush1.msra.mxu0 0.0
      %3848 = vmatprep.subr.mxu0 0.0
      %3849 = vmatpush1.msra.mxu0 0.0
      %3850 = vmatprep.subr.mxu0 0.0
      %3851 = vmatpush1.msra.mxu0 0.0
      %3852 = vmatprep.subr.mxu0 0.0
      %3853 = vmatpush1.msra.mxu0 0.0
      %3854 = vmatprep.subr.mxu0 0.0
      %3855 = vmatpush1.msra.mxu0 0.0
      %3856 = vmatprep.subr.mxu0 0.0
      %3857 = vmatpush1.msra.mxu0 %v3503
      %3858 = vmatprep.subr.mxu0 0.0
      %3859 = vmatpush1.msra.mxu0 %v3502
      %3860 = vmatprep.subr.mxu0 0.0
      %3861 = vmatpush1.msra.mxu0 %v3501
      %3862 = vmatprep.subr.mxu0 0.0
      %3863 = vmatpush1.msra.mxu0 %v3500
      %3864 = vmatprep.subr.mxu0 0.0
      %3865 = vmatpush2.msra.mxu0 0.0
      %3866 = vmatprep.subr.mxu0 0.0
      %3867 = vmatpush2.msra.mxu0 0.0
      %3868 = vmatprep.subr.mxu0 0.0
      %3869 = vmatpush2.msra.mxu0 0.0
      %3870 = vmatprep.subr.mxu0 0.0
      %3871 = vmatpush2.msra.mxu0 0.0
      %3872 = vmatprep.subr.mxu0 0.0
      %3873 = vmatpush2.msra.mxu0 0.0
      %3874 = vmatprep.subr.mxu0 0.0
      %3875 = vmatpush2.msra.mxu0 0.0
      %3876 = vmatprep.subr.mxu0 0.0
      %3877 = vmatpush2.msra.mxu0 0.0
      %3878 = vmatprep.subr.mxu0 0.0
      %3879 = vmatpush2.msra.mxu0 0.0
      %3880 = vmatprep.subr.mxu0 0.0
      %3881 = vmatpush2.msra.mxu0 0.0
      %3882 = vmatprep.subr.mxu0 0.0
      %3883 = vmatpush2.msra.mxu0 0.0
      %3884 = vmatprep.subr.mxu0 0.0
      %3885 = vmatpush2.msra.mxu0 0.0
      %3886 = vmatprep.subr.mxu0 0.0
      %3887 = vmatpush2.msra.mxu0 0.0
      %3888 = vmatprep.subr.mxu0 0.0
      %3889 = vmatpush2.msra.mxu0 0.0
      %3890 = vmatprep.subr.mxu0 0.0
      %3891 = vmatpush2.msra.mxu0 0.0
      %3892 = vmatprep.subr.mxu0 0.0
      %3893 = vmatpush2.msra.mxu0 0.0
      %3894 = vmatprep.subr.mxu0 0.0
      %3895 = vmatpush2.msra.mxu0 0.0
      %3896 = vmatprep.mubr.f32.mxu0 0.0
      %3897 = vmatmul.mubr.f32.gmra.mxu0 %v3512
      %v3898 = vpop.f32.mrf.mxu0
      %v3899 = vadd.f32 %v3674, %v3898
      %v3900 = vpop.f32.mrf.mxu0
      %3901 = vmatprep.mubr.f32.mxu0 0.0
      %3902 = vmatmul.mubr.f32.gmra.mxu0 %v3515
      %v3903 = vpop.f32.mrf.mxu0
      %v3904 = vadd.f32 %v3679, %v3903
      %v3905 = vpop.f32.mrf.mxu0
      %3906 = vmatprep.mubr.f32.mxu0 0.0
      %3907 = vmatmul.mubr.f32.gmra.mxu0 %v3518
      %v3908 = vpop.f32.mrf.mxu0
      %v3909 = vadd.f32 %v3684, %v3908
      %v3910 = vpop.f32.mrf.mxu0
      %3911 = vmatprep.mubr.f32.mxu0 0.0
      %3912 = vmatmul.mubr.f32.gmra.mxu0 %v3521
      %v3913 = vpop.f32.mrf.mxu0
      %v3914 = vadd.f32 %v3689, %v3913
      %v3915 = vpop.f32.mrf.mxu0
      %3916 = vmatprep.mubr.f32.mxu0 0.0
      %3917 = vmatmul.mubr.f32.gmra.mxu0 %v3524
      %v3918 = vpop.f32.mrf.mxu0
      %v3919 = vadd.f32 %v3694, %v3918
      %v3920 = vpop.f32.mrf.mxu0
      %3921 = vmatprep.mubr.f32.mxu0 0.0
      %3922 = vmatmul.mubr.f32.gmra.mxu0 %v3527
      %v3923 = vpop.f32.mrf.mxu0
      %v3924 = vadd.f32 %v3699, %v3923
      %v3925 = vpop.f32.mrf.mxu0
      %3926 = vmatprep.mubr.f32.mxu0 0.0
      %3927 = vmatmul.mubr.f32.gmra.mxu0 %v3530
      %v3928 = vpop.f32.mrf.mxu0
      %v3929 = vadd.f32 %v3704, %v3928
      %v3930 = vpop.f32.mrf.mxu0
      %3931 = vmatprep.mubr.f32.mxu0 0.0
      %3932 = vmatmul.mubr.f32.gmra.mxu0 %v3533
      %v3933 = vpop.f32.mrf.mxu0
      %v3934 = vadd.f32 %v3709, %v3933
      %v3935 = vpop.f32.mrf.mxu0
      %3936 = vmatprep.mubr.f32.mxu0 0.0
      %3937 = vmatmul.mubr.f32.gmra.mxu0 %v3536
      %v3938 = vpop.f32.mrf.mxu0
      %v3939 = vadd.f32 %v3714, %v3938
      %v3940 = vpop.f32.mrf.mxu0
      %3941 = vmatprep.mubr.f32.mxu0 0.0
      %3942 = vmatmul.mubr.f32.gmra.mxu0 %v3539
      %v3943 = vpop.f32.mrf.mxu0
      %v3944 = vadd.f32 %v3719, %v3943
      %v3945 = vpop.f32.mrf.mxu0
      %3946 = vmatprep.mubr.f32.mxu0 0.0
      %3947 = vmatmul.mubr.f32.gmra.mxu0 %v3542
      %v3948 = vpop.f32.mrf.mxu0
      %v3949 = vadd.f32 %v3724, %v3948
      %v3950 = vpop.f32.mrf.mxu0
      %3951 = vmatprep.mubr.f32.mxu0 0.0
      %3952 = vmatmul.mubr.f32.gmra.mxu0 %v3545
      %v3953 = vpop.f32.mrf.mxu0
      %v3954 = vadd.f32 %v3729, %v3953
      %v3955 = vpop.f32.mrf.mxu0
      %3956 = vmatprep.mubr.f32.mxu0 0.0
      %3957 = vmatmul.mubr.f32.gmra.mxu0 %v3548
      %v3958 = vpop.f32.mrf.mxu0
      %v3959 = vadd.f32 %v3734, %v3958
      %v3960 = vpop.f32.mrf.mxu0
      %3961 = vmatprep.mubr.f32.mxu0 0.0
      %3962 = vmatmul.mubr.f32.gmra.mxu0 %v3551
      %v3963 = vpop.f32.mrf.mxu0
      %v3964 = vadd.f32 %v3739, %v3963
      %v3965 = vpop.f32.mrf.mxu0
      %3966 = vmatprep.mubr.f32.mxu0 0.0
      %3967 = vmatmul.mubr.f32.gmra.mxu0 %v3554
      %v3968 = vpop.f32.mrf.mxu0
      %v3969 = vadd.f32 %v3744, %v3968
      %v3970 = vpop.f32.mrf.mxu0
      %3971 = vmatprep.mubr.f32.mxu0 0.0
      %3972 = vmatmul.mubr.f32.gmra.mxu0 %v3557
      %v3973 = vpop.f32.mrf.mxu0
      %v3974 = vadd.f32 %v3749, %v3973
      %v3975 = vpop.f32.mrf.mxu0
      %3976 = vmatprep.mubr.f32.mxu0 0.0
      %3977 = vmatmul.mubr.f32.gmra.mxu0 %v3560
      %v3978 = vpop.f32.mrf.mxu0
      %v3979 = vadd.f32 %v3754, %v3978
      %v3980 = vpop.f32.mrf.mxu0
      %3981 = vmatprep.mubr.f32.mxu0 0.0
      %3982 = vmatmul.mubr.f32.gmra.mxu0 %v3563
      %v3983 = vpop.f32.mrf.mxu0
      %v3984 = vadd.f32 %v3759, %v3983
      %v3985 = vpop.f32.mrf.mxu0
      %3986 = vmatprep.mubr.f32.mxu0 0.0
      %3987 = vmatmul.mubr.f32.gmra.mxu0 %v3566
      %v3988 = vpop.f32.mrf.mxu0
      %v3989 = vadd.f32 %v3764, %v3988
      %v3990 = vpop.f32.mrf.mxu0
      %3991 = vmatprep.mubr.f32.mxu0 0.0
      %3992 = vmatmul.mubr.f32.gmra.mxu0 %v3569
      %v3993 = vpop.f32.mrf.mxu0
      %v3994 = vadd.f32 %v3769, %v3993
      %v3995 = vpop.f32.mrf.mxu0
      %3996 = vmatprep.mubr.f32.mxu0 0.0
      %3997 = vmatmul.mubr.f32.gmra.mxu0 %v3572
      %v3998 = vpop.f32.mrf.mxu0
      %v3999 = vadd.f32 %v3774, %v3998
      %v4000 = vpop.f32.mrf.mxu0
      %4001 = vmatprep.mubr.f32.mxu0 0.0
      %4002 = vmatmul.mubr.f32.gmra.mxu0 %v3575
      %v4003 = vpop.f32.mrf.mxu0
      %v4004 = vadd.f32 %v3779, %v4003
      %v4005 = vpop.f32.mrf.mxu0
      %4006 = vmatprep.mubr.f32.mxu0 0.0
      %4007 = vmatmul.mubr.f32.gmra.mxu0 %v3578
      %v4008 = vpop.f32.mrf.mxu0
      %v4009 = vadd.f32 %v3784, %v4008
      %v4010 = vpop.f32.mrf.mxu0
      %4011 = vmatprep.mubr.f32.mxu0 0.0
      %4012 = vmatmul.mubr.f32.gmra.mxu0 %v3581
      %v4013 = vpop.f32.mrf.mxu0
      %v4014 = vadd.f32 %v3789, %v4013
      %v4015 = vpop.f32.mrf.mxu0
      %4016 = vmatprep.mubr.f32.mxu0 0.0
      %4017 = vmatmul.mubr.f32.gmra.mxu0 %v3584
      %v4018 = vpop.f32.mrf.mxu0
      %v4019 = vadd.f32 %v3794, %v4018
      %v4020 = vpop.f32.mrf.mxu0
      %4021 = vmatprep.mubr.f32.mxu0 0.0
      %4022 = vmatmul.mubr.f32.gmra.mxu0 %v3587
      %v4023 = vpop.f32.mrf.mxu0
      %v4024 = vadd.f32 %v3799, %v4023
      %v4025 = vpop.f32.mrf.mxu0
      %4026 = vmatprep.mubr.f32.mxu0 0.0
      %4027 = vmatmul.mubr.f32.gmra.mxu0 %v3590
      %v4028 = vpop.f32.mrf.mxu0
      %v4029 = vadd.f32 %v3804, %v4028
      %v4030 = vpop.f32.mrf.mxu0
      %4031 = vmatprep.mubr.f32.mxu0 0.0
      %4032 = vmatmul.mubr.f32.gmra.mxu0 %v3593
      %v4033 = vpop.f32.mrf.mxu0
      %v4034 = vadd.f32 %v3809, %v4033
      %v4035 = vpop.f32.mrf.mxu0
      %4036 = vmatprep.mubr.f32.mxu0 0.0
      %4037 = vmatmul.mubr.f32.gmra.mxu0 %v3596
      %v4038 = vpop.f32.mrf.mxu0
      %v4039 = vadd.f32 %v3814, %v4038
      %v4040 = vpop.f32.mrf.mxu0
      %4041 = vmatprep.mubr.f32.mxu0 0.0
      %4042 = vmatmul.mubr.f32.gmra.mxu0 %v3599
      %v4043 = vpop.f32.mrf.mxu0
      %v4044 = vadd.f32 %v3819, %v4043
      %v4045 = vpop.f32.mrf.mxu0
      %4046 = vmatprep.mubr.f32.mxu0 0.0
      %4047 = vmatmul.mubr.f32.gmra.mxu0 %v3602
      %v4048 = vpop.f32.mrf.mxu0
      %v4049 = vadd.f32 %v3824, %v4048
      %v4050 = vpop.f32.mrf.mxu0
      %4051 = vmatprep.mubr.f32.mxu0 0.0
      %4052 = vmatmul.mubr.f32.gmra.mxu0 %v3605
      %v4053 = vpop.f32.mrf.mxu0
      %v4054 = vadd.f32 %v3829, %v4053
      %v4055 = vpop.f32.mrf.mxu0
      %4056 = vdwg.mxu0
      %v4057 = vmax.f32 %v3899, 0.0
      %v4058 = vmax.f32 %v3904, 0.0
      %v4059 = vmax.f32 %v3909, 0.0
      %v4060 = vmax.f32 %v3914, 0.0
      %v4061 = vmax.f32 %v3919, 0.0
      %v4062 = vmax.f32 %v3924, 0.0
      %v4063 = vmax.f32 %v3929, 0.0
      %v4064 = vmax.f32 %v3934, 0.0
      %v4065 = vmax.f32 %v3939, 0.0
      %v4066 = vmax.f32 %v3944, 0.0
      %v4067 = vmax.f32 %v3949, 0.0
      %v4068 = vmax.f32 %v3954, 0.0
      %v4069 = vmax.f32 %v3959, 0.0
      %v4070 = vmax.f32 %v3964, 0.0
      %v4071 = vmax.f32 %v3969, 0.0
      %v4072 = vmax.f32 %v3974, 0.0
      %v4073 = vmax.f32 %v3979, 0.0
      %v4074 = vmax.f32 %v3984, 0.0
      %v4075 = vmax.f32 %v3989, 0.0
      %v4076 = vmax.f32 %v3994, 0.0
      %v4077 = vmax.f32 %v3999, 0.0
      %v4078 = vmax.f32 %v4004, 0.0
      %v4079 = vmax.f32 %v4009, 0.0
      %v4080 = vmax.f32 %v4014, 0.0
      %v4081 = vmax.f32 %v4019, 0.0
      %v4082 = vmax.f32 %v4024, 0.0
      %v4083 = vmax.f32 %v4029, 0.0
      %v4084 = vmax.f32 %v4034, 0.0
      %v4085 = vmax.f32 %v4039, 0.0
      %v4086 = vmax.f32 %v4044, 0.0
      %v4087 = vmax.f32 %v4049, 0.0
      %v4088 = vmax.f32 %v4054, 0.0
      %4089 = vst.msk [vmem:[#allocation5] sm:$0xff] %vm3306, %v4057
      %4090 = vst.msk [vmem:[#allocation5 + $0x8] sm:$0xff] %vm3306, %v4058
      %4091 = vst.msk [vmem:[#allocation5 + $0x10] sm:$0xff] %vm3306, %v4059
      %4092 = vst.msk [vmem:[#allocation5 + $0x18] sm:$0xff] %vm3306, %v4060
      %4093 = vst.msk [vmem:[#allocation5 + $0x20] sm:$0xff] %vm3306, %v4061
      %4094 = vst.msk [vmem:[#allocation5 + $0x28] sm:$0xff] %vm3306, %v4062
      %4095 = vst.msk [vmem:[#allocation5 + $0x30] sm:$0xff] %vm3306, %v4063
      %4096 = vst.msk [vmem:[#allocation5 + $0x38] sm:$0xff] %vm3306, %v4064
      %4097 = vst.msk [vmem:[#allocation5 + $0x40] sm:$0xff] %vm3306, %v4065
      %4098 = vst.msk [vmem:[#allocation5 + $0x48] sm:$0xff] %vm3306, %v4066
      %4099 = vst.msk [vmem:[#allocation5 + $0x50] sm:$0xff] %vm3306, %v4067
      %4100 = vst.msk [vmem:[#allocation5 + $0x58] sm:$0xff] %vm3306, %v4068
      %4101 = vst.msk [vmem:[#allocation5 + $0x60] sm:$0xff] %vm3306, %v4069
      %4102 = vst.msk [vmem:[#allocation5 + $0x68] sm:$0xff] %vm3306, %v4070
      %4103 = vst.msk [vmem:[#allocation5 + $0x70] sm:$0xff] %vm3306, %v4071
      %4104 = vst.msk [vmem:[#allocation5 + $0x78] sm:$0xff] %vm3306, %v4072
      %4105 = vst.msk [vmem:[#allocation5 + $0x80] sm:$0xff] %vm3306, %v4073
      %4106 = vst.msk [vmem:[#allocation5 + $0x88] sm:$0xff] %vm3306, %v4074
      %4107 = vst.msk [vmem:[#allocation5 + $0x90] sm:$0xff] %vm3306, %v4075
      %4108 = vst.msk [vmem:[#allocation5 + $0x98] sm:$0xff] %vm3306, %v4076
      %4109 = vst.msk [vmem:[#allocation5 + $0xa0] sm:$0xff] %vm3306, %v4077
      %4110 = vst.msk [vmem:[#allocation5 + $0xa8] sm:$0xff] %vm3306, %v4078
      %4111 = vst.msk [vmem:[#allocation5 + $0xb0] sm:$0xff] %vm3306, %v4079
      %4112 = vst.msk [vmem:[#allocation5 + $0xb8] sm:$0xff] %vm3306, %v4080
      %4113 = vst.msk [vmem:[#allocation5 + $0xc0] sm:$0xff] %vm3306, %v4081
      %4114 = vst.msk [vmem:[#allocation5 + $0xc8] sm:$0xff] %vm3306, %v4082
      %4115 = vst.msk [vmem:[#allocation5 + $0xd0] sm:$0xff] %vm3306, %v4083
      %4116 = vst.msk [vmem:[#allocation5 + $0xd8] sm:$0xff] %vm3306, %v4084
      %4117 = vst.msk [vmem:[#allocation5 + $0xe0] sm:$0xff] %vm3306, %v4085
      %4118 = vst.msk [vmem:[#allocation5 + $0xe8] sm:$0xff] %vm3306, %v4086
      %4119 = vst.msk [vmem:[#allocation5 + $0xf0] sm:$0xff] %vm3306, %v4087
      %4120 = vst.msk [vmem:[#allocation5 + $0xf8] sm:$0xff] %vm3306, %v4088
      %v4121 = vld [vmem:[#allocation5] sm:$0xff]
      %v4122 = vld [vmem:[#allocation5 + $0x8] sm:$0xff]
      %v4123 = vld [vmem:[#allocation5 + $0x20] sm:$0xff]
      %v4124 = vld [vmem:[#allocation5 + $0x28] sm:$0xff]
      %v4125 = vld [vmem:[#allocation5 + $0x40] sm:$0xff]
      %v4126 = vld [vmem:[#allocation5 + $0x48] sm:$0xff]
      %v4127 = vld [vmem:[#allocation5 + $0x60] sm:$0xff]
      %v4128 = vld [vmem:[#allocation5 + $0x68] sm:$0xff]
      %v4129 = vld [vmem:[#allocation5 + $0x80] sm:$0xff]
      %v4130 = vld [vmem:[#allocation5 + $0x88] sm:$0xff]
      %v4131 = vld [vmem:[#allocation5 + $0xa0] sm:$0xff]
      %v4132 = vld [vmem:[#allocation5 + $0xa8] sm:$0xff]
      %v4133 = vld [vmem:[#allocation5 + $0xc0] sm:$0xff]
      %v4134 = vld [vmem:[#allocation5 + $0xc8] sm:$0xff]
      %v4135 = vld [vmem:[#allocation5 + $0xe0] sm:$0xff]
      %v4136 = vld [vmem:[#allocation5 + $0xe8] sm:$0xff]
      %s4137 = scalar_lea.vmem [#allocation5], 16
      %v4138 = vld [vmem:[%s4137] sm:$0xff]
      %v4139 = vld [vmem:[%s4137 + $0x8] sm:$0xff]
      %v4140 = vld [vmem:[%s4137 + $0x20] sm:$0xff]
      %v4141 = vld [vmem:[%s4137 + $0x28] sm:$0xff]
      %v4142 = vld [vmem:[%s4137 + $0x40] sm:$0xff]
      %v4143 = vld [vmem:[%s4137 + $0x48] sm:$0xff]
      %v4144 = vld [vmem:[%s4137 + $0x60] sm:$0xff]
      %v4145 = vld [vmem:[%s4137 + $0x68] sm:$0xff]
      %v4146 = vld [vmem:[%s4137 + $0x80] sm:$0xff]
      %v4147 = vld [vmem:[%s4137 + $0x88] sm:$0xff]
      %v4148 = vld [vmem:[%s4137 + $0xa0] sm:$0xff]
      %v4149 = vld [vmem:[%s4137 + $0xa8] sm:$0xff]
      %v4150 = vld [vmem:[%s4137 + $0xc0] sm:$0xff]
      %v4151 = vld [vmem:[%s4137 + $0xc8] sm:$0xff]
      %v4152 = vld [vmem:[%s4137 + $0xe0] sm:$0xff]
      %v4153 = vld [vmem:[%s4137 + $0xe8] sm:$0xff]
      %v4154 = vmax.f32 %v4121, %v4138
      %v4155 = vmax.f32 %v4122, %v4139
      %v4156 = vmax.f32 %v4123, %v4140
      %v4157 = vmax.f32 %v4124, %v4141
      %v4158 = vmax.f32 %v4125, %v4142
      %v4159 = vmax.f32 %v4126, %v4143
      %v4160 = vmax.f32 %v4127, %v4144
      %v4161 = vmax.f32 %v4128, %v4145
      %v4162 = vmax.f32 %v4129, %v4146
      %v4163 = vmax.f32 %v4130, %v4147
      %v4164 = vmax.f32 %v4131, %v4148
      %v4165 = vmax.f32 %v4132, %v4149
      %v4166 = vmax.f32 %v4133, %v4150
      %v4167 = vmax.f32 %v4134, %v4151
      %v4168 = vmax.f32 %v4135, %v4152
      %v4169 = vmax.f32 %v4136, %v4153
      %4170 = vst.msk [vmem:[#allocation6] sm:$0xff] %vm3306, %v4154
      %4171 = vst.msk [vmem:[#allocation6 + $0x8] sm:$0xff] %vm3306, %v4155
      %4172 = vst.msk [vmem:[#allocation6 + $0x10] sm:$0xff] %vm3306, %v4156
      %4173 = vst.msk [vmem:[#allocation6 + $0x18] sm:$0xff] %vm3306, %v4157
      %4174 = vst.msk [vmem:[#allocation6 + $0x20] sm:$0xff] %vm3306, %v4158
      %4175 = vst.msk [vmem:[#allocation6 + $0x28] sm:$0xff] %vm3306, %v4159
      %4176 = vst.msk [vmem:[#allocation6 + $0x30] sm:$0xff] %vm3306, %v4160
      %4177 = vst.msk [vmem:[#allocation6 + $0x38] sm:$0xff] %vm3306, %v4161
      %4178 = vst.msk [vmem:[#allocation6 + $0x40] sm:$0xff] %vm3306, %v4162
      %4179 = vst.msk [vmem:[#allocation6 + $0x48] sm:$0xff] %vm3306, %v4163
      %4180 = vst.msk [vmem:[#allocation6 + $0x50] sm:$0xff] %vm3306, %v4164
      %4181 = vst.msk [vmem:[#allocation6 + $0x58] sm:$0xff] %vm3306, %v4165
      %4182 = vst.msk [vmem:[#allocation6 + $0x60] sm:$0xff] %vm3306, %v4166
      %4183 = vst.msk [vmem:[#allocation6 + $0x68] sm:$0xff] %vm3306, %v4167
      %4184 = vst.msk [vmem:[#allocation6 + $0x70] sm:$0xff] %vm3306, %v4168
      %4185 = vst.msk [vmem:[#allocation6 + $0x78] sm:$0xff] %vm3306, %v4169
      %v4186 = vld [vmem:[#allocation6] ss:$2 sm:$0xff]
      %s4187 = scalar_lea.vmem [#allocation6], 16
      %v4188 = vld [vmem:[%s4187] ss:$2 sm:$0xff]
      %s4189 = scalar_lea.vmem [#allocation6], 32
      %v4190 = vld [vmem:[%s4189] ss:$2 sm:$0xff]
      %s4191 = scalar_lea.vmem [#allocation6], 48
      %v4192 = vld [vmem:[%s4191] ss:$2 sm:$0xff]
      %s4193 = scalar_lea.vmem [#allocation6], 64
      %v4194 = vld [vmem:[%s4193] ss:$2 sm:$0xff]
      %s4195 = scalar_lea.vmem [#allocation6], 80
      %v4196 = vld [vmem:[%s4195] ss:$2 sm:$0xff]
      %s4197 = scalar_lea.vmem [#allocation6], 96
      %v4198 = vld [vmem:[%s4197] ss:$2 sm:$0xff]
      %s4199 = scalar_lea.vmem [#allocation6], 112
      %v4200 = vld [vmem:[%s4199] ss:$2 sm:$0xff]
      %s4201 = scalar_lea.vmem [#allocation6], 1
      %v4202 = vld [vmem:[%s4201] ss:$2 sm:$0xff]
      %s4203 = scalar_lea.vmem [#allocation6], 17
      %v4204 = vld [vmem:[%s4203] ss:$2 sm:$0xff]
      %s4205 = scalar_lea.vmem [#allocation6], 33
      %v4206 = vld [vmem:[%s4205] ss:$2 sm:$0xff]
      %s4207 = scalar_lea.vmem [#allocation6], 49
      %v4208 = vld [vmem:[%s4207] ss:$2 sm:$0xff]
      %s4209 = scalar_lea.vmem [#allocation6], 65
      %v4210 = vld [vmem:[%s4209] ss:$2 sm:$0xff]
      %s4211 = scalar_lea.vmem [#allocation6], 81
      %v4212 = vld [vmem:[%s4211] ss:$2 sm:$0xff]
      %s4213 = scalar_lea.vmem [#allocation6], 97
      %v4214 = vld [vmem:[%s4213] ss:$2 sm:$0xff]
      %s4215 = scalar_lea.vmem [#allocation6], 113
      %v4216 = vld [vmem:[%s4215] ss:$2 sm:$0xff]
      %v4217 = vmax.f32 %v4186, %v4202
      %v4218 = vmax.f32 %v4188, %v4204
      %v4219 = vmax.f32 %v4190, %v4206
      %v4220 = vmax.f32 %v4192, %v4208
      %v4221 = vmax.f32 %v4194, %v4210
      %v4222 = vmax.f32 %v4196, %v4212
      %v4223 = vmax.f32 %v4198, %v4214
      %v4224 = vmax.f32 %v4200, %v4216
      %4225 = vst.msk [vmem:[%s224] sm:$0xff] %vm3306, %v4217
      %4226 = vst.msk [vmem:[%s224 + $0x8] sm:$0xff] %vm3306, %v4218
      %4227 = vst.msk [vmem:[%s224 + $0x10] sm:$0xff] %vm3306, %v4219
      %4228 = vst.msk [vmem:[%s224 + $0x18] sm:$0xff] %vm3306, %v4220
      %4229 = vst.msk [vmem:[%s224 + $0x20] sm:$0xff] %vm3306, %v4221
      %4230 = vst.msk [vmem:[%s224 + $0x28] sm:$0xff] %vm3306, %v4222
      %4231 = vst.msk [vmem:[%s224 + $0x30] sm:$0xff] %vm3306, %v4223
      %4232 = vst.msk [vmem:[%s224 + $0x38] sm:$0xff] %vm3306, %v4224
      %p4233 = scmp.lt.s32.totalorder %s16, 1
      %s4234 = scalar_select %p4233, %s16, 1
      %s4235 = smul.addr %s4234, 8
      %s4236 = smul.addr %s4235, 8
      %s4237 = scalar_lea.vmem %s5, %s4236
      // Predicated region
      $region41: #{simple_cnn_forward.2} parent=39 // pred_check
        %p4238 = pneg %p144
      $region42: #{simple_cnn_forward.2} parent=39 // pred_check_branch
        %4240 = sbr.rel (%p4238) target = $region44
      $region43: #{simple_cnn_forward.2} parent=39 // pred_region
        _
      $region44: #{simple_cnn_forward.2} parent=39 // pred_fallthru
        _
    $region40: #{simple_cnn_forward.2} parent=5 // pred_fallthru
      _
    %p4241 = scmp.le.s32.totalorder 2, %s11
    // Predicated region
    $region45: #{simple_cnn_forward.2} parent=5 // pred_check
      %p4242 = pneg %p4241
    $region46: #{simple_cnn_forward.2} parent=5 // pred_check_branch
      %4244 = sbr.rel (%p4242) target = $region48
    $region47: #{simple_cnn_forward.2} parent=5 // pred_region
      %s4245 = ssub.s32 %s11, 2
      // Predicated region
      $region49: #{simple_cnn_forward.2} parent=47 // pred_check
        %p4246 = pneg %p150
      $region50: #{simple_cnn_forward.2} parent=47 // pred_check_branch
        %4248 = sbr.rel (%p4246) target = $region52
      $region51: #{simple_cnn_forward.2} parent=47 // pred_region
        %p4249 = scmp.lt.s32.totalorder %s17, 1
        %s4250 = scalar_select %p4249, %s17, 1
        %s4251 = smul.addr %s4250, 8
        %s4252 = smul.addr %s4251, 8
        %s4253 = scalar_lea.vmem %s5, %s4252
      $region52: #{simple_cnn_forward.2} parent=47 // pred_fallthru
        _
    $region48: #{simple_cnn_forward.2} parent=5 // pred_fallthru
      _
  $region6: #{simple_cnn_forward.2} parent=0 // loop_footer
    %s15 = sadd.s32 1, %s11
  $region7: #{simple_cnn_forward.2} parent=0 // loop_footer_branch
    %10 = sbr.rel target = $region3
  $region8: #{simple_cnn_forward.2} parent=0 // loop_exit
    _

</llo_original>
